<compile_context>
chip_gen: v7x
topology: tpu7x:2x2x1
jax: 0.10.0
libtpu: 0.0.40
codegen_flags: <defaults>
</compile_context>

<pallas_src>
import numpy as np
import jax
import jax.numpy as jnp
from jax import lax
from jax.experimental import pallas as pl
from jax.experimental.pallas import tpu as pltpu

H = 20            # true hidden size
HP = 32           # lane-padded hidden size (each gate occupies one 32-lane block)
INPUT = 3         # LSTM input size
IN_PAD = 8        # input channels padded to 8; channel 3 carries a constant 1.0 (bias row)
GATES = 4 * HP    # 128 lanes = one full vreg row, gate order [i | f | o | g]
HI = lax.Precision.HIGHEST


def _pick_unroll(t_block, max_unroll=8):
    """Largest unroll factor <= max_unroll that divides t_block."""
    u = min(max_unroll, t_block)
    while u > 1 and t_block % u:
        u -= 1
    return max(u, 1)


def _make_kernel(t_block, unroll, seq_len, seq_len_padded):
    needs_mask = (seq_len != seq_len_padded)

    def kernel(x_ref, la_ref, wih_ref, whh_ref, wfc_ref, bfc_ref,
               wcla_ref, wcy_ref, bc_ref, out_ref, h_ref, c_ref):
        @pl.when(pl.program_id(0) == 0)
        def _init():
            h_ref[...] = jnp.zeros_like(h_ref)
            c_ref[...] = jnp.zeros_like(c_ref)

        wih = wih_ref[...]                       # (IN_PAD, GATES); bias folded into row INPUT
        whh = whh_ref[...]                       # (HP, GATES)
        t_base = pl.program_id(0) * t_block

        # NOTE: W_hh is loop-invariant; explicit MXU weight latching via
        # pltpu.matmul_push_rhs is deferred until a bundle dump confirms a per-step
        # RHS reload (kept on jnp.dot for robustness).
        def step(t, carry):
            h, c = carry
            x_t = x_ref[t]                       # (B, IN_PAD); channel INPUT holds 1.0 (bias)
            # x-projection is independent of h -> off the serial critical path.
            gates = (jnp.dot(x_t, wih, precision=HI, preferred_element_type=jnp.float32)
                     + jnp.dot(h, whh, precision=HI, preferred_element_type=jnp.float32))
            # ONE EUP tanh over the full 128-lane gate slab; i/f/o weight columns were
            # pre-scaled by 0.5 so sigmoid(z) = 0.5*tanh(z/2) + 0.5.
            t_all = jnp.tanh(gates)
            sig = 0.5 * t_all[:, 0:3 * HP] + 0.5
            i_g = sig[:, 0:HP]
            f_g = sig[:, HP:2 * HP]
            o_g = sig[:, 2 * HP:3 * HP]
            g_g = t_all[:, 3 * HP:4 * HP]
            c_new = f_g * c + i_g * g_g
            h_new = o_g * jnp.tanh(c_new)
            if needs_mask:
                # Tail-padding passthrough (only emitted when T was padded up to t_block).
                keep = jnp.where(t_base + t < seq_len, 1.0, 0.0)
                c_new = keep * c_new + (1.0 - keep) * c
                h_new = keep * h_new + (1.0 - keep) * h
            return h_new, c_new

        h, c = lax.fori_loop(0, t_block, step, (h_ref[...], c_ref[...]), unroll=unroll)
        h_ref[...] = h
        c_ref[...] = c

        @pl.when(pl.program_id(0) == pl.num_programs(0) - 1)
        def _epilogue():
            # ReLU + fc2 (padded to HP lanes; pad rows/cols of the packed weights are zero,
            # and the pad lanes of h/c are exactly zero by construction).
            y = jnp.maximum(h, 0.0)
            y = (jnp.dot(y, wfc_ref[...], precision=HI, preferred_element_type=jnp.float32)
                 + bfc_ref[...])                                                    # (B, HP)
            # 1x1 conv over 21 channels, lane-dense as a (1, B) row:
            #   logits[b] = wc_la * lastAction[b] + sum_k wc_y[k] * y[b, k] + bc
            proj = lax.dot_general(wcy_ref[...], y,
                                   dimension_numbers=(((1,), (1,)), ((), ())),
                                   precision=HI,
                                   preferred_element_type=jnp.float32)              # (1, B)
            logits = wcla_ref[...] * la_ref[...] + proj + bc_ref[...]                # (1, B)
            # softmax over {1.0, logits_0, ..., logits_{B-1}} along the lane axis
            m = jnp.maximum(jnp.max(logits, axis=1, keepdims=True), 1.0)    # (1, 1)
            e1 = jnp.exp(1.0 - m)                                           # (1, 1)
            el = jnp.exp(logits - m)                                        # (1, B)
            inv = 1.0 / (e1 + jnp.sum(el, axis=1, keepdims=True))           # (1, 1)
            out_ref[:, 0:1] = e1 * inv
            out_ref[:, 1:] = el * inv

    return kernel


def _pack_gate_cols(w_t):
    """w_t: (K, 4*H) with PyTorch gate order [i, f, g, o] along columns.
    Returns (K, GATES) with gate order [i, f, o, g], each gate zero-padded from H=20 to
    HP=32 lanes. The i/f/o columns are pre-scaled by 0.5 so the kernel computes all four
    activations with a single tanh (sigmoid(z) = 0.5*tanh(z/2) + 0.5)."""
    out = jnp.zeros((w_t.shape[0], GATES), jnp.float32)
    blocks = ((w_t[:, 0:H], 0.5),            # i
              (w_t[:, H:2 * H], 0.5),        # f
              (w_t[:, 3 * H:4 * H], 0.5),    # o
              (w_t[:, 2 * H:3 * H], 1.0))    # g
    for gi, (blk, s) in enumerate(blocks):
        out = out.at[:, gi * HP:gi * HP + H].set(s * blk.astype(jnp.float32))
    return out


def rnn_policy_forward(x, last_action, params, t_block_max=256):
    """x: (3, B, T) float32 (PyTorch layout); last_action: (B,) float32 -> (B+1, 1)."""
    _, B, T = x.shape
    x = x.astype(jnp.float32)

    # ---- pack / pad weights (gate order [i, f, o, g]; hidden padded 20 -> 32 lanes) ----
    wih_rows = _pack_gate_cols(params["w_ih"].T)                                      # (3, 128)
    bias_row = _pack_gate_cols((params["b_ih"] + params["b_hh"]).reshape(1, 4 * H))   # (1, 128)
    wih_p = (jnp.zeros((IN_PAD, GATES), jnp.float32)
             .at[:INPUT, :].set(wih_rows)
             .at[INPUT, :].set(bias_row[0]))        # bias rides the constant-1.0 input channel
    whh_p = jnp.zeros((HP, GATES), jnp.float32).at[:H, :].set(
        _pack_gate_cols(params["w_hh"].T))                                            # (32, 128)

    wfc_p = jnp.zeros((HP, HP), jnp.float32).at[:H, :H].set(params["w_fc"].T)         # (32, 32)
    bfc_p = jnp.zeros((1, HP), jnp.float32).at[:, :H].set(params["b_fc"].reshape(1, H))
    wc_la = params["w_conv"][:, 0:1].astype(jnp.float32)                              # (1, 1)
    wcy_p = jnp.zeros((1, HP), jnp.float32).at[:, :H].set(params["w_conv"][:, 1:])    # (1, 32)
    bc = params["b_conv"].reshape(1, 1).astype(jnp.float32)                           # (1, 1)

    # ---- sequence blocking: big T blocks (tiny VMEM), ragged tail handled by masking ----
    t_block = min(T, t_block_max)
    num_blocks = -(-T // t_block)
    T_pad = num_blocks * t_block
    unroll = _pick_unroll(t_block)

    # Layout-only wrapper work (no hoisted compute): x transposed to (T, B, 3), channel-
    # padded to 8 with a constant-1.0 bias channel, zero-padded along T. This replaces the
    # previous 42x-inflated (T, B, 128) gate slab round-trip through HBM.
    xt = jnp.transpose(x, (2, 1, 0))                               # (T, B, 3)
    xp = jnp.zeros((T_pad, B, IN_PAD), jnp.float32)
    xp = xp.at[:T, :, :INPUT].set(xt)
    xp = xp.at[:T, :, INPUT].set(1.0)
    la_row = last_action.reshape(1, B).astype(jnp.float32)

    out = pl.pallas_call(
        _make_kernel(t_block, unroll, T, T_pad),
        grid=(num_blocks,),
        in_specs=[
            pl.BlockSpec((t_block, B, IN_PAD), lambda s: (s, 0, 0)),  # raw x, tiled over T
            pl.BlockSpec((1, B), lambda s: (0, 0)),                   # lastAction row
            pl.BlockSpec((IN_PAD, GATES), lambda s: (0, 0)),          # W_ih^T (+ bias row)
            pl.BlockSpec((HP, GATES), lambda s: (0, 0)),              # W_hh^T (packed/padded)
            pl.BlockSpec((HP, HP), lambda s: (0, 0)),                 # W_fc^T (padded)
            pl.BlockSpec((1, HP), lambda s: (0, 0)),                  # b_fc (padded)
            pl.BlockSpec((1, 1), lambda s: (0, 0)),                   # conv weight (lastAction)
            pl.BlockSpec((1, HP), lambda s: (0, 0)),                  # conv weights (y, padded)
            pl.BlockSpec((1, 1), lambda s: (0, 0)),                   # conv bias
        ],
        out_specs=pl.BlockSpec((1, B + 1), lambda s: (0, 0)),
        out_shape=jax.ShapeDtypeStruct((1, B + 1), jnp.float32),
        scratch_shapes=[pltpu.VMEM((B, HP), jnp.float32),             # h carry
                        pltpu.VMEM((B, HP), jnp.float32)],            # c carry
        compiler_params=pltpu.CompilerParams(
            dimension_semantics=("arbitrary",)),                      # sequential carry over T
    )(xp, la_row, wih_p, whh_p, wfc_p, bfc_p, wc_la, wcy_p, bc)
    return out.reshape(B + 1, 1)


# ---------------------------- reference + init ----------------------------

def rnn_policy_reference(x, last_action, params):
    """Pure-JAX reference with the original (unpadded) PyTorch gate layout."""
    P = lax.Precision.HIGHEST
    _, B, T = x.shape
    xp = jnp.transpose(x, (1, 2, 0)).astype(jnp.float32)          # (B, T, 3)
    wih_t, whh_t = params["w_ih"].T, params["w_hh"].T
    b = params["b_ih"] + params["b_hh"]
    h = jnp.zeros((B, H), jnp.float32)
    c = jnp.zeros((B, H), jnp.float32)
    for t in range(T):
        gates = (jnp.dot(xp[:, t, :], wih_t, precision=P)
                 + jnp.dot(h, whh_t, precision=P) + b)
        i = jax.nn.sigmoid(gates[:, 0:H])
        f = jax.nn.sigmoid(gates[:, H:2 * H])
        g = jnp.tanh(gates[:, 2 * H:3 * H])
        o = jax.nn.sigmoid(gates[:, 3 * H:4 * H])
        c = f * c + i * g
        h = o * jnp.tanh(c)
    y = jnp.dot(jnp.maximum(h, 0.0), params["w_fc"].T, precision=P) + params["b_fc"]
    feats = jnp.concatenate([last_action.reshape(B, 1), y], axis=1)              # (B, 21)
    logits = jnp.dot(feats, params["w_conv"].T, precision=P) + params["b_conv"]  # (B, 1)
    all_logits = jnp.concatenate([jnp.ones((1, 1), jnp.float32), logits], axis=0)
    return jax.nn.softmax(all_logits, axis=0)


def xavier_uniform(key, shape, fan_in, fan_out):
    bound = float(np.sqrt(6.0 / (fan_in + fan_out)))
    return jax.random.uniform(key, shape, jnp.float32, -bound, bound)


def init_params(key):
    ks = jax.random.split(key, 8)
    inv_sqrt_h = 1.0 / float(np.sqrt(H))
    return {
        # nn.LSTM weights, xavier_uniform as in the module __init__
        "w_ih": xavier_uniform(ks[0], (4 * H, INPUT), INPUT, 4 * H),
        "w_hh": xavier_uniform(ks[1], (4 * H, H), H, 4 * H),
        "b_ih": jax.random.uniform(ks[2], (4 * H,), jnp.float32, -inv_sqrt_h, inv_sqrt_h),
        "b_hh": jax.random.uniform(ks[3], (4 * H,), jnp.float32, -inv_sqrt_h, inv_sqrt_h),
        # fc2
        "w_fc": xavier_uniform(ks[4], (H, H), H, H),
        "b_fc": jax.random.uniform(ks[5], (H,), jnp.float32, -inv_sqrt_h, inv_sqrt_h),
        # conv3: Conv2d(21, 1, kernel_size=1) -> weight (1, 21, 1, 1) squeezed to (1, 21)
        "w_conv": xavier_uniform(ks[6], (1, H + 1), H + 1, 1),
        "b_conv": jax.random.uniform(ks[7], (1,), jnp.float32,
                                     -1.0 / float(np.sqrt(H + 1)), 1.0 / float(np.sqrt(H + 1))),
    }


if __name__ == "__main__":
    key = jax.random.PRNGKey(0)
    k_params, k_x, k_a = jax.random.split(key, 3)

    # Test 1: small shapes, single sequence block.
    B, T = 4, 8
    params = init_params(k_params)
    x = jax.random.normal(k_x, (INPUT, B, T), jnp.float32)       # PyTorch layout (3, batch, seq)
    last_action = jax.random.uniform(k_a, (B,), jnp.float32)

    out = jax.block_until_ready(rnn_policy_forward(x, last_action, params))
    assert out.shape == (B + 1, 1), out.shape
    assert bool(jnp.isfinite(out).all())
    assert abs(float(jnp.sum(out)) - 1.0) < 1e-4                 # softmax sums to 1

    ref = jax.block_until_ready(rnn_policy_reference(x, last_action, params))
    np.testing.assert_allclose(np.asarray(out), np.asarray(ref), rtol=5e-4, atol=5e-4)

    # Test 2: multi-block grid with a ragged tail (T=40, t_block=16 -> 3 blocks, last
    # block masked). Exercises the carried h/c scratch, the fori_loop recurrence with
    # unroll, the tail masking, and implicitly the zero pad-lane invariant of h/c.
    k_x2, k_a2 = jax.random.split(jax.random.PRNGKey(1), 2)
    B2, T2 = 4, 40
    x2 = jax.random.normal(k_x2, (INPUT, B2, T2), jnp.float32)
    la2 = jax.random.uniform(k_a2, (B2,), jnp.float32)
    out2 = jax.block_until_ready(rnn_policy_forward(x2, la2, params, t_block_max=16))
    ref2 = jax.block_until_ready(rnn_policy_reference(x2, la2, params))
    assert out2.shape == (B2 + 1, 1)
    np.testing.assert_allclose(np.asarray(out2), np.asarray(ref2), rtol=5e-4, atol=5e-4)

    print("KERNEL_OK")
</pallas_src>

<mosaic_0001>
module attributes {stable_mosaic.version = 11 : i64} {
  func.func @kernel(%arg0: i32, %arg1: memref<8x4x8xf32, #tpu.memory_space<vmem>>, %arg2: memref<1x4xf32, #tpu.memory_space<vmem>>, %arg3: memref<8x128xf32, #tpu.memory_space<vmem>>, %arg4: memref<32x128xf32, #tpu.memory_space<vmem>>, %arg5: memref<32x32xf32, #tpu.memory_space<vmem>>, %arg6: memref<1x32xf32, #tpu.memory_space<vmem>>, %arg7: memref<1x1xf32, #tpu.memory_space<vmem>>, %arg8: memref<1x32xf32, #tpu.memory_space<vmem>>, %arg9: memref<1x1xf32, #tpu.memory_space<vmem>>, %arg10: memref<1x5xf32, #tpu.memory_space<vmem>>, %arg11: memref<4x32xf32, #tpu.memory_space<vmem>>, %arg12: memref<4x32xf32, #tpu.memory_space<vmem>>) attributes {dimension_semantics = [#tpu.dimension_semantics<arbitrary>], iteration_bounds = array<i64: 1>, scalar_prefetch = 0 : i64, scratch_operands = 2 : i64, tpu.core_type = #tpu.core_type<tc>, window_params = [{transform_indices = @transform_0, window_bounds = array<i64: 8, 4, 8>}, {pipeline_mode = #tpu.pipeline_mode<synchronous>, transform_indices = @transform_1, window_bounds = array<i64: 1, 4>}, {pipeline_mode = #tpu.pipeline_mode<synchronous>, transform_indices = @transform_2, window_bounds = array<i64: 8, 128>}, {pipeline_mode = #tpu.pipeline_mode<synchronous>, transform_indices = @transform_3, window_bounds = array<i64: 32, 128>}, {pipeline_mode = #tpu.pipeline_mode<synchronous>, transform_indices = @transform_4, window_bounds = array<i64: 32, 32>}, {pipeline_mode = #tpu.pipeline_mode<synchronous>, transform_indices = @transform_5, window_bounds = array<i64: 1, 32>}, {pipeline_mode = #tpu.pipeline_mode<synchronous>, transform_indices = @transform_6, window_bounds = array<i64: 1, 1>}, {pipeline_mode = #tpu.pipeline_mode<synchronous>, transform_indices = @transform_7, window_bounds = array<i64: 1, 32>}, {pipeline_mode = #tpu.pipeline_mode<synchronous>, transform_indices = @transform_8, window_bounds = array<i64: 1, 1>}, {pipeline_mode = #tpu.pipeline_mode<synchronous>, transform_indices = @transform_9, window_bounds = array<i64: 1, 5>}]} {
    %c0_i32 = arith.constant 0 : i32
    %0 = arith.cmpi eq, %arg0, %c0_i32 : i32
    %1 = arith.extui %0 : i1 to i32
    %c0_i32_0 = arith.constant 0 : i32
    %2 = arith.cmpi ne, %1, %c0_i32_0 : i32
    scf.if %2 {
      %cst_62 = arith.constant 0.000000e+00 : f32
      %180 = vector.broadcast %cst_62 : f32 to vector<4x32xf32>
      %c0_63 = arith.constant 0 : index
      %c0_64 = arith.constant 0 : index
      %181 = vector.load %arg11[%c0_63, %c0_64] : memref<4x32xf32, #tpu.memory_space<vmem>>, vector<4x32xf32>
      tpu.vector_store %arg11[%c0_63, %c0_64], %180 {strides = array<i32>} : memref<4x32xf32, #tpu.memory_space<vmem>>, vector<4x32xf32>,
      %cst_65 = arith.constant 0.000000e+00 : f32
      %182 = vector.broadcast %cst_65 : f32 to vector<4x32xf32>
      %c0_66 = arith.constant 0 : index
      %c0_67 = arith.constant 0 : index
      %183 = vector.load %arg12[%c0_66, %c0_67] : memref<4x32xf32, #tpu.memory_space<vmem>>, vector<4x32xf32>
      tpu.vector_store %arg12[%c0_66, %c0_67], %182 {strides = array<i32>} : memref<4x32xf32, #tpu.memory_space<vmem>>, vector<4x32xf32>,
    } else {
    }
    %c0 = arith.constant 0 : index
    %c0_1 = arith.constant 0 : index
    %3 = vector.load %arg3[%c0, %c0_1] : memref<8x128xf32, #tpu.memory_space<vmem>>, vector<8x128xf32>
    %c0_2 = arith.constant 0 : index
    %c0_3 = arith.constant 0 : index
    %4 = vector.load %arg4[%c0_2, %c0_3] : memref<32x128xf32, #tpu.memory_space<vmem>>, vector<32x128xf32>
    %c0_4 = arith.constant 0 : index
    %c0_5 = arith.constant 0 : index
    %5 = vector.load %arg11[%c0_4, %c0_5] : memref<4x32xf32, #tpu.memory_space<vmem>>, vector<4x32xf32>
    %c0_6 = arith.constant 0 : index
    %c0_7 = arith.constant 0 : index
    %6 = vector.load %arg12[%c0_6, %c0_7] : memref<4x32xf32, #tpu.memory_space<vmem>>, vector<4x32xf32>
    %c0_i32_8 = arith.constant 0 : i32
    %7 = arith.index_cast %c0_i32_8 : i32 to index
    %c0_9 = arith.constant 0 : index
    %c0_10 = arith.constant 0 : index
    %8 = vector.load %arg1[%7, %c0_9, %c0_10] : memref<8x4x8xf32, #tpu.memory_space<vmem>>, vector<1x4x8xf32>
    %9 = vector.shape_cast %8 : vector<1x4x8xf32> to vector<4x8xf32>
    %cst = arith.constant dense<0.000000e+00> : vector<4x128xf32>
    %10 = tpu.matmul %9, %3, %cst {dimension_numbers = #tpu.dot_dimension_numbers<[1], [0], [0], [1], [0, 0, 1, 1], [], []>, precision = #tpu.contract_precision<fp32>} : vector<4x8xf32>, vector<8x128xf32>, vector<4x128xf32> -> vector<4x128xf32>
    %cst_11 = arith.constant dense<0.000000e+00> : vector<4x128xf32>
    %11 = tpu.matmul %5, %4, %cst_11 {dimension_numbers = #tpu.dot_dimension_numbers<[1], [0], [0], [1], [0, 0, 1, 1], [], []>, precision = #tpu.contract_precision<fp32>} : vector<4x32xf32>, vector<32x128xf32>, vector<4x128xf32> -> vector<4x128xf32>
    %12 = arith.addf %10, %11 : vector<4x128xf32>
    %13 = math.tanh %12 : vector<4x128xf32>
    %14 = vector.extract_strided_slice %13 {offsets = [0, 0], sizes = [4, 96], strides = [1, 1]} : vector<4x128xf32> to vector<4x96xf32>
    %cst_12 = arith.constant 5.000000e-01 : f32
    %15 = vector.broadcast %cst_12 : f32 to vector<4x96xf32>
    %16 = arith.mulf %15, %14 : vector<4x96xf32>
    %cst_13 = arith.constant 5.000000e-01 : f32
    %17 = vector.broadcast %cst_13 : f32 to vector<4x96xf32>
    %18 = arith.addf %16, %17 : vector<4x96xf32>
    %19 = vector.extract_strided_slice %18 {offsets = [0, 0], sizes = [4, 32], strides = [1, 1]} : vector<4x96xf32> to vector<4x32xf32>
    %20 = vector.extract_strided_slice %18 {offsets = [0, 32], sizes = [4, 32], strides = [1, 1]} : vector<4x96xf32> to vector<4x32xf32>
    %21 = vector.extract_strided_slice %18 {offsets = [0, 64], sizes = [4, 32], strides = [1, 1]} : vector<4x96xf32> to vector<4x32xf32>
    %22 = vector.extract_strided_slice %13 {offsets = [0, 96], sizes = [4, 32], strides = [1, 1]} : vector<4x128xf32> to vector<4x32xf32>
    %23 = arith.mulf %20, %6 : vector<4x32xf32>
    %24 = arith.mulf %19, %22 : vector<4x32xf32>
    %25 = arith.addf %23, %24 : vector<4x32xf32>
    %26 = math.tanh %25 : vector<4x32xf32>
    %27 = arith.mulf %21, %26 : vector<4x32xf32>
    %c1_i32 = arith.constant 1 : i32
    %28 = arith.index_cast %c1_i32 : i32 to index
    %c0_14 = arith.constant 0 : index
    %c0_15 = arith.constant 0 : index
    %29 = vector.load %arg1[%28, %c0_14, %c0_15] : memref<8x4x8xf32, #tpu.memory_space<vmem>>, vector<1x4x8xf32>
    %30 = vector.shape_cast %29 : vector<1x4x8xf32> to vector<4x8xf32>
    %cst_16 = arith.constant dense<0.000000e+00> : vector<4x128xf32>
    %31 = tpu.matmul %30, %3, %cst_16 {dimension_numbers = #tpu.dot_dimension_numbers<[1], [0], [0], [1], [0, 0, 1, 1], [], []>, precision = #tpu.contract_precision<fp32>} : vector<4x8xf32>, vector<8x128xf32>, vector<4x128xf32> -> vector<4x128xf32>
    %cst_17 = arith.constant dense<0.000000e+00> : vector<4x128xf32>
    %32 = tpu.matmul %27, %4, %cst_17 {dimension_numbers = #tpu.dot_dimension_numbers<[1], [0], [0], [1], [0, 0, 1, 1], [], []>, precision = #tpu.contract_precision<fp32>} : vector<4x32xf32>, vector<32x128xf32>, vector<4x128xf32> -> vector<4x128xf32>
    %33 = arith.addf %31, %32 : vector<4x128xf32>
    %34 = math.tanh %33 : vector<4x128xf32>
    %35 = vector.extract_strided_slice %34 {offsets = [0, 0], sizes = [4, 96], strides = [1, 1]} : vector<4x128xf32> to vector<4x96xf32>
    %cst_18 = arith.constant 5.000000e-01 : f32
    %36 = vector.broadcast %cst_18 : f32 to vector<4x96xf32>
    %37 = arith.mulf %36, %35 : vector<4x96xf32>
    %cst_19 = arith.constant 5.000000e-01 : f32
    %38 = vector.broadcast %cst_19 : f32 to vector<4x96xf32>
    %39 = arith.addf %37, %38 : vector<4x96xf32>
    %40 = vector.extract_strided_slice %39 {offsets = [0, 0], sizes = [4, 32], strides = [1, 1]} : vector<4x96xf32> to vector<4x32xf32>
    %41 = vector.extract_strided_slice %39 {offsets = [0, 32], sizes = [4, 32], strides = [1, 1]} : vector<4x96xf32> to vector<4x32xf32>
    %42 = vector.extract_strided_slice %39 {offsets = [0, 64], sizes = [4, 32], strides = [1, 1]} : vector<4x96xf32> to vector<4x32xf32>
    %43 = vector.extract_strided_slice %34 {offsets = [0, 96], sizes = [4, 32], strides = [1, 1]} : vector<4x128xf32> to vector<4x32xf32>
    %44 = arith.mulf %41, %25 : vector<4x32xf32>
    %45 = arith.mulf %40, %43 : vector<4x32xf32>
    %46 = arith.addf %44, %45 : vector<4x32xf32>
    %47 = math.tanh %46 : vector<4x32xf32>
    %48 = arith.mulf %42, %47 : vector<4x32xf32>
    %c2_i32 = arith.constant 2 : i32
    %49 = arith.index_cast %c2_i32 : i32 to index
    %c0_20 = arith.constant 0 : index
    %c0_21 = arith.constant 0 : index
    %50 = vector.load %arg1[%49, %c0_20, %c0_21] : memref<8x4x8xf32, #tpu.memory_space<vmem>>, vector<1x4x8xf32>
    %51 = vector.shape_cast %50 : vector<1x4x8xf32> to vector<4x8xf32>
    %cst_22 = arith.constant dense<0.000000e+00> : vector<4x128xf32>
    %52 = tpu.matmul %51, %3, %cst_22 {dimension_numbers = #tpu.dot_dimension_numbers<[1], [0], [0], [1], [0, 0, 1, 1], [], []>, precision = #tpu.contract_precision<fp32>} : vector<4x8xf32>, vector<8x128xf32>, vector<4x128xf32> -> vector<4x128xf32>
    %cst_23 = arith.constant dense<0.000000e+00> : vector<4x128xf32>
    %53 = tpu.matmul %48, %4, %cst_23 {dimension_numbers = #tpu.dot_dimension_numbers<[1], [0], [0], [1], [0, 0, 1, 1], [], []>, precision = #tpu.contract_precision<fp32>} : vector<4x32xf32>, vector<32x128xf32>, vector<4x128xf32> -> vector<4x128xf32>
    %54 = arith.addf %52, %53 : vector<4x128xf32>
    %55 = math.tanh %54 : vector<4x128xf32>
    %56 = vector.extract_strided_slice %55 {offsets = [0, 0], sizes = [4, 96], strides = [1, 1]} : vector<4x128xf32> to vector<4x96xf32>
    %cst_24 = arith.constant 5.000000e-01 : f32
    %57 = vector.broadcast %cst_24 : f32 to vector<4x96xf32>
    %58 = arith.mulf %57, %56 : vector<4x96xf32>
    %cst_25 = arith.constant 5.000000e-01 : f32
    %59 = vector.broadcast %cst_25 : f32 to vector<4x96xf32>
    %60 = arith.addf %58, %59 : vector<4x96xf32>
    %61 = vector.extract_strided_slice %60 {offsets = [0, 0], sizes = [4, 32], strides = [1, 1]} : vector<4x96xf32> to vector<4x32xf32>
    %62 = vector.extract_strided_slice %60 {offsets = [0, 32], sizes = [4, 32], strides = [1, 1]} : vector<4x96xf32> to vector<4x32xf32>
    %63 = vector.extract_strided_slice %60 {offsets = [0, 64], sizes = [4, 32], strides = [1, 1]} : vector<4x96xf32> to vector<4x32xf32>
    %64 = vector.extract_strided_slice %55 {offsets = [0, 96], sizes = [4, 32], strides = [1, 1]} : vector<4x128xf32> to vector<4x32xf32>
    %65 = arith.mulf %62, %46 : vector<4x32xf32>
    %66 = arith.mulf %61, %64 : vector<4x32xf32>
    %67 = arith.addf %65, %66 : vector<4x32xf32>
    %68 = math.tanh %67 : vector<4x32xf32>
    %69 = arith.mulf %63, %68 : vector<4x32xf32>
    %c3_i32 = arith.constant 3 : i32
    %70 = arith.index_cast %c3_i32 : i32 to index
    %c0_26 = arith.constant 0 : index
    %c0_27 = arith.constant 0 : index
    %71 = vector.load %arg1[%70, %c0_26, %c0_27] : memref<8x4x8xf32, #tpu.memory_space<vmem>>, vector<1x4x8xf32>
    %72 = vector.shape_cast %71 : vector<1x4x8xf32> to vector<4x8xf32>
    %cst_28 = arith.constant dense<0.000000e+00> : vector<4x128xf32>
    %73 = tpu.matmul %72, %3, %cst_28 {dimension_numbers = #tpu.dot_dimension_numbers<[1], [0], [0], [1], [0, 0, 1, 1], [], []>, precision = #tpu.contract_precision<fp32>} : vector<4x8xf32>, vector<8x128xf32>, vector<4x128xf32> -> vector<4x128xf32>
    %cst_29 = arith.constant dense<0.000000e+00> : vector<4x128xf32>
    %74 = tpu.matmul %69, %4, %cst_29 {dimension_numbers = #tpu.dot_dimension_numbers<[1], [0], [0], [1], [0, 0, 1, 1], [], []>, precision = #tpu.contract_precision<fp32>} : vector<4x32xf32>, vector<32x128xf32>, vector<4x128xf32> -> vector<4x128xf32>
    %75 = arith.addf %73, %74 : vector<4x128xf32>
    %76 = math.tanh %75 : vector<4x128xf32>
    %77 = vector.extract_strided_slice %76 {offsets = [0, 0], sizes = [4, 96], strides = [1, 1]} : vector<4x128xf32> to vector<4x96xf32>
    %cst_30 = arith.constant 5.000000e-01 : f32
    %78 = vector.broadcast %cst_30 : f32 to vector<4x96xf32>
    %79 = arith.mulf %78, %77 : vector<4x96xf32>
    %cst_31 = arith.constant 5.000000e-01 : f32
    %80 = vector.broadcast %cst_31 : f32 to vector<4x96xf32>
    %81 = arith.addf %79, %80 : vector<4x96xf32>
    %82 = vector.extract_strided_slice %81 {offsets = [0, 0], sizes = [4, 32], strides = [1, 1]} : vector<4x96xf32> to vector<4x32xf32>
    %83 = vector.extract_strided_slice %81 {offsets = [0, 32], sizes = [4, 32], strides = [1, 1]} : vector<4x96xf32> to vector<4x32xf32>
    %84 = vector.extract_strided_slice %81 {offsets = [0, 64], sizes = [4, 32], strides = [1, 1]} : vector<4x96xf32> to vector<4x32xf32>
    %85 = vector.extract_strided_slice %76 {offsets = [0, 96], sizes = [4, 32], strides = [1, 1]} : vector<4x128xf32> to vector<4x32xf32>
    %86 = arith.mulf %83, %67 : vector<4x32xf32>
    %87 = arith.mulf %82, %85 : vector<4x32xf32>
    %88 = arith.addf %86, %87 : vector<4x32xf32>
    %89 = math.tanh %88 : vector<4x32xf32>
    %90 = arith.mulf %84, %89 : vector<4x32xf32>
    %c4_i32 = arith.constant 4 : i32
    %91 = arith.index_cast %c4_i32 : i32 to index
    %c0_32 = arith.constant 0 : index
    %c0_33 = arith.constant 0 : index
    %92 = vector.load %arg1[%91, %c0_32, %c0_33] : memref<8x4x8xf32, #tpu.memory_space<vmem>>, vector<1x4x8xf32>
    %93 = vector.shape_cast %92 : vector<1x4x8xf32> to vector<4x8xf32>
    %cst_34 = arith.constant dense<0.000000e+00> : vector<4x128xf32>
    %94 = tpu.matmul %93, %3, %cst_34 {dimension_numbers = #tpu.dot_dimension_numbers<[1], [0], [0], [1], [0, 0, 1, 1], [], []>, precision = #tpu.contract_precision<fp32>} : vector<4x8xf32>, vector<8x128xf32>, vector<4x128xf32> -> vector<4x128xf32>
    %cst_35 = arith.constant dense<0.000000e+00> : vector<4x128xf32>
    %95 = tpu.matmul %90, %4, %cst_35 {dimension_numbers = #tpu.dot_dimension_numbers<[1], [0], [0], [1], [0, 0, 1, 1], [], []>, precision = #tpu.contract_precision<fp32>} : vector<4x32xf32>, vector<32x128xf32>, vector<4x128xf32> -> vector<4x128xf32>
    %96 = arith.addf %94, %95 : vector<4x128xf32>
    %97 = math.tanh %96 : vector<4x128xf32>
    %98 = vector.extract_strided_slice %97 {offsets = [0, 0], sizes = [4, 96], strides = [1, 1]} : vector<4x128xf32> to vector<4x96xf32>
    %cst_36 = arith.constant 5.000000e-01 : f32
    %99 = vector.broadcast %cst_36 : f32 to vector<4x96xf32>
    %100 = arith.mulf %99, %98 : vector<4x96xf32>
    %cst_37 = arith.constant 5.000000e-01 : f32
    %101 = vector.broadcast %cst_37 : f32 to vector<4x96xf32>
    %102 = arith.addf %100, %101 : vector<4x96xf32>
    %103 = vector.extract_strided_slice %102 {offsets = [0, 0], sizes = [4, 32], strides = [1, 1]} : vector<4x96xf32> to vector<4x32xf32>
    %104 = vector.extract_strided_slice %102 {offsets = [0, 32], sizes = [4, 32], strides = [1, 1]} : vector<4x96xf32> to vector<4x32xf32>
    %105 = vector.extract_strided_slice %102 {offsets = [0, 64], sizes = [4, 32], strides = [1, 1]} : vector<4x96xf32> to vector<4x32xf32>
    %106 = vector.extract_strided_slice %97 {offsets = [0, 96], sizes = [4, 32], strides = [1, 1]} : vector<4x128xf32> to vector<4x32xf32>
    %107 = arith.mulf %104, %88 : vector<4x32xf32>
    %108 = arith.mulf %103, %106 : vector<4x32xf32>
    %109 = arith.addf %107, %108 : vector<4x32xf32>
    %110 = math.tanh %109 : vector<4x32xf32>
    %111 = arith.mulf %105, %110 : vector<4x32xf32>
    %c5_i32 = arith.constant 5 : i32
    %112 = arith.index_cast %c5_i32 : i32 to index
    %c0_38 = arith.constant 0 : index
    %c0_39 = arith.constant 0 : index
    %113 = vector.load %arg1[%112, %c0_38, %c0_39] : memref<8x4x8xf32, #tpu.memory_space<vmem>>, vector<1x4x8xf32>
    %114 = vector.shape_cast %113 : vector<1x4x8xf32> to vector<4x8xf32>
    %cst_40 = arith.constant dense<0.000000e+00> : vector<4x128xf32>
    %115 = tpu.matmul %114, %3, %cst_40 {dimension_numbers = #tpu.dot_dimension_numbers<[1], [0], [0], [1], [0, 0, 1, 1], [], []>, precision = #tpu.contract_precision<fp32>} : vector<4x8xf32>, vector<8x128xf32>, vector<4x128xf32> -> vector<4x128xf32>
    %cst_41 = arith.constant dense<0.000000e+00> : vector<4x128xf32>
    %116 = tpu.matmul %111, %4, %cst_41 {dimension_numbers = #tpu.dot_dimension_numbers<[1], [0], [0], [1], [0, 0, 1, 1], [], []>, precision = #tpu.contract_precision<fp32>} : vector<4x32xf32>, vector<32x128xf32>, vector<4x128xf32> -> vector<4x128xf32>
    %117 = arith.addf %115, %116 : vector<4x128xf32>
    %118 = math.tanh %117 : vector<4x128xf32>
    %119 = vector.extract_strided_slice %118 {offsets = [0, 0], sizes = [4, 96], strides = [1, 1]} : vector<4x128xf32> to vector<4x96xf32>
    %cst_42 = arith.constant 5.000000e-01 : f32
    %120 = vector.broadcast %cst_42 : f32 to vector<4x96xf32>
    %121 = arith.mulf %120, %119 : vector<4x96xf32>
    %cst_43 = arith.constant 5.000000e-01 : f32
    %122 = vector.broadcast %cst_43 : f32 to vector<4x96xf32>
    %123 = arith.addf %121, %122 : vector<4x96xf32>
    %124 = vector.extract_strided_slice %123 {offsets = [0, 0], sizes = [4, 32], strides = [1, 1]} : vector<4x96xf32> to vector<4x32xf32>
    %125 = vector.extract_strided_slice %123 {offsets = [0, 32], sizes = [4, 32], strides = [1, 1]} : vector<4x96xf32> to vector<4x32xf32>
    %126 = vector.extract_strided_slice %123 {offsets = [0, 64], sizes = [4, 32], strides = [1, 1]} : vector<4x96xf32> to vector<4x32xf32>
    %127 = vector.extract_strided_slice %118 {offsets = [0, 96], sizes = [4, 32], strides = [1, 1]} : vector<4x128xf32> to vector<4x32xf32>
    %128 = arith.mulf %125, %109 : vector<4x32xf32>
    %129 = arith.mulf %124, %127 : vector<4x32xf32>
    %130 = arith.addf %128, %129 : vector<4x32xf32>
    %131 = math.tanh %130 : vector<4x32xf32>
    %132 = arith.mulf %126, %131 : vector<4x32xf32>
    %c6_i32 = arith.constant 6 : i32
    %133 = arith.index_cast %c6_i32 : i32 to index
    %c0_44 = arith.constant 0 : index
    %c0_45 = arith.constant 0 : index
    %134 = vector.load %arg1[%133, %c0_44, %c0_45] : memref<8x4x8xf32, #tpu.memory_space<vmem>>, vector<1x4x8xf32>
    %135 = vector.shape_cast %134 : vector<1x4x8xf32> to vector<4x8xf32>
    %cst_46 = arith.constant dense<0.000000e+00> : vector<4x128xf32>
    %136 = tpu.matmul %135, %3, %cst_46 {dimension_numbers = #tpu.dot_dimension_numbers<[1], [0], [0], [1], [0, 0, 1, 1], [], []>, precision = #tpu.contract_precision<fp32>} : vector<4x8xf32>, vector<8x128xf32>, vector<4x128xf32> -> vector<4x128xf32>
    %cst_47 = arith.constant dense<0.000000e+00> : vector<4x128xf32>
    %137 = tpu.matmul %132, %4, %cst_47 {dimension_numbers = #tpu.dot_dimension_numbers<[1], [0], [0], [1], [0, 0, 1, 1], [], []>, precision = #tpu.contract_precision<fp32>} : vector<4x32xf32>, vector<32x128xf32>, vector<4x128xf32> -> vector<4x128xf32>
    %138 = arith.addf %136, %137 : vector<4x128xf32>
    %139 = math.tanh %138 : vector<4x128xf32>
    %140 = vector.extract_strided_slice %139 {offsets = [0, 0], sizes = [4, 96], strides = [1, 1]} : vector<4x128xf32> to vector<4x96xf32>
    %cst_48 = arith.constant 5.000000e-01 : f32
    %141 = vector.broadcast %cst_48 : f32 to vector<4x96xf32>
    %142 = arith.mulf %141, %140 : vector<4x96xf32>
    %cst_49 = arith.constant 5.000000e-01 : f32
    %143 = vector.broadcast %cst_49 : f32 to vector<4x96xf32>
    %144 = arith.addf %142, %143 : vector<4x96xf32>
    %145 = vector.extract_strided_slice %144 {offsets = [0, 0], sizes = [4, 32], strides = [1, 1]} : vector<4x96xf32> to vector<4x32xf32>
    %146 = vector.extract_strided_slice %144 {offsets = [0, 32], sizes = [4, 32], strides = [1, 1]} : vector<4x96xf32> to vector<4x32xf32>
    %147 = vector.extract_strided_slice %144 {offsets = [0, 64], sizes = [4, 32], strides = [1, 1]} : vector<4x96xf32> to vector<4x32xf32>
    %148 = vector.extract_strided_slice %139 {offsets = [0, 96], sizes = [4, 32], strides = [1, 1]} : vector<4x128xf32> to vector<4x32xf32>
    %149 = arith.mulf %146, %130 : vector<4x32xf32>
    %150 = arith.mulf %145, %148 : vector<4x32xf32>
    %151 = arith.addf %149, %150 : vector<4x32xf32>
    %152 = math.tanh %151 : vector<4x32xf32>
    %153 = arith.mulf %147, %152 : vector<4x32xf32>
    %c7_i32 = arith.constant 7 : i32
    %154 = arith.index_cast %c7_i32 : i32 to index
    %c0_50 = arith.constant 0 : index
    %c0_51 = arith.constant 0 : index
    %155 = vector.load %arg1[%154, %c0_50, %c0_51] : memref<8x4x8xf32, #tpu.memory_space<vmem>>, vector<1x4x8xf32>
    %156 = vector.shape_cast %155 : vector<1x4x8xf32> to vector<4x8xf32>
    %cst_52 = arith.constant dense<0.000000e+00> : vector<4x128xf32>
    %157 = tpu.matmul %156, %3, %cst_52 {dimension_numbers = #tpu.dot_dimension_numbers<[1], [0], [0], [1], [0, 0, 1, 1], [], []>, precision = #tpu.contract_precision<fp32>} : vector<4x8xf32>, vector<8x128xf32>, vector<4x128xf32> -> vector<4x128xf32>
    %cst_53 = arith.constant dense<0.000000e+00> : vector<4x128xf32>
    %158 = tpu.matmul %153, %4, %cst_53 {dimension_numbers = #tpu.dot_dimension_numbers<[1], [0], [0], [1], [0, 0, 1, 1], [], []>, precision = #tpu.contract_precision<fp32>} : vector<4x32xf32>, vector<32x128xf32>, vector<4x128xf32> -> vector<4x128xf32>
    %159 = arith.addf %157, %158 : vector<4x128xf32>
    %160 = math.tanh %159 : vector<4x128xf32>
    %161 = vector.extract_strided_slice %160 {offsets = [0, 0], sizes = [4, 96], strides = [1, 1]} : vector<4x128xf32> to vector<4x96xf32>
    %cst_54 = arith.constant 5.000000e-01 : f32
    %162 = vector.broadcast %cst_54 : f32 to vector<4x96xf32>
    %163 = arith.mulf %162, %161 : vector<4x96xf32>
    %cst_55 = arith.constant 5.000000e-01 : f32
    %164 = vector.broadcast %cst_55 : f32 to vector<4x96xf32>
    %165 = arith.addf %163, %164 : vector<4x96xf32>
    %166 = vector.extract_strided_slice %165 {offsets = [0, 0], sizes = [4, 32], strides = [1, 1]} : vector<4x96xf32> to vector<4x32xf32>
    %167 = vector.extract_strided_slice %165 {offsets = [0, 32], sizes = [4, 32], strides = [1, 1]} : vector<4x96xf32> to vector<4x32xf32>
    %168 = vector.extract_strided_slice %165 {offsets = [0, 64], sizes = [4, 32], strides = [1, 1]} : vector<4x96xf32> to vector<4x32xf32>
    %169 = vector.extract_strided_slice %160 {offsets = [0, 96], sizes = [4, 32], strides = [1, 1]} : vector<4x128xf32> to vector<4x32xf32>
    %170 = arith.mulf %167, %151 : vector<4x32xf32>
    %171 = arith.mulf %166, %169 : vector<4x32xf32>
    %172 = arith.addf %170, %171 : vector<4x32xf32>
    %173 = math.tanh %172 : vector<4x32xf32>
    %174 = arith.mulf %168, %173 : vector<4x32xf32>
    %c8_i32 = arith.constant 8 : i32
    %c0_56 = arith.constant 0 : index
    %c0_57 = arith.constant 0 : index
    %175 = vector.load %arg11[%c0_56, %c0_57] : memref<4x32xf32, #tpu.memory_space<vmem>>, vector<4x32xf32>
    tpu.vector_store %arg11[%c0_56, %c0_57], %174 {strides = array<i32>} : memref<4x32xf32, #tpu.memory_space<vmem>>, vector<4x32xf32>,
    %c0_58 = arith.constant 0 : index
    %c0_59 = arith.constant 0 : index
    %176 = vector.load %arg12[%c0_58, %c0_59] : memref<4x32xf32, #tpu.memory_space<vmem>>, vector<4x32xf32>
    tpu.vector_store %arg12[%c0_58, %c0_59], %172 {strides = array<i32>} : memref<4x32xf32, #tpu.memory_space<vmem>>, vector<4x32xf32>,
    %c0_i32_60 = arith.constant 0 : i32
    %177 = arith.cmpi eq, %arg0, %c0_i32_60 : i32
    %178 = arith.extui %177 : i1 to i32
    %c0_i32_61 = arith.constant 0 : i32
    %179 = arith.cmpi ne, %178, %c0_i32_61 : i32
    scf.if %179 {
      %cst_62 = arith.constant 0.000000e+00 : f32
      %180 = vector.broadcast %cst_62 : f32 to vector<4x32xf32>
      %181 = arith.maximumf %174, %180 : vector<4x32xf32>
      %c0_63 = arith.constant 0 : index
      %c0_64 = arith.constant 0 : index
      %182 = vector.load %arg5[%c0_63, %c0_64] : memref<32x32xf32, #tpu.memory_space<vmem>>, vector<32x32xf32>
      %cst_65 = arith.constant dense<0.000000e+00> : vector<4x32xf32>
      %183 = tpu.matmul %181, %182, %cst_65 {dimension_numbers = #tpu.dot_dimension_numbers<[1], [0], [0], [1], [0, 0, 1, 1], [], []>, precision = #tpu.contract_precision<fp32>} : vector<4x32xf32>, vector<32x32xf32>, vector<4x32xf32> -> vector<4x32xf32>
      %c0_66 = arith.constant 0 : index
      %c0_67 = arith.constant 0 : index
      %184 = vector.load %arg6[%c0_66, %c0_67] : memref<1x32xf32, #tpu.memory_space<vmem>>, vector<1x32xf32>
      %185 = vector.broadcast %184 : vector<1x32xf32> to vector<4x32xf32>
      %186 = arith.addf %183, %185 : vector<4x32xf32>
      %c0_68 = arith.constant 0 : index
      %c0_69 = arith.constant 0 : index
      %187 = vector.load %arg8[%c0_68, %c0_69] : memref<1x32xf32, #tpu.memory_space<vmem>>, vector<1x32xf32>
      %cst_70 = arith.constant dense<0.000000e+00> : vector<1x4xf32>
      %188 = tpu.matmul %187, %186, %cst_70 {dimension_numbers = #tpu.dot_dimension_numbers<[1], [1], [0], [0], [0, 0, 1, 0], [], []>, precision = #tpu.contract_precision<fp32>} : vector<1x32xf32>, vector<4x32xf32>, vector<1x4xf32> -> vector<1x4xf32>
      %c0_71 = arith.constant 0 : index
      %c0_72 = arith.constant 0 : index
      %189 = vector.load %arg7[%c0_71, %c0_72] : memref<1x1xf32, #tpu.memory_space<vmem>>, vector<1x1xf32>
      %c0_73 = arith.constant 0 : index
      %c0_74 = arith.constant 0 : index
      %190 = vector.load %arg2[%c0_73, %c0_74] : memref<1x4xf32, #tpu.memory_space<vmem>>, vector<1x4xf32>
      %191 = vector.broadcast %189 : vector<1x1xf32> to vector<1x4xf32>
      %192 = arith.mulf %191, %190 : vector<1x4xf32>
      %193 = arith.addf %192, %188 : vector<1x4xf32>
      %c0_75 = arith.constant 0 : index
      %c0_76 = arith.constant 0 : index
      %194 = vector.load %arg9[%c0_75, %c0_76] : memref<1x1xf32, #tpu.memory_space<vmem>>, vector<1x1xf32>
      %195 = vector.broadcast %194 : vector<1x1xf32> to vector<1x4xf32>
      %196 = arith.addf %193, %195 : vector<1x4xf32>
      %cst_77 = arith.constant dense<0xFF800000> : vector<1xf32>
      %197 = vector.multi_reduction <maximumf>, %196, %cst_77 [1] : vector<1x4xf32> to vector<1xf32>
      %198 = vector.shape_cast %197 : vector<1xf32> to vector<1x1xf32>
      %cst_78 = arith.constant 1.000000e+00 : f32
      %199 = vector.broadcast %cst_78 : f32 to vector<1x1xf32>
      %200 = arith.maximumf %198, %199 : vector<1x1xf32>
      %cst_79 = arith.constant 1.000000e+00 : f32
      %201 = vector.broadcast %cst_79 : f32 to vector<1x1xf32>
      %202 = arith.subf %201, %200 : vector<1x1xf32>
      %203 = math.exp %202 : vector<1x1xf32>
      %204 = vector.broadcast %200 : vector<1x1xf32> to vector<1x4xf32>
      %205 = arith.subf %196, %204 : vector<1x4xf32>
      %206 = math.exp %205 : vector<1x4xf32>
      %cst_80 = arith.constant dense<0.000000e+00> : vector<1xf32>
      %207 = vector.multi_reduction <add>, %206, %cst_80 [1] : vector<1x4xf32> to vector<1xf32>
      %208 = vector.shape_cast %207 : vector<1xf32> to vector<1x1xf32>
      %209 = arith.addf %203, %208 : vector<1x1xf32>
      %cst_81 = arith.constant 1.000000e+00 : f32
      %210 = vector.broadcast %cst_81 : f32 to vector<1x1xf32>
      %211 = arith.divf %210, %209 : vector<1x1xf32>
      %212 = arith.mulf %203, %211 : vector<1x1xf32>
      %c0_82 = arith.constant 0 : index
      %c0_83 = arith.constant 0 : index
      %213 = vector.load %arg10[%c0_82, %c0_83] : memref<1x5xf32, #tpu.memory_space<vmem>>, vector<1x1xf32>
      tpu.vector_store %arg10[%c0_82, %c0_83], %212 {strides = array<i32>} : memref<1x5xf32, #tpu.memory_space<vmem>>, vector<1x1xf32>,
      %214 = vector.broadcast %211 : vector<1x1xf32> to vector<1x4xf32>
      %215 = arith.mulf %206, %214 : vector<1x4xf32>
      %c0_84 = arith.constant 0 : index
      %c1 = arith.constant 1 : index
      %216 = vector.load %arg10[%c0_84, %c1] : memref<1x5xf32, #tpu.memory_space<vmem>>, vector<1x4xf32>
      tpu.vector_store %arg10[%c0_84, %c1], %215 {strides = array<i32>} : memref<1x5xf32, #tpu.memory_space<vmem>>, vector<1x4xf32>,
    } else {
    }
    return
  }
  func.func @transform_0(%arg0: i32) -> (i32, i32, i32) {
    %c0_i32 = arith.constant 0 : i32
    %c0_i32_0 = arith.constant 0 : i32
    %c0_i32_1 = arith.constant 0 : i32
    return %arg0, %c0_i32, %c0_i32_0 : i32, i32, i32
  }
  func.func @transform_1(%arg0: i32) -> (i32, i32) {
    %c0_i32 = arith.constant 0 : i32
    %c0_i32_0 = arith.constant 0 : i32
    %c0_i32_1 = arith.constant 0 : i32
    return %c0_i32, %c0_i32_0 : i32, i32
  }
  func.func @transform_2(%arg0: i32) -> (i32, i32) {
    %c0_i32 = arith.constant 0 : i32
    %c0_i32_0 = arith.constant 0 : i32
    %c0_i32_1 = arith.constant 0 : i32
    return %c0_i32, %c0_i32_0 : i32, i32
  }
  func.func @transform_3(%arg0: i32) -> (i32, i32) {
    %c0_i32 = arith.constant 0 : i32
    %c0_i32_0 = arith.constant 0 : i32
    %c0_i32_1 = arith.constant 0 : i32
    return %c0_i32, %c0_i32_0 : i32, i32
  }
  func.func @transform_4(%arg0: i32) -> (i32, i32) {
    %c0_i32 = arith.constant 0 : i32
    %c0_i32_0 = arith.constant 0 : i32
    %c0_i32_1 = arith.constant 0 : i32
    return %c0_i32, %c0_i32_0 : i32, i32
  }
  func.func @transform_5(%arg0: i32) -> (i32, i32) {
    %c0_i32 = arith.constant 0 : i32
    %c0_i32_0 = arith.constant 0 : i32
    %c0_i32_1 = arith.constant 0 : i32
    return %c0_i32, %c0_i32_0 : i32, i32
  }
  func.func @transform_6(%arg0: i32) -> (i32, i32) {
    %c0_i32 = arith.constant 0 : i32
    %c0_i32_0 = arith.constant 0 : i32
    %c0_i32_1 = arith.constant 0 : i32
    return %c0_i32, %c0_i32_0 : i32, i32
  }
  func.func @transform_7(%arg0: i32) -> (i32, i32) {
    %c0_i32 = arith.constant 0 : i32
    %c0_i32_0 = arith.constant 0 : i32
    %c0_i32_1 = arith.constant 0 : i32
    return %c0_i32, %c0_i32_0 : i32, i32
  }
  func.func @transform_8(%arg0: i32) -> (i32, i32) {
    %c0_i32 = arith.constant 0 : i32
    %c0_i32_0 = arith.constant 0 : i32
    %c0_i32_1 = arith.constant 0 : i32
    return %c0_i32, %c0_i32_0 : i32, i32
  }
  func.func @transform_9(%arg0: i32) -> (i32, i32) {
    %c0_i32 = arith.constant 0 : i32
    %c0_i32_0 = arith.constant 0 : i32
    %c0_i32_1 = arith.constant 0 : i32
    return %c0_i32, %c0_i32_0 : i32, i32
  }
}

</mosaic_0001>

<llo_original>
// kernel: tpu_custom_call.1
$region0: #{tpu_custom_call.1}
  #allocation0 [shape = 'u32[]', space=smem, size = 0x4, offset = 0x4, fixed_abs, tag = 'smem constant byte address 0x4 - core index']
  #allocation1 [shape = 'u32[144,128]{1,0:T(1,128)}', space=vmem, size = 0x12000, scoped, tag = 'internal scratch']
  #allocation2 [shape = 'f32[4,32]{1,0:T(4,128)}', space=vmem, size = 0x800, scoped, tag = 'scratch operand']
  #allocation3 [shape = 'f32[4,32]{1,0:T(4,128)}', space=vmem, size = 0x800, scoped, tag = 'scratch operand']
  #allocation4 [shape = 'f32[1,1]{1,0:T(1,128)S(1)}', space=vmem, size = 0x200, scoped, tag = 'scoped memory for tpu_custom_call.1']
  #allocation5 [shape = 'f32[1,1]{1,0:T(1,128)S(1)}', space=vmem, size = 0x200, scoped, tag = 'scoped memory for tpu_custom_call.1']
  %s0 = inlined_call_operand.hbm [shape: f32[8,4,8], index: 0, kind: input, shape index: {}]
  %s1 = inlined_call_operand.vmem [shape: f32[1,4], index: 1, kind: input, shape index: {}]
  %s2 = inlined_call_operand.vmem [shape: f32[8,128], index: 2, kind: input, shape index: {}]
  %s3 = inlined_call_operand.hbm [shape: f32[32,128], index: 3, kind: input, shape index: {}]
  %s4 = inlined_call_operand.hbm [shape: f32[32,32], index: 4, kind: input, shape index: {}]
  %s5 = inlined_call_operand.vmem [shape: f32[1,32], index: 5, kind: input, shape index: {}]
  %s6 = inlined_call_operand.<no memory space> [shape: f32[1,1], index: 6, kind: input, shape index: {}]
  %s7 = inlined_call_operand.vmem [shape: f32[1,32], index: 7, kind: input, shape index: {}]
  %s8 = inlined_call_operand.<no memory space> [shape: f32[1,1], index: 8, kind: input, shape index: {}]
  %s9 = inlined_call_operand.hbm [shape: f32[1,5], index: 9, kind: output, shape index: {}]
  %s10 = sld [smem:[#allocation0]]
  $region66: #{tpu_custom_call.1} parent=0
    _
  %s12 = ssub.s32 1, %s10
  %s13 = scalar_select 0, %s12, %s10
  %v14 = vstv %s6
  %15 = vst [vmem:[#allocation4] sm:$0x1] %v14
  %v16 = vstv %s8
  %17 = vst [vmem:[#allocation5] sm:$0x1] %v16
  $region1: #{tpu_custom_call.1} parent=0
    #allocation6 [shape = 'u8[16384]{0}', space=vmem, size = 0x4000, scoped, tag = 'input window, operand 0, single buffered']
    #allocation7 [shape = 's32[1]{0}', space=sflag, size = 0x4, scoped, tag = 'scoped memory for tpu_custom_call.1']
    #allocation8 [shape = 's32[1]{0}', space=sflag, size = 0x4, scoped, tag = 'scoped memory for tpu_custom_call.1']
    #allocation9 [shape = 'u8[16384]{0}', space=vmem, size = 0x4000, scoped, tag = 'input window, operand 3, single buffered']
    #allocation10 [shape = 's32[1]{0}', space=sflag, size = 0x4, scoped, tag = 'scoped memory for tpu_custom_call.1']
    #allocation11 [shape = 'u8[16384]{0}', space=vmem, size = 0x4000, scoped, tag = 'input window, operand 4, single buffered']
    #allocation12 [shape = 'u8[512]{0}', space=vmem, size = 0x400, scoped, tag = 'output window, operand 0, single buffered']
    %18 = vsyncpa [#allocation7], 0
    %19 = vsyncpa [#allocation10], 0
    %20 = vsyncpa [#allocation8], 0
    // Predicated region
    $region2: #{tpu_custom_call.1} parent=1 // pred_check
      _
    $region3: #{tpu_custom_call.1} parent=1 // pred_check_branch
      %22 = sbr.rel (0) target = $region5
    $region4: #{tpu_custom_call.1} parent=1 // pred_region
      %s24 = ssub.s32 512, 512
      %25 = vsyncadd [#allocation7], %s24
      %s26 = sshll.u32 [#allocation6], 4
      %s27 = int_to_ptr.vmem [resolvable:$true] %s26
      %32 = dma.hbm_to_vmem [thread:$0]  %s0, 512, %s27, [#allocation7], 64, 64, 4
    $region5: #{tpu_custom_call.1} parent=1 // pred_fallthru
      _
    // Predicated region
    $region6: #{tpu_custom_call.1} parent=1 // pred_check
      _
    $region7: #{tpu_custom_call.1} parent=1 // pred_check_branch
      %34 = sbr.rel (0) target = $region9
    $region8: #{tpu_custom_call.1} parent=1 // pred_region
      _
    $region9: #{tpu_custom_call.1} parent=1 // pred_fallthru
      _
    // Predicated region
    $region10: #{tpu_custom_call.1} parent=1 // pred_check
      _
    $region11: #{tpu_custom_call.1} parent=1 // pred_check_branch
      %36 = sbr.rel (0) target = $region13
    $region12: #{tpu_custom_call.1} parent=1 // pred_region
      _
    $region13: #{tpu_custom_call.1} parent=1 // pred_fallthru
      _
    // Predicated region
    $region14: #{tpu_custom_call.1} parent=1 // pred_check
      _
    $region15: #{tpu_custom_call.1} parent=1 // pred_check_branch
      %38 = sbr.rel (0) target = $region17
    $region16: #{tpu_custom_call.1} parent=1 // pred_region
      %s40 = ssub.s32 512, 512
      %41 = vsyncadd [#allocation10], %s40
      %s42 = sshll.u32 [#allocation9], 4
      %s43 = int_to_ptr.vmem [resolvable:$true] %s42
      %48 = dma.hbm_to_vmem [thread:$0]  %s3, 512, %s43, [#allocation10], 128, 128, 8
    $region17: #{tpu_custom_call.1} parent=1 // pred_fallthru
      _
    // Predicated region
    $region18: #{tpu_custom_call.1} parent=1 // pred_check
      _
    $region19: #{tpu_custom_call.1} parent=1 // pred_check_branch
      %50 = sbr.rel (0) target = $region21
    $region20: #{tpu_custom_call.1} parent=1 // pred_region
      %s52 = ssub.s32 512, 512
      %53 = vsyncadd [#allocation10], %s52
      %s54 = sshll.u32 [#allocation11], 4
      %s55 = int_to_ptr.vmem [resolvable:$true] %s54
      %60 = dma.hbm_to_vmem [thread:$0]  %s4, 512, %s55, [#allocation10], 128, 128, 8
    $region21: #{tpu_custom_call.1} parent=1 // pred_fallthru
      _
    // Predicated region
    $region22: #{tpu_custom_call.1} parent=1 // pred_check
      _
    $region23: #{tpu_custom_call.1} parent=1 // pred_check_branch
      %62 = sbr.rel (0) target = $region25
    $region24: #{tpu_custom_call.1} parent=1 // pred_region
      _
    $region25: #{tpu_custom_call.1} parent=1 // pred_fallthru
      _
    // Predicated region
    $region26: #{tpu_custom_call.1} parent=1 // pred_check
      _
    $region27: #{tpu_custom_call.1} parent=1 // pred_check_branch
      %64 = sbr.rel (0) target = $region29
    $region28: #{tpu_custom_call.1} parent=1 // pred_region
      _
    $region29: #{tpu_custom_call.1} parent=1 // pred_fallthru
      _
    // Predicated region
    $region30: #{tpu_custom_call.1} parent=1 // pred_check
      _
    $region31: #{tpu_custom_call.1} parent=1 // pred_check_branch
      %66 = sbr.rel (0) target = $region33
    $region32: #{tpu_custom_call.1} parent=1 // pred_region
      _
    $region33: #{tpu_custom_call.1} parent=1 // pred_fallthru
      _
    // Predicated region
    $region34: #{tpu_custom_call.1} parent=1 // pred_check
      _
    $region35: #{tpu_custom_call.1} parent=1 // pred_check_branch
      %68 = sbr.rel (0) target = $region37
    $region36: #{tpu_custom_call.1} parent=1 // pred_region
      _
    $region37: #{tpu_custom_call.1} parent=1 // pred_fallthru
      _
    // Predicated region
    $region38: #{tpu_custom_call.1} parent=1 // pred_check
      _
    $region39: #{tpu_custom_call.1} parent=1 // pred_check_branch
      %70 = sbr.rel (0) target = $region41
    $region40: #{tpu_custom_call.1} parent=1 // pred_region
      %71 = dma.done [#allocation7], 512
    $region41: #{tpu_custom_call.1} parent=1 // pred_fallthru
      _
    // Predicated region
    $region42: #{tpu_custom_call.1} parent=1 // pred_check
      _
    $region43: #{tpu_custom_call.1} parent=1 // pred_check_branch
      %73 = sbr.rel (0) target = $region45
    $region44: #{tpu_custom_call.1} parent=1 // pred_region
      %74 = dma.done [#allocation10], 512
    $region45: #{tpu_custom_call.1} parent=1 // pred_fallthru
      _
    // Predicated region
    $region46: #{tpu_custom_call.1} parent=1 // pred_check
      _
    $region47: #{tpu_custom_call.1} parent=1 // pred_check_branch
      %76 = sbr.rel (0) target = $region49
    $region48: #{tpu_custom_call.1} parent=1 // pred_region
      %77 = dma.done [#allocation10], 512
    $region49: #{tpu_custom_call.1} parent=1 // pred_fallthru
      _
    %p78 = scmp.eq.s32.totalorder 0, 0
    // Predicated region
    $region50: #{tpu_custom_call.1} parent=1 // pred_check
      %p79 = pneg %p78
    $region51: #{tpu_custom_call.1} parent=1 // pred_check_branch
      %81 = sbr.rel (%p79) target = $region53
    $region52: #{tpu_custom_call.1} parent=1 // pred_region
      %vm82 = vcmask 257024
      %83 = vst.msk [vmem:[#allocation2] sm:$0xf] %vm82, 0.0
      %84 = vst.msk [vmem:[#allocation3] sm:$0xf] %vm82, 0.0
    $region53: #{tpu_custom_call.1} parent=1 // pred_fallthru
      _
    %v85 = vld [vmem:[%s2] sm:$0xff]
    %v86 = vld [vmem:[#allocation9] sm:$0xff]
    %v87 = vld [vmem:[#allocation9 + $0x8] sm:$0xff]
    %v88 = vld [vmem:[#allocation9 + $0x10] sm:$0xff]
    %v89 = vld [vmem:[#allocation9 + $0x18] sm:$0xff]
    %v90 = vld [vmem:[#allocation2] sm:$0xf]
    %v91 = vld [vmem:[#allocation3] sm:$0xf]
    %v92 = vld [vmem:[#allocation6] sm:$0xf]
    %vm93 = vcmask 261120
    %v95 = vsel %vm93, %v90, 0
    %97 = vmatprep.subr.mxu0 0.0
    %v98 = vand.u32 %v86, 4294901760
    %99 = vmatpush1.msra.mxu0 %v98
    %100 = vmatprep.subr.mxu0 0.0
    %v101 = vand.u32 %v87, 4294901760
    %102 = vmatpush1.msra.mxu0 %v101
    %103 = vmatprep.subr.mxu0 0.0
    %v104 = vand.u32 %v88, 4294901760
    %105 = vmatpush1.msra.mxu0 %v104
    %106 = vmatprep.subr.mxu0 0.0
    %v107 = vand.u32 %v89, 4294901760
    %108 = vmatpush1.msra.mxu0 %v107
    %109 = vmatprep.subr.mxu0 0.0
    %110 = vmatpush1.msra.mxu0 0.0
    %111 = vmatprep.subr.mxu0 0.0
    %112 = vmatpush1.msra.mxu0 0.0
    %113 = vmatprep.subr.mxu0 0.0
    %114 = vmatpush1.msra.mxu0 0.0
    %115 = vmatprep.subr.mxu0 0.0
    %116 = vmatpush1.msra.mxu0 0.0
    %117 = vmatprep.subr.mxu0 0.0
    %118 = vmatpush1.msra.mxu0 0.0
    %119 = vmatprep.subr.mxu0 0.0
    %120 = vmatpush1.msra.mxu0 0.0
    %121 = vmatprep.subr.mxu0 0.0
    %122 = vmatpush1.msra.mxu0 0.0
    %123 = vmatprep.subr.mxu0 0.0
    %124 = vmatpush1.msra.mxu0 0.0
    %125 = vmatprep.subr.mxu0 0.0
    %126 = vmatpush1.msra.mxu0 0.0
    %127 = vmatprep.subr.mxu0 0.0
    %128 = vmatpush1.msra.mxu0 0.0
    %129 = vmatprep.subr.mxu0 0.0
    %130 = vmatpush1.msra.mxu0 0.0
    %131 = vmatprep.subr.mxu0 0.0
    %132 = vmatpush1.msra.mxu0 0.0
    %133 = vmatprep.subr.mxu0 0.0
    %134 = vmatpush1.msra.mxu0 0.0
    %135 = vmatprep.subr.mxu0 0.0
    %136 = vmatpush1.msra.mxu0 0.0
    %137 = vmatprep.subr.mxu0 0.0
    %138 = vmatpush1.msra.mxu0 0.0
    %139 = vmatprep.subr.mxu0 0.0
    %140 = vmatpush1.msra.mxu0 0.0
    %141 = vmatprep.subr.mxu0 0.0
    %142 = vmatpush1.msra.mxu0 0.0
    %143 = vmatprep.subr.mxu0 0.0
    %144 = vmatpush1.msra.mxu0 0.0
    %145 = vmatprep.subr.mxu0 0.0
    %146 = vmatpush1.msra.mxu0 0.0
    %147 = vmatprep.subr.mxu0 0.0
    %148 = vmatpush1.msra.mxu0 0.0
    %149 = vmatprep.subr.mxu0 0.0
    %150 = vmatpush1.msra.mxu0 0.0
    %151 = vmatprep.subr.mxu0 0.0
    %152 = vmatpush1.msra.mxu0 0.0
    %153 = vmatprep.subr.mxu0 0.0
    %154 = vmatpush1.msra.mxu0 0.0
    %155 = vmatprep.subr.mxu0 0.0
    %156 = vmatpush1.msra.mxu0 0.0
    %157 = vmatprep.subr.mxu0 0.0
    %158 = vmatpush1.msra.mxu0 0.0
    %159 = vmatprep.subr.mxu0 0.0
    %160 = vmatpush1.msra.mxu0 0.0
    %161 = vmatprep.subr.mxu0 0.0
    %162 = vmatpush1.msra.mxu0 0.0
    %163 = vmatprep.subr.mxu0 0.0
    %164 = vmatpush1.msra.mxu0 0.0
    %165 = vmatprep.mubr.f32.mxu0 0.0
    %v166 = vand.u32 %v95, 4294901760
    %v167 = vsub.f32 %v95, %v166
    %v168 = vand.u32 %v167, 4294901760
    %v169 = vsub.f32 %v167, %v168
    %v170 = vand.u32 %v169, 4294901760
    %171 = vmatmul.mubr.f32.gmra.mrb[0].mxu0 %v170
    %v172 = vpop.f32.mrb[0].mxu0
    %v173 = vadd.f32 0.0, %v172
    %v174 = vpop.f32.mrb[0].mxu0
    %175 = vdwg.mxu0
    %176 = vmatprep.subr.mxu0 0.0
    %v177 = vand.u32 %v86, 4294901760
    %v178 = vsub.f32 %v86, %v177
    %v179 = vand.u32 %v178, 4294901760
    %v180 = vsub.f32 %v178, %v179
    %v181 = vand.u32 %v180, 4294901760
    %182 = vmatpush1.msra.mxu0 %v181
    %183 = vmatprep.subr.mxu0 0.0
    %v184 = vand.u32 %v87, 4294901760
    %v185 = vsub.f32 %v87, %v184
    %v186 = vand.u32 %v185, 4294901760
    %v187 = vsub.f32 %v185, %v186
    %v188 = vand.u32 %v187, 4294901760
    %189 = vmatpush1.msra.mxu0 %v188
    %190 = vmatprep.subr.mxu0 0.0
    %v191 = vand.u32 %v88, 4294901760
    %v192 = vsub.f32 %v88, %v191
    %v193 = vand.u32 %v192, 4294901760
    %v194 = vsub.f32 %v192, %v193
    %v195 = vand.u32 %v194, 4294901760
    %196 = vmatpush1.msra.mxu0 %v195
    %197 = vmatprep.subr.mxu0 0.0
    %v198 = vand.u32 %v89, 4294901760
    %v199 = vsub.f32 %v89, %v198
    %v200 = vand.u32 %v199, 4294901760
    %v201 = vsub.f32 %v199, %v200
    %v202 = vand.u32 %v201, 4294901760
    %203 = vmatpush1.msra.mxu0 %v202
    %204 = vmatprep.subr.mxu0 0.0
    %205 = vmatpush1.msra.mxu0 0.0
    %206 = vmatprep.subr.mxu0 0.0
    %207 = vmatpush1.msra.mxu0 0.0
    %208 = vmatprep.subr.mxu0 0.0
    %209 = vmatpush1.msra.mxu0 0.0
    %210 = vmatprep.subr.mxu0 0.0
    %211 = vmatpush1.msra.mxu0 0.0
    %212 = vmatprep.subr.mxu0 0.0
    %213 = vmatpush1.msra.mxu0 0.0
    %214 = vmatprep.subr.mxu0 0.0
    %215 = vmatpush1.msra.mxu0 0.0
    %216 = vmatprep.subr.mxu0 0.0
    %217 = vmatpush1.msra.mxu0 0.0
    %218 = vmatprep.subr.mxu0 0.0
    %219 = vmatpush1.msra.mxu0 0.0
    %220 = vmatprep.subr.mxu0 0.0
    %221 = vmatpush1.msra.mxu0 0.0
    %222 = vmatprep.subr.mxu0 0.0
    %223 = vmatpush1.msra.mxu0 0.0
    %224 = vmatprep.subr.mxu0 0.0
    %225 = vmatpush1.msra.mxu0 0.0
    %226 = vmatprep.subr.mxu0 0.0
    %227 = vmatpush1.msra.mxu0 0.0
    %228 = vmatprep.subr.mxu0 0.0
    %229 = vmatpush1.msra.mxu0 0.0
    %230 = vmatprep.subr.mxu0 0.0
    %231 = vmatpush1.msra.mxu0 0.0
    %232 = vmatprep.subr.mxu0 0.0
    %233 = vmatpush1.msra.mxu0 0.0
    %234 = vmatprep.subr.mxu0 0.0
    %235 = vmatpush1.msra.mxu0 0.0
    %236 = vmatprep.subr.mxu0 0.0
    %237 = vmatpush1.msra.mxu0 0.0
    %238 = vmatprep.subr.mxu0 0.0
    %239 = vmatpush1.msra.mxu0 0.0
    %240 = vmatprep.subr.mxu0 0.0
    %241 = vmatpush1.msra.mxu0 0.0
    %242 = vmatprep.subr.mxu0 0.0
    %243 = vmatpush1.msra.mxu0 0.0
    %244 = vmatprep.subr.mxu0 0.0
    %245 = vmatpush1.msra.mxu0 0.0
    %246 = vmatprep.subr.mxu0 0.0
    %247 = vmatpush1.msra.mxu0 0.0
    %248 = vmatprep.subr.mxu0 0.0
    %249 = vmatpush1.msra.mxu0 0.0
    %250 = vmatprep.subr.mxu0 0.0
    %251 = vmatpush1.msra.mxu0 0.0
    %252 = vmatprep.subr.mxu0 0.0
    %253 = vmatpush1.msra.mxu0 0.0
    %254 = vmatprep.subr.mxu0 0.0
    %255 = vmatpush1.msra.mxu0 0.0
    %256 = vmatprep.subr.mxu0 0.0
    %257 = vmatpush1.msra.mxu0 0.0
    %258 = vmatprep.subr.mxu0 0.0
    %259 = vmatpush1.msra.mxu0 0.0
    %260 = vmatprep.mubr.f32.mxu0 0.0
    %v261 = vand.u32 %v95, 4294901760
    %262 = vmatmul.mubr.f32.gmra.mrb[0].mxu0 %v261
    %v263 = vpop.f32.mrb[0].mxu0
    %v264 = vadd.f32 %v173, %v263
    %v265 = vpop.f32.mrb[0].mxu0
    %266 = vdwg.mxu0
    %267 = vmatprep.subr.mxu0 0.0
    %v268 = vand.u32 %v86, 4294901760
    %v269 = vsub.f32 %v86, %v268
    %270 = vmatpush1.msra.mxu0 %v269
    %271 = vmatprep.subr.mxu0 0.0
    %v272 = vand.u32 %v87, 4294901760
    %v273 = vsub.f32 %v87, %v272
    %274 = vmatpush1.msra.mxu0 %v273
    %275 = vmatprep.subr.mxu0 0.0
    %v276 = vand.u32 %v88, 4294901760
    %v277 = vsub.f32 %v88, %v276
    %278 = vmatpush1.msra.mxu0 %v277
    %279 = vmatprep.subr.mxu0 0.0
    %v280 = vand.u32 %v89, 4294901760
    %v281 = vsub.f32 %v89, %v280
    %282 = vmatpush1.msra.mxu0 %v281
    %283 = vmatprep.subr.mxu0 0.0
    %284 = vmatpush1.msra.mxu0 0.0
    %285 = vmatprep.subr.mxu0 0.0
    %286 = vmatpush1.msra.mxu0 0.0
    %287 = vmatprep.subr.mxu0 0.0
    %288 = vmatpush1.msra.mxu0 0.0
    %289 = vmatprep.subr.mxu0 0.0
    %290 = vmatpush1.msra.mxu0 0.0
    %291 = vmatprep.subr.mxu0 0.0
    %292 = vmatpush1.msra.mxu0 0.0
    %293 = vmatprep.subr.mxu0 0.0
    %294 = vmatpush1.msra.mxu0 0.0
    %295 = vmatprep.subr.mxu0 0.0
    %296 = vmatpush1.msra.mxu0 0.0
    %297 = vmatprep.subr.mxu0 0.0
    %298 = vmatpush1.msra.mxu0 0.0
    %299 = vmatprep.subr.mxu0 0.0
    %300 = vmatpush1.msra.mxu0 0.0
    %301 = vmatprep.subr.mxu0 0.0
    %302 = vmatpush1.msra.mxu0 0.0
    %303 = vmatprep.subr.mxu0 0.0
    %304 = vmatpush1.msra.mxu0 0.0
    %305 = vmatprep.subr.mxu0 0.0
    %306 = vmatpush1.msra.mxu0 0.0
    %307 = vmatprep.subr.mxu0 0.0
    %308 = vmatpush1.msra.mxu0 0.0
    %309 = vmatprep.subr.mxu0 0.0
    %310 = vmatpush1.msra.mxu0 0.0
    %311 = vmatprep.subr.mxu0 0.0
    %312 = vmatpush1.msra.mxu0 0.0
    %313 = vmatprep.subr.mxu0 0.0
    %314 = vmatpush1.msra.mxu0 0.0
    %315 = vmatprep.subr.mxu0 0.0
    %316 = vmatpush1.msra.mxu0 0.0
    %317 = vmatprep.subr.mxu0 0.0
    %318 = vmatpush1.msra.mxu0 0.0
    %319 = vmatprep.subr.mxu0 0.0
    %320 = vmatpush1.msra.mxu0 0.0
    %321 = vmatprep.subr.mxu0 0.0
    %322 = vmatpush1.msra.mxu0 0.0
    %323 = vmatprep.subr.mxu0 0.0
    %324 = vmatpush1.msra.mxu0 0.0
    %325 = vmatprep.subr.mxu0 0.0
    %326 = vmatpush1.msra.mxu0 0.0
    %327 = vmatprep.subr.mxu0 0.0
    %328 = vmatpush1.msra.mxu0 0.0
    %329 = vmatprep.subr.mxu0 0.0
    %330 = vmatpush1.msra.mxu0 0.0
    %331 = vmatprep.subr.mxu0 0.0
    %332 = vmatpush1.msra.mxu0 0.0
    %333 = vmatprep.subr.mxu0 0.0
    %334 = vmatpush1.msra.mxu0 0.0
    %335 = vmatprep.subr.mxu0 0.0
    %336 = vmatpush1.msra.mxu0 0.0
    %337 = vmatprep.subr.mxu0 0.0
    %338 = vmatpush1.msra.mxu0 0.0
    %339 = vmatprep.mubr.f32.mxu0 0.0
    %v340 = vand.u32 %v95, 4294901760
    %v341 = vsub.f32 %v95, %v340
    %342 = vmatmul.mubr.f32.gmra.mrb[0].mxu0 %v341
    %v343 = vpop.f32.mrb[0].mxu0
    %v344 = vadd.f32 %v264, %v343
    %v345 = vpop.f32.mrb[0].mxu0
    %346 = vdwg.mxu0
    %347 = vmatprep.subr.mxu0 0.0
    %v348 = vand.u32 %v86, 4294901760
    %349 = vmatpush1.msra.mxu0 %v348
    %350 = vmatprep.subr.mxu0 0.0
    %v351 = vand.u32 %v87, 4294901760
    %352 = vmatpush1.msra.mxu0 %v351
    %353 = vmatprep.subr.mxu0 0.0
    %v354 = vand.u32 %v88, 4294901760
    %355 = vmatpush1.msra.mxu0 %v354
    %356 = vmatprep.subr.mxu0 0.0
    %v357 = vand.u32 %v89, 4294901760
    %358 = vmatpush1.msra.mxu0 %v357
    %359 = vmatprep.subr.mxu0 0.0
    %360 = vmatpush1.msra.mxu0 0.0
    %361 = vmatprep.subr.mxu0 0.0
    %362 = vmatpush1.msra.mxu0 0.0
    %363 = vmatprep.subr.mxu0 0.0
    %364 = vmatpush1.msra.mxu0 0.0
    %365 = vmatprep.subr.mxu0 0.0
    %366 = vmatpush1.msra.mxu0 0.0
    %367 = vmatprep.subr.mxu0 0.0
    %368 = vmatpush1.msra.mxu0 0.0
    %369 = vmatprep.subr.mxu0 0.0
    %370 = vmatpush1.msra.mxu0 0.0
    %371 = vmatprep.subr.mxu0 0.0
    %372 = vmatpush1.msra.mxu0 0.0
    %373 = vmatprep.subr.mxu0 0.0
    %374 = vmatpush1.msra.mxu0 0.0
    %375 = vmatprep.subr.mxu0 0.0
    %376 = vmatpush1.msra.mxu0 0.0
    %377 = vmatprep.subr.mxu0 0.0
    %378 = vmatpush1.msra.mxu0 0.0
    %379 = vmatprep.subr.mxu0 0.0
    %380 = vmatpush1.msra.mxu0 0.0
    %381 = vmatprep.subr.mxu0 0.0
    %382 = vmatpush1.msra.mxu0 0.0
    %383 = vmatprep.subr.mxu0 0.0
    %384 = vmatpush1.msra.mxu0 0.0
    %385 = vmatprep.subr.mxu0 0.0
    %386 = vmatpush1.msra.mxu0 0.0
    %387 = vmatprep.subr.mxu0 0.0
    %388 = vmatpush1.msra.mxu0 0.0
    %389 = vmatprep.subr.mxu0 0.0
    %390 = vmatpush1.msra.mxu0 0.0
    %391 = vmatprep.subr.mxu0 0.0
    %392 = vmatpush1.msra.mxu0 0.0
    %393 = vmatprep.subr.mxu0 0.0
    %394 = vmatpush1.msra.mxu0 0.0
    %395 = vmatprep.subr.mxu0 0.0
    %396 = vmatpush1.msra.mxu0 0.0
    %397 = vmatprep.subr.mxu0 0.0
    %398 = vmatpush1.msra.mxu0 0.0
    %399 = vmatprep.subr.mxu0 0.0
    %400 = vmatpush1.msra.mxu0 0.0
    %401 = vmatprep.subr.mxu0 0.0
    %402 = vmatpush1.msra.mxu0 0.0
    %403 = vmatprep.subr.mxu0 0.0
    %404 = vmatpush1.msra.mxu0 0.0
    %405 = vmatprep.subr.mxu0 0.0
    %406 = vmatpush1.msra.mxu0 0.0
    %407 = vmatprep.subr.mxu0 0.0
    %408 = vmatpush1.msra.mxu0 0.0
    %409 = vmatprep.subr.mxu0 0.0
    %410 = vmatpush1.msra.mxu0 0.0
    %411 = vmatprep.subr.mxu0 0.0
    %412 = vmatpush1.msra.mxu0 0.0
    %413 = vmatprep.subr.mxu0 0.0
    %414 = vmatpush1.msra.mxu0 0.0
    %415 = vmatprep.mubr.f32.mxu0 0.0
    %v416 = vand.u32 %v95, 4294901760
    %v417 = vsub.f32 %v95, %v416
    %v418 = vand.u32 %v417, 4294901760
    %419 = vmatmul.mubr.f32.gmra.mrb[0].mxu0 %v418
    %v420 = vpop.f32.mrb[0].mxu0
    %v421 = vadd.f32 %v344, %v420
    %v422 = vpop.f32.mrb[0].mxu0
    %423 = vdwg.mxu0
    %424 = vmatprep.subr.mxu0 0.0
    %v425 = vand.u32 %v86, 4294901760
    %v426 = vsub.f32 %v86, %v425
    %v427 = vand.u32 %v426, 4294901760
    %428 = vmatpush1.msra.mxu0 %v427
    %429 = vmatprep.subr.mxu0 0.0
    %v430 = vand.u32 %v87, 4294901760
    %v431 = vsub.f32 %v87, %v430
    %v432 = vand.u32 %v431, 4294901760
    %433 = vmatpush1.msra.mxu0 %v432
    %434 = vmatprep.subr.mxu0 0.0
    %v435 = vand.u32 %v88, 4294901760
    %v436 = vsub.f32 %v88, %v435
    %v437 = vand.u32 %v436, 4294901760
    %438 = vmatpush1.msra.mxu0 %v437
    %439 = vmatprep.subr.mxu0 0.0
    %v440 = vand.u32 %v89, 4294901760
    %v441 = vsub.f32 %v89, %v440
    %v442 = vand.u32 %v441, 4294901760
    %443 = vmatpush1.msra.mxu0 %v442
    %444 = vmatprep.subr.mxu0 0.0
    %445 = vmatpush1.msra.mxu0 0.0
    %446 = vmatprep.subr.mxu0 0.0
    %447 = vmatpush1.msra.mxu0 0.0
    %448 = vmatprep.subr.mxu0 0.0
    %449 = vmatpush1.msra.mxu0 0.0
    %450 = vmatprep.subr.mxu0 0.0
    %451 = vmatpush1.msra.mxu0 0.0
    %452 = vmatprep.subr.mxu0 0.0
    %453 = vmatpush1.msra.mxu0 0.0
    %454 = vmatprep.subr.mxu0 0.0
    %455 = vmatpush1.msra.mxu0 0.0
    %456 = vmatprep.subr.mxu0 0.0
    %457 = vmatpush1.msra.mxu0 0.0
    %458 = vmatprep.subr.mxu0 0.0
    %459 = vmatpush1.msra.mxu0 0.0
    %460 = vmatprep.subr.mxu0 0.0
    %461 = vmatpush1.msra.mxu0 0.0
    %462 = vmatprep.subr.mxu0 0.0
    %463 = vmatpush1.msra.mxu0 0.0
    %464 = vmatprep.subr.mxu0 0.0
    %465 = vmatpush1.msra.mxu0 0.0
    %466 = vmatprep.subr.mxu0 0.0
    %467 = vmatpush1.msra.mxu0 0.0
    %468 = vmatprep.subr.mxu0 0.0
    %469 = vmatpush1.msra.mxu0 0.0
    %470 = vmatprep.subr.mxu0 0.0
    %471 = vmatpush1.msra.mxu0 0.0
    %472 = vmatprep.subr.mxu0 0.0
    %473 = vmatpush1.msra.mxu0 0.0
    %474 = vmatprep.subr.mxu0 0.0
    %475 = vmatpush1.msra.mxu0 0.0
    %476 = vmatprep.subr.mxu0 0.0
    %477 = vmatpush1.msra.mxu0 0.0
    %478 = vmatprep.subr.mxu0 0.0
    %479 = vmatpush1.msra.mxu0 0.0
    %480 = vmatprep.subr.mxu0 0.0
    %481 = vmatpush1.msra.mxu0 0.0
    %482 = vmatprep.subr.mxu0 0.0
    %483 = vmatpush1.msra.mxu0 0.0
    %484 = vmatprep.subr.mxu0 0.0
    %485 = vmatpush1.msra.mxu0 0.0
    %486 = vmatprep.subr.mxu0 0.0
    %487 = vmatpush1.msra.mxu0 0.0
    %488 = vmatprep.subr.mxu0 0.0
    %489 = vmatpush1.msra.mxu0 0.0
    %490 = vmatprep.subr.mxu0 0.0
    %491 = vmatpush1.msra.mxu0 0.0
    %492 = vmatprep.subr.mxu0 0.0
    %493 = vmatpush1.msra.mxu0 0.0
    %494 = vmatprep.subr.mxu0 0.0
    %495 = vmatpush1.msra.mxu0 0.0
    %496 = vmatprep.subr.mxu0 0.0
    %497 = vmatpush1.msra.mxu0 0.0
    %498 = vmatprep.subr.mxu0 0.0
    %499 = vmatpush1.msra.mxu0 0.0
    %500 = vmatprep.mubr.f32.mxu0 0.0
    %v501 = vand.u32 %v95, 4294901760
    %502 = vmatmul.mubr.f32.gmra.mrb[0].mxu0 %v501
    %v503 = vpop.f32.mrb[0].mxu0
    %v504 = vadd.f32 %v421, %v503
    %v505 = vpop.f32.mrb[0].mxu0
    %506 = vdwg.mxu0
    %507 = vmatprep.subr.mxu0 0.0
    %v508 = vand.u32 %v86, 4294901760
    %509 = vmatpush1.msra.mxu0 %v508
    %510 = vmatprep.subr.mxu0 0.0
    %v511 = vand.u32 %v87, 4294901760
    %512 = vmatpush1.msra.mxu0 %v511
    %513 = vmatprep.subr.mxu0 0.0
    %v514 = vand.u32 %v88, 4294901760
    %515 = vmatpush1.msra.mxu0 %v514
    %516 = vmatprep.subr.mxu0 0.0
    %v517 = vand.u32 %v89, 4294901760
    %518 = vmatpush1.msra.mxu0 %v517
    %519 = vmatprep.subr.mxu0 0.0
    %520 = vmatpush1.msra.mxu0 0.0
    %521 = vmatprep.subr.mxu0 0.0
    %522 = vmatpush1.msra.mxu0 0.0
    %523 = vmatprep.subr.mxu0 0.0
    %524 = vmatpush1.msra.mxu0 0.0
    %525 = vmatprep.subr.mxu0 0.0
    %526 = vmatpush1.msra.mxu0 0.0
    %527 = vmatprep.subr.mxu0 0.0
    %528 = vmatpush1.msra.mxu0 0.0
    %529 = vmatprep.subr.mxu0 0.0
    %530 = vmatpush1.msra.mxu0 0.0
    %531 = vmatprep.subr.mxu0 0.0
    %532 = vmatpush1.msra.mxu0 0.0
    %533 = vmatprep.subr.mxu0 0.0
    %534 = vmatpush1.msra.mxu0 0.0
    %535 = vmatprep.subr.mxu0 0.0
    %536 = vmatpush1.msra.mxu0 0.0
    %537 = vmatprep.subr.mxu0 0.0
    %538 = vmatpush1.msra.mxu0 0.0
    %539 = vmatprep.subr.mxu0 0.0
    %540 = vmatpush1.msra.mxu0 0.0
    %541 = vmatprep.subr.mxu0 0.0
    %542 = vmatpush1.msra.mxu0 0.0
    %543 = vmatprep.subr.mxu0 0.0
    %544 = vmatpush1.msra.mxu0 0.0
    %545 = vmatprep.subr.mxu0 0.0
    %546 = vmatpush1.msra.mxu0 0.0
    %547 = vmatprep.subr.mxu0 0.0
    %548 = vmatpush1.msra.mxu0 0.0
    %549 = vmatprep.subr.mxu0 0.0
    %550 = vmatpush1.msra.mxu0 0.0
    %551 = vmatprep.subr.mxu0 0.0
    %552 = vmatpush1.msra.mxu0 0.0
    %553 = vmatprep.subr.mxu0 0.0
    %554 = vmatpush1.msra.mxu0 0.0
    %555 = vmatprep.subr.mxu0 0.0
    %556 = vmatpush1.msra.mxu0 0.0
    %557 = vmatprep.subr.mxu0 0.0
    %558 = vmatpush1.msra.mxu0 0.0
    %559 = vmatprep.subr.mxu0 0.0
    %560 = vmatpush1.msra.mxu0 0.0
    %561 = vmatprep.subr.mxu0 0.0
    %562 = vmatpush1.msra.mxu0 0.0
    %563 = vmatprep.subr.mxu0 0.0
    %564 = vmatpush1.msra.mxu0 0.0
    %565 = vmatprep.subr.mxu0 0.0
    %566 = vmatpush1.msra.mxu0 0.0
    %567 = vmatprep.subr.mxu0 0.0
    %568 = vmatpush1.msra.mxu0 0.0
    %569 = vmatprep.subr.mxu0 0.0
    %570 = vmatpush1.msra.mxu0 0.0
    %571 = vmatprep.subr.mxu0 0.0
    %572 = vmatpush1.msra.mxu0 0.0
    %573 = vmatprep.subr.mxu0 0.0
    %574 = vmatpush1.msra.mxu0 0.0
    %575 = vmatprep.mubr.f32.mxu0 0.0
    %v576 = vand.u32 %v95, 4294901760
    %577 = vmatmul.mubr.f32.gmra.mrb[0].mxu0 %v576
    %v578 = vpop.f32.mrb[0].mxu0
    %v579 = vadd.f32 %v504, %v578
    %v580 = vpop.f32.mrb[0].mxu0
    %581 = vdwg.mxu0
    %vm582 = vcmask 64512
    %v584 = vsel %vm582, %v92, 0
    %586 = vmatprep.subr.mxu0 0.0
    %v587 = vand.u32 %v85, 4294901760
    %588 = vmatpush1.msra.mxu0 %v587
    %589 = vmatprep.subr.mxu0 0.0
    %590 = vmatpush1.msra.mxu0 0.0
    %591 = vmatprep.subr.mxu0 0.0
    %592 = vmatpush1.msra.mxu0 0.0
    %593 = vmatprep.subr.mxu0 0.0
    %594 = vmatpush1.msra.mxu0 0.0
    %595 = vmatprep.subr.mxu0 0.0
    %596 = vmatpush1.msra.mxu0 0.0
    %597 = vmatprep.subr.mxu0 0.0
    %598 = vmatpush1.msra.mxu0 0.0
    %599 = vmatprep.subr.mxu0 0.0
    %600 = vmatpush1.msra.mxu0 0.0
    %601 = vmatprep.subr.mxu0 0.0
    %602 = vmatpush1.msra.mxu0 0.0
    %603 = vmatprep.subr.mxu0 0.0
    %604 = vmatpush1.msra.mxu0 0.0
    %605 = vmatprep.subr.mxu0 0.0
    %606 = vmatpush1.msra.mxu0 0.0
    %607 = vmatprep.subr.mxu0 0.0
    %608 = vmatpush1.msra.mxu0 0.0
    %609 = vmatprep.subr.mxu0 0.0
    %610 = vmatpush1.msra.mxu0 0.0
    %611 = vmatprep.subr.mxu0 0.0
    %612 = vmatpush1.msra.mxu0 0.0
    %613 = vmatprep.subr.mxu0 0.0
    %614 = vmatpush1.msra.mxu0 0.0
    %615 = vmatprep.subr.mxu0 0.0
    %616 = vmatpush1.msra.mxu0 0.0
    %617 = vmatprep.subr.mxu0 0.0
    %618 = vmatpush1.msra.mxu0 0.0
    %619 = vmatprep.subr.mxu0 0.0
    %620 = vmatpush1.msra.mxu0 0.0
    %621 = vmatprep.subr.mxu0 0.0
    %622 = vmatpush1.msra.mxu0 0.0
    %623 = vmatprep.subr.mxu0 0.0
    %624 = vmatpush1.msra.mxu0 0.0
    %625 = vmatprep.subr.mxu0 0.0
    %626 = vmatpush1.msra.mxu0 0.0
    %627 = vmatprep.subr.mxu0 0.0
    %628 = vmatpush1.msra.mxu0 0.0
    %629 = vmatprep.subr.mxu0 0.0
    %630 = vmatpush1.msra.mxu0 0.0
    %631 = vmatprep.subr.mxu0 0.0
    %632 = vmatpush1.msra.mxu0 0.0
    %633 = vmatprep.subr.mxu0 0.0
    %634 = vmatpush1.msra.mxu0 0.0
    %635 = vmatprep.subr.mxu0 0.0
    %636 = vmatpush1.msra.mxu0 0.0
    %637 = vmatprep.subr.mxu0 0.0
    %638 = vmatpush1.msra.mxu0 0.0
    %639 = vmatprep.subr.mxu0 0.0
    %640 = vmatpush1.msra.mxu0 0.0
    %641 = vmatprep.subr.mxu0 0.0
    %642 = vmatpush1.msra.mxu0 0.0
    %643 = vmatprep.subr.mxu0 0.0
    %644 = vmatpush1.msra.mxu0 0.0
    %645 = vmatprep.subr.mxu0 0.0
    %646 = vmatpush1.msra.mxu0 0.0
    %647 = vmatprep.subr.mxu0 0.0
    %648 = vmatpush1.msra.mxu0 0.0
    %649 = vmatprep.subr.mxu0 0.0
    %650 = vmatpush1.msra.mxu0 0.0
    %651 = vmatprep.mubr.f32.mxu0 0.0
    %v652 = vand.u32 %v584, 4294901760
    %v653 = vsub.f32 %v584, %v652
    %v654 = vand.u32 %v653, 4294901760
    %v655 = vsub.f32 %v653, %v654
    %v656 = vand.u32 %v655, 4294901760
    %657 = vmatmul.mubr.f32.gmra.mrb[0].mxu0 %v656
    %v658 = vpop.f32.mrb[0].mxu0
    %v659 = vadd.f32 %v579, %v658
    %v660 = vpop.f32.mrb[0].mxu0
    %661 = vdwg.mxu0
    %662 = vmatprep.subr.mxu0 0.0
    %v663 = vand.u32 %v85, 4294901760
    %v664 = vsub.f32 %v85, %v663
    %v665 = vand.u32 %v664, 4294901760
    %v666 = vsub.f32 %v664, %v665
    %v667 = vand.u32 %v666, 4294901760
    %668 = vmatpush1.msra.mxu0 %v667
    %669 = vmatprep.subr.mxu0 0.0
    %670 = vmatpush1.msra.mxu0 0.0
    %671 = vmatprep.subr.mxu0 0.0
    %672 = vmatpush1.msra.mxu0 0.0
    %673 = vmatprep.subr.mxu0 0.0
    %674 = vmatpush1.msra.mxu0 0.0
    %675 = vmatprep.subr.mxu0 0.0
    %676 = vmatpush1.msra.mxu0 0.0
    %677 = vmatprep.subr.mxu0 0.0
    %678 = vmatpush1.msra.mxu0 0.0
    %679 = vmatprep.subr.mxu0 0.0
    %680 = vmatpush1.msra.mxu0 0.0
    %681 = vmatprep.subr.mxu0 0.0
    %682 = vmatpush1.msra.mxu0 0.0
    %683 = vmatprep.subr.mxu0 0.0
    %684 = vmatpush1.msra.mxu0 0.0
    %685 = vmatprep.subr.mxu0 0.0
    %686 = vmatpush1.msra.mxu0 0.0
    %687 = vmatprep.subr.mxu0 0.0
    %688 = vmatpush1.msra.mxu0 0.0
    %689 = vmatprep.subr.mxu0 0.0
    %690 = vmatpush1.msra.mxu0 0.0
    %691 = vmatprep.subr.mxu0 0.0
    %692 = vmatpush1.msra.mxu0 0.0
    %693 = vmatprep.subr.mxu0 0.0
    %694 = vmatpush1.msra.mxu0 0.0
    %695 = vmatprep.subr.mxu0 0.0
    %696 = vmatpush1.msra.mxu0 0.0
    %697 = vmatprep.subr.mxu0 0.0
    %698 = vmatpush1.msra.mxu0 0.0
    %699 = vmatprep.subr.mxu0 0.0
    %700 = vmatpush1.msra.mxu0 0.0
    %701 = vmatprep.subr.mxu0 0.0
    %702 = vmatpush1.msra.mxu0 0.0
    %703 = vmatprep.subr.mxu0 0.0
    %704 = vmatpush1.msra.mxu0 0.0
    %705 = vmatprep.subr.mxu0 0.0
    %706 = vmatpush1.msra.mxu0 0.0
    %707 = vmatprep.subr.mxu0 0.0
    %708 = vmatpush1.msra.mxu0 0.0
    %709 = vmatprep.subr.mxu0 0.0
    %710 = vmatpush1.msra.mxu0 0.0
    %711 = vmatprep.subr.mxu0 0.0
    %712 = vmatpush1.msra.mxu0 0.0
    %713 = vmatprep.subr.mxu0 0.0
    %714 = vmatpush1.msra.mxu0 0.0
    %715 = vmatprep.subr.mxu0 0.0
    %716 = vmatpush1.msra.mxu0 0.0
    %717 = vmatprep.subr.mxu0 0.0
    %718 = vmatpush1.msra.mxu0 0.0
    %719 = vmatprep.subr.mxu0 0.0
    %720 = vmatpush1.msra.mxu0 0.0
    %721 = vmatprep.subr.mxu0 0.0
    %722 = vmatpush1.msra.mxu0 0.0
    %723 = vmatprep.subr.mxu0 0.0
    %724 = vmatpush1.msra.mxu0 0.0
    %725 = vmatprep.subr.mxu0 0.0
    %726 = vmatpush1.msra.mxu0 0.0
    %727 = vmatprep.subr.mxu0 0.0
    %728 = vmatpush1.msra.mxu0 0.0
    %729 = vmatprep.subr.mxu0 0.0
    %730 = vmatpush1.msra.mxu0 0.0
    %731 = vmatprep.mubr.f32.mxu0 0.0
    %v732 = vand.u32 %v584, 4294901760
    %733 = vmatmul.mubr.f32.gmra.mrb[0].mxu0 %v732
    %v734 = vpop.f32.mrb[0].mxu0
    %v735 = vadd.f32 %v659, %v734
    %v736 = vpop.f32.mrb[0].mxu0
    %737 = vdwg.mxu0
    %738 = vmatprep.subr.mxu0 0.0
    %v739 = vand.u32 %v85, 4294901760
    %v740 = vsub.f32 %v85, %v739
    %741 = vmatpush1.msra.mxu0 %v740
    %742 = vmatprep.subr.mxu0 0.0
    %743 = vmatpush1.msra.mxu0 0.0
    %744 = vmatprep.subr.mxu0 0.0
    %745 = vmatpush1.msra.mxu0 0.0
    %746 = vmatprep.subr.mxu0 0.0
    %747 = vmatpush1.msra.mxu0 0.0
    %748 = vmatprep.subr.mxu0 0.0
    %749 = vmatpush1.msra.mxu0 0.0
    %750 = vmatprep.subr.mxu0 0.0
    %751 = vmatpush1.msra.mxu0 0.0
    %752 = vmatprep.subr.mxu0 0.0
    %753 = vmatpush1.msra.mxu0 0.0
    %754 = vmatprep.subr.mxu0 0.0
    %755 = vmatpush1.msra.mxu0 0.0
    %756 = vmatprep.subr.mxu0 0.0
    %757 = vmatpush1.msra.mxu0 0.0
    %758 = vmatprep.subr.mxu0 0.0
    %759 = vmatpush1.msra.mxu0 0.0
    %760 = vmatprep.subr.mxu0 0.0
    %761 = vmatpush1.msra.mxu0 0.0
    %762 = vmatprep.subr.mxu0 0.0
    %763 = vmatpush1.msra.mxu0 0.0
    %764 = vmatprep.subr.mxu0 0.0
    %765 = vmatpush1.msra.mxu0 0.0
    %766 = vmatprep.subr.mxu0 0.0
    %767 = vmatpush1.msra.mxu0 0.0
    %768 = vmatprep.subr.mxu0 0.0
    %769 = vmatpush1.msra.mxu0 0.0
    %770 = vmatprep.subr.mxu0 0.0
    %771 = vmatpush1.msra.mxu0 0.0
    %772 = vmatprep.subr.mxu0 0.0
    %773 = vmatpush1.msra.mxu0 0.0
    %774 = vmatprep.subr.mxu0 0.0
    %775 = vmatpush1.msra.mxu0 0.0
    %776 = vmatprep.subr.mxu0 0.0
    %777 = vmatpush1.msra.mxu0 0.0
    %778 = vmatprep.subr.mxu0 0.0
    %779 = vmatpush1.msra.mxu0 0.0
    %780 = vmatprep.subr.mxu0 0.0
    %781 = vmatpush1.msra.mxu0 0.0
    %782 = vmatprep.subr.mxu0 0.0
    %783 = vmatpush1.msra.mxu0 0.0
    %784 = vmatprep.subr.mxu0 0.0
    %785 = vmatpush1.msra.mxu0 0.0
    %786 = vmatprep.subr.mxu0 0.0
    %787 = vmatpush1.msra.mxu0 0.0
    %788 = vmatprep.subr.mxu0 0.0
    %789 = vmatpush1.msra.mxu0 0.0
    %790 = vmatprep.subr.mxu0 0.0
    %791 = vmatpush1.msra.mxu0 0.0
    %792 = vmatprep.subr.mxu0 0.0
    %793 = vmatpush1.msra.mxu0 0.0
    %794 = vmatprep.subr.mxu0 0.0
    %795 = vmatpush1.msra.mxu0 0.0
    %796 = vmatprep.subr.mxu0 0.0
    %797 = vmatpush1.msra.mxu0 0.0
    %798 = vmatprep.subr.mxu0 0.0
    %799 = vmatpush1.msra.mxu0 0.0
    %800 = vmatprep.subr.mxu0 0.0
    %801 = vmatpush1.msra.mxu0 0.0
    %802 = vmatprep.subr.mxu0 0.0
    %803 = vmatpush1.msra.mxu0 0.0
    %804 = vmatprep.mubr.f32.mxu0 0.0
    %v805 = vand.u32 %v584, 4294901760
    %v806 = vsub.f32 %v584, %v805
    %807 = vmatmul.mubr.f32.gmra.mrb[0].mxu0 %v806
    %v808 = vpop.f32.mrb[0].mxu0
    %v809 = vadd.f32 %v735, %v808
    %v810 = vpop.f32.mrb[0].mxu0
    %811 = vdwg.mxu0
    %812 = vmatprep.subr.mxu0 0.0
    %v813 = vand.u32 %v85, 4294901760
    %814 = vmatpush1.msra.mxu0 %v813
    %815 = vmatprep.subr.mxu0 0.0
    %816 = vmatpush1.msra.mxu0 0.0
    %817 = vmatprep.subr.mxu0 0.0
    %818 = vmatpush1.msra.mxu0 0.0
    %819 = vmatprep.subr.mxu0 0.0
    %820 = vmatpush1.msra.mxu0 0.0
    %821 = vmatprep.subr.mxu0 0.0
    %822 = vmatpush1.msra.mxu0 0.0
    %823 = vmatprep.subr.mxu0 0.0
    %824 = vmatpush1.msra.mxu0 0.0
    %825 = vmatprep.subr.mxu0 0.0
    %826 = vmatpush1.msra.mxu0 0.0
    %827 = vmatprep.subr.mxu0 0.0
    %828 = vmatpush1.msra.mxu0 0.0
    %829 = vmatprep.subr.mxu0 0.0
    %830 = vmatpush1.msra.mxu0 0.0
    %831 = vmatprep.subr.mxu0 0.0
    %832 = vmatpush1.msra.mxu0 0.0
    %833 = vmatprep.subr.mxu0 0.0
    %834 = vmatpush1.msra.mxu0 0.0
    %835 = vmatprep.subr.mxu0 0.0
    %836 = vmatpush1.msra.mxu0 0.0
    %837 = vmatprep.subr.mxu0 0.0
    %838 = vmatpush1.msra.mxu0 0.0
    %839 = vmatprep.subr.mxu0 0.0
    %840 = vmatpush1.msra.mxu0 0.0
    %841 = vmatprep.subr.mxu0 0.0
    %842 = vmatpush1.msra.mxu0 0.0
    %843 = vmatprep.subr.mxu0 0.0
    %844 = vmatpush1.msra.mxu0 0.0
    %845 = vmatprep.subr.mxu0 0.0
    %846 = vmatpush1.msra.mxu0 0.0
    %847 = vmatprep.subr.mxu0 0.0
    %848 = vmatpush1.msra.mxu0 0.0
    %849 = vmatprep.subr.mxu0 0.0
    %850 = vmatpush1.msra.mxu0 0.0
    %851 = vmatprep.subr.mxu0 0.0
    %852 = vmatpush1.msra.mxu0 0.0
    %853 = vmatprep.subr.mxu0 0.0
    %854 = vmatpush1.msra.mxu0 0.0
    %855 = vmatprep.subr.mxu0 0.0
    %856 = vmatpush1.msra.mxu0 0.0
    %857 = vmatprep.subr.mxu0 0.0
    %858 = vmatpush1.msra.mxu0 0.0
    %859 = vmatprep.subr.mxu0 0.0
    %860 = vmatpush1.msra.mxu0 0.0
    %861 = vmatprep.subr.mxu0 0.0
    %862 = vmatpush1.msra.mxu0 0.0
    %863 = vmatprep.subr.mxu0 0.0
    %864 = vmatpush1.msra.mxu0 0.0
    %865 = vmatprep.subr.mxu0 0.0
    %866 = vmatpush1.msra.mxu0 0.0
    %867 = vmatprep.subr.mxu0 0.0
    %868 = vmatpush1.msra.mxu0 0.0
    %869 = vmatprep.subr.mxu0 0.0
    %870 = vmatpush1.msra.mxu0 0.0
    %871 = vmatprep.subr.mxu0 0.0
    %872 = vmatpush1.msra.mxu0 0.0
    %873 = vmatprep.subr.mxu0 0.0
    %874 = vmatpush1.msra.mxu0 0.0
    %875 = vmatprep.subr.mxu0 0.0
    %876 = vmatpush1.msra.mxu0 0.0
    %877 = vmatprep.mubr.f32.mxu0 0.0
    %v878 = vand.u32 %v584, 4294901760
    %v879 = vsub.f32 %v584, %v878
    %v880 = vand.u32 %v879, 4294901760
    %881 = vmatmul.mubr.f32.gmra.mrb[0].mxu0 %v880
    %v882 = vpop.f32.mrb[0].mxu0
    %v883 = vadd.f32 %v809, %v882
    %v884 = vpop.f32.mrb[0].mxu0
    %885 = vdwg.mxu0
    %886 = vmatprep.subr.mxu0 0.0
    %v887 = vand.u32 %v85, 4294901760
    %v888 = vsub.f32 %v85, %v887
    %v889 = vand.u32 %v888, 4294901760
    %890 = vmatpush1.msra.mxu0 %v889
    %891 = vmatprep.subr.mxu0 0.0
    %892 = vmatpush1.msra.mxu0 0.0
    %893 = vmatprep.subr.mxu0 0.0
    %894 = vmatpush1.msra.mxu0 0.0
    %895 = vmatprep.subr.mxu0 0.0
    %896 = vmatpush1.msra.mxu0 0.0
    %897 = vmatprep.subr.mxu0 0.0
    %898 = vmatpush1.msra.mxu0 0.0
    %899 = vmatprep.subr.mxu0 0.0
    %900 = vmatpush1.msra.mxu0 0.0
    %901 = vmatprep.subr.mxu0 0.0
    %902 = vmatpush1.msra.mxu0 0.0
    %903 = vmatprep.subr.mxu0 0.0
    %904 = vmatpush1.msra.mxu0 0.0
    %905 = vmatprep.subr.mxu0 0.0
    %906 = vmatpush1.msra.mxu0 0.0
    %907 = vmatprep.subr.mxu0 0.0
    %908 = vmatpush1.msra.mxu0 0.0
    %909 = vmatprep.subr.mxu0 0.0
    %910 = vmatpush1.msra.mxu0 0.0
    %911 = vmatprep.subr.mxu0 0.0
    %912 = vmatpush1.msra.mxu0 0.0
    %913 = vmatprep.subr.mxu0 0.0
    %914 = vmatpush1.msra.mxu0 0.0
    %915 = vmatprep.subr.mxu0 0.0
    %916 = vmatpush1.msra.mxu0 0.0
    %917 = vmatprep.subr.mxu0 0.0
    %918 = vmatpush1.msra.mxu0 0.0
    %919 = vmatprep.subr.mxu0 0.0
    %920 = vmatpush1.msra.mxu0 0.0
    %921 = vmatprep.subr.mxu0 0.0
    %922 = vmatpush1.msra.mxu0 0.0
    %923 = vmatprep.subr.mxu0 0.0
    %924 = vmatpush1.msra.mxu0 0.0
    %925 = vmatprep.subr.mxu0 0.0
    %926 = vmatpush1.msra.mxu0 0.0
    %927 = vmatprep.subr.mxu0 0.0
    %928 = vmatpush1.msra.mxu0 0.0
    %929 = vmatprep.subr.mxu0 0.0
    %930 = vmatpush1.msra.mxu0 0.0
    %931 = vmatprep.subr.mxu0 0.0
    %932 = vmatpush1.msra.mxu0 0.0
    %933 = vmatprep.subr.mxu0 0.0
    %934 = vmatpush1.msra.mxu0 0.0
    %935 = vmatprep.subr.mxu0 0.0
    %936 = vmatpush1.msra.mxu0 0.0
    %937 = vmatprep.subr.mxu0 0.0
    %938 = vmatpush1.msra.mxu0 0.0
    %939 = vmatprep.subr.mxu0 0.0
    %940 = vmatpush1.msra.mxu0 0.0
    %941 = vmatprep.subr.mxu0 0.0
    %942 = vmatpush1.msra.mxu0 0.0
    %943 = vmatprep.subr.mxu0 0.0
    %944 = vmatpush1.msra.mxu0 0.0
    %945 = vmatprep.subr.mxu0 0.0
    %946 = vmatpush1.msra.mxu0 0.0
    %947 = vmatprep.subr.mxu0 0.0
    %948 = vmatpush1.msra.mxu0 0.0
    %949 = vmatprep.subr.mxu0 0.0
    %950 = vmatpush1.msra.mxu0 0.0
    %951 = vmatprep.subr.mxu0 0.0
    %952 = vmatpush1.msra.mxu0 0.0
    %953 = vmatprep.mubr.f32.mxu0 0.0
    %v954 = vand.u32 %v584, 4294901760
    %955 = vmatmul.mubr.f32.gmra.mrb[0].mxu0 %v954
    %v956 = vpop.f32.mrb[0].mxu0
    %v957 = vadd.f32 %v883, %v956
    %v958 = vpop.f32.mrb[0].mxu0
    %959 = vdwg.mxu0
    %960 = vmatprep.subr.mxu0 0.0
    %v961 = vand.u32 %v85, 4294901760
    %962 = vmatpush1.msra.mxu0 %v961
    %963 = vmatprep.subr.mxu0 0.0
    %964 = vmatpush1.msra.mxu0 0.0
    %965 = vmatprep.subr.mxu0 0.0
    %966 = vmatpush1.msra.mxu0 0.0
    %967 = vmatprep.subr.mxu0 0.0
    %968 = vmatpush1.msra.mxu0 0.0
    %969 = vmatprep.subr.mxu0 0.0
    %970 = vmatpush1.msra.mxu0 0.0
    %971 = vmatprep.subr.mxu0 0.0
    %972 = vmatpush1.msra.mxu0 0.0
    %973 = vmatprep.subr.mxu0 0.0
    %974 = vmatpush1.msra.mxu0 0.0
    %975 = vmatprep.subr.mxu0 0.0
    %976 = vmatpush1.msra.mxu0 0.0
    %977 = vmatprep.subr.mxu0 0.0
    %978 = vmatpush1.msra.mxu0 0.0
    %979 = vmatprep.subr.mxu0 0.0
    %980 = vmatpush1.msra.mxu0 0.0
    %981 = vmatprep.subr.mxu0 0.0
    %982 = vmatpush1.msra.mxu0 0.0
    %983 = vmatprep.subr.mxu0 0.0
    %984 = vmatpush1.msra.mxu0 0.0
    %985 = vmatprep.subr.mxu0 0.0
    %986 = vmatpush1.msra.mxu0 0.0
    %987 = vmatprep.subr.mxu0 0.0
    %988 = vmatpush1.msra.mxu0 0.0
    %989 = vmatprep.subr.mxu0 0.0
    %990 = vmatpush1.msra.mxu0 0.0
    %991 = vmatprep.subr.mxu0 0.0
    %992 = vmatpush1.msra.mxu0 0.0
    %993 = vmatprep.subr.mxu0 0.0
    %994 = vmatpush1.msra.mxu0 0.0
    %995 = vmatprep.subr.mxu0 0.0
    %996 = vmatpush1.msra.mxu0 0.0
    %997 = vmatprep.subr.mxu0 0.0
    %998 = vmatpush1.msra.mxu0 0.0
    %999 = vmatprep.subr.mxu0 0.0
    %1000 = vmatpush1.msra.mxu0 0.0
    %1001 = vmatprep.subr.mxu0 0.0
    %1002 = vmatpush1.msra.mxu0 0.0
    %1003 = vmatprep.subr.mxu0 0.0
    %1004 = vmatpush1.msra.mxu0 0.0
    %1005 = vmatprep.subr.mxu0 0.0
    %1006 = vmatpush1.msra.mxu0 0.0
    %1007 = vmatprep.subr.mxu0 0.0
    %1008 = vmatpush1.msra.mxu0 0.0
    %1009 = vmatprep.subr.mxu0 0.0
    %1010 = vmatpush1.msra.mxu0 0.0
    %1011 = vmatprep.subr.mxu0 0.0
    %1012 = vmatpush1.msra.mxu0 0.0
    %1013 = vmatprep.subr.mxu0 0.0
    %1014 = vmatpush1.msra.mxu0 0.0
    %1015 = vmatprep.subr.mxu0 0.0
    %1016 = vmatpush1.msra.mxu0 0.0
    %1017 = vmatprep.subr.mxu0 0.0
    %1018 = vmatpush1.msra.mxu0 0.0
    %1019 = vmatprep.subr.mxu0 0.0
    %1020 = vmatpush1.msra.mxu0 0.0
    %1021 = vmatprep.subr.mxu0 0.0
    %1022 = vmatpush1.msra.mxu0 0.0
    %1023 = vmatprep.subr.mxu0 0.0
    %1024 = vmatpush1.msra.mxu0 0.0
    %1025 = vmatprep.mubr.f32.mxu0 0.0
    %v1026 = vand.u32 %v584, 4294901760
    %1027 = vmatmul.mubr.f32.gmra.mrb[0].mxu0 %v1026
    %v1028 = vpop.f32.mrb[0].mxu0
    %v1029 = vadd.f32 %v957, %v1028
    %v1030 = vpop.f32.mrb[0].mxu0
    %1031 = vdwg.mxu0
    %v1032 = vtanh.pop %v1029
    %v1033 = vmul.f32 %v1032, 0.5
    %v1034 = vadd.f32 %v1033, 0.5
    %1036 = vrot.lane.b32.xlu0 %v91, 32
    %v1037 = vpop.permute.xlu0 %1036
    %v1039 = vmul.f32 %v1034, %v1037
    %1041 = vrot.lane.b32.xlu0 %v1032, 32
    %v1042 = vpop.permute.xlu0 %1041
    %v1044 = vmul.f32 %v1034, %v1042
    %1046 = vrot.lane.b32.xlu0 %v1044, 32
    %v1047 = vpop.permute.xlu0 %1046
    %v1049 = vadd.f32 %v1039, %v1047
    %v1050 = vtanh.pop %v1049
    %1052 = vrot.lane.b32.xlu0 %v1050, 32
    %v1053 = vpop.permute.xlu0 %1052
    %v1055 = vmul.f32 %v1034, %v1053
    %s1056 = scalar_lea.vmem [#allocation6], 4
    %v1057 = vld [vmem:[%s1056] sm:$0xf]
    %1059 = vrot.lane.b32.xlu0 %v1055, 64
    %v1060 = vpop.permute.xlu0 %1059
    %v1061 = vsel %vm93, %v1060, 0
    %1063 = vmatprep.subr.mxu0 0.0
    %v1064 = vand.u32 %v86, 4294901760
    %1065 = vmatpush1.msra.mxu0 %v1064
    %1066 = vmatprep.subr.mxu0 0.0
    %v1067 = vand.u32 %v87, 4294901760
    %1068 = vmatpush1.msra.mxu0 %v1067
    %1069 = vmatprep.subr.mxu0 0.0
    %v1070 = vand.u32 %v88, 4294901760
    %1071 = vmatpush1.msra.mxu0 %v1070
    %1072 = vmatprep.subr.mxu0 0.0
    %v1073 = vand.u32 %v89, 4294901760
    %1074 = vmatpush1.msra.mxu0 %v1073
    %1075 = vmatprep.subr.mxu0 0.0
    %1076 = vmatpush1.msra.mxu0 0.0
    %1077 = vmatprep.subr.mxu0 0.0
    %1078 = vmatpush1.msra.mxu0 0.0
    %1079 = vmatprep.subr.mxu0 0.0
    %1080 = vmatpush1.msra.mxu0 0.0
    %1081 = vmatprep.subr.mxu0 0.0
    %1082 = vmatpush1.msra.mxu0 0.0
    %1083 = vmatprep.subr.mxu0 0.0
    %1084 = vmatpush1.msra.mxu0 0.0
    %1085 = vmatprep.subr.mxu0 0.0
    %1086 = vmatpush1.msra.mxu0 0.0
    %1087 = vmatprep.subr.mxu0 0.0
    %1088 = vmatpush1.msra.mxu0 0.0
    %1089 = vmatprep.subr.mxu0 0.0
    %1090 = vmatpush1.msra.mxu0 0.0
    %1091 = vmatprep.subr.mxu0 0.0
    %1092 = vmatpush1.msra.mxu0 0.0
    %1093 = vmatprep.subr.mxu0 0.0
    %1094 = vmatpush1.msra.mxu0 0.0
    %1095 = vmatprep.subr.mxu0 0.0
    %1096 = vmatpush1.msra.mxu0 0.0
    %1097 = vmatprep.subr.mxu0 0.0
    %1098 = vmatpush1.msra.mxu0 0.0
    %1099 = vmatprep.subr.mxu0 0.0
    %1100 = vmatpush1.msra.mxu0 0.0
    %1101 = vmatprep.subr.mxu0 0.0
    %1102 = vmatpush1.msra.mxu0 0.0
    %1103 = vmatprep.subr.mxu0 0.0
    %1104 = vmatpush1.msra.mxu0 0.0
    %1105 = vmatprep.subr.mxu0 0.0
    %1106 = vmatpush1.msra.mxu0 0.0
    %1107 = vmatprep.subr.mxu0 0.0
    %1108 = vmatpush1.msra.mxu0 0.0
    %1109 = vmatprep.subr.mxu0 0.0
    %1110 = vmatpush1.msra.mxu0 0.0
    %1111 = vmatprep.subr.mxu0 0.0
    %1112 = vmatpush1.msra.mxu0 0.0
    %1113 = vmatprep.subr.mxu0 0.0
    %1114 = vmatpush1.msra.mxu0 0.0
    %1115 = vmatprep.subr.mxu0 0.0
    %1116 = vmatpush1.msra.mxu0 0.0
    %1117 = vmatprep.subr.mxu0 0.0
    %1118 = vmatpush1.msra.mxu0 0.0
    %1119 = vmatprep.subr.mxu0 0.0
    %1120 = vmatpush1.msra.mxu0 0.0
    %1121 = vmatprep.subr.mxu0 0.0
    %1122 = vmatpush1.msra.mxu0 0.0
    %1123 = vmatprep.subr.mxu0 0.0
    %1124 = vmatpush1.msra.mxu0 0.0
    %1125 = vmatprep.subr.mxu0 0.0
    %1126 = vmatpush1.msra.mxu0 0.0
    %1127 = vmatprep.subr.mxu0 0.0
    %1128 = vmatpush1.msra.mxu0 0.0
    %1129 = vmatprep.subr.mxu0 0.0
    %1130 = vmatpush1.msra.mxu0 0.0
    %1131 = vmatprep.mubr.f32.mxu0 0.0
    %v1132 = vand.u32 %v1061, 4294901760
    %v1133 = vsub.f32 %v1061, %v1132
    %v1134 = vand.u32 %v1133, 4294901760
    %v1135 = vsub.f32 %v1133, %v1134
    %v1136 = vand.u32 %v1135, 4294901760
    %1137 = vmatmul.mubr.f32.gmra.mrb[0].mxu0 %v1136
    %v1138 = vpop.f32.mrb[0].mxu0
    %v1139 = vadd.f32 0.0, %v1138
    %v1140 = vpop.f32.mrb[0].mxu0
    %1141 = vdwg.mxu0
    %1142 = vmatprep.subr.mxu0 0.0
    %v1143 = vand.u32 %v86, 4294901760
    %v1144 = vsub.f32 %v86, %v1143
    %v1145 = vand.u32 %v1144, 4294901760
    %v1146 = vsub.f32 %v1144, %v1145
    %v1147 = vand.u32 %v1146, 4294901760
    %1148 = vmatpush1.msra.mxu0 %v1147
    %1149 = vmatprep.subr.mxu0 0.0
    %v1150 = vand.u32 %v87, 4294901760
    %v1151 = vsub.f32 %v87, %v1150
    %v1152 = vand.u32 %v1151, 4294901760
    %v1153 = vsub.f32 %v1151, %v1152
    %v1154 = vand.u32 %v1153, 4294901760
    %1155 = vmatpush1.msra.mxu0 %v1154
    %1156 = vmatprep.subr.mxu0 0.0
    %v1157 = vand.u32 %v88, 4294901760
    %v1158 = vsub.f32 %v88, %v1157
    %v1159 = vand.u32 %v1158, 4294901760
    %v1160 = vsub.f32 %v1158, %v1159
    %v1161 = vand.u32 %v1160, 4294901760
    %1162 = vmatpush1.msra.mxu0 %v1161
    %1163 = vmatprep.subr.mxu0 0.0
    %v1164 = vand.u32 %v89, 4294901760
    %v1165 = vsub.f32 %v89, %v1164
    %v1166 = vand.u32 %v1165, 4294901760
    %v1167 = vsub.f32 %v1165, %v1166
    %v1168 = vand.u32 %v1167, 4294901760
    %1169 = vmatpush1.msra.mxu0 %v1168
    %1170 = vmatprep.subr.mxu0 0.0
    %1171 = vmatpush1.msra.mxu0 0.0
    %1172 = vmatprep.subr.mxu0 0.0
    %1173 = vmatpush1.msra.mxu0 0.0
    %1174 = vmatprep.subr.mxu0 0.0
    %1175 = vmatpush1.msra.mxu0 0.0
    %1176 = vmatprep.subr.mxu0 0.0
    %1177 = vmatpush1.msra.mxu0 0.0
    %1178 = vmatprep.subr.mxu0 0.0
    %1179 = vmatpush1.msra.mxu0 0.0
    %1180 = vmatprep.subr.mxu0 0.0
    %1181 = vmatpush1.msra.mxu0 0.0
    %1182 = vmatprep.subr.mxu0 0.0
    %1183 = vmatpush1.msra.mxu0 0.0
    %1184 = vmatprep.subr.mxu0 0.0
    %1185 = vmatpush1.msra.mxu0 0.0
    %1186 = vmatprep.subr.mxu0 0.0
    %1187 = vmatpush1.msra.mxu0 0.0
    %1188 = vmatprep.subr.mxu0 0.0
    %1189 = vmatpush1.msra.mxu0 0.0
    %1190 = vmatprep.subr.mxu0 0.0
    %1191 = vmatpush1.msra.mxu0 0.0
    %1192 = vmatprep.subr.mxu0 0.0
    %1193 = vmatpush1.msra.mxu0 0.0
    %1194 = vmatprep.subr.mxu0 0.0
    %1195 = vmatpush1.msra.mxu0 0.0
    %1196 = vmatprep.subr.mxu0 0.0
    %1197 = vmatpush1.msra.mxu0 0.0
    %1198 = vmatprep.subr.mxu0 0.0
    %1199 = vmatpush1.msra.mxu0 0.0
    %1200 = vmatprep.subr.mxu0 0.0
    %1201 = vmatpush1.msra.mxu0 0.0
    %1202 = vmatprep.subr.mxu0 0.0
    %1203 = vmatpush1.msra.mxu0 0.0
    %1204 = vmatprep.subr.mxu0 0.0
    %1205 = vmatpush1.msra.mxu0 0.0
    %1206 = vmatprep.subr.mxu0 0.0
    %1207 = vmatpush1.msra.mxu0 0.0
    %1208 = vmatprep.subr.mxu0 0.0
    %1209 = vmatpush1.msra.mxu0 0.0
    %1210 = vmatprep.subr.mxu0 0.0
    %1211 = vmatpush1.msra.mxu0 0.0
    %1212 = vmatprep.subr.mxu0 0.0
    %1213 = vmatpush1.msra.mxu0 0.0
    %1214 = vmatprep.subr.mxu0 0.0
    %1215 = vmatpush1.msra.mxu0 0.0
    %1216 = vmatprep.subr.mxu0 0.0
    %1217 = vmatpush1.msra.mxu0 0.0
    %1218 = vmatprep.subr.mxu0 0.0
    %1219 = vmatpush1.msra.mxu0 0.0
    %1220 = vmatprep.subr.mxu0 0.0
    %1221 = vmatpush1.msra.mxu0 0.0
    %1222 = vmatprep.subr.mxu0 0.0
    %1223 = vmatpush1.msra.mxu0 0.0
    %1224 = vmatprep.subr.mxu0 0.0
    %1225 = vmatpush1.msra.mxu0 0.0
    %1226 = vmatprep.mubr.f32.mxu0 0.0
    %v1227 = vand.u32 %v1061, 4294901760
    %1228 = vmatmul.mubr.f32.gmra.mrb[0].mxu0 %v1227
    %v1229 = vpop.f32.mrb[0].mxu0
    %v1230 = vadd.f32 %v1139, %v1229
    %v1231 = vpop.f32.mrb[0].mxu0
    %1232 = vdwg.mxu0
    %1233 = vmatprep.subr.mxu0 0.0
    %v1234 = vand.u32 %v86, 4294901760
    %v1235 = vsub.f32 %v86, %v1234
    %1236 = vmatpush1.msra.mxu0 %v1235
    %1237 = vmatprep.subr.mxu0 0.0
    %v1238 = vand.u32 %v87, 4294901760
    %v1239 = vsub.f32 %v87, %v1238
    %1240 = vmatpush1.msra.mxu0 %v1239
    %1241 = vmatprep.subr.mxu0 0.0
    %v1242 = vand.u32 %v88, 4294901760
    %v1243 = vsub.f32 %v88, %v1242
    %1244 = vmatpush1.msra.mxu0 %v1243
    %1245 = vmatprep.subr.mxu0 0.0
    %v1246 = vand.u32 %v89, 4294901760
    %v1247 = vsub.f32 %v89, %v1246
    %1248 = vmatpush1.msra.mxu0 %v1247
    %1249 = vmatprep.subr.mxu0 0.0
    %1250 = vmatpush1.msra.mxu0 0.0
    %1251 = vmatprep.subr.mxu0 0.0
    %1252 = vmatpush1.msra.mxu0 0.0
    %1253 = vmatprep.subr.mxu0 0.0
    %1254 = vmatpush1.msra.mxu0 0.0
    %1255 = vmatprep.subr.mxu0 0.0
    %1256 = vmatpush1.msra.mxu0 0.0
    %1257 = vmatprep.subr.mxu0 0.0
    %1258 = vmatpush1.msra.mxu0 0.0
    %1259 = vmatprep.subr.mxu0 0.0
    %1260 = vmatpush1.msra.mxu0 0.0
    %1261 = vmatprep.subr.mxu0 0.0
    %1262 = vmatpush1.msra.mxu0 0.0
    %1263 = vmatprep.subr.mxu0 0.0
    %1264 = vmatpush1.msra.mxu0 0.0
    %1265 = vmatprep.subr.mxu0 0.0
    %1266 = vmatpush1.msra.mxu0 0.0
    %1267 = vmatprep.subr.mxu0 0.0
    %1268 = vmatpush1.msra.mxu0 0.0
    %1269 = vmatprep.subr.mxu0 0.0
    %1270 = vmatpush1.msra.mxu0 0.0
    %1271 = vmatprep.subr.mxu0 0.0
    %1272 = vmatpush1.msra.mxu0 0.0
    %1273 = vmatprep.subr.mxu0 0.0
    %1274 = vmatpush1.msra.mxu0 0.0
    %1275 = vmatprep.subr.mxu0 0.0
    %1276 = vmatpush1.msra.mxu0 0.0
    %1277 = vmatprep.subr.mxu0 0.0
    %1278 = vmatpush1.msra.mxu0 0.0
    %1279 = vmatprep.subr.mxu0 0.0
    %1280 = vmatpush1.msra.mxu0 0.0
    %1281 = vmatprep.subr.mxu0 0.0
    %1282 = vmatpush1.msra.mxu0 0.0
    %1283 = vmatprep.subr.mxu0 0.0
    %1284 = vmatpush1.msra.mxu0 0.0
    %1285 = vmatprep.subr.mxu0 0.0
    %1286 = vmatpush1.msra.mxu0 0.0
    %1287 = vmatprep.subr.mxu0 0.0
    %1288 = vmatpush1.msra.mxu0 0.0
    %1289 = vmatprep.subr.mxu0 0.0
    %1290 = vmatpush1.msra.mxu0 0.0
    %1291 = vmatprep.subr.mxu0 0.0
    %1292 = vmatpush1.msra.mxu0 0.0
    %1293 = vmatprep.subr.mxu0 0.0
    %1294 = vmatpush1.msra.mxu0 0.0
    %1295 = vmatprep.subr.mxu0 0.0
    %1296 = vmatpush1.msra.mxu0 0.0
    %1297 = vmatprep.subr.mxu0 0.0
    %1298 = vmatpush1.msra.mxu0 0.0
    %1299 = vmatprep.subr.mxu0 0.0
    %1300 = vmatpush1.msra.mxu0 0.0
    %1301 = vmatprep.subr.mxu0 0.0
    %1302 = vmatpush1.msra.mxu0 0.0
    %1303 = vmatprep.subr.mxu0 0.0
    %1304 = vmatpush1.msra.mxu0 0.0
    %1305 = vmatprep.mubr.f32.mxu0 0.0
    %v1306 = vand.u32 %v1061, 4294901760
    %v1307 = vsub.f32 %v1061, %v1306
    %1308 = vmatmul.mubr.f32.gmra.mrb[0].mxu0 %v1307
    %v1309 = vpop.f32.mrb[0].mxu0
    %v1310 = vadd.f32 %v1230, %v1309
    %v1311 = vpop.f32.mrb[0].mxu0
    %1312 = vdwg.mxu0
    %1313 = vmatprep.subr.mxu0 0.0
    %v1314 = vand.u32 %v86, 4294901760
    %1315 = vmatpush1.msra.mxu0 %v1314
    %1316 = vmatprep.subr.mxu0 0.0
    %v1317 = vand.u32 %v87, 4294901760
    %1318 = vmatpush1.msra.mxu0 %v1317
    %1319 = vmatprep.subr.mxu0 0.0
    %v1320 = vand.u32 %v88, 4294901760
    %1321 = vmatpush1.msra.mxu0 %v1320
    %1322 = vmatprep.subr.mxu0 0.0
    %v1323 = vand.u32 %v89, 4294901760
    %1324 = vmatpush1.msra.mxu0 %v1323
    %1325 = vmatprep.subr.mxu0 0.0
    %1326 = vmatpush1.msra.mxu0 0.0
    %1327 = vmatprep.subr.mxu0 0.0
    %1328 = vmatpush1.msra.mxu0 0.0
    %1329 = vmatprep.subr.mxu0 0.0
    %1330 = vmatpush1.msra.mxu0 0.0
    %1331 = vmatprep.subr.mxu0 0.0
    %1332 = vmatpush1.msra.mxu0 0.0
    %1333 = vmatprep.subr.mxu0 0.0
    %1334 = vmatpush1.msra.mxu0 0.0
    %1335 = vmatprep.subr.mxu0 0.0
    %1336 = vmatpush1.msra.mxu0 0.0
    %1337 = vmatprep.subr.mxu0 0.0
    %1338 = vmatpush1.msra.mxu0 0.0
    %1339 = vmatprep.subr.mxu0 0.0
    %1340 = vmatpush1.msra.mxu0 0.0
    %1341 = vmatprep.subr.mxu0 0.0
    %1342 = vmatpush1.msra.mxu0 0.0
    %1343 = vmatprep.subr.mxu0 0.0
    %1344 = vmatpush1.msra.mxu0 0.0
    %1345 = vmatprep.subr.mxu0 0.0
    %1346 = vmatpush1.msra.mxu0 0.0
    %1347 = vmatprep.subr.mxu0 0.0
    %1348 = vmatpush1.msra.mxu0 0.0
    %1349 = vmatprep.subr.mxu0 0.0
    %1350 = vmatpush1.msra.mxu0 0.0
    %1351 = vmatprep.subr.mxu0 0.0
    %1352 = vmatpush1.msra.mxu0 0.0
    %1353 = vmatprep.subr.mxu0 0.0
    %1354 = vmatpush1.msra.mxu0 0.0
    %1355 = vmatprep.subr.mxu0 0.0
    %1356 = vmatpush1.msra.mxu0 0.0
    %1357 = vmatprep.subr.mxu0 0.0
    %1358 = vmatpush1.msra.mxu0 0.0
    %1359 = vmatprep.subr.mxu0 0.0
    %1360 = vmatpush1.msra.mxu0 0.0
    %1361 = vmatprep.subr.mxu0 0.0
    %1362 = vmatpush1.msra.mxu0 0.0
    %1363 = vmatprep.subr.mxu0 0.0
    %1364 = vmatpush1.msra.mxu0 0.0
    %1365 = vmatprep.subr.mxu0 0.0
    %1366 = vmatpush1.msra.mxu0 0.0
    %1367 = vmatprep.subr.mxu0 0.0
    %1368 = vmatpush1.msra.mxu0 0.0
    %1369 = vmatprep.subr.mxu0 0.0
    %1370 = vmatpush1.msra.mxu0 0.0
    %1371 = vmatprep.subr.mxu0 0.0
    %1372 = vmatpush1.msra.mxu0 0.0
    %1373 = vmatprep.subr.mxu0 0.0
    %1374 = vmatpush1.msra.mxu0 0.0
    %1375 = vmatprep.subr.mxu0 0.0
    %1376 = vmatpush1.msra.mxu0 0.0
    %1377 = vmatprep.subr.mxu0 0.0
    %1378 = vmatpush1.msra.mxu0 0.0
    %1379 = vmatprep.subr.mxu0 0.0
    %1380 = vmatpush1.msra.mxu0 0.0
    %1381 = vmatprep.mubr.f32.mxu0 0.0
    %v1382 = vand.u32 %v1061, 4294901760
    %v1383 = vsub.f32 %v1061, %v1382
    %v1384 = vand.u32 %v1383, 4294901760
    %1385 = vmatmul.mubr.f32.gmra.mrb[0].mxu0 %v1384
    %v1386 = vpop.f32.mrb[0].mxu0
    %v1387 = vadd.f32 %v1310, %v1386
    %v1388 = vpop.f32.mrb[0].mxu0
    %1389 = vdwg.mxu0
    %1390 = vmatprep.subr.mxu0 0.0
    %v1391 = vand.u32 %v86, 4294901760
    %v1392 = vsub.f32 %v86, %v1391
    %v1393 = vand.u32 %v1392, 4294901760
    %1394 = vmatpush1.msra.mxu0 %v1393
    %1395 = vmatprep.subr.mxu0 0.0
    %v1396 = vand.u32 %v87, 4294901760
    %v1397 = vsub.f32 %v87, %v1396
    %v1398 = vand.u32 %v1397, 4294901760
    %1399 = vmatpush1.msra.mxu0 %v1398
    %1400 = vmatprep.subr.mxu0 0.0
    %v1401 = vand.u32 %v88, 4294901760
    %v1402 = vsub.f32 %v88, %v1401
    %v1403 = vand.u32 %v1402, 4294901760
    %1404 = vmatpush1.msra.mxu0 %v1403
    %1405 = vmatprep.subr.mxu0 0.0
    %v1406 = vand.u32 %v89, 4294901760
    %v1407 = vsub.f32 %v89, %v1406
    %v1408 = vand.u32 %v1407, 4294901760
    %1409 = vmatpush1.msra.mxu0 %v1408
    %1410 = vmatprep.subr.mxu0 0.0
    %1411 = vmatpush1.msra.mxu0 0.0
    %1412 = vmatprep.subr.mxu0 0.0
    %1413 = vmatpush1.msra.mxu0 0.0
    %1414 = vmatprep.subr.mxu0 0.0
    %1415 = vmatpush1.msra.mxu0 0.0
    %1416 = vmatprep.subr.mxu0 0.0
    %1417 = vmatpush1.msra.mxu0 0.0
    %1418 = vmatprep.subr.mxu0 0.0
    %1419 = vmatpush1.msra.mxu0 0.0
    %1420 = vmatprep.subr.mxu0 0.0
    %1421 = vmatpush1.msra.mxu0 0.0
    %1422 = vmatprep.subr.mxu0 0.0
    %1423 = vmatpush1.msra.mxu0 0.0
    %1424 = vmatprep.subr.mxu0 0.0
    %1425 = vmatpush1.msra.mxu0 0.0
    %1426 = vmatprep.subr.mxu0 0.0
    %1427 = vmatpush1.msra.mxu0 0.0
    %1428 = vmatprep.subr.mxu0 0.0
    %1429 = vmatpush1.msra.mxu0 0.0
    %1430 = vmatprep.subr.mxu0 0.0
    %1431 = vmatpush1.msra.mxu0 0.0
    %1432 = vmatprep.subr.mxu0 0.0
    %1433 = vmatpush1.msra.mxu0 0.0
    %1434 = vmatprep.subr.mxu0 0.0
    %1435 = vmatpush1.msra.mxu0 0.0
    %1436 = vmatprep.subr.mxu0 0.0
    %1437 = vmatpush1.msra.mxu0 0.0
    %1438 = vmatprep.subr.mxu0 0.0
    %1439 = vmatpush1.msra.mxu0 0.0
    %1440 = vmatprep.subr.mxu0 0.0
    %1441 = vmatpush1.msra.mxu0 0.0
    %1442 = vmatprep.subr.mxu0 0.0
    %1443 = vmatpush1.msra.mxu0 0.0
    %1444 = vmatprep.subr.mxu0 0.0
    %1445 = vmatpush1.msra.mxu0 0.0
    %1446 = vmatprep.subr.mxu0 0.0
    %1447 = vmatpush1.msra.mxu0 0.0
    %1448 = vmatprep.subr.mxu0 0.0
    %1449 = vmatpush1.msra.mxu0 0.0
    %1450 = vmatprep.subr.mxu0 0.0
    %1451 = vmatpush1.msra.mxu0 0.0
    %1452 = vmatprep.subr.mxu0 0.0
    %1453 = vmatpush1.msra.mxu0 0.0
    %1454 = vmatprep.subr.mxu0 0.0
    %1455 = vmatpush1.msra.mxu0 0.0
    %1456 = vmatprep.subr.mxu0 0.0
    %1457 = vmatpush1.msra.mxu0 0.0
    %1458 = vmatprep.subr.mxu0 0.0
    %1459 = vmatpush1.msra.mxu0 0.0
    %1460 = vmatprep.subr.mxu0 0.0
    %1461 = vmatpush1.msra.mxu0 0.0
    %1462 = vmatprep.subr.mxu0 0.0
    %1463 = vmatpush1.msra.mxu0 0.0
    %1464 = vmatprep.subr.mxu0 0.0
    %1465 = vmatpush1.msra.mxu0 0.0
    %1466 = vmatprep.mubr.f32.mxu0 0.0
    %v1467 = vand.u32 %v1061, 4294901760
    %1468 = vmatmul.mubr.f32.gmra.mrb[0].mxu0 %v1467
    %v1469 = vpop.f32.mrb[0].mxu0
    %v1470 = vadd.f32 %v1387, %v1469
    %v1471 = vpop.f32.mrb[0].mxu0
    %1472 = vdwg.mxu0
    %1473 = vmatprep.subr.mxu0 0.0
    %v1474 = vand.u32 %v86, 4294901760
    %1475 = vmatpush1.msra.mxu0 %v1474
    %1476 = vmatprep.subr.mxu0 0.0
    %v1477 = vand.u32 %v87, 4294901760
    %1478 = vmatpush1.msra.mxu0 %v1477
    %1479 = vmatprep.subr.mxu0 0.0
    %v1480 = vand.u32 %v88, 4294901760
    %1481 = vmatpush1.msra.mxu0 %v1480
    %1482 = vmatprep.subr.mxu0 0.0
    %v1483 = vand.u32 %v89, 4294901760
    %1484 = vmatpush1.msra.mxu0 %v1483
    %1485 = vmatprep.subr.mxu0 0.0
    %1486 = vmatpush1.msra.mxu0 0.0
    %1487 = vmatprep.subr.mxu0 0.0
    %1488 = vmatpush1.msra.mxu0 0.0
    %1489 = vmatprep.subr.mxu0 0.0
    %1490 = vmatpush1.msra.mxu0 0.0
    %1491 = vmatprep.subr.mxu0 0.0
    %1492 = vmatpush1.msra.mxu0 0.0
    %1493 = vmatprep.subr.mxu0 0.0
    %1494 = vmatpush1.msra.mxu0 0.0
    %1495 = vmatprep.subr.mxu0 0.0
    %1496 = vmatpush1.msra.mxu0 0.0
    %1497 = vmatprep.subr.mxu0 0.0
    %1498 = vmatpush1.msra.mxu0 0.0
    %1499 = vmatprep.subr.mxu0 0.0
    %1500 = vmatpush1.msra.mxu0 0.0
    %1501 = vmatprep.subr.mxu0 0.0
    %1502 = vmatpush1.msra.mxu0 0.0
    %1503 = vmatprep.subr.mxu0 0.0
    %1504 = vmatpush1.msra.mxu0 0.0
    %1505 = vmatprep.subr.mxu0 0.0
    %1506 = vmatpush1.msra.mxu0 0.0
    %1507 = vmatprep.subr.mxu0 0.0
    %1508 = vmatpush1.msra.mxu0 0.0
    %1509 = vmatprep.subr.mxu0 0.0
    %1510 = vmatpush1.msra.mxu0 0.0
    %1511 = vmatprep.subr.mxu0 0.0
    %1512 = vmatpush1.msra.mxu0 0.0
    %1513 = vmatprep.subr.mxu0 0.0
    %1514 = vmatpush1.msra.mxu0 0.0
    %1515 = vmatprep.subr.mxu0 0.0
    %1516 = vmatpush1.msra.mxu0 0.0
    %1517 = vmatprep.subr.mxu0 0.0
    %1518 = vmatpush1.msra.mxu0 0.0
    %1519 = vmatprep.subr.mxu0 0.0
    %1520 = vmatpush1.msra.mxu0 0.0
    %1521 = vmatprep.subr.mxu0 0.0
    %1522 = vmatpush1.msra.mxu0 0.0
    %1523 = vmatprep.subr.mxu0 0.0
    %1524 = vmatpush1.msra.mxu0 0.0
    %1525 = vmatprep.subr.mxu0 0.0
    %1526 = vmatpush1.msra.mxu0 0.0
    %1527 = vmatprep.subr.mxu0 0.0
    %1528 = vmatpush1.msra.mxu0 0.0
    %1529 = vmatprep.subr.mxu0 0.0
    %1530 = vmatpush1.msra.mxu0 0.0
    %1531 = vmatprep.subr.mxu0 0.0
    %1532 = vmatpush1.msra.mxu0 0.0
    %1533 = vmatprep.subr.mxu0 0.0
    %1534 = vmatpush1.msra.mxu0 0.0
    %1535 = vmatprep.subr.mxu0 0.0
    %1536 = vmatpush1.msra.mxu0 0.0
    %1537 = vmatprep.subr.mxu0 0.0
    %1538 = vmatpush1.msra.mxu0 0.0
    %1539 = vmatprep.subr.mxu0 0.0
    %1540 = vmatpush1.msra.mxu0 0.0
    %1541 = vmatprep.mubr.f32.mxu0 0.0
    %v1542 = vand.u32 %v1061, 4294901760
    %1543 = vmatmul.mubr.f32.gmra.mrb[0].mxu0 %v1542
    %v1544 = vpop.f32.mrb[0].mxu0
    %v1545 = vadd.f32 %v1470, %v1544
    %v1546 = vpop.f32.mrb[0].mxu0
    %1547 = vdwg.mxu0
    %v1549 = vsel %vm582, %v1057, 0
    %1551 = vmatprep.subr.mxu0 0.0
    %v1552 = vand.u32 %v85, 4294901760
    %1553 = vmatpush1.msra.mxu0 %v1552
    %1554 = vmatprep.subr.mxu0 0.0
    %1555 = vmatpush1.msra.mxu0 0.0
    %1556 = vmatprep.subr.mxu0 0.0
    %1557 = vmatpush1.msra.mxu0 0.0
    %1558 = vmatprep.subr.mxu0 0.0
    %1559 = vmatpush1.msra.mxu0 0.0
    %1560 = vmatprep.subr.mxu0 0.0
    %1561 = vmatpush1.msra.mxu0 0.0
    %1562 = vmatprep.subr.mxu0 0.0
    %1563 = vmatpush1.msra.mxu0 0.0
    %1564 = vmatprep.subr.mxu0 0.0
    %1565 = vmatpush1.msra.mxu0 0.0
    %1566 = vmatprep.subr.mxu0 0.0
    %1567 = vmatpush1.msra.mxu0 0.0
    %1568 = vmatprep.subr.mxu0 0.0
    %1569 = vmatpush1.msra.mxu0 0.0
    %1570 = vmatprep.subr.mxu0 0.0
    %1571 = vmatpush1.msra.mxu0 0.0
    %1572 = vmatprep.subr.mxu0 0.0
    %1573 = vmatpush1.msra.mxu0 0.0
    %1574 = vmatprep.subr.mxu0 0.0
    %1575 = vmatpush1.msra.mxu0 0.0
    %1576 = vmatprep.subr.mxu0 0.0
    %1577 = vmatpush1.msra.mxu0 0.0
    %1578 = vmatprep.subr.mxu0 0.0
    %1579 = vmatpush1.msra.mxu0 0.0
    %1580 = vmatprep.subr.mxu0 0.0
    %1581 = vmatpush1.msra.mxu0 0.0
    %1582 = vmatprep.subr.mxu0 0.0
    %1583 = vmatpush1.msra.mxu0 0.0
    %1584 = vmatprep.subr.mxu0 0.0
    %1585 = vmatpush1.msra.mxu0 0.0
    %1586 = vmatprep.subr.mxu0 0.0
    %1587 = vmatpush1.msra.mxu0 0.0
    %1588 = vmatprep.subr.mxu0 0.0
    %1589 = vmatpush1.msra.mxu0 0.0
    %1590 = vmatprep.subr.mxu0 0.0
    %1591 = vmatpush1.msra.mxu0 0.0
    %1592 = vmatprep.subr.mxu0 0.0
    %1593 = vmatpush1.msra.mxu0 0.0
    %1594 = vmatprep.subr.mxu0 0.0
    %1595 = vmatpush1.msra.mxu0 0.0
    %1596 = vmatprep.subr.mxu0 0.0
    %1597 = vmatpush1.msra.mxu0 0.0
    %1598 = vmatprep.subr.mxu0 0.0
    %1599 = vmatpush1.msra.mxu0 0.0
    %1600 = vmatprep.subr.mxu0 0.0
    %1601 = vmatpush1.msra.mxu0 0.0
    %1602 = vmatprep.subr.mxu0 0.0
    %1603 = vmatpush1.msra.mxu0 0.0
    %1604 = vmatprep.subr.mxu0 0.0
    %1605 = vmatpush1.msra.mxu0 0.0
    %1606 = vmatprep.subr.mxu0 0.0
    %1607 = vmatpush1.msra.mxu0 0.0
    %1608 = vmatprep.subr.mxu0 0.0
    %1609 = vmatpush1.msra.mxu0 0.0
    %1610 = vmatprep.subr.mxu0 0.0
    %1611 = vmatpush1.msra.mxu0 0.0
    %1612 = vmatprep.subr.mxu0 0.0
    %1613 = vmatpush1.msra.mxu0 0.0
    %1614 = vmatprep.subr.mxu0 0.0
    %1615 = vmatpush1.msra.mxu0 0.0
    %1616 = vmatprep.mubr.f32.mxu0 0.0
    %v1617 = vand.u32 %v1549, 4294901760
    %v1618 = vsub.f32 %v1549, %v1617
    %v1619 = vand.u32 %v1618, 4294901760
    %v1620 = vsub.f32 %v1618, %v1619
    %v1621 = vand.u32 %v1620, 4294901760
    %1622 = vmatmul.mubr.f32.gmra.mrb[0].mxu0 %v1621
    %v1623 = vpop.f32.mrb[0].mxu0
    %v1624 = vadd.f32 %v1545, %v1623
    %v1625 = vpop.f32.mrb[0].mxu0
    %1626 = vdwg.mxu0
    %1627 = vmatprep.subr.mxu0 0.0
    %v1628 = vand.u32 %v85, 4294901760
    %v1629 = vsub.f32 %v85, %v1628
    %v1630 = vand.u32 %v1629, 4294901760
    %v1631 = vsub.f32 %v1629, %v1630
    %v1632 = vand.u32 %v1631, 4294901760
    %1633 = vmatpush1.msra.mxu0 %v1632
    %1634 = vmatprep.subr.mxu0 0.0
    %1635 = vmatpush1.msra.mxu0 0.0
    %1636 = vmatprep.subr.mxu0 0.0
    %1637 = vmatpush1.msra.mxu0 0.0
    %1638 = vmatprep.subr.mxu0 0.0
    %1639 = vmatpush1.msra.mxu0 0.0
    %1640 = vmatprep.subr.mxu0 0.0
    %1641 = vmatpush1.msra.mxu0 0.0
    %1642 = vmatprep.subr.mxu0 0.0
    %1643 = vmatpush1.msra.mxu0 0.0
    %1644 = vmatprep.subr.mxu0 0.0
    %1645 = vmatpush1.msra.mxu0 0.0
    %1646 = vmatprep.subr.mxu0 0.0
    %1647 = vmatpush1.msra.mxu0 0.0
    %1648 = vmatprep.subr.mxu0 0.0
    %1649 = vmatpush1.msra.mxu0 0.0
    %1650 = vmatprep.subr.mxu0 0.0
    %1651 = vmatpush1.msra.mxu0 0.0
    %1652 = vmatprep.subr.mxu0 0.0
    %1653 = vmatpush1.msra.mxu0 0.0
    %1654 = vmatprep.subr.mxu0 0.0
    %1655 = vmatpush1.msra.mxu0 0.0
    %1656 = vmatprep.subr.mxu0 0.0
    %1657 = vmatpush1.msra.mxu0 0.0
    %1658 = vmatprep.subr.mxu0 0.0
    %1659 = vmatpush1.msra.mxu0 0.0
    %1660 = vmatprep.subr.mxu0 0.0
    %1661 = vmatpush1.msra.mxu0 0.0
    %1662 = vmatprep.subr.mxu0 0.0
    %1663 = vmatpush1.msra.mxu0 0.0
    %1664 = vmatprep.subr.mxu0 0.0
    %1665 = vmatpush1.msra.mxu0 0.0
    %1666 = vmatprep.subr.mxu0 0.0
    %1667 = vmatpush1.msra.mxu0 0.0
    %1668 = vmatprep.subr.mxu0 0.0
    %1669 = vmatpush1.msra.mxu0 0.0
    %1670 = vmatprep.subr.mxu0 0.0
    %1671 = vmatpush1.msra.mxu0 0.0
    %1672 = vmatprep.subr.mxu0 0.0
    %1673 = vmatpush1.msra.mxu0 0.0
    %1674 = vmatprep.subr.mxu0 0.0
    %1675 = vmatpush1.msra.mxu0 0.0
    %1676 = vmatprep.subr.mxu0 0.0
    %1677 = vmatpush1.msra.mxu0 0.0
    %1678 = vmatprep.subr.mxu0 0.0
    %1679 = vmatpush1.msra.mxu0 0.0
    %1680 = vmatprep.subr.mxu0 0.0
    %1681 = vmatpush1.msra.mxu0 0.0
    %1682 = vmatprep.subr.mxu0 0.0
    %1683 = vmatpush1.msra.mxu0 0.0
    %1684 = vmatprep.subr.mxu0 0.0
    %1685 = vmatpush1.msra.mxu0 0.0
    %1686 = vmatprep.subr.mxu0 0.0
    %1687 = vmatpush1.msra.mxu0 0.0
    %1688 = vmatprep.subr.mxu0 0.0
    %1689 = vmatpush1.msra.mxu0 0.0
    %1690 = vmatprep.subr.mxu0 0.0
    %1691 = vmatpush1.msra.mxu0 0.0
    %1692 = vmatprep.subr.mxu0 0.0
    %1693 = vmatpush1.msra.mxu0 0.0
    %1694 = vmatprep.subr.mxu0 0.0
    %1695 = vmatpush1.msra.mxu0 0.0
    %1696 = vmatprep.mubr.f32.mxu0 0.0
    %v1697 = vand.u32 %v1549, 4294901760
    %1698 = vmatmul.mubr.f32.gmra.mrb[0].mxu0 %v1697
    %v1699 = vpop.f32.mrb[0].mxu0
    %v1700 = vadd.f32 %v1624, %v1699
    %v1701 = vpop.f32.mrb[0].mxu0
    %1702 = vdwg.mxu0
    %1703 = vmatprep.subr.mxu0 0.0
    %v1704 = vand.u32 %v85, 4294901760
    %v1705 = vsub.f32 %v85, %v1704
    %1706 = vmatpush1.msra.mxu0 %v1705
    %1707 = vmatprep.subr.mxu0 0.0
    %1708 = vmatpush1.msra.mxu0 0.0
    %1709 = vmatprep.subr.mxu0 0.0
    %1710 = vmatpush1.msra.mxu0 0.0
    %1711 = vmatprep.subr.mxu0 0.0
    %1712 = vmatpush1.msra.mxu0 0.0
    %1713 = vmatprep.subr.mxu0 0.0
    %1714 = vmatpush1.msra.mxu0 0.0
    %1715 = vmatprep.subr.mxu0 0.0
    %1716 = vmatpush1.msra.mxu0 0.0
    %1717 = vmatprep.subr.mxu0 0.0
    %1718 = vmatpush1.msra.mxu0 0.0
    %1719 = vmatprep.subr.mxu0 0.0
    %1720 = vmatpush1.msra.mxu0 0.0
    %1721 = vmatprep.subr.mxu0 0.0
    %1722 = vmatpush1.msra.mxu0 0.0
    %1723 = vmatprep.subr.mxu0 0.0
    %1724 = vmatpush1.msra.mxu0 0.0
    %1725 = vmatprep.subr.mxu0 0.0
    %1726 = vmatpush1.msra.mxu0 0.0
    %1727 = vmatprep.subr.mxu0 0.0
    %1728 = vmatpush1.msra.mxu0 0.0
    %1729 = vmatprep.subr.mxu0 0.0
    %1730 = vmatpush1.msra.mxu0 0.0
    %1731 = vmatprep.subr.mxu0 0.0
    %1732 = vmatpush1.msra.mxu0 0.0
    %1733 = vmatprep.subr.mxu0 0.0
    %1734 = vmatpush1.msra.mxu0 0.0
    %1735 = vmatprep.subr.mxu0 0.0
    %1736 = vmatpush1.msra.mxu0 0.0
    %1737 = vmatprep.subr.mxu0 0.0
    %1738 = vmatpush1.msra.mxu0 0.0
    %1739 = vmatprep.subr.mxu0 0.0
    %1740 = vmatpush1.msra.mxu0 0.0
    %1741 = vmatprep.subr.mxu0 0.0
    %1742 = vmatpush1.msra.mxu0 0.0
    %1743 = vmatprep.subr.mxu0 0.0
    %1744 = vmatpush1.msra.mxu0 0.0
    %1745 = vmatprep.subr.mxu0 0.0
    %1746 = vmatpush1.msra.mxu0 0.0
    %1747 = vmatprep.subr.mxu0 0.0
    %1748 = vmatpush1.msra.mxu0 0.0
    %1749 = vmatprep.subr.mxu0 0.0
    %1750 = vmatpush1.msra.mxu0 0.0
    %1751 = vmatprep.subr.mxu0 0.0
    %1752 = vmatpush1.msra.mxu0 0.0
    %1753 = vmatprep.subr.mxu0 0.0
    %1754 = vmatpush1.msra.mxu0 0.0
    %1755 = vmatprep.subr.mxu0 0.0
    %1756 = vmatpush1.msra.mxu0 0.0
    %1757 = vmatprep.subr.mxu0 0.0
    %1758 = vmatpush1.msra.mxu0 0.0
    %1759 = vmatprep.subr.mxu0 0.0
    %1760 = vmatpush1.msra.mxu0 0.0
    %1761 = vmatprep.subr.mxu0 0.0
    %1762 = vmatpush1.msra.mxu0 0.0
    %1763 = vmatprep.subr.mxu0 0.0
    %1764 = vmatpush1.msra.mxu0 0.0
    %1765 = vmatprep.subr.mxu0 0.0
    %1766 = vmatpush1.msra.mxu0 0.0
    %1767 = vmatprep.subr.mxu0 0.0
    %1768 = vmatpush1.msra.mxu0 0.0
    %1769 = vmatprep.mubr.f32.mxu0 0.0
    %v1770 = vand.u32 %v1549, 4294901760
    %v1771 = vsub.f32 %v1549, %v1770
    %1772 = vmatmul.mubr.f32.gmra.mrb[0].mxu0 %v1771
    %v1773 = vpop.f32.mrb[0].mxu0
    %v1774 = vadd.f32 %v1700, %v1773
    %v1775 = vpop.f32.mrb[0].mxu0
    %1776 = vdwg.mxu0
    %1777 = vmatprep.subr.mxu0 0.0
    %v1778 = vand.u32 %v85, 4294901760
    %1779 = vmatpush1.msra.mxu0 %v1778
    %1780 = vmatprep.subr.mxu0 0.0
    %1781 = vmatpush1.msra.mxu0 0.0
    %1782 = vmatprep.subr.mxu0 0.0
    %1783 = vmatpush1.msra.mxu0 0.0
    %1784 = vmatprep.subr.mxu0 0.0
    %1785 = vmatpush1.msra.mxu0 0.0
    %1786 = vmatprep.subr.mxu0 0.0
    %1787 = vmatpush1.msra.mxu0 0.0
    %1788 = vmatprep.subr.mxu0 0.0
    %1789 = vmatpush1.msra.mxu0 0.0
    %1790 = vmatprep.subr.mxu0 0.0
    %1791 = vmatpush1.msra.mxu0 0.0
    %1792 = vmatprep.subr.mxu0 0.0
    %1793 = vmatpush1.msra.mxu0 0.0
    %1794 = vmatprep.subr.mxu0 0.0
    %1795 = vmatpush1.msra.mxu0 0.0
    %1796 = vmatprep.subr.mxu0 0.0
    %1797 = vmatpush1.msra.mxu0 0.0
    %1798 = vmatprep.subr.mxu0 0.0
    %1799 = vmatpush1.msra.mxu0 0.0
    %1800 = vmatprep.subr.mxu0 0.0
    %1801 = vmatpush1.msra.mxu0 0.0
    %1802 = vmatprep.subr.mxu0 0.0
    %1803 = vmatpush1.msra.mxu0 0.0
    %1804 = vmatprep.subr.mxu0 0.0
    %1805 = vmatpush1.msra.mxu0 0.0
    %1806 = vmatprep.subr.mxu0 0.0
    %1807 = vmatpush1.msra.mxu0 0.0
    %1808 = vmatprep.subr.mxu0 0.0
    %1809 = vmatpush1.msra.mxu0 0.0
    %1810 = vmatprep.subr.mxu0 0.0
    %1811 = vmatpush1.msra.mxu0 0.0
    %1812 = vmatprep.subr.mxu0 0.0
    %1813 = vmatpush1.msra.mxu0 0.0
    %1814 = vmatprep.subr.mxu0 0.0
    %1815 = vmatpush1.msra.mxu0 0.0
    %1816 = vmatprep.subr.mxu0 0.0
    %1817 = vmatpush1.msra.mxu0 0.0
    %1818 = vmatprep.subr.mxu0 0.0
    %1819 = vmatpush1.msra.mxu0 0.0
    %1820 = vmatprep.subr.mxu0 0.0
    %1821 = vmatpush1.msra.mxu0 0.0
    %1822 = vmatprep.subr.mxu0 0.0
    %1823 = vmatpush1.msra.mxu0 0.0
    %1824 = vmatprep.subr.mxu0 0.0
    %1825 = vmatpush1.msra.mxu0 0.0
    %1826 = vmatprep.subr.mxu0 0.0
    %1827 = vmatpush1.msra.mxu0 0.0
    %1828 = vmatprep.subr.mxu0 0.0
    %1829 = vmatpush1.msra.mxu0 0.0
    %1830 = vmatprep.subr.mxu0 0.0
    %1831 = vmatpush1.msra.mxu0 0.0
    %1832 = vmatprep.subr.mxu0 0.0
    %1833 = vmatpush1.msra.mxu0 0.0
    %1834 = vmatprep.subr.mxu0 0.0
    %1835 = vmatpush1.msra.mxu0 0.0
    %1836 = vmatprep.subr.mxu0 0.0
    %1837 = vmatpush1.msra.mxu0 0.0
    %1838 = vmatprep.subr.mxu0 0.0
    %1839 = vmatpush1.msra.mxu0 0.0
    %1840 = vmatprep.subr.mxu0 0.0
    %1841 = vmatpush1.msra.mxu0 0.0
    %1842 = vmatprep.mubr.f32.mxu0 0.0
    %v1843 = vand.u32 %v1549, 4294901760
    %v1844 = vsub.f32 %v1549, %v1843
    %v1845 = vand.u32 %v1844, 4294901760
    %1846 = vmatmul.mubr.f32.gmra.mrb[0].mxu0 %v1845
    %v1847 = vpop.f32.mrb[0].mxu0
    %v1848 = vadd.f32 %v1774, %v1847
    %v1849 = vpop.f32.mrb[0].mxu0
    %1850 = vdwg.mxu0
    %1851 = vmatprep.subr.mxu0 0.0
    %v1852 = vand.u32 %v85, 4294901760
    %v1853 = vsub.f32 %v85, %v1852
    %v1854 = vand.u32 %v1853, 4294901760
    %1855 = vmatpush1.msra.mxu0 %v1854
    %1856 = vmatprep.subr.mxu0 0.0
    %1857 = vmatpush1.msra.mxu0 0.0
    %1858 = vmatprep.subr.mxu0 0.0
    %1859 = vmatpush1.msra.mxu0 0.0
    %1860 = vmatprep.subr.mxu0 0.0
    %1861 = vmatpush1.msra.mxu0 0.0
    %1862 = vmatprep.subr.mxu0 0.0
    %1863 = vmatpush1.msra.mxu0 0.0
    %1864 = vmatprep.subr.mxu0 0.0
    %1865 = vmatpush1.msra.mxu0 0.0
    %1866 = vmatprep.subr.mxu0 0.0
    %1867 = vmatpush1.msra.mxu0 0.0
    %1868 = vmatprep.subr.mxu0 0.0
    %1869 = vmatpush1.msra.mxu0 0.0
    %1870 = vmatprep.subr.mxu0 0.0
    %1871 = vmatpush1.msra.mxu0 0.0
    %1872 = vmatprep.subr.mxu0 0.0
    %1873 = vmatpush1.msra.mxu0 0.0
    %1874 = vmatprep.subr.mxu0 0.0
    %1875 = vmatpush1.msra.mxu0 0.0
    %1876 = vmatprep.subr.mxu0 0.0
    %1877 = vmatpush1.msra.mxu0 0.0
    %1878 = vmatprep.subr.mxu0 0.0
    %1879 = vmatpush1.msra.mxu0 0.0
    %1880 = vmatprep.subr.mxu0 0.0
    %1881 = vmatpush1.msra.mxu0 0.0
    %1882 = vmatprep.subr.mxu0 0.0
    %1883 = vmatpush1.msra.mxu0 0.0
    %1884 = vmatprep.subr.mxu0 0.0
    %1885 = vmatpush1.msra.mxu0 0.0
    %1886 = vmatprep.subr.mxu0 0.0
    %1887 = vmatpush1.msra.mxu0 0.0
    %1888 = vmatprep.subr.mxu0 0.0
    %1889 = vmatpush1.msra.mxu0 0.0
    %1890 = vmatprep.subr.mxu0 0.0
    %1891 = vmatpush1.msra.mxu0 0.0
    %1892 = vmatprep.subr.mxu0 0.0
    %1893 = vmatpush1.msra.mxu0 0.0
    %1894 = vmatprep.subr.mxu0 0.0
    %1895 = vmatpush1.msra.mxu0 0.0
    %1896 = vmatprep.subr.mxu0 0.0
    %1897 = vmatpush1.msra.mxu0 0.0
    %1898 = vmatprep.subr.mxu0 0.0
    %1899 = vmatpush1.msra.mxu0 0.0
    %1900 = vmatprep.subr.mxu0 0.0
    %1901 = vmatpush1.msra.mxu0 0.0
    %1902 = vmatprep.subr.mxu0 0.0
    %1903 = vmatpush1.msra.mxu0 0.0
    %1904 = vmatprep.subr.mxu0 0.0
    %1905 = vmatpush1.msra.mxu0 0.0
    %1906 = vmatprep.subr.mxu0 0.0
    %1907 = vmatpush1.msra.mxu0 0.0
    %1908 = vmatprep.subr.mxu0 0.0
    %1909 = vmatpush1.msra.mxu0 0.0
    %1910 = vmatprep.subr.mxu0 0.0
    %1911 = vmatpush1.msra.mxu0 0.0
    %1912 = vmatprep.subr.mxu0 0.0
    %1913 = vmatpush1.msra.mxu0 0.0
    %1914 = vmatprep.subr.mxu0 0.0
    %1915 = vmatpush1.msra.mxu0 0.0
    %1916 = vmatprep.subr.mxu0 0.0
    %1917 = vmatpush1.msra.mxu0 0.0
    %1918 = vmatprep.mubr.f32.mxu0 0.0
    %v1919 = vand.u32 %v1549, 4294901760
    %1920 = vmatmul.mubr.f32.gmra.mrb[0].mxu0 %v1919
    %v1921 = vpop.f32.mrb[0].mxu0
    %v1922 = vadd.f32 %v1848, %v1921
    %v1923 = vpop.f32.mrb[0].mxu0
    %1924 = vdwg.mxu0
    %1925 = vmatprep.subr.mxu0 0.0
    %v1926 = vand.u32 %v85, 4294901760
    %1927 = vmatpush1.msra.mxu0 %v1926
    %1928 = vmatprep.subr.mxu0 0.0
    %1929 = vmatpush1.msra.mxu0 0.0
    %1930 = vmatprep.subr.mxu0 0.0
    %1931 = vmatpush1.msra.mxu0 0.0
    %1932 = vmatprep.subr.mxu0 0.0
    %1933 = vmatpush1.msra.mxu0 0.0
    %1934 = vmatprep.subr.mxu0 0.0
    %1935 = vmatpush1.msra.mxu0 0.0
    %1936 = vmatprep.subr.mxu0 0.0
    %1937 = vmatpush1.msra.mxu0 0.0
    %1938 = vmatprep.subr.mxu0 0.0
    %1939 = vmatpush1.msra.mxu0 0.0
    %1940 = vmatprep.subr.mxu0 0.0
    %1941 = vmatpush1.msra.mxu0 0.0
    %1942 = vmatprep.subr.mxu0 0.0
    %1943 = vmatpush1.msra.mxu0 0.0
    %1944 = vmatprep.subr.mxu0 0.0
    %1945 = vmatpush1.msra.mxu0 0.0
    %1946 = vmatprep.subr.mxu0 0.0
    %1947 = vmatpush1.msra.mxu0 0.0
    %1948 = vmatprep.subr.mxu0 0.0
    %1949 = vmatpush1.msra.mxu0 0.0
    %1950 = vmatprep.subr.mxu0 0.0
    %1951 = vmatpush1.msra.mxu0 0.0
    %1952 = vmatprep.subr.mxu0 0.0
    %1953 = vmatpush1.msra.mxu0 0.0
    %1954 = vmatprep.subr.mxu0 0.0
    %1955 = vmatpush1.msra.mxu0 0.0
    %1956 = vmatprep.subr.mxu0 0.0
    %1957 = vmatpush1.msra.mxu0 0.0
    %1958 = vmatprep.subr.mxu0 0.0
    %1959 = vmatpush1.msra.mxu0 0.0
    %1960 = vmatprep.subr.mxu0 0.0
    %1961 = vmatpush1.msra.mxu0 0.0
    %1962 = vmatprep.subr.mxu0 0.0
    %1963 = vmatpush1.msra.mxu0 0.0
    %1964 = vmatprep.subr.mxu0 0.0
    %1965 = vmatpush1.msra.mxu0 0.0
    %1966 = vmatprep.subr.mxu0 0.0
    %1967 = vmatpush1.msra.mxu0 0.0
    %1968 = vmatprep.subr.mxu0 0.0
    %1969 = vmatpush1.msra.mxu0 0.0
    %1970 = vmatprep.subr.mxu0 0.0
    %1971 = vmatpush1.msra.mxu0 0.0
    %1972 = vmatprep.subr.mxu0 0.0
    %1973 = vmatpush1.msra.mxu0 0.0
    %1974 = vmatprep.subr.mxu0 0.0
    %1975 = vmatpush1.msra.mxu0 0.0
    %1976 = vmatprep.subr.mxu0 0.0
    %1977 = vmatpush1.msra.mxu0 0.0
    %1978 = vmatprep.subr.mxu0 0.0
    %1979 = vmatpush1.msra.mxu0 0.0
    %1980 = vmatprep.subr.mxu0 0.0
    %1981 = vmatpush1.msra.mxu0 0.0
    %1982 = vmatprep.subr.mxu0 0.0
    %1983 = vmatpush1.msra.mxu0 0.0
    %1984 = vmatprep.subr.mxu0 0.0
    %1985 = vmatpush1.msra.mxu0 0.0
    %1986 = vmatprep.subr.mxu0 0.0
    %1987 = vmatpush1.msra.mxu0 0.0
    %1988 = vmatprep.subr.mxu0 0.0
    %1989 = vmatpush1.msra.mxu0 0.0
    %1990 = vmatprep.mubr.f32.mxu0 0.0
    %v1991 = vand.u32 %v1549, 4294901760
    %1992 = vmatmul.mubr.f32.gmra.mrb[0].mxu0 %v1991
    %v1993 = vpop.f32.mrb[0].mxu0
    %v1994 = vadd.f32 %v1922, %v1993
    %v1995 = vpop.f32.mrb[0].mxu0
    %1996 = vdwg.mxu0
    %v1997 = vtanh.pop %v1994
    %v1998 = vmul.f32 %v1997, 0.5
    %v1999 = vadd.f32 %v1998, 0.5
    %v2000 = vmul.f32 %v1999, %v1049
    %2002 = vrot.lane.b32.xlu0 %v1997, 32
    %v2003 = vpop.permute.xlu0 %2002
    %v2005 = vmul.f32 %v1999, %v2003
    %2007 = vrot.lane.b32.xlu0 %v2005, 32
    %v2008 = vpop.permute.xlu0 %2007
    %v2010 = vadd.f32 %v2000, %v2008
    %v2011 = vtanh.pop %v2010
    %2013 = vrot.lane.b32.xlu0 %v2011, 32
    %v2014 = vpop.permute.xlu0 %2013
    %v2016 = vmul.f32 %v1999, %v2014
    %s2017 = scalar_lea.vmem [#allocation6], 8
    %v2018 = vld [vmem:[%s2017] sm:$0xf]
    %2020 = vrot.lane.b32.xlu0 %v2016, 64
    %v2021 = vpop.permute.xlu0 %2020
    %v2022 = vsel %vm93, %v2021, 0
    %2024 = vmatprep.subr.mxu0 0.0
    %v2025 = vand.u32 %v86, 4294901760
    %2026 = vmatpush1.msra.mxu0 %v2025
    %2027 = vmatprep.subr.mxu0 0.0
    %v2028 = vand.u32 %v87, 4294901760
    %2029 = vmatpush1.msra.mxu0 %v2028
    %2030 = vmatprep.subr.mxu0 0.0
    %v2031 = vand.u32 %v88, 4294901760
    %2032 = vmatpush1.msra.mxu0 %v2031
    %2033 = vmatprep.subr.mxu0 0.0
    %v2034 = vand.u32 %v89, 4294901760
    %2035 = vmatpush1.msra.mxu0 %v2034
    %2036 = vmatprep.subr.mxu0 0.0
    %2037 = vmatpush1.msra.mxu0 0.0
    %2038 = vmatprep.subr.mxu0 0.0
    %2039 = vmatpush1.msra.mxu0 0.0
    %2040 = vmatprep.subr.mxu0 0.0
    %2041 = vmatpush1.msra.mxu0 0.0
    %2042 = vmatprep.subr.mxu0 0.0
    %2043 = vmatpush1.msra.mxu0 0.0
    %2044 = vmatprep.subr.mxu0 0.0
    %2045 = vmatpush1.msra.mxu0 0.0
    %2046 = vmatprep.subr.mxu0 0.0
    %2047 = vmatpush1.msra.mxu0 0.0
    %2048 = vmatprep.subr.mxu0 0.0
    %2049 = vmatpush1.msra.mxu0 0.0
    %2050 = vmatprep.subr.mxu0 0.0
    %2051 = vmatpush1.msra.mxu0 0.0
    %2052 = vmatprep.subr.mxu0 0.0
    %2053 = vmatpush1.msra.mxu0 0.0
    %2054 = vmatprep.subr.mxu0 0.0
    %2055 = vmatpush1.msra.mxu0 0.0
    %2056 = vmatprep.subr.mxu0 0.0
    %2057 = vmatpush1.msra.mxu0 0.0
    %2058 = vmatprep.subr.mxu0 0.0
    %2059 = vmatpush1.msra.mxu0 0.0
    %2060 = vmatprep.subr.mxu0 0.0
    %2061 = vmatpush1.msra.mxu0 0.0
    %2062 = vmatprep.subr.mxu0 0.0
    %2063 = vmatpush1.msra.mxu0 0.0
    %2064 = vmatprep.subr.mxu0 0.0
    %2065 = vmatpush1.msra.mxu0 0.0
    %2066 = vmatprep.subr.mxu0 0.0
    %2067 = vmatpush1.msra.mxu0 0.0
    %2068 = vmatprep.subr.mxu0 0.0
    %2069 = vmatpush1.msra.mxu0 0.0
    %2070 = vmatprep.subr.mxu0 0.0
    %2071 = vmatpush1.msra.mxu0 0.0
    %2072 = vmatprep.subr.mxu0 0.0
    %2073 = vmatpush1.msra.mxu0 0.0
    %2074 = vmatprep.subr.mxu0 0.0
    %2075 = vmatpush1.msra.mxu0 0.0
    %2076 = vmatprep.subr.mxu0 0.0
    %2077 = vmatpush1.msra.mxu0 0.0
    %2078 = vmatprep.subr.mxu0 0.0
    %2079 = vmatpush1.msra.mxu0 0.0
    %2080 = vmatprep.subr.mxu0 0.0
    %2081 = vmatpush1.msra.mxu0 0.0
    %2082 = vmatprep.subr.mxu0 0.0
    %2083 = vmatpush1.msra.mxu0 0.0
    %2084 = vmatprep.subr.mxu0 0.0
    %2085 = vmatpush1.msra.mxu0 0.0
    %2086 = vmatprep.subr.mxu0 0.0
    %2087 = vmatpush1.msra.mxu0 0.0
    %2088 = vmatprep.subr.mxu0 0.0
    %2089 = vmatpush1.msra.mxu0 0.0
    %2090 = vmatprep.subr.mxu0 0.0
    %2091 = vmatpush1.msra.mxu0 0.0
    %2092 = vmatprep.mubr.f32.mxu0 0.0
    %v2093 = vand.u32 %v2022, 4294901760
    %v2094 = vsub.f32 %v2022, %v2093
    %v2095 = vand.u32 %v2094, 4294901760
    %v2096 = vsub.f32 %v2094, %v2095
    %v2097 = vand.u32 %v2096, 4294901760
    %2098 = vmatmul.mubr.f32.gmra.mrb[0].mxu0 %v2097
    %v2099 = vpop.f32.mrb[0].mxu0
    %v2100 = vadd.f32 0.0, %v2099
    %v2101 = vpop.f32.mrb[0].mxu0
    %2102 = vdwg.mxu0
    %2103 = vmatprep.subr.mxu0 0.0
    %v2104 = vand.u32 %v86, 4294901760
    %v2105 = vsub.f32 %v86, %v2104
    %v2106 = vand.u32 %v2105, 4294901760
    %v2107 = vsub.f32 %v2105, %v2106
    %v2108 = vand.u32 %v2107, 4294901760
    %2109 = vmatpush1.msra.mxu0 %v2108
    %2110 = vmatprep.subr.mxu0 0.0
    %v2111 = vand.u32 %v87, 4294901760
    %v2112 = vsub.f32 %v87, %v2111
    %v2113 = vand.u32 %v2112, 4294901760
    %v2114 = vsub.f32 %v2112, %v2113
    %v2115 = vand.u32 %v2114, 4294901760
    %2116 = vmatpush1.msra.mxu0 %v2115
    %2117 = vmatprep.subr.mxu0 0.0
    %v2118 = vand.u32 %v88, 4294901760
    %v2119 = vsub.f32 %v88, %v2118
    %v2120 = vand.u32 %v2119, 4294901760
    %v2121 = vsub.f32 %v2119, %v2120
    %v2122 = vand.u32 %v2121, 4294901760
    %2123 = vmatpush1.msra.mxu0 %v2122
    %2124 = vmatprep.subr.mxu0 0.0
    %v2125 = vand.u32 %v89, 4294901760
    %v2126 = vsub.f32 %v89, %v2125
    %v2127 = vand.u32 %v2126, 4294901760
    %v2128 = vsub.f32 %v2126, %v2127
    %v2129 = vand.u32 %v2128, 4294901760
    %2130 = vmatpush1.msra.mxu0 %v2129
    %2131 = vmatprep.subr.mxu0 0.0
    %2132 = vmatpush1.msra.mxu0 0.0
    %2133 = vmatprep.subr.mxu0 0.0
    %2134 = vmatpush1.msra.mxu0 0.0
    %2135 = vmatprep.subr.mxu0 0.0
    %2136 = vmatpush1.msra.mxu0 0.0
    %2137 = vmatprep.subr.mxu0 0.0
    %2138 = vmatpush1.msra.mxu0 0.0
    %2139 = vmatprep.subr.mxu0 0.0
    %2140 = vmatpush1.msra.mxu0 0.0
    %2141 = vmatprep.subr.mxu0 0.0
    %2142 = vmatpush1.msra.mxu0 0.0
    %2143 = vmatprep.subr.mxu0 0.0
    %2144 = vmatpush1.msra.mxu0 0.0
    %2145 = vmatprep.subr.mxu0 0.0
    %2146 = vmatpush1.msra.mxu0 0.0
    %2147 = vmatprep.subr.mxu0 0.0
    %2148 = vmatpush1.msra.mxu0 0.0
    %2149 = vmatprep.subr.mxu0 0.0
    %2150 = vmatpush1.msra.mxu0 0.0
    %2151 = vmatprep.subr.mxu0 0.0
    %2152 = vmatpush1.msra.mxu0 0.0
    %2153 = vmatprep.subr.mxu0 0.0
    %2154 = vmatpush1.msra.mxu0 0.0
    %2155 = vmatprep.subr.mxu0 0.0
    %2156 = vmatpush1.msra.mxu0 0.0
    %2157 = vmatprep.subr.mxu0 0.0
    %2158 = vmatpush1.msra.mxu0 0.0
    %2159 = vmatprep.subr.mxu0 0.0
    %2160 = vmatpush1.msra.mxu0 0.0
    %2161 = vmatprep.subr.mxu0 0.0
    %2162 = vmatpush1.msra.mxu0 0.0
    %2163 = vmatprep.subr.mxu0 0.0
    %2164 = vmatpush1.msra.mxu0 0.0
    %2165 = vmatprep.subr.mxu0 0.0
    %2166 = vmatpush1.msra.mxu0 0.0
    %2167 = vmatprep.subr.mxu0 0.0
    %2168 = vmatpush1.msra.mxu0 0.0
    %2169 = vmatprep.subr.mxu0 0.0
    %2170 = vmatpush1.msra.mxu0 0.0
    %2171 = vmatprep.subr.mxu0 0.0
    %2172 = vmatpush1.msra.mxu0 0.0
    %2173 = vmatprep.subr.mxu0 0.0
    %2174 = vmatpush1.msra.mxu0 0.0
    %2175 = vmatprep.subr.mxu0 0.0
    %2176 = vmatpush1.msra.mxu0 0.0
    %2177 = vmatprep.subr.mxu0 0.0
    %2178 = vmatpush1.msra.mxu0 0.0
    %2179 = vmatprep.subr.mxu0 0.0
    %2180 = vmatpush1.msra.mxu0 0.0
    %2181 = vmatprep.subr.mxu0 0.0
    %2182 = vmatpush1.msra.mxu0 0.0
    %2183 = vmatprep.subr.mxu0 0.0
    %2184 = vmatpush1.msra.mxu0 0.0
    %2185 = vmatprep.subr.mxu0 0.0
    %2186 = vmatpush1.msra.mxu0 0.0
    %2187 = vmatprep.mubr.f32.mxu0 0.0
    %v2188 = vand.u32 %v2022, 4294901760
    %2189 = vmatmul.mubr.f32.gmra.mrb[0].mxu0 %v2188
    %v2190 = vpop.f32.mrb[0].mxu0
    %v2191 = vadd.f32 %v2100, %v2190
    %v2192 = vpop.f32.mrb[0].mxu0
    %2193 = vdwg.mxu0
    %2194 = vmatprep.subr.mxu0 0.0
    %v2195 = vand.u32 %v86, 4294901760
    %v2196 = vsub.f32 %v86, %v2195
    %2197 = vmatpush1.msra.mxu0 %v2196
    %2198 = vmatprep.subr.mxu0 0.0
    %v2199 = vand.u32 %v87, 4294901760
    %v2200 = vsub.f32 %v87, %v2199
    %2201 = vmatpush1.msra.mxu0 %v2200
    %2202 = vmatprep.subr.mxu0 0.0
    %v2203 = vand.u32 %v88, 4294901760
    %v2204 = vsub.f32 %v88, %v2203
    %2205 = vmatpush1.msra.mxu0 %v2204
    %2206 = vmatprep.subr.mxu0 0.0
    %v2207 = vand.u32 %v89, 4294901760
    %v2208 = vsub.f32 %v89, %v2207
    %2209 = vmatpush1.msra.mxu0 %v2208
    %2210 = vmatprep.subr.mxu0 0.0
    %2211 = vmatpush1.msra.mxu0 0.0
    %2212 = vmatprep.subr.mxu0 0.0
    %2213 = vmatpush1.msra.mxu0 0.0
    %2214 = vmatprep.subr.mxu0 0.0
    %2215 = vmatpush1.msra.mxu0 0.0
    %2216 = vmatprep.subr.mxu0 0.0
    %2217 = vmatpush1.msra.mxu0 0.0
    %2218 = vmatprep.subr.mxu0 0.0
    %2219 = vmatpush1.msra.mxu0 0.0
    %2220 = vmatprep.subr.mxu0 0.0
    %2221 = vmatpush1.msra.mxu0 0.0
    %2222 = vmatprep.subr.mxu0 0.0
    %2223 = vmatpush1.msra.mxu0 0.0
    %2224 = vmatprep.subr.mxu0 0.0
    %2225 = vmatpush1.msra.mxu0 0.0
    %2226 = vmatprep.subr.mxu0 0.0
    %2227 = vmatpush1.msra.mxu0 0.0
    %2228 = vmatprep.subr.mxu0 0.0
    %2229 = vmatpush1.msra.mxu0 0.0
    %2230 = vmatprep.subr.mxu0 0.0
    %2231 = vmatpush1.msra.mxu0 0.0
    %2232 = vmatprep.subr.mxu0 0.0
    %2233 = vmatpush1.msra.mxu0 0.0
    %2234 = vmatprep.subr.mxu0 0.0
    %2235 = vmatpush1.msra.mxu0 0.0
    %2236 = vmatprep.subr.mxu0 0.0
    %2237 = vmatpush1.msra.mxu0 0.0
    %2238 = vmatprep.subr.mxu0 0.0
    %2239 = vmatpush1.msra.mxu0 0.0
    %2240 = vmatprep.subr.mxu0 0.0
    %2241 = vmatpush1.msra.mxu0 0.0
    %2242 = vmatprep.subr.mxu0 0.0
    %2243 = vmatpush1.msra.mxu0 0.0
    %2244 = vmatprep.subr.mxu0 0.0
    %2245 = vmatpush1.msra.mxu0 0.0
    %2246 = vmatprep.subr.mxu0 0.0
    %2247 = vmatpush1.msra.mxu0 0.0
    %2248 = vmatprep.subr.mxu0 0.0
    %2249 = vmatpush1.msra.mxu0 0.0
    %2250 = vmatprep.subr.mxu0 0.0
    %2251 = vmatpush1.msra.mxu0 0.0
    %2252 = vmatprep.subr.mxu0 0.0
    %2253 = vmatpush1.msra.mxu0 0.0
    %2254 = vmatprep.subr.mxu0 0.0
    %2255 = vmatpush1.msra.mxu0 0.0
    %2256 = vmatprep.subr.mxu0 0.0
    %2257 = vmatpush1.msra.mxu0 0.0
    %2258 = vmatprep.subr.mxu0 0.0
    %2259 = vmatpush1.msra.mxu0 0.0
    %2260 = vmatprep.subr.mxu0 0.0
    %2261 = vmatpush1.msra.mxu0 0.0
    %2262 = vmatprep.subr.mxu0 0.0
    %2263 = vmatpush1.msra.mxu0 0.0
    %2264 = vmatprep.subr.mxu0 0.0
    %2265 = vmatpush1.msra.mxu0 0.0
    %2266 = vmatprep.mubr.f32.mxu0 0.0
    %v2267 = vand.u32 %v2022, 4294901760
    %v2268 = vsub.f32 %v2022, %v2267
    %2269 = vmatmul.mubr.f32.gmra.mrb[0].mxu0 %v2268
    %v2270 = vpop.f32.mrb[0].mxu0
    %v2271 = vadd.f32 %v2191, %v2270
    %v2272 = vpop.f32.mrb[0].mxu0
    %2273 = vdwg.mxu0
    %2274 = vmatprep.subr.mxu0 0.0
    %v2275 = vand.u32 %v86, 4294901760
    %2276 = vmatpush1.msra.mxu0 %v2275
    %2277 = vmatprep.subr.mxu0 0.0
    %v2278 = vand.u32 %v87, 4294901760
    %2279 = vmatpush1.msra.mxu0 %v2278
    %2280 = vmatprep.subr.mxu0 0.0
    %v2281 = vand.u32 %v88, 4294901760
    %2282 = vmatpush1.msra.mxu0 %v2281
    %2283 = vmatprep.subr.mxu0 0.0
    %v2284 = vand.u32 %v89, 4294901760
    %2285 = vmatpush1.msra.mxu0 %v2284
    %2286 = vmatprep.subr.mxu0 0.0
    %2287 = vmatpush1.msra.mxu0 0.0
    %2288 = vmatprep.subr.mxu0 0.0
    %2289 = vmatpush1.msra.mxu0 0.0
    %2290 = vmatprep.subr.mxu0 0.0
    %2291 = vmatpush1.msra.mxu0 0.0
    %2292 = vmatprep.subr.mxu0 0.0
    %2293 = vmatpush1.msra.mxu0 0.0
    %2294 = vmatprep.subr.mxu0 0.0
    %2295 = vmatpush1.msra.mxu0 0.0
    %2296 = vmatprep.subr.mxu0 0.0
    %2297 = vmatpush1.msra.mxu0 0.0
    %2298 = vmatprep.subr.mxu0 0.0
    %2299 = vmatpush1.msra.mxu0 0.0
    %2300 = vmatprep.subr.mxu0 0.0
    %2301 = vmatpush1.msra.mxu0 0.0
    %2302 = vmatprep.subr.mxu0 0.0
    %2303 = vmatpush1.msra.mxu0 0.0
    %2304 = vmatprep.subr.mxu0 0.0
    %2305 = vmatpush1.msra.mxu0 0.0
    %2306 = vmatprep.subr.mxu0 0.0
    %2307 = vmatpush1.msra.mxu0 0.0
    %2308 = vmatprep.subr.mxu0 0.0
    %2309 = vmatpush1.msra.mxu0 0.0
    %2310 = vmatprep.subr.mxu0 0.0
    %2311 = vmatpush1.msra.mxu0 0.0
    %2312 = vmatprep.subr.mxu0 0.0
    %2313 = vmatpush1.msra.mxu0 0.0
    %2314 = vmatprep.subr.mxu0 0.0
    %2315 = vmatpush1.msra.mxu0 0.0
    %2316 = vmatprep.subr.mxu0 0.0
    %2317 = vmatpush1.msra.mxu0 0.0
    %2318 = vmatprep.subr.mxu0 0.0
    %2319 = vmatpush1.msra.mxu0 0.0
    %2320 = vmatprep.subr.mxu0 0.0
    %2321 = vmatpush1.msra.mxu0 0.0
    %2322 = vmatprep.subr.mxu0 0.0
    %2323 = vmatpush1.msra.mxu0 0.0
    %2324 = vmatprep.subr.mxu0 0.0
    %2325 = vmatpush1.msra.mxu0 0.0
    %2326 = vmatprep.subr.mxu0 0.0
    %2327 = vmatpush1.msra.mxu0 0.0
    %2328 = vmatprep.subr.mxu0 0.0
    %2329 = vmatpush1.msra.mxu0 0.0
    %2330 = vmatprep.subr.mxu0 0.0
    %2331 = vmatpush1.msra.mxu0 0.0
    %2332 = vmatprep.subr.mxu0 0.0
    %2333 = vmatpush1.msra.mxu0 0.0
    %2334 = vmatprep.subr.mxu0 0.0
    %2335 = vmatpush1.msra.mxu0 0.0
    %2336 = vmatprep.subr.mxu0 0.0
    %2337 = vmatpush1.msra.mxu0 0.0
    %2338 = vmatprep.subr.mxu0 0.0
    %2339 = vmatpush1.msra.mxu0 0.0
    %2340 = vmatprep.subr.mxu0 0.0
    %2341 = vmatpush1.msra.mxu0 0.0
    %2342 = vmatprep.mubr.f32.mxu0 0.0
    %v2343 = vand.u32 %v2022, 4294901760
    %v2344 = vsub.f32 %v2022, %v2343
    %v2345 = vand.u32 %v2344, 4294901760
    %2346 = vmatmul.mubr.f32.gmra.mrb[0].mxu0 %v2345
    %v2347 = vpop.f32.mrb[0].mxu0
    %v2348 = vadd.f32 %v2271, %v2347
    %v2349 = vpop.f32.mrb[0].mxu0
    %2350 = vdwg.mxu0
    %2351 = vmatprep.subr.mxu0 0.0
    %v2352 = vand.u32 %v86, 4294901760
    %v2353 = vsub.f32 %v86, %v2352
    %v2354 = vand.u32 %v2353, 4294901760
    %2355 = vmatpush1.msra.mxu0 %v2354
    %2356 = vmatprep.subr.mxu0 0.0
    %v2357 = vand.u32 %v87, 4294901760
    %v2358 = vsub.f32 %v87, %v2357
    %v2359 = vand.u32 %v2358, 4294901760
    %2360 = vmatpush1.msra.mxu0 %v2359
    %2361 = vmatprep.subr.mxu0 0.0
    %v2362 = vand.u32 %v88, 4294901760
    %v2363 = vsub.f32 %v88, %v2362
    %v2364 = vand.u32 %v2363, 4294901760
    %2365 = vmatpush1.msra.mxu0 %v2364
    %2366 = vmatprep.subr.mxu0 0.0
    %v2367 = vand.u32 %v89, 4294901760
    %v2368 = vsub.f32 %v89, %v2367
    %v2369 = vand.u32 %v2368, 4294901760
    %2370 = vmatpush1.msra.mxu0 %v2369
    %2371 = vmatprep.subr.mxu0 0.0
    %2372 = vmatpush1.msra.mxu0 0.0
    %2373 = vmatprep.subr.mxu0 0.0
    %2374 = vmatpush1.msra.mxu0 0.0
    %2375 = vmatprep.subr.mxu0 0.0
    %2376 = vmatpush1.msra.mxu0 0.0
    %2377 = vmatprep.subr.mxu0 0.0
    %2378 = vmatpush1.msra.mxu0 0.0
    %2379 = vmatprep.subr.mxu0 0.0
    %2380 = vmatpush1.msra.mxu0 0.0
    %2381 = vmatprep.subr.mxu0 0.0
    %2382 = vmatpush1.msra.mxu0 0.0
    %2383 = vmatprep.subr.mxu0 0.0
    %2384 = vmatpush1.msra.mxu0 0.0
    %2385 = vmatprep.subr.mxu0 0.0
    %2386 = vmatpush1.msra.mxu0 0.0
    %2387 = vmatprep.subr.mxu0 0.0
    %2388 = vmatpush1.msra.mxu0 0.0
    %2389 = vmatprep.subr.mxu0 0.0
    %2390 = vmatpush1.msra.mxu0 0.0
    %2391 = vmatprep.subr.mxu0 0.0
    %2392 = vmatpush1.msra.mxu0 0.0
    %2393 = vmatprep.subr.mxu0 0.0
    %2394 = vmatpush1.msra.mxu0 0.0
    %2395 = vmatprep.subr.mxu0 0.0
    %2396 = vmatpush1.msra.mxu0 0.0
    %2397 = vmatprep.subr.mxu0 0.0
    %2398 = vmatpush1.msra.mxu0 0.0
    %2399 = vmatprep.subr.mxu0 0.0
    %2400 = vmatpush1.msra.mxu0 0.0
    %2401 = vmatprep.subr.mxu0 0.0
    %2402 = vmatpush1.msra.mxu0 0.0
    %2403 = vmatprep.subr.mxu0 0.0
    %2404 = vmatpush1.msra.mxu0 0.0
    %2405 = vmatprep.subr.mxu0 0.0
    %2406 = vmatpush1.msra.mxu0 0.0
    %2407 = vmatprep.subr.mxu0 0.0
    %2408 = vmatpush1.msra.mxu0 0.0
    %2409 = vmatprep.subr.mxu0 0.0
    %2410 = vmatpush1.msra.mxu0 0.0
    %2411 = vmatprep.subr.mxu0 0.0
    %2412 = vmatpush1.msra.mxu0 0.0
    %2413 = vmatprep.subr.mxu0 0.0
    %2414 = vmatpush1.msra.mxu0 0.0
    %2415 = vmatprep.subr.mxu0 0.0
    %2416 = vmatpush1.msra.mxu0 0.0
    %2417 = vmatprep.subr.mxu0 0.0
    %2418 = vmatpush1.msra.mxu0 0.0
    %2419 = vmatprep.subr.mxu0 0.0
    %2420 = vmatpush1.msra.mxu0 0.0
    %2421 = vmatprep.subr.mxu0 0.0
    %2422 = vmatpush1.msra.mxu0 0.0
    %2423 = vmatprep.subr.mxu0 0.0
    %2424 = vmatpush1.msra.mxu0 0.0
    %2425 = vmatprep.subr.mxu0 0.0
    %2426 = vmatpush1.msra.mxu0 0.0
    %2427 = vmatprep.mubr.f32.mxu0 0.0
    %v2428 = vand.u32 %v2022, 4294901760
    %2429 = vmatmul.mubr.f32.gmra.mrb[0].mxu0 %v2428
    %v2430 = vpop.f32.mrb[0].mxu0
    %v2431 = vadd.f32 %v2348, %v2430
    %v2432 = vpop.f32.mrb[0].mxu0
    %2433 = vdwg.mxu0
    %2434 = vmatprep.subr.mxu0 0.0
    %v2435 = vand.u32 %v86, 4294901760
    %2436 = vmatpush1.msra.mxu0 %v2435
    %2437 = vmatprep.subr.mxu0 0.0
    %v2438 = vand.u32 %v87, 4294901760
    %2439 = vmatpush1.msra.mxu0 %v2438
    %2440 = vmatprep.subr.mxu0 0.0
    %v2441 = vand.u32 %v88, 4294901760
    %2442 = vmatpush1.msra.mxu0 %v2441
    %2443 = vmatprep.subr.mxu0 0.0
    %v2444 = vand.u32 %v89, 4294901760
    %2445 = vmatpush1.msra.mxu0 %v2444
    %2446 = vmatprep.subr.mxu0 0.0
    %2447 = vmatpush1.msra.mxu0 0.0
    %2448 = vmatprep.subr.mxu0 0.0
    %2449 = vmatpush1.msra.mxu0 0.0
    %2450 = vmatprep.subr.mxu0 0.0
    %2451 = vmatpush1.msra.mxu0 0.0
    %2452 = vmatprep.subr.mxu0 0.0
    %2453 = vmatpush1.msra.mxu0 0.0
    %2454 = vmatprep.subr.mxu0 0.0
    %2455 = vmatpush1.msra.mxu0 0.0
    %2456 = vmatprep.subr.mxu0 0.0
    %2457 = vmatpush1.msra.mxu0 0.0
    %2458 = vmatprep.subr.mxu0 0.0
    %2459 = vmatpush1.msra.mxu0 0.0
    %2460 = vmatprep.subr.mxu0 0.0
    %2461 = vmatpush1.msra.mxu0 0.0
    %2462 = vmatprep.subr.mxu0 0.0
    %2463 = vmatpush1.msra.mxu0 0.0
    %2464 = vmatprep.subr.mxu0 0.0
    %2465 = vmatpush1.msra.mxu0 0.0
    %2466 = vmatprep.subr.mxu0 0.0
    %2467 = vmatpush1.msra.mxu0 0.0
    %2468 = vmatprep.subr.mxu0 0.0
    %2469 = vmatpush1.msra.mxu0 0.0
    %2470 = vmatprep.subr.mxu0 0.0
    %2471 = vmatpush1.msra.mxu0 0.0
    %2472 = vmatprep.subr.mxu0 0.0
    %2473 = vmatpush1.msra.mxu0 0.0
    %2474 = vmatprep.subr.mxu0 0.0
    %2475 = vmatpush1.msra.mxu0 0.0
    %2476 = vmatprep.subr.mxu0 0.0
    %2477 = vmatpush1.msra.mxu0 0.0
    %2478 = vmatprep.subr.mxu0 0.0
    %2479 = vmatpush1.msra.mxu0 0.0
    %2480 = vmatprep.subr.mxu0 0.0
    %2481 = vmatpush1.msra.mxu0 0.0
    %2482 = vmatprep.subr.mxu0 0.0
    %2483 = vmatpush1.msra.mxu0 0.0
    %2484 = vmatprep.subr.mxu0 0.0
    %2485 = vmatpush1.msra.mxu0 0.0
    %2486 = vmatprep.subr.mxu0 0.0
    %2487 = vmatpush1.msra.mxu0 0.0
    %2488 = vmatprep.subr.mxu0 0.0
    %2489 = vmatpush1.msra.mxu0 0.0
    %2490 = vmatprep.subr.mxu0 0.0
    %2491 = vmatpush1.msra.mxu0 0.0
    %2492 = vmatprep.subr.mxu0 0.0
    %2493 = vmatpush1.msra.mxu0 0.0
    %2494 = vmatprep.subr.mxu0 0.0
    %2495 = vmatpush1.msra.mxu0 0.0
    %2496 = vmatprep.subr.mxu0 0.0
    %2497 = vmatpush1.msra.mxu0 0.0
    %2498 = vmatprep.subr.mxu0 0.0
    %2499 = vmatpush1.msra.mxu0 0.0
    %2500 = vmatprep.subr.mxu0 0.0
    %2501 = vmatpush1.msra.mxu0 0.0
    %2502 = vmatprep.mubr.f32.mxu0 0.0
    %v2503 = vand.u32 %v2022, 4294901760
    %2504 = vmatmul.mubr.f32.gmra.mrb[0].mxu0 %v2503
    %v2505 = vpop.f32.mrb[0].mxu0
    %v2506 = vadd.f32 %v2431, %v2505
    %v2507 = vpop.f32.mrb[0].mxu0
    %2508 = vdwg.mxu0
    %v2510 = vsel %vm582, %v2018, 0
    %2512 = vmatprep.subr.mxu0 0.0
    %v2513 = vand.u32 %v85, 4294901760
    %2514 = vmatpush1.msra.mxu0 %v2513
    %2515 = vmatprep.subr.mxu0 0.0
    %2516 = vmatpush1.msra.mxu0 0.0
    %2517 = vmatprep.subr.mxu0 0.0
    %2518 = vmatpush1.msra.mxu0 0.0
    %2519 = vmatprep.subr.mxu0 0.0
    %2520 = vmatpush1.msra.mxu0 0.0
    %2521 = vmatprep.subr.mxu0 0.0
    %2522 = vmatpush1.msra.mxu0 0.0
    %2523 = vmatprep.subr.mxu0 0.0
    %2524 = vmatpush1.msra.mxu0 0.0
    %2525 = vmatprep.subr.mxu0 0.0
    %2526 = vmatpush1.msra.mxu0 0.0
    %2527 = vmatprep.subr.mxu0 0.0
    %2528 = vmatpush1.msra.mxu0 0.0
    %2529 = vmatprep.subr.mxu0 0.0
    %2530 = vmatpush1.msra.mxu0 0.0
    %2531 = vmatprep.subr.mxu0 0.0
    %2532 = vmatpush1.msra.mxu0 0.0
    %2533 = vmatprep.subr.mxu0 0.0
    %2534 = vmatpush1.msra.mxu0 0.0
    %2535 = vmatprep.subr.mxu0 0.0
    %2536 = vmatpush1.msra.mxu0 0.0
    %2537 = vmatprep.subr.mxu0 0.0
    %2538 = vmatpush1.msra.mxu0 0.0
    %2539 = vmatprep.subr.mxu0 0.0
    %2540 = vmatpush1.msra.mxu0 0.0
    %2541 = vmatprep.subr.mxu0 0.0
    %2542 = vmatpush1.msra.mxu0 0.0
    %2543 = vmatprep.subr.mxu0 0.0
    %2544 = vmatpush1.msra.mxu0 0.0
    %2545 = vmatprep.subr.mxu0 0.0
    %2546 = vmatpush1.msra.mxu0 0.0
    %2547 = vmatprep.subr.mxu0 0.0
    %2548 = vmatpush1.msra.mxu0 0.0
    %2549 = vmatprep.subr.mxu0 0.0
    %2550 = vmatpush1.msra.mxu0 0.0
    %2551 = vmatprep.subr.mxu0 0.0
    %2552 = vmatpush1.msra.mxu0 0.0
    %2553 = vmatprep.subr.mxu0 0.0
    %2554 = vmatpush1.msra.mxu0 0.0
    %2555 = vmatprep.subr.mxu0 0.0
    %2556 = vmatpush1.msra.mxu0 0.0
    %2557 = vmatprep.subr.mxu0 0.0
    %2558 = vmatpush1.msra.mxu0 0.0
    %2559 = vmatprep.subr.mxu0 0.0
    %2560 = vmatpush1.msra.mxu0 0.0
    %2561 = vmatprep.subr.mxu0 0.0
    %2562 = vmatpush1.msra.mxu0 0.0
    %2563 = vmatprep.subr.mxu0 0.0
    %2564 = vmatpush1.msra.mxu0 0.0
    %2565 = vmatprep.subr.mxu0 0.0
    %2566 = vmatpush1.msra.mxu0 0.0
    %2567 = vmatprep.subr.mxu0 0.0
    %2568 = vmatpush1.msra.mxu0 0.0
    %2569 = vmatprep.subr.mxu0 0.0
    %2570 = vmatpush1.msra.mxu0 0.0
    %2571 = vmatprep.subr.mxu0 0.0
    %2572 = vmatpush1.msra.mxu0 0.0
    %2573 = vmatprep.subr.mxu0 0.0
    %2574 = vmatpush1.msra.mxu0 0.0
    %2575 = vmatprep.subr.mxu0 0.0
    %2576 = vmatpush1.msra.mxu0 0.0
    %2577 = vmatprep.mubr.f32.mxu0 0.0
    %v2578 = vand.u32 %v2510, 4294901760
    %v2579 = vsub.f32 %v2510, %v2578
    %v2580 = vand.u32 %v2579, 4294901760
    %v2581 = vsub.f32 %v2579, %v2580
    %v2582 = vand.u32 %v2581, 4294901760
    %2583 = vmatmul.mubr.f32.gmra.mrb[0].mxu0 %v2582
    %v2584 = vpop.f32.mrb[0].mxu0
    %v2585 = vadd.f32 %v2506, %v2584
    %v2586 = vpop.f32.mrb[0].mxu0
    %2587 = vdwg.mxu0
    %2588 = vmatprep.subr.mxu0 0.0
    %v2589 = vand.u32 %v85, 4294901760
    %v2590 = vsub.f32 %v85, %v2589
    %v2591 = vand.u32 %v2590, 4294901760
    %v2592 = vsub.f32 %v2590, %v2591
    %v2593 = vand.u32 %v2592, 4294901760
    %2594 = vmatpush1.msra.mxu0 %v2593
    %2595 = vmatprep.subr.mxu0 0.0
    %2596 = vmatpush1.msra.mxu0 0.0
    %2597 = vmatprep.subr.mxu0 0.0
    %2598 = vmatpush1.msra.mxu0 0.0
    %2599 = vmatprep.subr.mxu0 0.0
    %2600 = vmatpush1.msra.mxu0 0.0
    %2601 = vmatprep.subr.mxu0 0.0
    %2602 = vmatpush1.msra.mxu0 0.0
    %2603 = vmatprep.subr.mxu0 0.0
    %2604 = vmatpush1.msra.mxu0 0.0
    %2605 = vmatprep.subr.mxu0 0.0
    %2606 = vmatpush1.msra.mxu0 0.0
    %2607 = vmatprep.subr.mxu0 0.0
    %2608 = vmatpush1.msra.mxu0 0.0
    %2609 = vmatprep.subr.mxu0 0.0
    %2610 = vmatpush1.msra.mxu0 0.0
    %2611 = vmatprep.subr.mxu0 0.0
    %2612 = vmatpush1.msra.mxu0 0.0
    %2613 = vmatprep.subr.mxu0 0.0
    %2614 = vmatpush1.msra.mxu0 0.0
    %2615 = vmatprep.subr.mxu0 0.0
    %2616 = vmatpush1.msra.mxu0 0.0
    %2617 = vmatprep.subr.mxu0 0.0
    %2618 = vmatpush1.msra.mxu0 0.0
    %2619 = vmatprep.subr.mxu0 0.0
    %2620 = vmatpush1.msra.mxu0 0.0
    %2621 = vmatprep.subr.mxu0 0.0
    %2622 = vmatpush1.msra.mxu0 0.0
    %2623 = vmatprep.subr.mxu0 0.0
    %2624 = vmatpush1.msra.mxu0 0.0
    %2625 = vmatprep.subr.mxu0 0.0
    %2626 = vmatpush1.msra.mxu0 0.0
    %2627 = vmatprep.subr.mxu0 0.0
    %2628 = vmatpush1.msra.mxu0 0.0
    %2629 = vmatprep.subr.mxu0 0.0
    %2630 = vmatpush1.msra.mxu0 0.0
    %2631 = vmatprep.subr.mxu0 0.0
    %2632 = vmatpush1.msra.mxu0 0.0
    %2633 = vmatprep.subr.mxu0 0.0
    %2634 = vmatpush1.msra.mxu0 0.0
    %2635 = vmatprep.subr.mxu0 0.0
    %2636 = vmatpush1.msra.mxu0 0.0
    %2637 = vmatprep.subr.mxu0 0.0
    %2638 = vmatpush1.msra.mxu0 0.0
    %2639 = vmatprep.subr.mxu0 0.0
    %2640 = vmatpush1.msra.mxu0 0.0
    %2641 = vmatprep.subr.mxu0 0.0
    %2642 = vmatpush1.msra.mxu0 0.0
    %2643 = vmatprep.subr.mxu0 0.0
    %2644 = vmatpush1.msra.mxu0 0.0
    %2645 = vmatprep.subr.mxu0 0.0
    %2646 = vmatpush1.msra.mxu0 0.0
    %2647 = vmatprep.subr.mxu0 0.0
    %2648 = vmatpush1.msra.mxu0 0.0
    %2649 = vmatprep.subr.mxu0 0.0
    %2650 = vmatpush1.msra.mxu0 0.0
    %2651 = vmatprep.subr.mxu0 0.0
    %2652 = vmatpush1.msra.mxu0 0.0
    %2653 = vmatprep.subr.mxu0 0.0
    %2654 = vmatpush1.msra.mxu0 0.0
    %2655 = vmatprep.subr.mxu0 0.0
    %2656 = vmatpush1.msra.mxu0 0.0
    %2657 = vmatprep.mubr.f32.mxu0 0.0
    %v2658 = vand.u32 %v2510, 4294901760
    %2659 = vmatmul.mubr.f32.gmra.mrb[0].mxu0 %v2658
    %v2660 = vpop.f32.mrb[0].mxu0
    %v2661 = vadd.f32 %v2585, %v2660
    %v2662 = vpop.f32.mrb[0].mxu0
    %2663 = vdwg.mxu0
    %2664 = vmatprep.subr.mxu0 0.0
    %v2665 = vand.u32 %v85, 4294901760
    %v2666 = vsub.f32 %v85, %v2665
    %2667 = vmatpush1.msra.mxu0 %v2666
    %2668 = vmatprep.subr.mxu0 0.0
    %2669 = vmatpush1.msra.mxu0 0.0
    %2670 = vmatprep.subr.mxu0 0.0
    %2671 = vmatpush1.msra.mxu0 0.0
    %2672 = vmatprep.subr.mxu0 0.0
    %2673 = vmatpush1.msra.mxu0 0.0
    %2674 = vmatprep.subr.mxu0 0.0
    %2675 = vmatpush1.msra.mxu0 0.0
    %2676 = vmatprep.subr.mxu0 0.0
    %2677 = vmatpush1.msra.mxu0 0.0
    %2678 = vmatprep.subr.mxu0 0.0
    %2679 = vmatpush1.msra.mxu0 0.0
    %2680 = vmatprep.subr.mxu0 0.0
    %2681 = vmatpush1.msra.mxu0 0.0
    %2682 = vmatprep.subr.mxu0 0.0
    %2683 = vmatpush1.msra.mxu0 0.0
    %2684 = vmatprep.subr.mxu0 0.0
    %2685 = vmatpush1.msra.mxu0 0.0
    %2686 = vmatprep.subr.mxu0 0.0
    %2687 = vmatpush1.msra.mxu0 0.0
    %2688 = vmatprep.subr.mxu0 0.0
    %2689 = vmatpush1.msra.mxu0 0.0
    %2690 = vmatprep.subr.mxu0 0.0
    %2691 = vmatpush1.msra.mxu0 0.0
    %2692 = vmatprep.subr.mxu0 0.0
    %2693 = vmatpush1.msra.mxu0 0.0
    %2694 = vmatprep.subr.mxu0 0.0
    %2695 = vmatpush1.msra.mxu0 0.0
    %2696 = vmatprep.subr.mxu0 0.0
    %2697 = vmatpush1.msra.mxu0 0.0
    %2698 = vmatprep.subr.mxu0 0.0
    %2699 = vmatpush1.msra.mxu0 0.0
    %2700 = vmatprep.subr.mxu0 0.0
    %2701 = vmatpush1.msra.mxu0 0.0
    %2702 = vmatprep.subr.mxu0 0.0
    %2703 = vmatpush1.msra.mxu0 0.0
    %2704 = vmatprep.subr.mxu0 0.0
    %2705 = vmatpush1.msra.mxu0 0.0
    %2706 = vmatprep.subr.mxu0 0.0
    %2707 = vmatpush1.msra.mxu0 0.0
    %2708 = vmatprep.subr.mxu0 0.0
    %2709 = vmatpush1.msra.mxu0 0.0
    %2710 = vmatprep.subr.mxu0 0.0
    %2711 = vmatpush1.msra.mxu0 0.0
    %2712 = vmatprep.subr.mxu0 0.0
    %2713 = vmatpush1.msra.mxu0 0.0
    %2714 = vmatprep.subr.mxu0 0.0
    %2715 = vmatpush1.msra.mxu0 0.0
    %2716 = vmatprep.subr.mxu0 0.0
    %2717 = vmatpush1.msra.mxu0 0.0
    %2718 = vmatprep.subr.mxu0 0.0
    %2719 = vmatpush1.msra.mxu0 0.0
    %2720 = vmatprep.subr.mxu0 0.0
    %2721 = vmatpush1.msra.mxu0 0.0
    %2722 = vmatprep.subr.mxu0 0.0
    %2723 = vmatpush1.msra.mxu0 0.0
    %2724 = vmatprep.subr.mxu0 0.0
    %2725 = vmatpush1.msra.mxu0 0.0
    %2726 = vmatprep.subr.mxu0 0.0
    %2727 = vmatpush1.msra.mxu0 0.0
    %2728 = vmatprep.subr.mxu0 0.0
    %2729 = vmatpush1.msra.mxu0 0.0
    %2730 = vmatprep.mubr.f32.mxu0 0.0
    %v2731 = vand.u32 %v2510, 4294901760
    %v2732 = vsub.f32 %v2510, %v2731
    %2733 = vmatmul.mubr.f32.gmra.mrb[0].mxu0 %v2732
    %v2734 = vpop.f32.mrb[0].mxu0
    %v2735 = vadd.f32 %v2661, %v2734
    %v2736 = vpop.f32.mrb[0].mxu0
    %2737 = vdwg.mxu0
    %2738 = vmatprep.subr.mxu0 0.0
    %v2739 = vand.u32 %v85, 4294901760
    %2740 = vmatpush1.msra.mxu0 %v2739
    %2741 = vmatprep.subr.mxu0 0.0
    %2742 = vmatpush1.msra.mxu0 0.0
    %2743 = vmatprep.subr.mxu0 0.0
    %2744 = vmatpush1.msra.mxu0 0.0
    %2745 = vmatprep.subr.mxu0 0.0
    %2746 = vmatpush1.msra.mxu0 0.0
    %2747 = vmatprep.subr.mxu0 0.0
    %2748 = vmatpush1.msra.mxu0 0.0
    %2749 = vmatprep.subr.mxu0 0.0
    %2750 = vmatpush1.msra.mxu0 0.0
    %2751 = vmatprep.subr.mxu0 0.0
    %2752 = vmatpush1.msra.mxu0 0.0
    %2753 = vmatprep.subr.mxu0 0.0
    %2754 = vmatpush1.msra.mxu0 0.0
    %2755 = vmatprep.subr.mxu0 0.0
    %2756 = vmatpush1.msra.mxu0 0.0
    %2757 = vmatprep.subr.mxu0 0.0
    %2758 = vmatpush1.msra.mxu0 0.0
    %2759 = vmatprep.subr.mxu0 0.0
    %2760 = vmatpush1.msra.mxu0 0.0
    %2761 = vmatprep.subr.mxu0 0.0
    %2762 = vmatpush1.msra.mxu0 0.0
    %2763 = vmatprep.subr.mxu0 0.0
    %2764 = vmatpush1.msra.mxu0 0.0
    %2765 = vmatprep.subr.mxu0 0.0
    %2766 = vmatpush1.msra.mxu0 0.0
    %2767 = vmatprep.subr.mxu0 0.0
    %2768 = vmatpush1.msra.mxu0 0.0
    %2769 = vmatprep.subr.mxu0 0.0
    %2770 = vmatpush1.msra.mxu0 0.0
    %2771 = vmatprep.subr.mxu0 0.0
    %2772 = vmatpush1.msra.mxu0 0.0
    %2773 = vmatprep.subr.mxu0 0.0
    %2774 = vmatpush1.msra.mxu0 0.0
    %2775 = vmatprep.subr.mxu0 0.0
    %2776 = vmatpush1.msra.mxu0 0.0
    %2777 = vmatprep.subr.mxu0 0.0
    %2778 = vmatpush1.msra.mxu0 0.0
    %2779 = vmatprep.subr.mxu0 0.0
    %2780 = vmatpush1.msra.mxu0 0.0
    %2781 = vmatprep.subr.mxu0 0.0
    %2782 = vmatpush1.msra.mxu0 0.0
    %2783 = vmatprep.subr.mxu0 0.0
    %2784 = vmatpush1.msra.mxu0 0.0
    %2785 = vmatprep.subr.mxu0 0.0
    %2786 = vmatpush1.msra.mxu0 0.0
    %2787 = vmatprep.subr.mxu0 0.0
    %2788 = vmatpush1.msra.mxu0 0.0
    %2789 = vmatprep.subr.mxu0 0.0
    %2790 = vmatpush1.msra.mxu0 0.0
    %2791 = vmatprep.subr.mxu0 0.0
    %2792 = vmatpush1.msra.mxu0 0.0
    %2793 = vmatprep.subr.mxu0 0.0
    %2794 = vmatpush1.msra.mxu0 0.0
    %2795 = vmatprep.subr.mxu0 0.0
    %2796 = vmatpush1.msra.mxu0 0.0
    %2797 = vmatprep.subr.mxu0 0.0
    %2798 = vmatpush1.msra.mxu0 0.0
    %2799 = vmatprep.subr.mxu0 0.0
    %2800 = vmatpush1.msra.mxu0 0.0
    %2801 = vmatprep.subr.mxu0 0.0
    %2802 = vmatpush1.msra.mxu0 0.0
    %2803 = vmatprep.mubr.f32.mxu0 0.0
    %v2804 = vand.u32 %v2510, 4294901760
    %v2805 = vsub.f32 %v2510, %v2804
    %v2806 = vand.u32 %v2805, 4294901760
    %2807 = vmatmul.mubr.f32.gmra.mrb[0].mxu0 %v2806
    %v2808 = vpop.f32.mrb[0].mxu0
    %v2809 = vadd.f32 %v2735, %v2808
    %v2810 = vpop.f32.mrb[0].mxu0
    %2811 = vdwg.mxu0
    %2812 = vmatprep.subr.mxu0 0.0
    %v2813 = vand.u32 %v85, 4294901760
    %v2814 = vsub.f32 %v85, %v2813
    %v2815 = vand.u32 %v2814, 4294901760
    %2816 = vmatpush1.msra.mxu0 %v2815
    %2817 = vmatprep.subr.mxu0 0.0
    %2818 = vmatpush1.msra.mxu0 0.0
    %2819 = vmatprep.subr.mxu0 0.0
    %2820 = vmatpush1.msra.mxu0 0.0
    %2821 = vmatprep.subr.mxu0 0.0
    %2822 = vmatpush1.msra.mxu0 0.0
    %2823 = vmatprep.subr.mxu0 0.0
    %2824 = vmatpush1.msra.mxu0 0.0
    %2825 = vmatprep.subr.mxu0 0.0
    %2826 = vmatpush1.msra.mxu0 0.0
    %2827 = vmatprep.subr.mxu0 0.0
    %2828 = vmatpush1.msra.mxu0 0.0
    %2829 = vmatprep.subr.mxu0 0.0
    %2830 = vmatpush1.msra.mxu0 0.0
    %2831 = vmatprep.subr.mxu0 0.0
    %2832 = vmatpush1.msra.mxu0 0.0
    %2833 = vmatprep.subr.mxu0 0.0
    %2834 = vmatpush1.msra.mxu0 0.0
    %2835 = vmatprep.subr.mxu0 0.0
    %2836 = vmatpush1.msra.mxu0 0.0
    %2837 = vmatprep.subr.mxu0 0.0
    %2838 = vmatpush1.msra.mxu0 0.0
    %2839 = vmatprep.subr.mxu0 0.0
    %2840 = vmatpush1.msra.mxu0 0.0
    %2841 = vmatprep.subr.mxu0 0.0
    %2842 = vmatpush1.msra.mxu0 0.0
    %2843 = vmatprep.subr.mxu0 0.0
    %2844 = vmatpush1.msra.mxu0 0.0
    %2845 = vmatprep.subr.mxu0 0.0
    %2846 = vmatpush1.msra.mxu0 0.0
    %2847 = vmatprep.subr.mxu0 0.0
    %2848 = vmatpush1.msra.mxu0 0.0
    %2849 = vmatprep.subr.mxu0 0.0
    %2850 = vmatpush1.msra.mxu0 0.0
    %2851 = vmatprep.subr.mxu0 0.0
    %2852 = vmatpush1.msra.mxu0 0.0
    %2853 = vmatprep.subr.mxu0 0.0
    %2854 = vmatpush1.msra.mxu0 0.0
    %2855 = vmatprep.subr.mxu0 0.0
    %2856 = vmatpush1.msra.mxu0 0.0
    %2857 = vmatprep.subr.mxu0 0.0
    %2858 = vmatpush1.msra.mxu0 0.0
    %2859 = vmatprep.subr.mxu0 0.0
    %2860 = vmatpush1.msra.mxu0 0.0
    %2861 = vmatprep.subr.mxu0 0.0
    %2862 = vmatpush1.msra.mxu0 0.0
    %2863 = vmatprep.subr.mxu0 0.0
    %2864 = vmatpush1.msra.mxu0 0.0
    %2865 = vmatprep.subr.mxu0 0.0
    %2866 = vmatpush1.msra.mxu0 0.0
    %2867 = vmatprep.subr.mxu0 0.0
    %2868 = vmatpush1.msra.mxu0 0.0
    %2869 = vmatprep.subr.mxu0 0.0
    %2870 = vmatpush1.msra.mxu0 0.0
    %2871 = vmatprep.subr.mxu0 0.0
    %2872 = vmatpush1.msra.mxu0 0.0
    %2873 = vmatprep.subr.mxu0 0.0
    %2874 = vmatpush1.msra.mxu0 0.0
    %2875 = vmatprep.subr.mxu0 0.0
    %2876 = vmatpush1.msra.mxu0 0.0
    %2877 = vmatprep.subr.mxu0 0.0
    %2878 = vmatpush1.msra.mxu0 0.0
    %2879 = vmatprep.mubr.f32.mxu0 0.0
    %v2880 = vand.u32 %v2510, 4294901760
    %2881 = vmatmul.mubr.f32.gmra.mrb[0].mxu0 %v2880
    %v2882 = vpop.f32.mrb[0].mxu0
    %v2883 = vadd.f32 %v2809, %v2882
    %v2884 = vpop.f32.mrb[0].mxu0
    %2885 = vdwg.mxu0
    %2886 = vmatprep.subr.mxu0 0.0
    %v2887 = vand.u32 %v85, 4294901760
    %2888 = vmatpush1.msra.mxu0 %v2887
    %2889 = vmatprep.subr.mxu0 0.0
    %2890 = vmatpush1.msra.mxu0 0.0
    %2891 = vmatprep.subr.mxu0 0.0
    %2892 = vmatpush1.msra.mxu0 0.0
    %2893 = vmatprep.subr.mxu0 0.0
    %2894 = vmatpush1.msra.mxu0 0.0
    %2895 = vmatprep.subr.mxu0 0.0
    %2896 = vmatpush1.msra.mxu0 0.0
    %2897 = vmatprep.subr.mxu0 0.0
    %2898 = vmatpush1.msra.mxu0 0.0
    %2899 = vmatprep.subr.mxu0 0.0
    %2900 = vmatpush1.msra.mxu0 0.0
    %2901 = vmatprep.subr.mxu0 0.0
    %2902 = vmatpush1.msra.mxu0 0.0
    %2903 = vmatprep.subr.mxu0 0.0
    %2904 = vmatpush1.msra.mxu0 0.0
    %2905 = vmatprep.subr.mxu0 0.0
    %2906 = vmatpush1.msra.mxu0 0.0
    %2907 = vmatprep.subr.mxu0 0.0
    %2908 = vmatpush1.msra.mxu0 0.0
    %2909 = vmatprep.subr.mxu0 0.0
    %2910 = vmatpush1.msra.mxu0 0.0
    %2911 = vmatprep.subr.mxu0 0.0
    %2912 = vmatpush1.msra.mxu0 0.0
    %2913 = vmatprep.subr.mxu0 0.0
    %2914 = vmatpush1.msra.mxu0 0.0
    %2915 = vmatprep.subr.mxu0 0.0
    %2916 = vmatpush1.msra.mxu0 0.0
    %2917 = vmatprep.subr.mxu0 0.0
    %2918 = vmatpush1.msra.mxu0 0.0
    %2919 = vmatprep.subr.mxu0 0.0
    %2920 = vmatpush1.msra.mxu0 0.0
    %2921 = vmatprep.subr.mxu0 0.0
    %2922 = vmatpush1.msra.mxu0 0.0
    %2923 = vmatprep.subr.mxu0 0.0
    %2924 = vmatpush1.msra.mxu0 0.0
    %2925 = vmatprep.subr.mxu0 0.0
    %2926 = vmatpush1.msra.mxu0 0.0
    %2927 = vmatprep.subr.mxu0 0.0
    %2928 = vmatpush1.msra.mxu0 0.0
    %2929 = vmatprep.subr.mxu0 0.0
    %2930 = vmatpush1.msra.mxu0 0.0
    %2931 = vmatprep.subr.mxu0 0.0
    %2932 = vmatpush1.msra.mxu0 0.0
    %2933 = vmatprep.subr.mxu0 0.0
    %2934 = vmatpush1.msra.mxu0 0.0
    %2935 = vmatprep.subr.mxu0 0.0
    %2936 = vmatpush1.msra.mxu0 0.0
    %2937 = vmatprep.subr.mxu0 0.0
    %2938 = vmatpush1.msra.mxu0 0.0
    %2939 = vmatprep.subr.mxu0 0.0
    %2940 = vmatpush1.msra.mxu0 0.0
    %2941 = vmatprep.subr.mxu0 0.0
    %2942 = vmatpush1.msra.mxu0 0.0
    %2943 = vmatprep.subr.mxu0 0.0
    %2944 = vmatpush1.msra.mxu0 0.0
    %2945 = vmatprep.subr.mxu0 0.0
    %2946 = vmatpush1.msra.mxu0 0.0
    %2947 = vmatprep.subr.mxu0 0.0
    %2948 = vmatpush1.msra.mxu0 0.0
    %2949 = vmatprep.subr.mxu0 0.0
    %2950 = vmatpush1.msra.mxu0 0.0
    %2951 = vmatprep.mubr.f32.mxu0 0.0
    %v2952 = vand.u32 %v2510, 4294901760
    %2953 = vmatmul.mubr.f32.gmra.mrb[0].mxu0 %v2952
    %v2954 = vpop.f32.mrb[0].mxu0
    %v2955 = vadd.f32 %v2883, %v2954
    %v2956 = vpop.f32.mrb[0].mxu0
    %2957 = vdwg.mxu0
    %v2958 = vtanh.pop %v2955
    %v2959 = vmul.f32 %v2958, 0.5
    %v2960 = vadd.f32 %v2959, 0.5
    %v2961 = vmul.f32 %v2960, %v2010
    %2963 = vrot.lane.b32.xlu0 %v2958, 32
    %v2964 = vpop.permute.xlu0 %2963
    %v2966 = vmul.f32 %v2960, %v2964
    %2968 = vrot.lane.b32.xlu0 %v2966, 32
    %v2969 = vpop.permute.xlu0 %2968
    %v2971 = vadd.f32 %v2961, %v2969
    %v2972 = vtanh.pop %v2971
    %2974 = vrot.lane.b32.xlu0 %v2972, 32
    %v2975 = vpop.permute.xlu0 %2974
    %v2977 = vmul.f32 %v2960, %v2975
    %s2978 = scalar_lea.vmem [#allocation6], 12
    %v2979 = vld [vmem:[%s2978] sm:$0xf]
    %2981 = vrot.lane.b32.xlu0 %v2977, 64
    %v2982 = vpop.permute.xlu0 %2981
    %v2983 = vsel %vm93, %v2982, 0
    %2985 = vmatprep.subr.mxu0 0.0
    %v2986 = vand.u32 %v86, 4294901760
    %2987 = vmatpush1.msra.mxu0 %v2986
    %2988 = vmatprep.subr.mxu0 0.0
    %v2989 = vand.u32 %v87, 4294901760
    %2990 = vmatpush1.msra.mxu0 %v2989
    %2991 = vmatprep.subr.mxu0 0.0
    %v2992 = vand.u32 %v88, 4294901760
    %2993 = vmatpush1.msra.mxu0 %v2992
    %2994 = vmatprep.subr.mxu0 0.0
    %v2995 = vand.u32 %v89, 4294901760
    %2996 = vmatpush1.msra.mxu0 %v2995
    %2997 = vmatprep.subr.mxu0 0.0
    %2998 = vmatpush1.msra.mxu0 0.0
    %2999 = vmatprep.subr.mxu0 0.0
    %3000 = vmatpush1.msra.mxu0 0.0
    %3001 = vmatprep.subr.mxu0 0.0
    %3002 = vmatpush1.msra.mxu0 0.0
    %3003 = vmatprep.subr.mxu0 0.0
    %3004 = vmatpush1.msra.mxu0 0.0
    %3005 = vmatprep.subr.mxu0 0.0
    %3006 = vmatpush1.msra.mxu0 0.0
    %3007 = vmatprep.subr.mxu0 0.0
    %3008 = vmatpush1.msra.mxu0 0.0
    %3009 = vmatprep.subr.mxu0 0.0
    %3010 = vmatpush1.msra.mxu0 0.0
    %3011 = vmatprep.subr.mxu0 0.0
    %3012 = vmatpush1.msra.mxu0 0.0
    %3013 = vmatprep.subr.mxu0 0.0
    %3014 = vmatpush1.msra.mxu0 0.0
    %3015 = vmatprep.subr.mxu0 0.0
    %3016 = vmatpush1.msra.mxu0 0.0
    %3017 = vmatprep.subr.mxu0 0.0
    %3018 = vmatpush1.msra.mxu0 0.0
    %3019 = vmatprep.subr.mxu0 0.0
    %3020 = vmatpush1.msra.mxu0 0.0
    %3021 = vmatprep.subr.mxu0 0.0
    %3022 = vmatpush1.msra.mxu0 0.0
    %3023 = vmatprep.subr.mxu0 0.0
    %3024 = vmatpush1.msra.mxu0 0.0
    %3025 = vmatprep.subr.mxu0 0.0
    %3026 = vmatpush1.msra.mxu0 0.0
    %3027 = vmatprep.subr.mxu0 0.0
    %3028 = vmatpush1.msra.mxu0 0.0
    %3029 = vmatprep.subr.mxu0 0.0
    %3030 = vmatpush1.msra.mxu0 0.0
    %3031 = vmatprep.subr.mxu0 0.0
    %3032 = vmatpush1.msra.mxu0 0.0
    %3033 = vmatprep.subr.mxu0 0.0
    %3034 = vmatpush1.msra.mxu0 0.0
    %3035 = vmatprep.subr.mxu0 0.0
    %3036 = vmatpush1.msra.mxu0 0.0
    %3037 = vmatprep.subr.mxu0 0.0
    %3038 = vmatpush1.msra.mxu0 0.0
    %3039 = vmatprep.subr.mxu0 0.0
    %3040 = vmatpush1.msra.mxu0 0.0
    %3041 = vmatprep.subr.mxu0 0.0
    %3042 = vmatpush1.msra.mxu0 0.0
    %3043 = vmatprep.subr.mxu0 0.0
    %3044 = vmatpush1.msra.mxu0 0.0
    %3045 = vmatprep.subr.mxu0 0.0
    %3046 = vmatpush1.msra.mxu0 0.0
    %3047 = vmatprep.subr.mxu0 0.0
    %3048 = vmatpush1.msra.mxu0 0.0
    %3049 = vmatprep.subr.mxu0 0.0
    %3050 = vmatpush1.msra.mxu0 0.0
    %3051 = vmatprep.subr.mxu0 0.0
    %3052 = vmatpush1.msra.mxu0 0.0
    %3053 = vmatprep.mubr.f32.mxu0 0.0
    %v3054 = vand.u32 %v2983, 4294901760
    %v3055 = vsub.f32 %v2983, %v3054
    %v3056 = vand.u32 %v3055, 4294901760
    %v3057 = vsub.f32 %v3055, %v3056
    %v3058 = vand.u32 %v3057, 4294901760
    %3059 = vmatmul.mubr.f32.gmra.mrb[0].mxu0 %v3058
    %v3060 = vpop.f32.mrb[0].mxu0
    %v3061 = vadd.f32 0.0, %v3060
    %v3062 = vpop.f32.mrb[0].mxu0
    %3063 = vdwg.mxu0
    %3064 = vmatprep.subr.mxu0 0.0
    %v3065 = vand.u32 %v86, 4294901760
    %v3066 = vsub.f32 %v86, %v3065
    %v3067 = vand.u32 %v3066, 4294901760
    %v3068 = vsub.f32 %v3066, %v3067
    %v3069 = vand.u32 %v3068, 4294901760
    %3070 = vmatpush1.msra.mxu0 %v3069
    %3071 = vmatprep.subr.mxu0 0.0
    %v3072 = vand.u32 %v87, 4294901760
    %v3073 = vsub.f32 %v87, %v3072
    %v3074 = vand.u32 %v3073, 4294901760
    %v3075 = vsub.f32 %v3073, %v3074
    %v3076 = vand.u32 %v3075, 4294901760
    %3077 = vmatpush1.msra.mxu0 %v3076
    %3078 = vmatprep.subr.mxu0 0.0
    %v3079 = vand.u32 %v88, 4294901760
    %v3080 = vsub.f32 %v88, %v3079
    %v3081 = vand.u32 %v3080, 4294901760
    %v3082 = vsub.f32 %v3080, %v3081
    %v3083 = vand.u32 %v3082, 4294901760
    %3084 = vmatpush1.msra.mxu0 %v3083
    %3085 = vmatprep.subr.mxu0 0.0
    %v3086 = vand.u32 %v89, 4294901760
    %v3087 = vsub.f32 %v89, %v3086
    %v3088 = vand.u32 %v3087, 4294901760
    %v3089 = vsub.f32 %v3087, %v3088
    %v3090 = vand.u32 %v3089, 4294901760
    %3091 = vmatpush1.msra.mxu0 %v3090
    %3092 = vmatprep.subr.mxu0 0.0
    %3093 = vmatpush1.msra.mxu0 0.0
    %3094 = vmatprep.subr.mxu0 0.0
    %3095 = vmatpush1.msra.mxu0 0.0
    %3096 = vmatprep.subr.mxu0 0.0
    %3097 = vmatpush1.msra.mxu0 0.0
    %3098 = vmatprep.subr.mxu0 0.0
    %3099 = vmatpush1.msra.mxu0 0.0
    %3100 = vmatprep.subr.mxu0 0.0
    %3101 = vmatpush1.msra.mxu0 0.0
    %3102 = vmatprep.subr.mxu0 0.0
    %3103 = vmatpush1.msra.mxu0 0.0
    %3104 = vmatprep.subr.mxu0 0.0
    %3105 = vmatpush1.msra.mxu0 0.0
    %3106 = vmatprep.subr.mxu0 0.0
    %3107 = vmatpush1.msra.mxu0 0.0
    %3108 = vmatprep.subr.mxu0 0.0
    %3109 = vmatpush1.msra.mxu0 0.0
    %3110 = vmatprep.subr.mxu0 0.0
    %3111 = vmatpush1.msra.mxu0 0.0
    %3112 = vmatprep.subr.mxu0 0.0
    %3113 = vmatpush1.msra.mxu0 0.0
    %3114 = vmatprep.subr.mxu0 0.0
    %3115 = vmatpush1.msra.mxu0 0.0
    %3116 = vmatprep.subr.mxu0 0.0
    %3117 = vmatpush1.msra.mxu0 0.0
    %3118 = vmatprep.subr.mxu0 0.0
    %3119 = vmatpush1.msra.mxu0 0.0
    %3120 = vmatprep.subr.mxu0 0.0
    %3121 = vmatpush1.msra.mxu0 0.0
    %3122 = vmatprep.subr.mxu0 0.0
    %3123 = vmatpush1.msra.mxu0 0.0
    %3124 = vmatprep.subr.mxu0 0.0
    %3125 = vmatpush1.msra.mxu0 0.0
    %3126 = vmatprep.subr.mxu0 0.0
    %3127 = vmatpush1.msra.mxu0 0.0
    %3128 = vmatprep.subr.mxu0 0.0
    %3129 = vmatpush1.msra.mxu0 0.0
    %3130 = vmatprep.subr.mxu0 0.0
    %3131 = vmatpush1.msra.mxu0 0.0
    %3132 = vmatprep.subr.mxu0 0.0
    %3133 = vmatpush1.msra.mxu0 0.0
    %3134 = vmatprep.subr.mxu0 0.0
    %3135 = vmatpush1.msra.mxu0 0.0
    %3136 = vmatprep.subr.mxu0 0.0
    %3137 = vmatpush1.msra.mxu0 0.0
    %3138 = vmatprep.subr.mxu0 0.0
    %3139 = vmatpush1.msra.mxu0 0.0
    %3140 = vmatprep.subr.mxu0 0.0
    %3141 = vmatpush1.msra.mxu0 0.0
    %3142 = vmatprep.subr.mxu0 0.0
    %3143 = vmatpush1.msra.mxu0 0.0
    %3144 = vmatprep.subr.mxu0 0.0
    %3145 = vmatpush1.msra.mxu0 0.0
    %3146 = vmatprep.subr.mxu0 0.0
    %3147 = vmatpush1.msra.mxu0 0.0
    %3148 = vmatprep.mubr.f32.mxu0 0.0
    %v3149 = vand.u32 %v2983, 4294901760
    %3150 = vmatmul.mubr.f32.gmra.mrb[0].mxu0 %v3149
    %v3151 = vpop.f32.mrb[0].mxu0
    %v3152 = vadd.f32 %v3061, %v3151
    %v3153 = vpop.f32.mrb[0].mxu0
    %3154 = vdwg.mxu0
    %3155 = vmatprep.subr.mxu0 0.0
    %v3156 = vand.u32 %v86, 4294901760
    %v3157 = vsub.f32 %v86, %v3156
    %3158 = vmatpush1.msra.mxu0 %v3157
    %3159 = vmatprep.subr.mxu0 0.0
    %v3160 = vand.u32 %v87, 4294901760
    %v3161 = vsub.f32 %v87, %v3160
    %3162 = vmatpush1.msra.mxu0 %v3161
    %3163 = vmatprep.subr.mxu0 0.0
    %v3164 = vand.u32 %v88, 4294901760
    %v3165 = vsub.f32 %v88, %v3164
    %3166 = vmatpush1.msra.mxu0 %v3165
    %3167 = vmatprep.subr.mxu0 0.0
    %v3168 = vand.u32 %v89, 4294901760
    %v3169 = vsub.f32 %v89, %v3168
    %3170 = vmatpush1.msra.mxu0 %v3169
    %3171 = vmatprep.subr.mxu0 0.0
    %3172 = vmatpush1.msra.mxu0 0.0
    %3173 = vmatprep.subr.mxu0 0.0
    %3174 = vmatpush1.msra.mxu0 0.0
    %3175 = vmatprep.subr.mxu0 0.0
    %3176 = vmatpush1.msra.mxu0 0.0
    %3177 = vmatprep.subr.mxu0 0.0
    %3178 = vmatpush1.msra.mxu0 0.0
    %3179 = vmatprep.subr.mxu0 0.0
    %3180 = vmatpush1.msra.mxu0 0.0
    %3181 = vmatprep.subr.mxu0 0.0
    %3182 = vmatpush1.msra.mxu0 0.0
    %3183 = vmatprep.subr.mxu0 0.0
    %3184 = vmatpush1.msra.mxu0 0.0
    %3185 = vmatprep.subr.mxu0 0.0
    %3186 = vmatpush1.msra.mxu0 0.0
    %3187 = vmatprep.subr.mxu0 0.0
    %3188 = vmatpush1.msra.mxu0 0.0
    %3189 = vmatprep.subr.mxu0 0.0
    %3190 = vmatpush1.msra.mxu0 0.0
    %3191 = vmatprep.subr.mxu0 0.0
    %3192 = vmatpush1.msra.mxu0 0.0
    %3193 = vmatprep.subr.mxu0 0.0
    %3194 = vmatpush1.msra.mxu0 0.0
    %3195 = vmatprep.subr.mxu0 0.0
    %3196 = vmatpush1.msra.mxu0 0.0
    %3197 = vmatprep.subr.mxu0 0.0
    %3198 = vmatpush1.msra.mxu0 0.0
    %3199 = vmatprep.subr.mxu0 0.0
    %3200 = vmatpush1.msra.mxu0 0.0
    %3201 = vmatprep.subr.mxu0 0.0
    %3202 = vmatpush1.msra.mxu0 0.0
    %3203 = vmatprep.subr.mxu0 0.0
    %3204 = vmatpush1.msra.mxu0 0.0
    %3205 = vmatprep.subr.mxu0 0.0
    %3206 = vmatpush1.msra.mxu0 0.0
    %3207 = vmatprep.subr.mxu0 0.0
    %3208 = vmatpush1.msra.mxu0 0.0
    %3209 = vmatprep.subr.mxu0 0.0
    %3210 = vmatpush1.msra.mxu0 0.0
    %3211 = vmatprep.subr.mxu0 0.0
    %3212 = vmatpush1.msra.mxu0 0.0
    %3213 = vmatprep.subr.mxu0 0.0
    %3214 = vmatpush1.msra.mxu0 0.0
    %3215 = vmatprep.subr.mxu0 0.0
    %3216 = vmatpush1.msra.mxu0 0.0
    %3217 = vmatprep.subr.mxu0 0.0
    %3218 = vmatpush1.msra.mxu0 0.0
    %3219 = vmatprep.subr.mxu0 0.0
    %3220 = vmatpush1.msra.mxu0 0.0
    %3221 = vmatprep.subr.mxu0 0.0
    %3222 = vmatpush1.msra.mxu0 0.0
    %3223 = vmatprep.subr.mxu0 0.0
    %3224 = vmatpush1.msra.mxu0 0.0
    %3225 = vmatprep.subr.mxu0 0.0
    %3226 = vmatpush1.msra.mxu0 0.0
    %3227 = vmatprep.mubr.f32.mxu0 0.0
    %v3228 = vand.u32 %v2983, 4294901760
    %v3229 = vsub.f32 %v2983, %v3228
    %3230 = vmatmul.mubr.f32.gmra.mrb[0].mxu0 %v3229
    %v3231 = vpop.f32.mrb[0].mxu0
    %v3232 = vadd.f32 %v3152, %v3231
    %v3233 = vpop.f32.mrb[0].mxu0
    %3234 = vdwg.mxu0
    %3235 = vmatprep.subr.mxu0 0.0
    %v3236 = vand.u32 %v86, 4294901760
    %3237 = vmatpush1.msra.mxu0 %v3236
    %3238 = vmatprep.subr.mxu0 0.0
    %v3239 = vand.u32 %v87, 4294901760
    %3240 = vmatpush1.msra.mxu0 %v3239
    %3241 = vmatprep.subr.mxu0 0.0
    %v3242 = vand.u32 %v88, 4294901760
    %3243 = vmatpush1.msra.mxu0 %v3242
    %3244 = vmatprep.subr.mxu0 0.0
    %v3245 = vand.u32 %v89, 4294901760
    %3246 = vmatpush1.msra.mxu0 %v3245
    %3247 = vmatprep.subr.mxu0 0.0
    %3248 = vmatpush1.msra.mxu0 0.0
    %3249 = vmatprep.subr.mxu0 0.0
    %3250 = vmatpush1.msra.mxu0 0.0
    %3251 = vmatprep.subr.mxu0 0.0
    %3252 = vmatpush1.msra.mxu0 0.0
    %3253 = vmatprep.subr.mxu0 0.0
    %3254 = vmatpush1.msra.mxu0 0.0
    %3255 = vmatprep.subr.mxu0 0.0
    %3256 = vmatpush1.msra.mxu0 0.0
    %3257 = vmatprep.subr.mxu0 0.0
    %3258 = vmatpush1.msra.mxu0 0.0
    %3259 = vmatprep.subr.mxu0 0.0
    %3260 = vmatpush1.msra.mxu0 0.0
    %3261 = vmatprep.subr.mxu0 0.0
    %3262 = vmatpush1.msra.mxu0 0.0
    %3263 = vmatprep.subr.mxu0 0.0
    %3264 = vmatpush1.msra.mxu0 0.0
    %3265 = vmatprep.subr.mxu0 0.0
    %3266 = vmatpush1.msra.mxu0 0.0
    %3267 = vmatprep.subr.mxu0 0.0
    %3268 = vmatpush1.msra.mxu0 0.0
    %3269 = vmatprep.subr.mxu0 0.0
    %3270 = vmatpush1.msra.mxu0 0.0
    %3271 = vmatprep.subr.mxu0 0.0
    %3272 = vmatpush1.msra.mxu0 0.0
    %3273 = vmatprep.subr.mxu0 0.0
    %3274 = vmatpush1.msra.mxu0 0.0
    %3275 = vmatprep.subr.mxu0 0.0
    %3276 = vmatpush1.msra.mxu0 0.0
    %3277 = vmatprep.subr.mxu0 0.0
    %3278 = vmatpush1.msra.mxu0 0.0
    %3279 = vmatprep.subr.mxu0 0.0
    %3280 = vmatpush1.msra.mxu0 0.0
    %3281 = vmatprep.subr.mxu0 0.0
    %3282 = vmatpush1.msra.mxu0 0.0
    %3283 = vmatprep.subr.mxu0 0.0
    %3284 = vmatpush1.msra.mxu0 0.0
    %3285 = vmatprep.subr.mxu0 0.0
    %3286 = vmatpush1.msra.mxu0 0.0
    %3287 = vmatprep.subr.mxu0 0.0
    %3288 = vmatpush1.msra.mxu0 0.0
    %3289 = vmatprep.subr.mxu0 0.0
    %3290 = vmatpush1.msra.mxu0 0.0
    %3291 = vmatprep.subr.mxu0 0.0
    %3292 = vmatpush1.msra.mxu0 0.0
    %3293 = vmatprep.subr.mxu0 0.0
    %3294 = vmatpush1.msra.mxu0 0.0
    %3295 = vmatprep.subr.mxu0 0.0
    %3296 = vmatpush1.msra.mxu0 0.0
    %3297 = vmatprep.subr.mxu0 0.0
    %3298 = vmatpush1.msra.mxu0 0.0
    %3299 = vmatprep.subr.mxu0 0.0
    %3300 = vmatpush1.msra.mxu0 0.0
    %3301 = vmatprep.subr.mxu0 0.0
    %3302 = vmatpush1.msra.mxu0 0.0
    %3303 = vmatprep.mubr.f32.mxu0 0.0
    %v3304 = vand.u32 %v2983, 4294901760
    %v3305 = vsub.f32 %v2983, %v3304
    %v3306 = vand.u32 %v3305, 4294901760
    %3307 = vmatmul.mubr.f32.gmra.mrb[0].mxu0 %v3306
    %v3308 = vpop.f32.mrb[0].mxu0
    %v3309 = vadd.f32 %v3232, %v3308
    %v3310 = vpop.f32.mrb[0].mxu0
    %3311 = vdwg.mxu0
    %3312 = vmatprep.subr.mxu0 0.0
    %v3313 = vand.u32 %v86, 4294901760
    %v3314 = vsub.f32 %v86, %v3313
    %v3315 = vand.u32 %v3314, 4294901760
    %3316 = vmatpush1.msra.mxu0 %v3315
    %3317 = vmatprep.subr.mxu0 0.0
    %v3318 = vand.u32 %v87, 4294901760
    %v3319 = vsub.f32 %v87, %v3318
    %v3320 = vand.u32 %v3319, 4294901760
    %3321 = vmatpush1.msra.mxu0 %v3320
    %3322 = vmatprep.subr.mxu0 0.0
    %v3323 = vand.u32 %v88, 4294901760
    %v3324 = vsub.f32 %v88, %v3323
    %v3325 = vand.u32 %v3324, 4294901760
    %3326 = vmatpush1.msra.mxu0 %v3325
    %3327 = vmatprep.subr.mxu0 0.0
    %v3328 = vand.u32 %v89, 4294901760
    %v3329 = vsub.f32 %v89, %v3328
    %v3330 = vand.u32 %v3329, 4294901760
    %3331 = vmatpush1.msra.mxu0 %v3330
    %3332 = vmatprep.subr.mxu0 0.0
    %3333 = vmatpush1.msra.mxu0 0.0
    %3334 = vmatprep.subr.mxu0 0.0
    %3335 = vmatpush1.msra.mxu0 0.0
    %3336 = vmatprep.subr.mxu0 0.0
    %3337 = vmatpush1.msra.mxu0 0.0
    %3338 = vmatprep.subr.mxu0 0.0
    %3339 = vmatpush1.msra.mxu0 0.0
    %3340 = vmatprep.subr.mxu0 0.0
    %3341 = vmatpush1.msra.mxu0 0.0
    %3342 = vmatprep.subr.mxu0 0.0
    %3343 = vmatpush1.msra.mxu0 0.0
    %3344 = vmatprep.subr.mxu0 0.0
    %3345 = vmatpush1.msra.mxu0 0.0
    %3346 = vmatprep.subr.mxu0 0.0
    %3347 = vmatpush1.msra.mxu0 0.0
    %3348 = vmatprep.subr.mxu0 0.0
    %3349 = vmatpush1.msra.mxu0 0.0
    %3350 = vmatprep.subr.mxu0 0.0
    %3351 = vmatpush1.msra.mxu0 0.0
    %3352 = vmatprep.subr.mxu0 0.0
    %3353 = vmatpush1.msra.mxu0 0.0
    %3354 = vmatprep.subr.mxu0 0.0
    %3355 = vmatpush1.msra.mxu0 0.0
    %3356 = vmatprep.subr.mxu0 0.0
    %3357 = vmatpush1.msra.mxu0 0.0
    %3358 = vmatprep.subr.mxu0 0.0
    %3359 = vmatpush1.msra.mxu0 0.0
    %3360 = vmatprep.subr.mxu0 0.0
    %3361 = vmatpush1.msra.mxu0 0.0
    %3362 = vmatprep.subr.mxu0 0.0
    %3363 = vmatpush1.msra.mxu0 0.0
    %3364 = vmatprep.subr.mxu0 0.0
    %3365 = vmatpush1.msra.mxu0 0.0
    %3366 = vmatprep.subr.mxu0 0.0
    %3367 = vmatpush1.msra.mxu0 0.0
    %3368 = vmatprep.subr.mxu0 0.0
    %3369 = vmatpush1.msra.mxu0 0.0
    %3370 = vmatprep.subr.mxu0 0.0
    %3371 = vmatpush1.msra.mxu0 0.0
    %3372 = vmatprep.subr.mxu0 0.0
    %3373 = vmatpush1.msra.mxu0 0.0
    %3374 = vmatprep.subr.mxu0 0.0
    %3375 = vmatpush1.msra.mxu0 0.0
    %3376 = vmatprep.subr.mxu0 0.0
    %3377 = vmatpush1.msra.mxu0 0.0
    %3378 = vmatprep.subr.mxu0 0.0
    %3379 = vmatpush1.msra.mxu0 0.0
    %3380 = vmatprep.subr.mxu0 0.0
    %3381 = vmatpush1.msra.mxu0 0.0
    %3382 = vmatprep.subr.mxu0 0.0
    %3383 = vmatpush1.msra.mxu0 0.0
    %3384 = vmatprep.subr.mxu0 0.0
    %3385 = vmatpush1.msra.mxu0 0.0
    %3386 = vmatprep.subr.mxu0 0.0
    %3387 = vmatpush1.msra.mxu0 0.0
    %3388 = vmatprep.mubr.f32.mxu0 0.0
    %v3389 = vand.u32 %v2983, 4294901760
    %3390 = vmatmul.mubr.f32.gmra.mrb[0].mxu0 %v3389
    %v3391 = vpop.f32.mrb[0].mxu0
    %v3392 = vadd.f32 %v3309, %v3391
    %v3393 = vpop.f32.mrb[0].mxu0
    %3394 = vdwg.mxu0
    %3395 = vmatprep.subr.mxu0 0.0
    %v3396 = vand.u32 %v86, 4294901760
    %3397 = vmatpush1.msra.mxu0 %v3396
    %3398 = vmatprep.subr.mxu0 0.0
    %v3399 = vand.u32 %v87, 4294901760
    %3400 = vmatpush1.msra.mxu0 %v3399
    %3401 = vmatprep.subr.mxu0 0.0
    %v3402 = vand.u32 %v88, 4294901760
    %3403 = vmatpush1.msra.mxu0 %v3402
    %3404 = vmatprep.subr.mxu0 0.0
    %v3405 = vand.u32 %v89, 4294901760
    %3406 = vmatpush1.msra.mxu0 %v3405
    %3407 = vmatprep.subr.mxu0 0.0
    %3408 = vmatpush1.msra.mxu0 0.0
    %3409 = vmatprep.subr.mxu0 0.0
    %3410 = vmatpush1.msra.mxu0 0.0
    %3411 = vmatprep.subr.mxu0 0.0
    %3412 = vmatpush1.msra.mxu0 0.0
    %3413 = vmatprep.subr.mxu0 0.0
    %3414 = vmatpush1.msra.mxu0 0.0
    %3415 = vmatprep.subr.mxu0 0.0
    %3416 = vmatpush1.msra.mxu0 0.0
    %3417 = vmatprep.subr.mxu0 0.0
    %3418 = vmatpush1.msra.mxu0 0.0
    %3419 = vmatprep.subr.mxu0 0.0
    %3420 = vmatpush1.msra.mxu0 0.0
    %3421 = vmatprep.subr.mxu0 0.0
    %3422 = vmatpush1.msra.mxu0 0.0
    %3423 = vmatprep.subr.mxu0 0.0
    %3424 = vmatpush1.msra.mxu0 0.0
    %3425 = vmatprep.subr.mxu0 0.0
    %3426 = vmatpush1.msra.mxu0 0.0
    %3427 = vmatprep.subr.mxu0 0.0
    %3428 = vmatpush1.msra.mxu0 0.0
    %3429 = vmatprep.subr.mxu0 0.0
    %3430 = vmatpush1.msra.mxu0 0.0
    %3431 = vmatprep.subr.mxu0 0.0
    %3432 = vmatpush1.msra.mxu0 0.0
    %3433 = vmatprep.subr.mxu0 0.0
    %3434 = vmatpush1.msra.mxu0 0.0
    %3435 = vmatprep.subr.mxu0 0.0
    %3436 = vmatpush1.msra.mxu0 0.0
    %3437 = vmatprep.subr.mxu0 0.0
    %3438 = vmatpush1.msra.mxu0 0.0
    %3439 = vmatprep.subr.mxu0 0.0
    %3440 = vmatpush1.msra.mxu0 0.0
    %3441 = vmatprep.subr.mxu0 0.0
    %3442 = vmatpush1.msra.mxu0 0.0
    %3443 = vmatprep.subr.mxu0 0.0
    %3444 = vmatpush1.msra.mxu0 0.0
    %3445 = vmatprep.subr.mxu0 0.0
    %3446 = vmatpush1.msra.mxu0 0.0
    %3447 = vmatprep.subr.mxu0 0.0
    %3448 = vmatpush1.msra.mxu0 0.0
    %3449 = vmatprep.subr.mxu0 0.0
    %3450 = vmatpush1.msra.mxu0 0.0
    %3451 = vmatprep.subr.mxu0 0.0
    %3452 = vmatpush1.msra.mxu0 0.0
    %3453 = vmatprep.subr.mxu0 0.0
    %3454 = vmatpush1.msra.mxu0 0.0
    %3455 = vmatprep.subr.mxu0 0.0
    %3456 = vmatpush1.msra.mxu0 0.0
    %3457 = vmatprep.subr.mxu0 0.0
    %3458 = vmatpush1.msra.mxu0 0.0
    %3459 = vmatprep.subr.mxu0 0.0
    %3460 = vmatpush1.msra.mxu0 0.0
    %3461 = vmatprep.subr.mxu0 0.0
    %3462 = vmatpush1.msra.mxu0 0.0
    %3463 = vmatprep.mubr.f32.mxu0 0.0
    %v3464 = vand.u32 %v2983, 4294901760
    %3465 = vmatmul.mubr.f32.gmra.mrb[0].mxu0 %v3464
    %v3466 = vpop.f32.mrb[0].mxu0
    %v3467 = vadd.f32 %v3392, %v3466
    %v3468 = vpop.f32.mrb[0].mxu0
    %3469 = vdwg.mxu0
    %v3471 = vsel %vm582, %v2979, 0
    %3473 = vmatprep.subr.mxu0 0.0
    %v3474 = vand.u32 %v85, 4294901760
    %3475 = vmatpush1.msra.mxu0 %v3474
    %3476 = vmatprep.subr.mxu0 0.0
    %3477 = vmatpush1.msra.mxu0 0.0
    %3478 = vmatprep.subr.mxu0 0.0
    %3479 = vmatpush1.msra.mxu0 0.0
    %3480 = vmatprep.subr.mxu0 0.0
    %3481 = vmatpush1.msra.mxu0 0.0
    %3482 = vmatprep.subr.mxu0 0.0
    %3483 = vmatpush1.msra.mxu0 0.0
    %3484 = vmatprep.subr.mxu0 0.0
    %3485 = vmatpush1.msra.mxu0 0.0
    %3486 = vmatprep.subr.mxu0 0.0
    %3487 = vmatpush1.msra.mxu0 0.0
    %3488 = vmatprep.subr.mxu0 0.0
    %3489 = vmatpush1.msra.mxu0 0.0
    %3490 = vmatprep.subr.mxu0 0.0
    %3491 = vmatpush1.msra.mxu0 0.0
    %3492 = vmatprep.subr.mxu0 0.0
    %3493 = vmatpush1.msra.mxu0 0.0
    %3494 = vmatprep.subr.mxu0 0.0
    %3495 = vmatpush1.msra.mxu0 0.0
    %3496 = vmatprep.subr.mxu0 0.0
    %3497 = vmatpush1.msra.mxu0 0.0
    %3498 = vmatprep.subr.mxu0 0.0
    %3499 = vmatpush1.msra.mxu0 0.0
    %3500 = vmatprep.subr.mxu0 0.0
    %3501 = vmatpush1.msra.mxu0 0.0
    %3502 = vmatprep.subr.mxu0 0.0
    %3503 = vmatpush1.msra.mxu0 0.0
    %3504 = vmatprep.subr.mxu0 0.0
    %3505 = vmatpush1.msra.mxu0 0.0
    %3506 = vmatprep.subr.mxu0 0.0
    %3507 = vmatpush1.msra.mxu0 0.0
    %3508 = vmatprep.subr.mxu0 0.0
    %3509 = vmatpush1.msra.mxu0 0.0
    %3510 = vmatprep.subr.mxu0 0.0
    %3511 = vmatpush1.msra.mxu0 0.0
    %3512 = vmatprep.subr.mxu0 0.0
    %3513 = vmatpush1.msra.mxu0 0.0
    %3514 = vmatprep.subr.mxu0 0.0
    %3515 = vmatpush1.msra.mxu0 0.0
    %3516 = vmatprep.subr.mxu0 0.0
    %3517 = vmatpush1.msra.mxu0 0.0
    %3518 = vmatprep.subr.mxu0 0.0
    %3519 = vmatpush1.msra.mxu0 0.0
    %3520 = vmatprep.subr.mxu0 0.0
    %3521 = vmatpush1.msra.mxu0 0.0
    %3522 = vmatprep.subr.mxu0 0.0
    %3523 = vmatpush1.msra.mxu0 0.0
    %3524 = vmatprep.subr.mxu0 0.0
    %3525 = vmatpush1.msra.mxu0 0.0
    %3526 = vmatprep.subr.mxu0 0.0
    %3527 = vmatpush1.msra.mxu0 0.0
    %3528 = vmatprep.subr.mxu0 0.0
    %3529 = vmatpush1.msra.mxu0 0.0
    %3530 = vmatprep.subr.mxu0 0.0
    %3531 = vmatpush1.msra.mxu0 0.0
    %3532 = vmatprep.subr.mxu0 0.0
    %3533 = vmatpush1.msra.mxu0 0.0
    %3534 = vmatprep.subr.mxu0 0.0
    %3535 = vmatpush1.msra.mxu0 0.0
    %3536 = vmatprep.subr.mxu0 0.0
    %3537 = vmatpush1.msra.mxu0 0.0
    %3538 = vmatprep.mubr.f32.mxu0 0.0
    %v3539 = vand.u32 %v3471, 4294901760
    %v3540 = vsub.f32 %v3471, %v3539
    %v3541 = vand.u32 %v3540, 4294901760
    %v3542 = vsub.f32 %v3540, %v3541
    %v3543 = vand.u32 %v3542, 4294901760
    %3544 = vmatmul.mubr.f32.gmra.mrb[0].mxu0 %v3543
    %v3545 = vpop.f32.mrb[0].mxu0
    %v3546 = vadd.f32 %v3467, %v3545
    %v3547 = vpop.f32.mrb[0].mxu0
    %3548 = vdwg.mxu0
    %3549 = vmatprep.subr.mxu0 0.0
    %v3550 = vand.u32 %v85, 4294901760
    %v3551 = vsub.f32 %v85, %v3550
    %v3552 = vand.u32 %v3551, 4294901760
    %v3553 = vsub.f32 %v3551, %v3552
    %v3554 = vand.u32 %v3553, 4294901760
    %3555 = vmatpush1.msra.mxu0 %v3554
    %3556 = vmatprep.subr.mxu0 0.0
    %3557 = vmatpush1.msra.mxu0 0.0
    %3558 = vmatprep.subr.mxu0 0.0
    %3559 = vmatpush1.msra.mxu0 0.0
    %3560 = vmatprep.subr.mxu0 0.0
    %3561 = vmatpush1.msra.mxu0 0.0
    %3562 = vmatprep.subr.mxu0 0.0
    %3563 = vmatpush1.msra.mxu0 0.0
    %3564 = vmatprep.subr.mxu0 0.0
    %3565 = vmatpush1.msra.mxu0 0.0
    %3566 = vmatprep.subr.mxu0 0.0
    %3567 = vmatpush1.msra.mxu0 0.0
    %3568 = vmatprep.subr.mxu0 0.0
    %3569 = vmatpush1.msra.mxu0 0.0
    %3570 = vmatprep.subr.mxu0 0.0
    %3571 = vmatpush1.msra.mxu0 0.0
    %3572 = vmatprep.subr.mxu0 0.0
    %3573 = vmatpush1.msra.mxu0 0.0
    %3574 = vmatprep.subr.mxu0 0.0
    %3575 = vmatpush1.msra.mxu0 0.0
    %3576 = vmatprep.subr.mxu0 0.0
    %3577 = vmatpush1.msra.mxu0 0.0
    %3578 = vmatprep.subr.mxu0 0.0
    %3579 = vmatpush1.msra.mxu0 0.0
    %3580 = vmatprep.subr.mxu0 0.0
    %3581 = vmatpush1.msra.mxu0 0.0
    %3582 = vmatprep.subr.mxu0 0.0
    %3583 = vmatpush1.msra.mxu0 0.0
    %3584 = vmatprep.subr.mxu0 0.0
    %3585 = vmatpush1.msra.mxu0 0.0
    %3586 = vmatprep.subr.mxu0 0.0
    %3587 = vmatpush1.msra.mxu0 0.0
    %3588 = vmatprep.subr.mxu0 0.0
    %3589 = vmatpush1.msra.mxu0 0.0
    %3590 = vmatprep.subr.mxu0 0.0
    %3591 = vmatpush1.msra.mxu0 0.0
    %3592 = vmatprep.subr.mxu0 0.0
    %3593 = vmatpush1.msra.mxu0 0.0
    %3594 = vmatprep.subr.mxu0 0.0
    %3595 = vmatpush1.msra.mxu0 0.0
    %3596 = vmatprep.subr.mxu0 0.0
    %3597 = vmatpush1.msra.mxu0 0.0
    %3598 = vmatprep.subr.mxu0 0.0
    %3599 = vmatpush1.msra.mxu0 0.0
    %3600 = vmatprep.subr.mxu0 0.0
    %3601 = vmatpush1.msra.mxu0 0.0
    %3602 = vmatprep.subr.mxu0 0.0
    %3603 = vmatpush1.msra.mxu0 0.0
    %3604 = vmatprep.subr.mxu0 0.0
    %3605 = vmatpush1.msra.mxu0 0.0
    %3606 = vmatprep.subr.mxu0 0.0
    %3607 = vmatpush1.msra.mxu0 0.0
    %3608 = vmatprep.subr.mxu0 0.0
    %3609 = vmatpush1.msra.mxu0 0.0
    %3610 = vmatprep.subr.mxu0 0.0
    %3611 = vmatpush1.msra.mxu0 0.0
    %3612 = vmatprep.subr.mxu0 0.0
    %3613 = vmatpush1.msra.mxu0 0.0
    %3614 = vmatprep.subr.mxu0 0.0
    %3615 = vmatpush1.msra.mxu0 0.0
    %3616 = vmatprep.subr.mxu0 0.0
    %3617 = vmatpush1.msra.mxu0 0.0
    %3618 = vmatprep.mubr.f32.mxu0 0.0
    %v3619 = vand.u32 %v3471, 4294901760
    %3620 = vmatmul.mubr.f32.gmra.mrb[0].mxu0 %v3619
    %v3621 = vpop.f32.mrb[0].mxu0
    %v3622 = vadd.f32 %v3546, %v3621
    %v3623 = vpop.f32.mrb[0].mxu0
    %3624 = vdwg.mxu0
    %3625 = vmatprep.subr.mxu0 0.0
    %v3626 = vand.u32 %v85, 4294901760
    %v3627 = vsub.f32 %v85, %v3626
    %3628 = vmatpush1.msra.mxu0 %v3627
    %3629 = vmatprep.subr.mxu0 0.0
    %3630 = vmatpush1.msra.mxu0 0.0
    %3631 = vmatprep.subr.mxu0 0.0
    %3632 = vmatpush1.msra.mxu0 0.0
    %3633 = vmatprep.subr.mxu0 0.0
    %3634 = vmatpush1.msra.mxu0 0.0
    %3635 = vmatprep.subr.mxu0 0.0
    %3636 = vmatpush1.msra.mxu0 0.0
    %3637 = vmatprep.subr.mxu0 0.0
    %3638 = vmatpush1.msra.mxu0 0.0
    %3639 = vmatprep.subr.mxu0 0.0
    %3640 = vmatpush1.msra.mxu0 0.0
    %3641 = vmatprep.subr.mxu0 0.0
    %3642 = vmatpush1.msra.mxu0 0.0
    %3643 = vmatprep.subr.mxu0 0.0
    %3644 = vmatpush1.msra.mxu0 0.0
    %3645 = vmatprep.subr.mxu0 0.0
    %3646 = vmatpush1.msra.mxu0 0.0
    %3647 = vmatprep.subr.mxu0 0.0
    %3648 = vmatpush1.msra.mxu0 0.0
    %3649 = vmatprep.subr.mxu0 0.0
    %3650 = vmatpush1.msra.mxu0 0.0
    %3651 = vmatprep.subr.mxu0 0.0
    %3652 = vmatpush1.msra.mxu0 0.0
    %3653 = vmatprep.subr.mxu0 0.0
    %3654 = vmatpush1.msra.mxu0 0.0
    %3655 = vmatprep.subr.mxu0 0.0
    %3656 = vmatpush1.msra.mxu0 0.0
    %3657 = vmatprep.subr.mxu0 0.0
    %3658 = vmatpush1.msra.mxu0 0.0
    %3659 = vmatprep.subr.mxu0 0.0
    %3660 = vmatpush1.msra.mxu0 0.0
    %3661 = vmatprep.subr.mxu0 0.0
    %3662 = vmatpush1.msra.mxu0 0.0
    %3663 = vmatprep.subr.mxu0 0.0
    %3664 = vmatpush1.msra.mxu0 0.0
    %3665 = vmatprep.subr.mxu0 0.0
    %3666 = vmatpush1.msra.mxu0 0.0
    %3667 = vmatprep.subr.mxu0 0.0
    %3668 = vmatpush1.msra.mxu0 0.0
    %3669 = vmatprep.subr.mxu0 0.0
    %3670 = vmatpush1.msra.mxu0 0.0
    %3671 = vmatprep.subr.mxu0 0.0
    %3672 = vmatpush1.msra.mxu0 0.0
    %3673 = vmatprep.subr.mxu0 0.0
    %3674 = vmatpush1.msra.mxu0 0.0
    %3675 = vmatprep.subr.mxu0 0.0
    %3676 = vmatpush1.msra.mxu0 0.0
    %3677 = vmatprep.subr.mxu0 0.0
    %3678 = vmatpush1.msra.mxu0 0.0
    %3679 = vmatprep.subr.mxu0 0.0
    %3680 = vmatpush1.msra.mxu0 0.0
    %3681 = vmatprep.subr.mxu0 0.0
    %3682 = vmatpush1.msra.mxu0 0.0
    %3683 = vmatprep.subr.mxu0 0.0
    %3684 = vmatpush1.msra.mxu0 0.0
    %3685 = vmatprep.subr.mxu0 0.0
    %3686 = vmatpush1.msra.mxu0 0.0
    %3687 = vmatprep.subr.mxu0 0.0
    %3688 = vmatpush1.msra.mxu0 0.0
    %3689 = vmatprep.subr.mxu0 0.0
    %3690 = vmatpush1.msra.mxu0 0.0
    %3691 = vmatprep.mubr.f32.mxu0 0.0
    %v3692 = vand.u32 %v3471, 4294901760
    %v3693 = vsub.f32 %v3471, %v3692
    %3694 = vmatmul.mubr.f32.gmra.mrb[0].mxu0 %v3693
    %v3695 = vpop.f32.mrb[0].mxu0
    %v3696 = vadd.f32 %v3622, %v3695
    %v3697 = vpop.f32.mrb[0].mxu0
    %3698 = vdwg.mxu0
    %3699 = vmatprep.subr.mxu0 0.0
    %v3700 = vand.u32 %v85, 4294901760
    %3701 = vmatpush1.msra.mxu0 %v3700
    %3702 = vmatprep.subr.mxu0 0.0
    %3703 = vmatpush1.msra.mxu0 0.0
    %3704 = vmatprep.subr.mxu0 0.0
    %3705 = vmatpush1.msra.mxu0 0.0
    %3706 = vmatprep.subr.mxu0 0.0
    %3707 = vmatpush1.msra.mxu0 0.0
    %3708 = vmatprep.subr.mxu0 0.0
    %3709 = vmatpush1.msra.mxu0 0.0
    %3710 = vmatprep.subr.mxu0 0.0
    %3711 = vmatpush1.msra.mxu0 0.0
    %3712 = vmatprep.subr.mxu0 0.0
    %3713 = vmatpush1.msra.mxu0 0.0
    %3714 = vmatprep.subr.mxu0 0.0
    %3715 = vmatpush1.msra.mxu0 0.0
    %3716 = vmatprep.subr.mxu0 0.0
    %3717 = vmatpush1.msra.mxu0 0.0
    %3718 = vmatprep.subr.mxu0 0.0
    %3719 = vmatpush1.msra.mxu0 0.0
    %3720 = vmatprep.subr.mxu0 0.0
    %3721 = vmatpush1.msra.mxu0 0.0
    %3722 = vmatprep.subr.mxu0 0.0
    %3723 = vmatpush1.msra.mxu0 0.0
    %3724 = vmatprep.subr.mxu0 0.0
    %3725 = vmatpush1.msra.mxu0 0.0
    %3726 = vmatprep.subr.mxu0 0.0
    %3727 = vmatpush1.msra.mxu0 0.0
    %3728 = vmatprep.subr.mxu0 0.0
    %3729 = vmatpush1.msra.mxu0 0.0
    %3730 = vmatprep.subr.mxu0 0.0
    %3731 = vmatpush1.msra.mxu0 0.0
    %3732 = vmatprep.subr.mxu0 0.0
    %3733 = vmatpush1.msra.mxu0 0.0
    %3734 = vmatprep.subr.mxu0 0.0
    %3735 = vmatpush1.msra.mxu0 0.0
    %3736 = vmatprep.subr.mxu0 0.0
    %3737 = vmatpush1.msra.mxu0 0.0
    %3738 = vmatprep.subr.mxu0 0.0
    %3739 = vmatpush1.msra.mxu0 0.0
    %3740 = vmatprep.subr.mxu0 0.0
    %3741 = vmatpush1.msra.mxu0 0.0
    %3742 = vmatprep.subr.mxu0 0.0
    %3743 = vmatpush1.msra.mxu0 0.0
    %3744 = vmatprep.subr.mxu0 0.0
    %3745 = vmatpush1.msra.mxu0 0.0
    %3746 = vmatprep.subr.mxu0 0.0
    %3747 = vmatpush1.msra.mxu0 0.0
    %3748 = vmatprep.subr.mxu0 0.0
    %3749 = vmatpush1.msra.mxu0 0.0
    %3750 = vmatprep.subr.mxu0 0.0
    %3751 = vmatpush1.msra.mxu0 0.0
    %3752 = vmatprep.subr.mxu0 0.0
    %3753 = vmatpush1.msra.mxu0 0.0
    %3754 = vmatprep.subr.mxu0 0.0
    %3755 = vmatpush1.msra.mxu0 0.0
    %3756 = vmatprep.subr.mxu0 0.0
    %3757 = vmatpush1.msra.mxu0 0.0
    %3758 = vmatprep.subr.mxu0 0.0
    %3759 = vmatpush1.msra.mxu0 0.0
    %3760 = vmatprep.subr.mxu0 0.0
    %3761 = vmatpush1.msra.mxu0 0.0
    %3762 = vmatprep.subr.mxu0 0.0
    %3763 = vmatpush1.msra.mxu0 0.0
    %3764 = vmatprep.mubr.f32.mxu0 0.0
    %v3765 = vand.u32 %v3471, 4294901760
    %v3766 = vsub.f32 %v3471, %v3765
    %v3767 = vand.u32 %v3766, 4294901760
    %3768 = vmatmul.mubr.f32.gmra.mrb[0].mxu0 %v3767
    %v3769 = vpop.f32.mrb[0].mxu0
    %v3770 = vadd.f32 %v3696, %v3769
    %v3771 = vpop.f32.mrb[0].mxu0
    %3772 = vdwg.mxu0
    %3773 = vmatprep.subr.mxu0 0.0
    %v3774 = vand.u32 %v85, 4294901760
    %v3775 = vsub.f32 %v85, %v3774
    %v3776 = vand.u32 %v3775, 4294901760
    %3777 = vmatpush1.msra.mxu0 %v3776
    %3778 = vmatprep.subr.mxu0 0.0
    %3779 = vmatpush1.msra.mxu0 0.0
    %3780 = vmatprep.subr.mxu0 0.0
    %3781 = vmatpush1.msra.mxu0 0.0
    %3782 = vmatprep.subr.mxu0 0.0
    %3783 = vmatpush1.msra.mxu0 0.0
    %3784 = vmatprep.subr.mxu0 0.0
    %3785 = vmatpush1.msra.mxu0 0.0
    %3786 = vmatprep.subr.mxu0 0.0
    %3787 = vmatpush1.msra.mxu0 0.0
    %3788 = vmatprep.subr.mxu0 0.0
    %3789 = vmatpush1.msra.mxu0 0.0
    %3790 = vmatprep.subr.mxu0 0.0
    %3791 = vmatpush1.msra.mxu0 0.0
    %3792 = vmatprep.subr.mxu0 0.0
    %3793 = vmatpush1.msra.mxu0 0.0
    %3794 = vmatprep.subr.mxu0 0.0
    %3795 = vmatpush1.msra.mxu0 0.0
    %3796 = vmatprep.subr.mxu0 0.0
    %3797 = vmatpush1.msra.mxu0 0.0
    %3798 = vmatprep.subr.mxu0 0.0
    %3799 = vmatpush1.msra.mxu0 0.0
    %3800 = vmatprep.subr.mxu0 0.0
    %3801 = vmatpush1.msra.mxu0 0.0
    %3802 = vmatprep.subr.mxu0 0.0
    %3803 = vmatpush1.msra.mxu0 0.0
    %3804 = vmatprep.subr.mxu0 0.0
    %3805 = vmatpush1.msra.mxu0 0.0
    %3806 = vmatprep.subr.mxu0 0.0
    %3807 = vmatpush1.msra.mxu0 0.0
    %3808 = vmatprep.subr.mxu0 0.0
    %3809 = vmatpush1.msra.mxu0 0.0
    %3810 = vmatprep.subr.mxu0 0.0
    %3811 = vmatpush1.msra.mxu0 0.0
    %3812 = vmatprep.subr.mxu0 0.0
    %3813 = vmatpush1.msra.mxu0 0.0
    %3814 = vmatprep.subr.mxu0 0.0
    %3815 = vmatpush1.msra.mxu0 0.0
    %3816 = vmatprep.subr.mxu0 0.0
    %3817 = vmatpush1.msra.mxu0 0.0
    %3818 = vmatprep.subr.mxu0 0.0
    %3819 = vmatpush1.msra.mxu0 0.0
    %3820 = vmatprep.subr.mxu0 0.0
    %3821 = vmatpush1.msra.mxu0 0.0
    %3822 = vmatprep.subr.mxu0 0.0
    %3823 = vmatpush1.msra.mxu0 0.0
    %3824 = vmatprep.subr.mxu0 0.0
    %3825 = vmatpush1.msra.mxu0 0.0
    %3826 = vmatprep.subr.mxu0 0.0
    %3827 = vmatpush1.msra.mxu0 0.0
    %3828 = vmatprep.subr.mxu0 0.0
    %3829 = vmatpush1.msra.mxu0 0.0
    %3830 = vmatprep.subr.mxu0 0.0
    %3831 = vmatpush1.msra.mxu0 0.0
    %3832 = vmatprep.subr.mxu0 0.0
    %3833 = vmatpush1.msra.mxu0 0.0
    %3834 = vmatprep.subr.mxu0 0.0
    %3835 = vmatpush1.msra.mxu0 0.0
    %3836 = vmatprep.subr.mxu0 0.0
    %3837 = vmatpush1.msra.mxu0 0.0
    %3838 = vmatprep.subr.mxu0 0.0
    %3839 = vmatpush1.msra.mxu0 0.0
    %3840 = vmatprep.mubr.f32.mxu0 0.0
    %v3841 = vand.u32 %v3471, 4294901760
    %3842 = vmatmul.mubr.f32.gmra.mrb[0].mxu0 %v3841
    %v3843 = vpop.f32.mrb[0].mxu0
    %v3844 = vadd.f32 %v3770, %v3843
    %v3845 = vpop.f32.mrb[0].mxu0
    %3846 = vdwg.mxu0
    %3847 = vmatprep.subr.mxu0 0.0
    %v3848 = vand.u32 %v85, 4294901760
    %3849 = vmatpush1.msra.mxu0 %v3848
    %3850 = vmatprep.subr.mxu0 0.0
    %3851 = vmatpush1.msra.mxu0 0.0
    %3852 = vmatprep.subr.mxu0 0.0
    %3853 = vmatpush1.msra.mxu0 0.0
    %3854 = vmatprep.subr.mxu0 0.0
    %3855 = vmatpush1.msra.mxu0 0.0
    %3856 = vmatprep.subr.mxu0 0.0
    %3857 = vmatpush1.msra.mxu0 0.0
    %3858 = vmatprep.subr.mxu0 0.0
    %3859 = vmatpush1.msra.mxu0 0.0
    %3860 = vmatprep.subr.mxu0 0.0
    %3861 = vmatpush1.msra.mxu0 0.0
    %3862 = vmatprep.subr.mxu0 0.0
    %3863 = vmatpush1.msra.mxu0 0.0
    %3864 = vmatprep.subr.mxu0 0.0
    %3865 = vmatpush1.msra.mxu0 0.0
    %3866 = vmatprep.subr.mxu0 0.0
    %3867 = vmatpush1.msra.mxu0 0.0
    %3868 = vmatprep.subr.mxu0 0.0
    %3869 = vmatpush1.msra.mxu0 0.0
    %3870 = vmatprep.subr.mxu0 0.0
    %3871 = vmatpush1.msra.mxu0 0.0
    %3872 = vmatprep.subr.mxu0 0.0
    %3873 = vmatpush1.msra.mxu0 0.0
    %3874 = vmatprep.subr.mxu0 0.0
    %3875 = vmatpush1.msra.mxu0 0.0
    %3876 = vmatprep.subr.mxu0 0.0
    %3877 = vmatpush1.msra.mxu0 0.0
    %3878 = vmatprep.subr.mxu0 0.0
    %3879 = vmatpush1.msra.mxu0 0.0
    %3880 = vmatprep.subr.mxu0 0.0
    %3881 = vmatpush1.msra.mxu0 0.0
    %3882 = vmatprep.subr.mxu0 0.0
    %3883 = vmatpush1.msra.mxu0 0.0
    %3884 = vmatprep.subr.mxu0 0.0
    %3885 = vmatpush1.msra.mxu0 0.0
    %3886 = vmatprep.subr.mxu0 0.0
    %3887 = vmatpush1.msra.mxu0 0.0
    %3888 = vmatprep.subr.mxu0 0.0
    %3889 = vmatpush1.msra.mxu0 0.0
    %3890 = vmatprep.subr.mxu0 0.0
    %3891 = vmatpush1.msra.mxu0 0.0
    %3892 = vmatprep.subr.mxu0 0.0
    %3893 = vmatpush1.msra.mxu0 0.0
    %3894 = vmatprep.subr.mxu0 0.0
    %3895 = vmatpush1.msra.mxu0 0.0
    %3896 = vmatprep.subr.mxu0 0.0
    %3897 = vmatpush1.msra.mxu0 0.0
    %3898 = vmatprep.subr.mxu0 0.0
    %3899 = vmatpush1.msra.mxu0 0.0
    %3900 = vmatprep.subr.mxu0 0.0
    %3901 = vmatpush1.msra.mxu0 0.0
    %3902 = vmatprep.subr.mxu0 0.0
    %3903 = vmatpush1.msra.mxu0 0.0
    %3904 = vmatprep.subr.mxu0 0.0
    %3905 = vmatpush1.msra.mxu0 0.0
    %3906 = vmatprep.subr.mxu0 0.0
    %3907 = vmatpush1.msra.mxu0 0.0
    %3908 = vmatprep.subr.mxu0 0.0
    %3909 = vmatpush1.msra.mxu0 0.0
    %3910 = vmatprep.subr.mxu0 0.0
    %3911 = vmatpush1.msra.mxu0 0.0
    %3912 = vmatprep.mubr.f32.mxu0 0.0
    %v3913 = vand.u32 %v3471, 4294901760
    %3914 = vmatmul.mubr.f32.gmra.mrb[0].mxu0 %v3913
    %v3915 = vpop.f32.mrb[0].mxu0
    %v3916 = vadd.f32 %v3844, %v3915
    %v3917 = vpop.f32.mrb[0].mxu0
    %3918 = vdwg.mxu0
    %v3919 = vtanh.pop %v3916
    %v3920 = vmul.f32 %v3919, 0.5
    %v3921 = vadd.f32 %v3920, 0.5
    %v3922 = vmul.f32 %v3921, %v2971
    %3924 = vrot.lane.b32.xlu0 %v3919, 32
    %v3925 = vpop.permute.xlu0 %3924
    %v3927 = vmul.f32 %v3921, %v3925
    %3929 = vrot.lane.b32.xlu0 %v3927, 32
    %v3930 = vpop.permute.xlu0 %3929
    %v3932 = vadd.f32 %v3922, %v3930
    %v3933 = vtanh.pop %v3932
    %3935 = vrot.lane.b32.xlu0 %v3933, 32
    %v3936 = vpop.permute.xlu0 %3935
    %v3938 = vmul.f32 %v3921, %v3936
    %s3939 = scalar_lea.vmem [#allocation6], 16
    %v3940 = vld [vmem:[%s3939] sm:$0xf]
    %3942 = vrot.lane.b32.xlu0 %v3938, 64
    %v3943 = vpop.permute.xlu0 %3942
    %v3944 = vsel %vm93, %v3943, 0
    %3946 = vmatprep.subr.mxu0 0.0
    %v3947 = vand.u32 %v86, 4294901760
    %3948 = vmatpush1.msra.mxu0 %v3947
    %3949 = vmatprep.subr.mxu0 0.0
    %v3950 = vand.u32 %v87, 4294901760
    %3951 = vmatpush1.msra.mxu0 %v3950
    %3952 = vmatprep.subr.mxu0 0.0
    %v3953 = vand.u32 %v88, 4294901760
    %3954 = vmatpush1.msra.mxu0 %v3953
    %3955 = vmatprep.subr.mxu0 0.0
    %v3956 = vand.u32 %v89, 4294901760
    %3957 = vmatpush1.msra.mxu0 %v3956
    %3958 = vmatprep.subr.mxu0 0.0
    %3959 = vmatpush1.msra.mxu0 0.0
    %3960 = vmatprep.subr.mxu0 0.0
    %3961 = vmatpush1.msra.mxu0 0.0
    %3962 = vmatprep.subr.mxu0 0.0
    %3963 = vmatpush1.msra.mxu0 0.0
    %3964 = vmatprep.subr.mxu0 0.0
    %3965 = vmatpush1.msra.mxu0 0.0
    %3966 = vmatprep.subr.mxu0 0.0
    %3967 = vmatpush1.msra.mxu0 0.0
    %3968 = vmatprep.subr.mxu0 0.0
    %3969 = vmatpush1.msra.mxu0 0.0
    %3970 = vmatprep.subr.mxu0 0.0
    %3971 = vmatpush1.msra.mxu0 0.0
    %3972 = vmatprep.subr.mxu0 0.0
    %3973 = vmatpush1.msra.mxu0 0.0
    %3974 = vmatprep.subr.mxu0 0.0
    %3975 = vmatpush1.msra.mxu0 0.0
    %3976 = vmatprep.subr.mxu0 0.0
    %3977 = vmatpush1.msra.mxu0 0.0
    %3978 = vmatprep.subr.mxu0 0.0
    %3979 = vmatpush1.msra.mxu0 0.0
    %3980 = vmatprep.subr.mxu0 0.0
    %3981 = vmatpush1.msra.mxu0 0.0
    %3982 = vmatprep.subr.mxu0 0.0
    %3983 = vmatpush1.msra.mxu0 0.0
    %3984 = vmatprep.subr.mxu0 0.0
    %3985 = vmatpush1.msra.mxu0 0.0
    %3986 = vmatprep.subr.mxu0 0.0
    %3987 = vmatpush1.msra.mxu0 0.0
    %3988 = vmatprep.subr.mxu0 0.0
    %3989 = vmatpush1.msra.mxu0 0.0
    %3990 = vmatprep.subr.mxu0 0.0
    %3991 = vmatpush1.msra.mxu0 0.0
    %3992 = vmatprep.subr.mxu0 0.0
    %3993 = vmatpush1.msra.mxu0 0.0
    %3994 = vmatprep.subr.mxu0 0.0
    %3995 = vmatpush1.msra.mxu0 0.0
    %3996 = vmatprep.subr.mxu0 0.0
    %3997 = vmatpush1.msra.mxu0 0.0
    %3998 = vmatprep.subr.mxu0 0.0
    %3999 = vmatpush1.msra.mxu0 0.0
    %4000 = vmatprep.subr.mxu0 0.0
    %4001 = vmatpush1.msra.mxu0 0.0
    %4002 = vmatprep.subr.mxu0 0.0
    %4003 = vmatpush1.msra.mxu0 0.0
    %4004 = vmatprep.subr.mxu0 0.0
    %4005 = vmatpush1.msra.mxu0 0.0
    %4006 = vmatprep.subr.mxu0 0.0
    %4007 = vmatpush1.msra.mxu0 0.0
    %4008 = vmatprep.subr.mxu0 0.0
    %4009 = vmatpush1.msra.mxu0 0.0
    %4010 = vmatprep.subr.mxu0 0.0
    %4011 = vmatpush1.msra.mxu0 0.0
    %4012 = vmatprep.subr.mxu0 0.0
    %4013 = vmatpush1.msra.mxu0 0.0
    %4014 = vmatprep.mubr.f32.mxu0 0.0
    %v4015 = vand.u32 %v3944, 4294901760
    %v4016 = vsub.f32 %v3944, %v4015
    %v4017 = vand.u32 %v4016, 4294901760
    %v4018 = vsub.f32 %v4016, %v4017
    %v4019 = vand.u32 %v4018, 4294901760
    %4020 = vmatmul.mubr.f32.gmra.mrb[0].mxu0 %v4019
    %v4021 = vpop.f32.mrb[0].mxu0
    %v4022 = vadd.f32 0.0, %v4021
    %v4023 = vpop.f32.mrb[0].mxu0
    %4024 = vdwg.mxu0
    %4025 = vmatprep.subr.mxu0 0.0
    %v4026 = vand.u32 %v86, 4294901760
    %v4027 = vsub.f32 %v86, %v4026
    %v4028 = vand.u32 %v4027, 4294901760
    %v4029 = vsub.f32 %v4027, %v4028
    %v4030 = vand.u32 %v4029, 4294901760
    %4031 = vmatpush1.msra.mxu0 %v4030
    %4032 = vmatprep.subr.mxu0 0.0
    %v4033 = vand.u32 %v87, 4294901760
    %v4034 = vsub.f32 %v87, %v4033
    %v4035 = vand.u32 %v4034, 4294901760
    %v4036 = vsub.f32 %v4034, %v4035
    %v4037 = vand.u32 %v4036, 4294901760
    %4038 = vmatpush1.msra.mxu0 %v4037
    %4039 = vmatprep.subr.mxu0 0.0
    %v4040 = vand.u32 %v88, 4294901760
    %v4041 = vsub.f32 %v88, %v4040
    %v4042 = vand.u32 %v4041, 4294901760
    %v4043 = vsub.f32 %v4041, %v4042
    %v4044 = vand.u32 %v4043, 4294901760
    %4045 = vmatpush1.msra.mxu0 %v4044
    %4046 = vmatprep.subr.mxu0 0.0
    %v4047 = vand.u32 %v89, 4294901760
    %v4048 = vsub.f32 %v89, %v4047
    %v4049 = vand.u32 %v4048, 4294901760
    %v4050 = vsub.f32 %v4048, %v4049
    %v4051 = vand.u32 %v4050, 4294901760
    %4052 = vmatpush1.msra.mxu0 %v4051
    %4053 = vmatprep.subr.mxu0 0.0
    %4054 = vmatpush1.msra.mxu0 0.0
    %4055 = vmatprep.subr.mxu0 0.0
    %4056 = vmatpush1.msra.mxu0 0.0
    %4057 = vmatprep.subr.mxu0 0.0
    %4058 = vmatpush1.msra.mxu0 0.0
    %4059 = vmatprep.subr.mxu0 0.0
    %4060 = vmatpush1.msra.mxu0 0.0
    %4061 = vmatprep.subr.mxu0 0.0
    %4062 = vmatpush1.msra.mxu0 0.0
    %4063 = vmatprep.subr.mxu0 0.0
    %4064 = vmatpush1.msra.mxu0 0.0
    %4065 = vmatprep.subr.mxu0 0.0
    %4066 = vmatpush1.msra.mxu0 0.0
    %4067 = vmatprep.subr.mxu0 0.0
    %4068 = vmatpush1.msra.mxu0 0.0
    %4069 = vmatprep.subr.mxu0 0.0
    %4070 = vmatpush1.msra.mxu0 0.0
    %4071 = vmatprep.subr.mxu0 0.0
    %4072 = vmatpush1.msra.mxu0 0.0
    %4073 = vmatprep.subr.mxu0 0.0
    %4074 = vmatpush1.msra.mxu0 0.0
    %4075 = vmatprep.subr.mxu0 0.0
    %4076 = vmatpush1.msra.mxu0 0.0
    %4077 = vmatprep.subr.mxu0 0.0
    %4078 = vmatpush1.msra.mxu0 0.0
    %4079 = vmatprep.subr.mxu0 0.0
    %4080 = vmatpush1.msra.mxu0 0.0
    %4081 = vmatprep.subr.mxu0 0.0
    %4082 = vmatpush1.msra.mxu0 0.0
    %4083 = vmatprep.subr.mxu0 0.0
    %4084 = vmatpush1.msra.mxu0 0.0
    %4085 = vmatprep.subr.mxu0 0.0
    %4086 = vmatpush1.msra.mxu0 0.0
    %4087 = vmatprep.subr.mxu0 0.0
    %4088 = vmatpush1.msra.mxu0 0.0
    %4089 = vmatprep.subr.mxu0 0.0
    %4090 = vmatpush1.msra.mxu0 0.0
    %4091 = vmatprep.subr.mxu0 0.0
    %4092 = vmatpush1.msra.mxu0 0.0
    %4093 = vmatprep.subr.mxu0 0.0
    %4094 = vmatpush1.msra.mxu0 0.0
    %4095 = vmatprep.subr.mxu0 0.0
    %4096 = vmatpush1.msra.mxu0 0.0
    %4097 = vmatprep.subr.mxu0 0.0
    %4098 = vmatpush1.msra.mxu0 0.0
    %4099 = vmatprep.subr.mxu0 0.0
    %4100 = vmatpush1.msra.mxu0 0.0
    %4101 = vmatprep.subr.mxu0 0.0
    %4102 = vmatpush1.msra.mxu0 0.0
    %4103 = vmatprep.subr.mxu0 0.0
    %4104 = vmatpush1.msra.mxu0 0.0
    %4105 = vmatprep.subr.mxu0 0.0
    %4106 = vmatpush1.msra.mxu0 0.0
    %4107 = vmatprep.subr.mxu0 0.0
    %4108 = vmatpush1.msra.mxu0 0.0
    %4109 = vmatprep.mubr.f32.mxu0 0.0
    %v4110 = vand.u32 %v3944, 4294901760
    %4111 = vmatmul.mubr.f32.gmra.mrb[0].mxu0 %v4110
    %v4112 = vpop.f32.mrb[0].mxu0
    %v4113 = vadd.f32 %v4022, %v4112
    %v4114 = vpop.f32.mrb[0].mxu0
    %4115 = vdwg.mxu0
    %4116 = vmatprep.subr.mxu0 0.0
    %v4117 = vand.u32 %v86, 4294901760
    %v4118 = vsub.f32 %v86, %v4117
    %4119 = vmatpush1.msra.mxu0 %v4118
    %4120 = vmatprep.subr.mxu0 0.0
    %v4121 = vand.u32 %v87, 4294901760
    %v4122 = vsub.f32 %v87, %v4121
    %4123 = vmatpush1.msra.mxu0 %v4122
    %4124 = vmatprep.subr.mxu0 0.0
    %v4125 = vand.u32 %v88, 4294901760
    %v4126 = vsub.f32 %v88, %v4125
    %4127 = vmatpush1.msra.mxu0 %v4126
    %4128 = vmatprep.subr.mxu0 0.0
    %v4129 = vand.u32 %v89, 4294901760
    %v4130 = vsub.f32 %v89, %v4129
    %4131 = vmatpush1.msra.mxu0 %v4130
    %4132 = vmatprep.subr.mxu0 0.0
    %4133 = vmatpush1.msra.mxu0 0.0
    %4134 = vmatprep.subr.mxu0 0.0
    %4135 = vmatpush1.msra.mxu0 0.0
    %4136 = vmatprep.subr.mxu0 0.0
    %4137 = vmatpush1.msra.mxu0 0.0
    %4138 = vmatprep.subr.mxu0 0.0
    %4139 = vmatpush1.msra.mxu0 0.0
    %4140 = vmatprep.subr.mxu0 0.0
    %4141 = vmatpush1.msra.mxu0 0.0
    %4142 = vmatprep.subr.mxu0 0.0
    %4143 = vmatpush1.msra.mxu0 0.0
    %4144 = vmatprep.subr.mxu0 0.0
    %4145 = vmatpush1.msra.mxu0 0.0
    %4146 = vmatprep.subr.mxu0 0.0
    %4147 = vmatpush1.msra.mxu0 0.0
    %4148 = vmatprep.subr.mxu0 0.0
    %4149 = vmatpush1.msra.mxu0 0.0
    %4150 = vmatprep.subr.mxu0 0.0
    %4151 = vmatpush1.msra.mxu0 0.0
    %4152 = vmatprep.subr.mxu0 0.0
    %4153 = vmatpush1.msra.mxu0 0.0
    %4154 = vmatprep.subr.mxu0 0.0
    %4155 = vmatpush1.msra.mxu0 0.0
    %4156 = vmatprep.subr.mxu0 0.0
    %4157 = vmatpush1.msra.mxu0 0.0
    %4158 = vmatprep.subr.mxu0 0.0
    %4159 = vmatpush1.msra.mxu0 0.0
    %4160 = vmatprep.subr.mxu0 0.0
    %4161 = vmatpush1.msra.mxu0 0.0
    %4162 = vmatprep.subr.mxu0 0.0
    %4163 = vmatpush1.msra.mxu0 0.0
    %4164 = vmatprep.subr.mxu0 0.0
    %4165 = vmatpush1.msra.mxu0 0.0
    %4166 = vmatprep.subr.mxu0 0.0
    %4167 = vmatpush1.msra.mxu0 0.0
    %4168 = vmatprep.subr.mxu0 0.0
    %4169 = vmatpush1.msra.mxu0 0.0
    %4170 = vmatprep.subr.mxu0 0.0
    %4171 = vmatpush1.msra.mxu0 0.0
    %4172 = vmatprep.subr.mxu0 0.0
    %4173 = vmatpush1.msra.mxu0 0.0
    %4174 = vmatprep.subr.mxu0 0.0
    %4175 = vmatpush1.msra.mxu0 0.0
    %4176 = vmatprep.subr.mxu0 0.0
    %4177 = vmatpush1.msra.mxu0 0.0
    %4178 = vmatprep.subr.mxu0 0.0
    %4179 = vmatpush1.msra.mxu0 0.0
    %4180 = vmatprep.subr.mxu0 0.0
    %4181 = vmatpush1.msra.mxu0 0.0
    %4182 = vmatprep.subr.mxu0 0.0
    %4183 = vmatpush1.msra.mxu0 0.0
    %4184 = vmatprep.subr.mxu0 0.0
    %4185 = vmatpush1.msra.mxu0 0.0
    %4186 = vmatprep.subr.mxu0 0.0
    %4187 = vmatpush1.msra.mxu0 0.0
    %4188 = vmatprep.mubr.f32.mxu0 0.0
    %v4189 = vand.u32 %v3944, 4294901760
    %v4190 = vsub.f32 %v3944, %v4189
    %4191 = vmatmul.mubr.f32.gmra.mrb[0].mxu0 %v4190
    %v4192 = vpop.f32.mrb[0].mxu0
    %v4193 = vadd.f32 %v4113, %v4192
    %v4194 = vpop.f32.mrb[0].mxu0
    %4195 = vdwg.mxu0
    %4196 = vmatprep.subr.mxu0 0.0
    %v4197 = vand.u32 %v86, 4294901760
    %4198 = vmatpush1.msra.mxu0 %v4197
    %4199 = vmatprep.subr.mxu0 0.0
    %v4200 = vand.u32 %v87, 4294901760
    %4201 = vmatpush1.msra.mxu0 %v4200
    %4202 = vmatprep.subr.mxu0 0.0
    %v4203 = vand.u32 %v88, 4294901760
    %4204 = vmatpush1.msra.mxu0 %v4203
    %4205 = vmatprep.subr.mxu0 0.0
    %v4206 = vand.u32 %v89, 4294901760
    %4207 = vmatpush1.msra.mxu0 %v4206
    %4208 = vmatprep.subr.mxu0 0.0
    %4209 = vmatpush1.msra.mxu0 0.0
    %4210 = vmatprep.subr.mxu0 0.0
    %4211 = vmatpush1.msra.mxu0 0.0
    %4212 = vmatprep.subr.mxu0 0.0
    %4213 = vmatpush1.msra.mxu0 0.0
    %4214 = vmatprep.subr.mxu0 0.0
    %4215 = vmatpush1.msra.mxu0 0.0
    %4216 = vmatprep.subr.mxu0 0.0
    %4217 = vmatpush1.msra.mxu0 0.0
    %4218 = vmatprep.subr.mxu0 0.0
    %4219 = vmatpush1.msra.mxu0 0.0
    %4220 = vmatprep.subr.mxu0 0.0
    %4221 = vmatpush1.msra.mxu0 0.0
    %4222 = vmatprep.subr.mxu0 0.0
    %4223 = vmatpush1.msra.mxu0 0.0
    %4224 = vmatprep.subr.mxu0 0.0
    %4225 = vmatpush1.msra.mxu0 0.0
    %4226 = vmatprep.subr.mxu0 0.0
    %4227 = vmatpush1.msra.mxu0 0.0
    %4228 = vmatprep.subr.mxu0 0.0
    %4229 = vmatpush1.msra.mxu0 0.0
    %4230 = vmatprep.subr.mxu0 0.0
    %4231 = vmatpush1.msra.mxu0 0.0
    %4232 = vmatprep.subr.mxu0 0.0
    %4233 = vmatpush1.msra.mxu0 0.0
    %4234 = vmatprep.subr.mxu0 0.0
    %4235 = vmatpush1.msra.mxu0 0.0
    %4236 = vmatprep.subr.mxu0 0.0
    %4237 = vmatpush1.msra.mxu0 0.0
    %4238 = vmatprep.subr.mxu0 0.0
    %4239 = vmatpush1.msra.mxu0 0.0
    %4240 = vmatprep.subr.mxu0 0.0
    %4241 = vmatpush1.msra.mxu0 0.0
    %4242 = vmatprep.subr.mxu0 0.0
    %4243 = vmatpush1.msra.mxu0 0.0
    %4244 = vmatprep.subr.mxu0 0.0
    %4245 = vmatpush1.msra.mxu0 0.0
    %4246 = vmatprep.subr.mxu0 0.0
    %4247 = vmatpush1.msra.mxu0 0.0
    %4248 = vmatprep.subr.mxu0 0.0
    %4249 = vmatpush1.msra.mxu0 0.0
    %4250 = vmatprep.subr.mxu0 0.0
    %4251 = vmatpush1.msra.mxu0 0.0
    %4252 = vmatprep.subr.mxu0 0.0
    %4253 = vmatpush1.msra.mxu0 0.0
    %4254 = vmatprep.subr.mxu0 0.0
    %4255 = vmatpush1.msra.mxu0 0.0
    %4256 = vmatprep.subr.mxu0 0.0
    %4257 = vmatpush1.msra.mxu0 0.0
    %4258 = vmatprep.subr.mxu0 0.0
    %4259 = vmatpush1.msra.mxu0 0.0
    %4260 = vmatprep.subr.mxu0 0.0
    %4261 = vmatpush1.msra.mxu0 0.0
    %4262 = vmatprep.subr.mxu0 0.0
    %4263 = vmatpush1.msra.mxu0 0.0
    %4264 = vmatprep.mubr.f32.mxu0 0.0
    %v4265 = vand.u32 %v3944, 4294901760
    %v4266 = vsub.f32 %v3944, %v4265
    %v4267 = vand.u32 %v4266, 4294901760
    %4268 = vmatmul.mubr.f32.gmra.mrb[0].mxu0 %v4267
    %v4269 = vpop.f32.mrb[0].mxu0
    %v4270 = vadd.f32 %v4193, %v4269
    %v4271 = vpop.f32.mrb[0].mxu0
    %4272 = vdwg.mxu0
    %4273 = vmatprep.subr.mxu0 0.0
    %v4274 = vand.u32 %v86, 4294901760
    %v4275 = vsub.f32 %v86, %v4274
    %v4276 = vand.u32 %v4275, 4294901760
    %4277 = vmatpush1.msra.mxu0 %v4276
    %4278 = vmatprep.subr.mxu0 0.0
    %v4279 = vand.u32 %v87, 4294901760
    %v4280 = vsub.f32 %v87, %v4279
    %v4281 = vand.u32 %v4280, 4294901760
    %4282 = vmatpush1.msra.mxu0 %v4281
    %4283 = vmatprep.subr.mxu0 0.0
    %v4284 = vand.u32 %v88, 4294901760
    %v4285 = vsub.f32 %v88, %v4284
    %v4286 = vand.u32 %v4285, 4294901760
    %4287 = vmatpush1.msra.mxu0 %v4286
    %4288 = vmatprep.subr.mxu0 0.0
    %v4289 = vand.u32 %v89, 4294901760
    %v4290 = vsub.f32 %v89, %v4289
    %v4291 = vand.u32 %v4290, 4294901760
    %4292 = vmatpush1.msra.mxu0 %v4291
    %4293 = vmatprep.subr.mxu0 0.0
    %4294 = vmatpush1.msra.mxu0 0.0
    %4295 = vmatprep.subr.mxu0 0.0
    %4296 = vmatpush1.msra.mxu0 0.0
    %4297 = vmatprep.subr.mxu0 0.0
    %4298 = vmatpush1.msra.mxu0 0.0
    %4299 = vmatprep.subr.mxu0 0.0
    %4300 = vmatpush1.msra.mxu0 0.0
    %4301 = vmatprep.subr.mxu0 0.0
    %4302 = vmatpush1.msra.mxu0 0.0
    %4303 = vmatprep.subr.mxu0 0.0
    %4304 = vmatpush1.msra.mxu0 0.0
    %4305 = vmatprep.subr.mxu0 0.0
    %4306 = vmatpush1.msra.mxu0 0.0
    %4307 = vmatprep.subr.mxu0 0.0
    %4308 = vmatpush1.msra.mxu0 0.0
    %4309 = vmatprep.subr.mxu0 0.0
    %4310 = vmatpush1.msra.mxu0 0.0
    %4311 = vmatprep.subr.mxu0 0.0
    %4312 = vmatpush1.msra.mxu0 0.0
    %4313 = vmatprep.subr.mxu0 0.0
    %4314 = vmatpush1.msra.mxu0 0.0
    %4315 = vmatprep.subr.mxu0 0.0
    %4316 = vmatpush1.msra.mxu0 0.0
    %4317 = vmatprep.subr.mxu0 0.0
    %4318 = vmatpush1.msra.mxu0 0.0
    %4319 = vmatprep.subr.mxu0 0.0
    %4320 = vmatpush1.msra.mxu0 0.0
    %4321 = vmatprep.subr.mxu0 0.0
    %4322 = vmatpush1.msra.mxu0 0.0
    %4323 = vmatprep.subr.mxu0 0.0
    %4324 = vmatpush1.msra.mxu0 0.0
    %4325 = vmatprep.subr.mxu0 0.0
    %4326 = vmatpush1.msra.mxu0 0.0
    %4327 = vmatprep.subr.mxu0 0.0
    %4328 = vmatpush1.msra.mxu0 0.0
    %4329 = vmatprep.subr.mxu0 0.0
    %4330 = vmatpush1.msra.mxu0 0.0
    %4331 = vmatprep.subr.mxu0 0.0
    %4332 = vmatpush1.msra.mxu0 0.0
    %4333 = vmatprep.subr.mxu0 0.0
    %4334 = vmatpush1.msra.mxu0 0.0
    %4335 = vmatprep.subr.mxu0 0.0
    %4336 = vmatpush1.msra.mxu0 0.0
    %4337 = vmatprep.subr.mxu0 0.0
    %4338 = vmatpush1.msra.mxu0 0.0
    %4339 = vmatprep.subr.mxu0 0.0
    %4340 = vmatpush1.msra.mxu0 0.0
    %4341 = vmatprep.subr.mxu0 0.0
    %4342 = vmatpush1.msra.mxu0 0.0
    %4343 = vmatprep.subr.mxu0 0.0
    %4344 = vmatpush1.msra.mxu0 0.0
    %4345 = vmatprep.subr.mxu0 0.0
    %4346 = vmatpush1.msra.mxu0 0.0
    %4347 = vmatprep.subr.mxu0 0.0
    %4348 = vmatpush1.msra.mxu0 0.0
    %4349 = vmatprep.mubr.f32.mxu0 0.0
    %v4350 = vand.u32 %v3944, 4294901760
    %4351 = vmatmul.mubr.f32.gmra.mrb[0].mxu0 %v4350
    %v4352 = vpop.f32.mrb[0].mxu0
    %v4353 = vadd.f32 %v4270, %v4352
    %v4354 = vpop.f32.mrb[0].mxu0
    %4355 = vdwg.mxu0
    %4356 = vmatprep.subr.mxu0 0.0
    %v4357 = vand.u32 %v86, 4294901760
    %4358 = vmatpush1.msra.mxu0 %v4357
    %4359 = vmatprep.subr.mxu0 0.0
    %v4360 = vand.u32 %v87, 4294901760
    %4361 = vmatpush1.msra.mxu0 %v4360
    %4362 = vmatprep.subr.mxu0 0.0
    %v4363 = vand.u32 %v88, 4294901760
    %4364 = vmatpush1.msra.mxu0 %v4363
    %4365 = vmatprep.subr.mxu0 0.0
    %v4366 = vand.u32 %v89, 4294901760
    %4367 = vmatpush1.msra.mxu0 %v4366
    %4368 = vmatprep.subr.mxu0 0.0
    %4369 = vmatpush1.msra.mxu0 0.0
    %4370 = vmatprep.subr.mxu0 0.0
    %4371 = vmatpush1.msra.mxu0 0.0
    %4372 = vmatprep.subr.mxu0 0.0
    %4373 = vmatpush1.msra.mxu0 0.0
    %4374 = vmatprep.subr.mxu0 0.0
    %4375 = vmatpush1.msra.mxu0 0.0
    %4376 = vmatprep.subr.mxu0 0.0
    %4377 = vmatpush1.msra.mxu0 0.0
    %4378 = vmatprep.subr.mxu0 0.0
    %4379 = vmatpush1.msra.mxu0 0.0
    %4380 = vmatprep.subr.mxu0 0.0
    %4381 = vmatpush1.msra.mxu0 0.0
    %4382 = vmatprep.subr.mxu0 0.0
    %4383 = vmatpush1.msra.mxu0 0.0
    %4384 = vmatprep.subr.mxu0 0.0
    %4385 = vmatpush1.msra.mxu0 0.0
    %4386 = vmatprep.subr.mxu0 0.0
    %4387 = vmatpush1.msra.mxu0 0.0
    %4388 = vmatprep.subr.mxu0 0.0
    %4389 = vmatpush1.msra.mxu0 0.0
    %4390 = vmatprep.subr.mxu0 0.0
    %4391 = vmatpush1.msra.mxu0 0.0
    %4392 = vmatprep.subr.mxu0 0.0
    %4393 = vmatpush1.msra.mxu0 0.0
    %4394 = vmatprep.subr.mxu0 0.0
    %4395 = vmatpush1.msra.mxu0 0.0
    %4396 = vmatprep.subr.mxu0 0.0
    %4397 = vmatpush1.msra.mxu0 0.0
    %4398 = vmatprep.subr.mxu0 0.0
    %4399 = vmatpush1.msra.mxu0 0.0
    %4400 = vmatprep.subr.mxu0 0.0
    %4401 = vmatpush1.msra.mxu0 0.0
    %4402 = vmatprep.subr.mxu0 0.0
    %4403 = vmatpush1.msra.mxu0 0.0
    %4404 = vmatprep.subr.mxu0 0.0
    %4405 = vmatpush1.msra.mxu0 0.0
    %4406 = vmatprep.subr.mxu0 0.0
    %4407 = vmatpush1.msra.mxu0 0.0
    %4408 = vmatprep.subr.mxu0 0.0
    %4409 = vmatpush1.msra.mxu0 0.0
    %4410 = vmatprep.subr.mxu0 0.0
    %4411 = vmatpush1.msra.mxu0 0.0
    %4412 = vmatprep.subr.mxu0 0.0
    %4413 = vmatpush1.msra.mxu0 0.0
    %4414 = vmatprep.subr.mxu0 0.0
    %4415 = vmatpush1.msra.mxu0 0.0
    %4416 = vmatprep.subr.mxu0 0.0
    %4417 = vmatpush1.msra.mxu0 0.0
    %4418 = vmatprep.subr.mxu0 0.0
    %4419 = vmatpush1.msra.mxu0 0.0
    %4420 = vmatprep.subr.mxu0 0.0
    %4421 = vmatpush1.msra.mxu0 0.0
    %4422 = vmatprep.subr.mxu0 0.0
    %4423 = vmatpush1.msra.mxu0 0.0
    %4424 = vmatprep.mubr.f32.mxu0 0.0
    %v4425 = vand.u32 %v3944, 4294901760
    %4426 = vmatmul.mubr.f32.gmra.mrb[0].mxu0 %v4425
    %v4427 = vpop.f32.mrb[0].mxu0
    %v4428 = vadd.f32 %v4353, %v4427
    %v4429 = vpop.f32.mrb[0].mxu0
    %4430 = vdwg.mxu0
    %v4432 = vsel %vm582, %v3940, 0
    %4434 = vmatprep.subr.mxu0 0.0
    %v4435 = vand.u32 %v85, 4294901760
    %4436 = vmatpush1.msra.mxu0 %v4435
    %4437 = vmatprep.subr.mxu0 0.0
    %4438 = vmatpush1.msra.mxu0 0.0
    %4439 = vmatprep.subr.mxu0 0.0
    %4440 = vmatpush1.msra.mxu0 0.0
    %4441 = vmatprep.subr.mxu0 0.0
    %4442 = vmatpush1.msra.mxu0 0.0
    %4443 = vmatprep.subr.mxu0 0.0
    %4444 = vmatpush1.msra.mxu0 0.0
    %4445 = vmatprep.subr.mxu0 0.0
    %4446 = vmatpush1.msra.mxu0 0.0
    %4447 = vmatprep.subr.mxu0 0.0
    %4448 = vmatpush1.msra.mxu0 0.0
    %4449 = vmatprep.subr.mxu0 0.0
    %4450 = vmatpush1.msra.mxu0 0.0
    %4451 = vmatprep.subr.mxu0 0.0
    %4452 = vmatpush1.msra.mxu0 0.0
    %4453 = vmatprep.subr.mxu0 0.0
    %4454 = vmatpush1.msra.mxu0 0.0
    %4455 = vmatprep.subr.mxu0 0.0
    %4456 = vmatpush1.msra.mxu0 0.0
    %4457 = vmatprep.subr.mxu0 0.0
    %4458 = vmatpush1.msra.mxu0 0.0
    %4459 = vmatprep.subr.mxu0 0.0
    %4460 = vmatpush1.msra.mxu0 0.0
    %4461 = vmatprep.subr.mxu0 0.0
    %4462 = vmatpush1.msra.mxu0 0.0
    %4463 = vmatprep.subr.mxu0 0.0
    %4464 = vmatpush1.msra.mxu0 0.0
    %4465 = vmatprep.subr.mxu0 0.0
    %4466 = vmatpush1.msra.mxu0 0.0
    %4467 = vmatprep.subr.mxu0 0.0
    %4468 = vmatpush1.msra.mxu0 0.0
    %4469 = vmatprep.subr.mxu0 0.0
    %4470 = vmatpush1.msra.mxu0 0.0
    %4471 = vmatprep.subr.mxu0 0.0
    %4472 = vmatpush1.msra.mxu0 0.0
    %4473 = vmatprep.subr.mxu0 0.0
    %4474 = vmatpush1.msra.mxu0 0.0
    %4475 = vmatprep.subr.mxu0 0.0
    %4476 = vmatpush1.msra.mxu0 0.0
    %4477 = vmatprep.subr.mxu0 0.0
    %4478 = vmatpush1.msra.mxu0 0.0
    %4479 = vmatprep.subr.mxu0 0.0
    %4480 = vmatpush1.msra.mxu0 0.0
    %4481 = vmatprep.subr.mxu0 0.0
    %4482 = vmatpush1.msra.mxu0 0.0
    %4483 = vmatprep.subr.mxu0 0.0
    %4484 = vmatpush1.msra.mxu0 0.0
    %4485 = vmatprep.subr.mxu0 0.0
    %4486 = vmatpush1.msra.mxu0 0.0
    %4487 = vmatprep.subr.mxu0 0.0
    %4488 = vmatpush1.msra.mxu0 0.0
    %4489 = vmatprep.subr.mxu0 0.0
    %4490 = vmatpush1.msra.mxu0 0.0
    %4491 = vmatprep.subr.mxu0 0.0
    %4492 = vmatpush1.msra.mxu0 0.0
    %4493 = vmatprep.subr.mxu0 0.0
    %4494 = vmatpush1.msra.mxu0 0.0
    %4495 = vmatprep.subr.mxu0 0.0
    %4496 = vmatpush1.msra.mxu0 0.0
    %4497 = vmatprep.subr.mxu0 0.0
    %4498 = vmatpush1.msra.mxu0 0.0
    %4499 = vmatprep.mubr.f32.mxu0 0.0
    %v4500 = vand.u32 %v4432, 4294901760
    %v4501 = vsub.f32 %v4432, %v4500
    %v4502 = vand.u32 %v4501, 4294901760
    %v4503 = vsub.f32 %v4501, %v4502
    %v4504 = vand.u32 %v4503, 4294901760
    %4505 = vmatmul.mubr.f32.gmra.mrb[0].mxu0 %v4504
    %v4506 = vpop.f32.mrb[0].mxu0
    %v4507 = vadd.f32 %v4428, %v4506
    %v4508 = vpop.f32.mrb[0].mxu0
    %4509 = vdwg.mxu0
    %4510 = vmatprep.subr.mxu0 0.0
    %v4511 = vand.u32 %v85, 4294901760
    %v4512 = vsub.f32 %v85, %v4511
    %v4513 = vand.u32 %v4512, 4294901760
    %v4514 = vsub.f32 %v4512, %v4513
    %v4515 = vand.u32 %v4514, 4294901760
    %4516 = vmatpush1.msra.mxu0 %v4515
    %4517 = vmatprep.subr.mxu0 0.0
    %4518 = vmatpush1.msra.mxu0 0.0
    %4519 = vmatprep.subr.mxu0 0.0
    %4520 = vmatpush1.msra.mxu0 0.0
    %4521 = vmatprep.subr.mxu0 0.0
    %4522 = vmatpush1.msra.mxu0 0.0
    %4523 = vmatprep.subr.mxu0 0.0
    %4524 = vmatpush1.msra.mxu0 0.0
    %4525 = vmatprep.subr.mxu0 0.0
    %4526 = vmatpush1.msra.mxu0 0.0
    %4527 = vmatprep.subr.mxu0 0.0
    %4528 = vmatpush1.msra.mxu0 0.0
    %4529 = vmatprep.subr.mxu0 0.0
    %4530 = vmatpush1.msra.mxu0 0.0
    %4531 = vmatprep.subr.mxu0 0.0
    %4532 = vmatpush1.msra.mxu0 0.0
    %4533 = vmatprep.subr.mxu0 0.0
    %4534 = vmatpush1.msra.mxu0 0.0
    %4535 = vmatprep.subr.mxu0 0.0
    %4536 = vmatpush1.msra.mxu0 0.0
    %4537 = vmatprep.subr.mxu0 0.0
    %4538 = vmatpush1.msra.mxu0 0.0
    %4539 = vmatprep.subr.mxu0 0.0
    %4540 = vmatpush1.msra.mxu0 0.0
    %4541 = vmatprep.subr.mxu0 0.0
    %4542 = vmatpush1.msra.mxu0 0.0
    %4543 = vmatprep.subr.mxu0 0.0
    %4544 = vmatpush1.msra.mxu0 0.0
    %4545 = vmatprep.subr.mxu0 0.0
    %4546 = vmatpush1.msra.mxu0 0.0
    %4547 = vmatprep.subr.mxu0 0.0
    %4548 = vmatpush1.msra.mxu0 0.0
    %4549 = vmatprep.subr.mxu0 0.0
    %4550 = vmatpush1.msra.mxu0 0.0
    %4551 = vmatprep.subr.mxu0 0.0
    %4552 = vmatpush1.msra.mxu0 0.0
    %4553 = vmatprep.subr.mxu0 0.0
    %4554 = vmatpush1.msra.mxu0 0.0
    %4555 = vmatprep.subr.mxu0 0.0
    %4556 = vmatpush1.msra.mxu0 0.0
    %4557 = vmatprep.subr.mxu0 0.0
    %4558 = vmatpush1.msra.mxu0 0.0
    %4559 = vmatprep.subr.mxu0 0.0
    %4560 = vmatpush1.msra.mxu0 0.0
    %4561 = vmatprep.subr.mxu0 0.0
    %4562 = vmatpush1.msra.mxu0 0.0
    %4563 = vmatprep.subr.mxu0 0.0
    %4564 = vmatpush1.msra.mxu0 0.0
    %4565 = vmatprep.subr.mxu0 0.0
    %4566 = vmatpush1.msra.mxu0 0.0
    %4567 = vmatprep.subr.mxu0 0.0
    %4568 = vmatpush1.msra.mxu0 0.0
    %4569 = vmatprep.subr.mxu0 0.0
    %4570 = vmatpush1.msra.mxu0 0.0
    %4571 = vmatprep.subr.mxu0 0.0
    %4572 = vmatpush1.msra.mxu0 0.0
    %4573 = vmatprep.subr.mxu0 0.0
    %4574 = vmatpush1.msra.mxu0 0.0
    %4575 = vmatprep.subr.mxu0 0.0
    %4576 = vmatpush1.msra.mxu0 0.0
    %4577 = vmatprep.subr.mxu0 0.0
    %4578 = vmatpush1.msra.mxu0 0.0
    %4579 = vmatprep.mubr.f32.mxu0 0.0
    %v4580 = vand.u32 %v4432, 4294901760
    %4581 = vmatmul.mubr.f32.gmra.mrb[0].mxu0 %v4580
    %v4582 = vpop.f32.mrb[0].mxu0
    %v4583 = vadd.f32 %v4507, %v4582
    %v4584 = vpop.f32.mrb[0].mxu0
    %4585 = vdwg.mxu0
    %4586 = vmatprep.subr.mxu0 0.0
    %v4587 = vand.u32 %v85, 4294901760
    %v4588 = vsub.f32 %v85, %v4587
    %4589 = vmatpush1.msra.mxu0 %v4588
    %4590 = vmatprep.subr.mxu0 0.0
    %4591 = vmatpush1.msra.mxu0 0.0
    %4592 = vmatprep.subr.mxu0 0.0
    %4593 = vmatpush1.msra.mxu0 0.0
    %4594 = vmatprep.subr.mxu0 0.0
    %4595 = vmatpush1.msra.mxu0 0.0
    %4596 = vmatprep.subr.mxu0 0.0
    %4597 = vmatpush1.msra.mxu0 0.0
    %4598 = vmatprep.subr.mxu0 0.0
    %4599 = vmatpush1.msra.mxu0 0.0
    %4600 = vmatprep.subr.mxu0 0.0
    %4601 = vmatpush1.msra.mxu0 0.0
    %4602 = vmatprep.subr.mxu0 0.0
    %4603 = vmatpush1.msra.mxu0 0.0
    %4604 = vmatprep.subr.mxu0 0.0
    %4605 = vmatpush1.msra.mxu0 0.0
    %4606 = vmatprep.subr.mxu0 0.0
    %4607 = vmatpush1.msra.mxu0 0.0
    %4608 = vmatprep.subr.mxu0 0.0
    %4609 = vmatpush1.msra.mxu0 0.0
    %4610 = vmatprep.subr.mxu0 0.0
    %4611 = vmatpush1.msra.mxu0 0.0
    %4612 = vmatprep.subr.mxu0 0.0
    %4613 = vmatpush1.msra.mxu0 0.0
    %4614 = vmatprep.subr.mxu0 0.0
    %4615 = vmatpush1.msra.mxu0 0.0
    %4616 = vmatprep.subr.mxu0 0.0
    %4617 = vmatpush1.msra.mxu0 0.0
    %4618 = vmatprep.subr.mxu0 0.0
    %4619 = vmatpush1.msra.mxu0 0.0
    %4620 = vmatprep.subr.mxu0 0.0
    %4621 = vmatpush1.msra.mxu0 0.0
    %4622 = vmatprep.subr.mxu0 0.0
    %4623 = vmatpush1.msra.mxu0 0.0
    %4624 = vmatprep.subr.mxu0 0.0
    %4625 = vmatpush1.msra.mxu0 0.0
    %4626 = vmatprep.subr.mxu0 0.0
    %4627 = vmatpush1.msra.mxu0 0.0
    %4628 = vmatprep.subr.mxu0 0.0
    %4629 = vmatpush1.msra.mxu0 0.0
    %4630 = vmatprep.subr.mxu0 0.0
    %4631 = vmatpush1.msra.mxu0 0.0
    %4632 = vmatprep.subr.mxu0 0.0
    %4633 = vmatpush1.msra.mxu0 0.0
    %4634 = vmatprep.subr.mxu0 0.0
    %4635 = vmatpush1.msra.mxu0 0.0
    %4636 = vmatprep.subr.mxu0 0.0
    %4637 = vmatpush1.msra.mxu0 0.0
    %4638 = vmatprep.subr.mxu0 0.0
    %4639 = vmatpush1.msra.mxu0 0.0
    %4640 = vmatprep.subr.mxu0 0.0
    %4641 = vmatpush1.msra.mxu0 0.0
    %4642 = vmatprep.subr.mxu0 0.0
    %4643 = vmatpush1.msra.mxu0 0.0
    %4644 = vmatprep.subr.mxu0 0.0
    %4645 = vmatpush1.msra.mxu0 0.0
    %4646 = vmatprep.subr.mxu0 0.0
    %4647 = vmatpush1.msra.mxu0 0.0
    %4648 = vmatprep.subr.mxu0 0.0
    %4649 = vmatpush1.msra.mxu0 0.0
    %4650 = vmatprep.subr.mxu0 0.0
    %4651 = vmatpush1.msra.mxu0 0.0
    %4652 = vmatprep.mubr.f32.mxu0 0.0
    %v4653 = vand.u32 %v4432, 4294901760
    %v4654 = vsub.f32 %v4432, %v4653
    %4655 = vmatmul.mubr.f32.gmra.mrb[0].mxu0 %v4654
    %v4656 = vpop.f32.mrb[0].mxu0
    %v4657 = vadd.f32 %v4583, %v4656
    %v4658 = vpop.f32.mrb[0].mxu0
    %4659 = vdwg.mxu0
    %4660 = vmatprep.subr.mxu0 0.0
    %v4661 = vand.u32 %v85, 4294901760
    %4662 = vmatpush1.msra.mxu0 %v4661
    %4663 = vmatprep.subr.mxu0 0.0
    %4664 = vmatpush1.msra.mxu0 0.0
    %4665 = vmatprep.subr.mxu0 0.0
    %4666 = vmatpush1.msra.mxu0 0.0
    %4667 = vmatprep.subr.mxu0 0.0
    %4668 = vmatpush1.msra.mxu0 0.0
    %4669 = vmatprep.subr.mxu0 0.0
    %4670 = vmatpush1.msra.mxu0 0.0
    %4671 = vmatprep.subr.mxu0 0.0
    %4672 = vmatpush1.msra.mxu0 0.0
    %4673 = vmatprep.subr.mxu0 0.0
    %4674 = vmatpush1.msra.mxu0 0.0
    %4675 = vmatprep.subr.mxu0 0.0
    %4676 = vmatpush1.msra.mxu0 0.0
    %4677 = vmatprep.subr.mxu0 0.0
    %4678 = vmatpush1.msra.mxu0 0.0
    %4679 = vmatprep.subr.mxu0 0.0
    %4680 = vmatpush1.msra.mxu0 0.0
    %4681 = vmatprep.subr.mxu0 0.0
    %4682 = vmatpush1.msra.mxu0 0.0
    %4683 = vmatprep.subr.mxu0 0.0
    %4684 = vmatpush1.msra.mxu0 0.0
    %4685 = vmatprep.subr.mxu0 0.0
    %4686 = vmatpush1.msra.mxu0 0.0
    %4687 = vmatprep.subr.mxu0 0.0
    %4688 = vmatpush1.msra.mxu0 0.0
    %4689 = vmatprep.subr.mxu0 0.0
    %4690 = vmatpush1.msra.mxu0 0.0
    %4691 = vmatprep.subr.mxu0 0.0
    %4692 = vmatpush1.msra.mxu0 0.0
    %4693 = vmatprep.subr.mxu0 0.0
    %4694 = vmatpush1.msra.mxu0 0.0
    %4695 = vmatprep.subr.mxu0 0.0
    %4696 = vmatpush1.msra.mxu0 0.0
    %4697 = vmatprep.subr.mxu0 0.0
    %4698 = vmatpush1.msra.mxu0 0.0
    %4699 = vmatprep.subr.mxu0 0.0
    %4700 = vmatpush1.msra.mxu0 0.0
    %4701 = vmatprep.subr.mxu0 0.0
    %4702 = vmatpush1.msra.mxu0 0.0
    %4703 = vmatprep.subr.mxu0 0.0
    %4704 = vmatpush1.msra.mxu0 0.0
    %4705 = vmatprep.subr.mxu0 0.0
    %4706 = vmatpush1.msra.mxu0 0.0
    %4707 = vmatprep.subr.mxu0 0.0
    %4708 = vmatpush1.msra.mxu0 0.0
    %4709 = vmatprep.subr.mxu0 0.0
    %4710 = vmatpush1.msra.mxu0 0.0
    %4711 = vmatprep.subr.mxu0 0.0
    %4712 = vmatpush1.msra.mxu0 0.0
    %4713 = vmatprep.subr.mxu0 0.0
    %4714 = vmatpush1.msra.mxu0 0.0
    %4715 = vmatprep.subr.mxu0 0.0
    %4716 = vmatpush1.msra.mxu0 0.0
    %4717 = vmatprep.subr.mxu0 0.0
    %4718 = vmatpush1.msra.mxu0 0.0
    %4719 = vmatprep.subr.mxu0 0.0
    %4720 = vmatpush1.msra.mxu0 0.0
    %4721 = vmatprep.subr.mxu0 0.0
    %4722 = vmatpush1.msra.mxu0 0.0
    %4723 = vmatprep.subr.mxu0 0.0
    %4724 = vmatpush1.msra.mxu0 0.0
    %4725 = vmatprep.mubr.f32.mxu0 0.0
    %v4726 = vand.u32 %v4432, 4294901760
    %v4727 = vsub.f32 %v4432, %v4726
    %v4728 = vand.u32 %v4727, 4294901760
    %4729 = vmatmul.mubr.f32.gmra.mrb[0].mxu0 %v4728
    %v4730 = vpop.f32.mrb[0].mxu0
    %v4731 = vadd.f32 %v4657, %v4730
    %v4732 = vpop.f32.mrb[0].mxu0
    %4733 = vdwg.mxu0
    %4734 = vmatprep.subr.mxu0 0.0
    %v4735 = vand.u32 %v85, 4294901760
    %v4736 = vsub.f32 %v85, %v4735
    %v4737 = vand.u32 %v4736, 4294901760
    %4738 = vmatpush1.msra.mxu0 %v4737
    %4739 = vmatprep.subr.mxu0 0.0
    %4740 = vmatpush1.msra.mxu0 0.0
    %4741 = vmatprep.subr.mxu0 0.0
    %4742 = vmatpush1.msra.mxu0 0.0
    %4743 = vmatprep.subr.mxu0 0.0
    %4744 = vmatpush1.msra.mxu0 0.0
    %4745 = vmatprep.subr.mxu0 0.0
    %4746 = vmatpush1.msra.mxu0 0.0
    %4747 = vmatprep.subr.mxu0 0.0
    %4748 = vmatpush1.msra.mxu0 0.0
    %4749 = vmatprep.subr.mxu0 0.0
    %4750 = vmatpush1.msra.mxu0 0.0
    %4751 = vmatprep.subr.mxu0 0.0
    %4752 = vmatpush1.msra.mxu0 0.0
    %4753 = vmatprep.subr.mxu0 0.0
    %4754 = vmatpush1.msra.mxu0 0.0
    %4755 = vmatprep.subr.mxu0 0.0
    %4756 = vmatpush1.msra.mxu0 0.0
    %4757 = vmatprep.subr.mxu0 0.0
    %4758 = vmatpush1.msra.mxu0 0.0
    %4759 = vmatprep.subr.mxu0 0.0
    %4760 = vmatpush1.msra.mxu0 0.0
    %4761 = vmatprep.subr.mxu0 0.0
    %4762 = vmatpush1.msra.mxu0 0.0
    %4763 = vmatprep.subr.mxu0 0.0
    %4764 = vmatpush1.msra.mxu0 0.0
    %4765 = vmatprep.subr.mxu0 0.0
    %4766 = vmatpush1.msra.mxu0 0.0
    %4767 = vmatprep.subr.mxu0 0.0
    %4768 = vmatpush1.msra.mxu0 0.0
    %4769 = vmatprep.subr.mxu0 0.0
    %4770 = vmatpush1.msra.mxu0 0.0
    %4771 = vmatprep.subr.mxu0 0.0
    %4772 = vmatpush1.msra.mxu0 0.0
    %4773 = vmatprep.subr.mxu0 0.0
    %4774 = vmatpush1.msra.mxu0 0.0
    %4775 = vmatprep.subr.mxu0 0.0
    %4776 = vmatpush1.msra.mxu0 0.0
    %4777 = vmatprep.subr.mxu0 0.0
    %4778 = vmatpush1.msra.mxu0 0.0
    %4779 = vmatprep.subr.mxu0 0.0
    %4780 = vmatpush1.msra.mxu0 0.0
    %4781 = vmatprep.subr.mxu0 0.0
    %4782 = vmatpush1.msra.mxu0 0.0
    %4783 = vmatprep.subr.mxu0 0.0
    %4784 = vmatpush1.msra.mxu0 0.0
    %4785 = vmatprep.subr.mxu0 0.0
    %4786 = vmatpush1.msra.mxu0 0.0
    %4787 = vmatprep.subr.mxu0 0.0
    %4788 = vmatpush1.msra.mxu0 0.0
    %4789 = vmatprep.subr.mxu0 0.0
    %4790 = vmatpush1.msra.mxu0 0.0
    %4791 = vmatprep.subr.mxu0 0.0
    %4792 = vmatpush1.msra.mxu0 0.0
    %4793 = vmatprep.subr.mxu0 0.0
    %4794 = vmatpush1.msra.mxu0 0.0
    %4795 = vmatprep.subr.mxu0 0.0
    %4796 = vmatpush1.msra.mxu0 0.0
    %4797 = vmatprep.subr.mxu0 0.0
    %4798 = vmatpush1.msra.mxu0 0.0
    %4799 = vmatprep.subr.mxu0 0.0
    %4800 = vmatpush1.msra.mxu0 0.0
    %4801 = vmatprep.mubr.f32.mxu0 0.0
    %v4802 = vand.u32 %v4432, 4294901760
    %4803 = vmatmul.mubr.f32.gmra.mrb[0].mxu0 %v4802
    %v4804 = vpop.f32.mrb[0].mxu0
    %v4805 = vadd.f32 %v4731, %v4804
    %v4806 = vpop.f32.mrb[0].mxu0
    %4807 = vdwg.mxu0
    %4808 = vmatprep.subr.mxu0 0.0
    %v4809 = vand.u32 %v85, 4294901760
    %4810 = vmatpush1.msra.mxu0 %v4809
    %4811 = vmatprep.subr.mxu0 0.0
    %4812 = vmatpush1.msra.mxu0 0.0
    %4813 = vmatprep.subr.mxu0 0.0
    %4814 = vmatpush1.msra.mxu0 0.0
    %4815 = vmatprep.subr.mxu0 0.0
    %4816 = vmatpush1.msra.mxu0 0.0
    %4817 = vmatprep.subr.mxu0 0.0
    %4818 = vmatpush1.msra.mxu0 0.0
    %4819 = vmatprep.subr.mxu0 0.0
    %4820 = vmatpush1.msra.mxu0 0.0
    %4821 = vmatprep.subr.mxu0 0.0
    %4822 = vmatpush1.msra.mxu0 0.0
    %4823 = vmatprep.subr.mxu0 0.0
    %4824 = vmatpush1.msra.mxu0 0.0
    %4825 = vmatprep.subr.mxu0 0.0
    %4826 = vmatpush1.msra.mxu0 0.0
    %4827 = vmatprep.subr.mxu0 0.0
    %4828 = vmatpush1.msra.mxu0 0.0
    %4829 = vmatprep.subr.mxu0 0.0
    %4830 = vmatpush1.msra.mxu0 0.0
    %4831 = vmatprep.subr.mxu0 0.0
    %4832 = vmatpush1.msra.mxu0 0.0
    %4833 = vmatprep.subr.mxu0 0.0
    %4834 = vmatpush1.msra.mxu0 0.0
    %4835 = vmatprep.subr.mxu0 0.0
    %4836 = vmatpush1.msra.mxu0 0.0
    %4837 = vmatprep.subr.mxu0 0.0
    %4838 = vmatpush1.msra.mxu0 0.0
    %4839 = vmatprep.subr.mxu0 0.0
    %4840 = vmatpush1.msra.mxu0 0.0
    %4841 = vmatprep.subr.mxu0 0.0
    %4842 = vmatpush1.msra.mxu0 0.0
    %4843 = vmatprep.subr.mxu0 0.0
    %4844 = vmatpush1.msra.mxu0 0.0
    %4845 = vmatprep.subr.mxu0 0.0
    %4846 = vmatpush1.msra.mxu0 0.0
    %4847 = vmatprep.subr.mxu0 0.0
    %4848 = vmatpush1.msra.mxu0 0.0
    %4849 = vmatprep.subr.mxu0 0.0
    %4850 = vmatpush1.msra.mxu0 0.0
    %4851 = vmatprep.subr.mxu0 0.0
    %4852 = vmatpush1.msra.mxu0 0.0
    %4853 = vmatprep.subr.mxu0 0.0
    %4854 = vmatpush1.msra.mxu0 0.0
    %4855 = vmatprep.subr.mxu0 0.0
    %4856 = vmatpush1.msra.mxu0 0.0
    %4857 = vmatprep.subr.mxu0 0.0
    %4858 = vmatpush1.msra.mxu0 0.0
    %4859 = vmatprep.subr.mxu0 0.0
    %4860 = vmatpush1.msra.mxu0 0.0
    %4861 = vmatprep.subr.mxu0 0.0
    %4862 = vmatpush1.msra.mxu0 0.0
    %4863 = vmatprep.subr.mxu0 0.0
    %4864 = vmatpush1.msra.mxu0 0.0
    %4865 = vmatprep.subr.mxu0 0.0
    %4866 = vmatpush1.msra.mxu0 0.0
    %4867 = vmatprep.subr.mxu0 0.0
    %4868 = vmatpush1.msra.mxu0 0.0
    %4869 = vmatprep.subr.mxu0 0.0
    %4870 = vmatpush1.msra.mxu0 0.0
    %4871 = vmatprep.subr.mxu0 0.0
    %4872 = vmatpush1.msra.mxu0 0.0
    %4873 = vmatprep.mubr.f32.mxu0 0.0
    %v4874 = vand.u32 %v4432, 4294901760
    %4875 = vmatmul.mubr.f32.gmra.mrb[0].mxu0 %v4874
    %v4876 = vpop.f32.mrb[0].mxu0
    %v4877 = vadd.f32 %v4805, %v4876
    %v4878 = vpop.f32.mrb[0].mxu0
    %4879 = vdwg.mxu0
    %v4880 = vtanh.pop %v4877
    %v4881 = vmul.f32 %v4880, 0.5
    %v4882 = vadd.f32 %v4881, 0.5
    %v4883 = vmul.f32 %v4882, %v3932
    %4885 = vrot.lane.b32.xlu0 %v4880, 32
    %v4886 = vpop.permute.xlu0 %4885
    %v4888 = vmul.f32 %v4882, %v4886
    %4890 = vrot.lane.b32.xlu0 %v4888, 32
    %v4891 = vpop.permute.xlu0 %4890
    %v4893 = vadd.f32 %v4883, %v4891
    %v4894 = vtanh.pop %v4893
    %4896 = vrot.lane.b32.xlu0 %v4894, 32
    %v4897 = vpop.permute.xlu0 %4896
    %v4899 = vmul.f32 %v4882, %v4897
    %s4900 = scalar_lea.vmem [#allocation6], 20
    %v4901 = vld [vmem:[%s4900] sm:$0xf]
    %4903 = vrot.lane.b32.xlu0 %v4899, 64
    %v4904 = vpop.permute.xlu0 %4903
    %v4905 = vsel %vm93, %v4904, 0
    %4907 = vmatprep.subr.mxu0 0.0
    %v4908 = vand.u32 %v86, 4294901760
    %4909 = vmatpush1.msra.mxu0 %v4908
    %4910 = vmatprep.subr.mxu0 0.0
    %v4911 = vand.u32 %v87, 4294901760
    %4912 = vmatpush1.msra.mxu0 %v4911
    %4913 = vmatprep.subr.mxu0 0.0
    %v4914 = vand.u32 %v88, 4294901760
    %4915 = vmatpush1.msra.mxu0 %v4914
    %4916 = vmatprep.subr.mxu0 0.0
    %v4917 = vand.u32 %v89, 4294901760
    %4918 = vmatpush1.msra.mxu0 %v4917
    %4919 = vmatprep.subr.mxu0 0.0
    %4920 = vmatpush1.msra.mxu0 0.0
    %4921 = vmatprep.subr.mxu0 0.0
    %4922 = vmatpush1.msra.mxu0 0.0
    %4923 = vmatprep.subr.mxu0 0.0
    %4924 = vmatpush1.msra.mxu0 0.0
    %4925 = vmatprep.subr.mxu0 0.0
    %4926 = vmatpush1.msra.mxu0 0.0
    %4927 = vmatprep.subr.mxu0 0.0
    %4928 = vmatpush1.msra.mxu0 0.0
    %4929 = vmatprep.subr.mxu0 0.0
    %4930 = vmatpush1.msra.mxu0 0.0
    %4931 = vmatprep.subr.mxu0 0.0
    %4932 = vmatpush1.msra.mxu0 0.0
    %4933 = vmatprep.subr.mxu0 0.0
    %4934 = vmatpush1.msra.mxu0 0.0
    %4935 = vmatprep.subr.mxu0 0.0
    %4936 = vmatpush1.msra.mxu0 0.0
    %4937 = vmatprep.subr.mxu0 0.0
    %4938 = vmatpush1.msra.mxu0 0.0
    %4939 = vmatprep.subr.mxu0 0.0
    %4940 = vmatpush1.msra.mxu0 0.0
    %4941 = vmatprep.subr.mxu0 0.0
    %4942 = vmatpush1.msra.mxu0 0.0
    %4943 = vmatprep.subr.mxu0 0.0
    %4944 = vmatpush1.msra.mxu0 0.0
    %4945 = vmatprep.subr.mxu0 0.0
    %4946 = vmatpush1.msra.mxu0 0.0
    %4947 = vmatprep.subr.mxu0 0.0
    %4948 = vmatpush1.msra.mxu0 0.0
    %4949 = vmatprep.subr.mxu0 0.0
    %4950 = vmatpush1.msra.mxu0 0.0
    %4951 = vmatprep.subr.mxu0 0.0
    %4952 = vmatpush1.msra.mxu0 0.0
    %4953 = vmatprep.subr.mxu0 0.0
    %4954 = vmatpush1.msra.mxu0 0.0
    %4955 = vmatprep.subr.mxu0 0.0
    %4956 = vmatpush1.msra.mxu0 0.0
    %4957 = vmatprep.subr.mxu0 0.0
    %4958 = vmatpush1.msra.mxu0 0.0
    %4959 = vmatprep.subr.mxu0 0.0
    %4960 = vmatpush1.msra.mxu0 0.0
    %4961 = vmatprep.subr.mxu0 0.0
    %4962 = vmatpush1.msra.mxu0 0.0
    %4963 = vmatprep.subr.mxu0 0.0
    %4964 = vmatpush1.msra.mxu0 0.0
    %4965 = vmatprep.subr.mxu0 0.0
    %4966 = vmatpush1.msra.mxu0 0.0
    %4967 = vmatprep.subr.mxu0 0.0
    %4968 = vmatpush1.msra.mxu0 0.0
    %4969 = vmatprep.subr.mxu0 0.0
    %4970 = vmatpush1.msra.mxu0 0.0
    %4971 = vmatprep.subr.mxu0 0.0
    %4972 = vmatpush1.msra.mxu0 0.0
    %4973 = vmatprep.subr.mxu0 0.0
    %4974 = vmatpush1.msra.mxu0 0.0
    %4975 = vmatprep.mubr.f32.mxu0 0.0
    %v4976 = vand.u32 %v4905, 4294901760
    %v4977 = vsub.f32 %v4905, %v4976
    %v4978 = vand.u32 %v4977, 4294901760
    %v4979 = vsub.f32 %v4977, %v4978
    %v4980 = vand.u32 %v4979, 4294901760
    %4981 = vmatmul.mubr.f32.gmra.mrb[0].mxu0 %v4980
    %v4982 = vpop.f32.mrb[0].mxu0
    %v4983 = vadd.f32 0.0, %v4982
    %v4984 = vpop.f32.mrb[0].mxu0
    %4985 = vdwg.mxu0
    %4986 = vmatprep.subr.mxu0 0.0
    %v4987 = vand.u32 %v86, 4294901760
    %v4988 = vsub.f32 %v86, %v4987
    %v4989 = vand.u32 %v4988, 4294901760
    %v4990 = vsub.f32 %v4988, %v4989
    %v4991 = vand.u32 %v4990, 4294901760
    %4992 = vmatpush1.msra.mxu0 %v4991
    %4993 = vmatprep.subr.mxu0 0.0
    %v4994 = vand.u32 %v87, 4294901760
    %v4995 = vsub.f32 %v87, %v4994
    %v4996 = vand.u32 %v4995, 4294901760
    %v4997 = vsub.f32 %v4995, %v4996
    %v4998 = vand.u32 %v4997, 4294901760
    %4999 = vmatpush1.msra.mxu0 %v4998
    %5000 = vmatprep.subr.mxu0 0.0
    %v5001 = vand.u32 %v88, 4294901760
    %v5002 = vsub.f32 %v88, %v5001
    %v5003 = vand.u32 %v5002, 4294901760
    %v5004 = vsub.f32 %v5002, %v5003
    %v5005 = vand.u32 %v5004, 4294901760
    %5006 = vmatpush1.msra.mxu0 %v5005
    %5007 = vmatprep.subr.mxu0 0.0
    %v5008 = vand.u32 %v89, 4294901760
    %v5009 = vsub.f32 %v89, %v5008
    %v5010 = vand.u32 %v5009, 4294901760
    %v5011 = vsub.f32 %v5009, %v5010
    %v5012 = vand.u32 %v5011, 4294901760
    %5013 = vmatpush1.msra.mxu0 %v5012
    %5014 = vmatprep.subr.mxu0 0.0
    %5015 = vmatpush1.msra.mxu0 0.0
    %5016 = vmatprep.subr.mxu0 0.0
    %5017 = vmatpush1.msra.mxu0 0.0
    %5018 = vmatprep.subr.mxu0 0.0
    %5019 = vmatpush1.msra.mxu0 0.0
    %5020 = vmatprep.subr.mxu0 0.0
    %5021 = vmatpush1.msra.mxu0 0.0
    %5022 = vmatprep.subr.mxu0 0.0
    %5023 = vmatpush1.msra.mxu0 0.0
    %5024 = vmatprep.subr.mxu0 0.0
    %5025 = vmatpush1.msra.mxu0 0.0
    %5026 = vmatprep.subr.mxu0 0.0
    %5027 = vmatpush1.msra.mxu0 0.0
    %5028 = vmatprep.subr.mxu0 0.0
    %5029 = vmatpush1.msra.mxu0 0.0
    %5030 = vmatprep.subr.mxu0 0.0
    %5031 = vmatpush1.msra.mxu0 0.0
    %5032 = vmatprep.subr.mxu0 0.0
    %5033 = vmatpush1.msra.mxu0 0.0
    %5034 = vmatprep.subr.mxu0 0.0
    %5035 = vmatpush1.msra.mxu0 0.0
    %5036 = vmatprep.subr.mxu0 0.0
    %5037 = vmatpush1.msra.mxu0 0.0
    %5038 = vmatprep.subr.mxu0 0.0
    %5039 = vmatpush1.msra.mxu0 0.0
    %5040 = vmatprep.subr.mxu0 0.0
    %5041 = vmatpush1.msra.mxu0 0.0
    %5042 = vmatprep.subr.mxu0 0.0
    %5043 = vmatpush1.msra.mxu0 0.0
    %5044 = vmatprep.subr.mxu0 0.0
    %5045 = vmatpush1.msra.mxu0 0.0
    %5046 = vmatprep.subr.mxu0 0.0
    %5047 = vmatpush1.msra.mxu0 0.0
    %5048 = vmatprep.subr.mxu0 0.0
    %5049 = vmatpush1.msra.mxu0 0.0
    %5050 = vmatprep.subr.mxu0 0.0
    %5051 = vmatpush1.msra.mxu0 0.0
    %5052 = vmatprep.subr.mxu0 0.0
    %5053 = vmatpush1.msra.mxu0 0.0
    %5054 = vmatprep.subr.mxu0 0.0
    %5055 = vmatpush1.msra.mxu0 0.0
    %5056 = vmatprep.subr.mxu0 0.0
    %5057 = vmatpush1.msra.mxu0 0.0
    %5058 = vmatprep.subr.mxu0 0.0
    %5059 = vmatpush1.msra.mxu0 0.0
    %5060 = vmatprep.subr.mxu0 0.0
    %5061 = vmatpush1.msra.mxu0 0.0
    %5062 = vmatprep.subr.mxu0 0.0
    %5063 = vmatpush1.msra.mxu0 0.0
    %5064 = vmatprep.subr.mxu0 0.0
    %5065 = vmatpush1.msra.mxu0 0.0
    %5066 = vmatprep.subr.mxu0 0.0
    %5067 = vmatpush1.msra.mxu0 0.0
    %5068 = vmatprep.subr.mxu0 0.0
    %5069 = vmatpush1.msra.mxu0 0.0
    %5070 = vmatprep.mubr.f32.mxu0 0.0
    %v5071 = vand.u32 %v4905, 4294901760
    %5072 = vmatmul.mubr.f32.gmra.mrb[0].mxu0 %v5071
    %v5073 = vpop.f32.mrb[0].mxu0
    %v5074 = vadd.f32 %v4983, %v5073
    %v5075 = vpop.f32.mrb[0].mxu0
    %5076 = vdwg.mxu0
    %5077 = vmatprep.subr.mxu0 0.0
    %v5078 = vand.u32 %v86, 4294901760
    %v5079 = vsub.f32 %v86, %v5078
    %5080 = vmatpush1.msra.mxu0 %v5079
    %5081 = vmatprep.subr.mxu0 0.0
    %v5082 = vand.u32 %v87, 4294901760
    %v5083 = vsub.f32 %v87, %v5082
    %5084 = vmatpush1.msra.mxu0 %v5083
    %5085 = vmatprep.subr.mxu0 0.0
    %v5086 = vand.u32 %v88, 4294901760
    %v5087 = vsub.f32 %v88, %v5086
    %5088 = vmatpush1.msra.mxu0 %v5087
    %5089 = vmatprep.subr.mxu0 0.0
    %v5090 = vand.u32 %v89, 4294901760
    %v5091 = vsub.f32 %v89, %v5090
    %5092 = vmatpush1.msra.mxu0 %v5091
    %5093 = vmatprep.subr.mxu0 0.0
    %5094 = vmatpush1.msra.mxu0 0.0
    %5095 = vmatprep.subr.mxu0 0.0
    %5096 = vmatpush1.msra.mxu0 0.0
    %5097 = vmatprep.subr.mxu0 0.0
    %5098 = vmatpush1.msra.mxu0 0.0
    %5099 = vmatprep.subr.mxu0 0.0
    %5100 = vmatpush1.msra.mxu0 0.0
    %5101 = vmatprep.subr.mxu0 0.0
    %5102 = vmatpush1.msra.mxu0 0.0
    %5103 = vmatprep.subr.mxu0 0.0
    %5104 = vmatpush1.msra.mxu0 0.0
    %5105 = vmatprep.subr.mxu0 0.0
    %5106 = vmatpush1.msra.mxu0 0.0
    %5107 = vmatprep.subr.mxu0 0.0
    %5108 = vmatpush1.msra.mxu0 0.0
    %5109 = vmatprep.subr.mxu0 0.0
    %5110 = vmatpush1.msra.mxu0 0.0
    %5111 = vmatprep.subr.mxu0 0.0
    %5112 = vmatpush1.msra.mxu0 0.0
    %5113 = vmatprep.subr.mxu0 0.0
    %5114 = vmatpush1.msra.mxu0 0.0
    %5115 = vmatprep.subr.mxu0 0.0
    %5116 = vmatpush1.msra.mxu0 0.0
    %5117 = vmatprep.subr.mxu0 0.0
    %5118 = vmatpush1.msra.mxu0 0.0
    %5119 = vmatprep.subr.mxu0 0.0
    %5120 = vmatpush1.msra.mxu0 0.0
    %5121 = vmatprep.subr.mxu0 0.0
    %5122 = vmatpush1.msra.mxu0 0.0
    %5123 = vmatprep.subr.mxu0 0.0
    %5124 = vmatpush1.msra.mxu0 0.0
    %5125 = vmatprep.subr.mxu0 0.0
    %5126 = vmatpush1.msra.mxu0 0.0
    %5127 = vmatprep.subr.mxu0 0.0
    %5128 = vmatpush1.msra.mxu0 0.0
    %5129 = vmatprep.subr.mxu0 0.0
    %5130 = vmatpush1.msra.mxu0 0.0
    %5131 = vmatprep.subr.mxu0 0.0
    %5132 = vmatpush1.msra.mxu0 0.0
    %5133 = vmatprep.subr.mxu0 0.0
    %5134 = vmatpush1.msra.mxu0 0.0
    %5135 = vmatprep.subr.mxu0 0.0
    %5136 = vmatpush1.msra.mxu0 0.0
    %5137 = vmatprep.subr.mxu0 0.0
    %5138 = vmatpush1.msra.mxu0 0.0
    %5139 = vmatprep.subr.mxu0 0.0
    %5140 = vmatpush1.msra.mxu0 0.0
    %5141 = vmatprep.subr.mxu0 0.0
    %5142 = vmatpush1.msra.mxu0 0.0
    %5143 = vmatprep.subr.mxu0 0.0
    %5144 = vmatpush1.msra.mxu0 0.0
    %5145 = vmatprep.subr.mxu0 0.0
    %5146 = vmatpush1.msra.mxu0 0.0
    %5147 = vmatprep.subr.mxu0 0.0
    %5148 = vmatpush1.msra.mxu0 0.0
    %5149 = vmatprep.mubr.f32.mxu0 0.0
    %v5150 = vand.u32 %v4905, 4294901760
    %v5151 = vsub.f32 %v4905, %v5150
    %5152 = vmatmul.mubr.f32.gmra.mrb[0].mxu0 %v5151
    %v5153 = vpop.f32.mrb[0].mxu0
    %v5154 = vadd.f32 %v5074, %v5153
    %v5155 = vpop.f32.mrb[0].mxu0
    %5156 = vdwg.mxu0
    %5157 = vmatprep.subr.mxu0 0.0
    %v5158 = vand.u32 %v86, 4294901760
    %5159 = vmatpush1.msra.mxu0 %v5158
    %5160 = vmatprep.subr.mxu0 0.0
    %v5161 = vand.u32 %v87, 4294901760
    %5162 = vmatpush1.msra.mxu0 %v5161
    %5163 = vmatprep.subr.mxu0 0.0
    %v5164 = vand.u32 %v88, 4294901760
    %5165 = vmatpush1.msra.mxu0 %v5164
    %5166 = vmatprep.subr.mxu0 0.0
    %v5167 = vand.u32 %v89, 4294901760
    %5168 = vmatpush1.msra.mxu0 %v5167
    %5169 = vmatprep.subr.mxu0 0.0
    %5170 = vmatpush1.msra.mxu0 0.0
    %5171 = vmatprep.subr.mxu0 0.0
    %5172 = vmatpush1.msra.mxu0 0.0
    %5173 = vmatprep.subr.mxu0 0.0
    %5174 = vmatpush1.msra.mxu0 0.0
    %5175 = vmatprep.subr.mxu0 0.0
    %5176 = vmatpush1.msra.mxu0 0.0
    %5177 = vmatprep.subr.mxu0 0.0
    %5178 = vmatpush1.msra.mxu0 0.0
    %5179 = vmatprep.subr.mxu0 0.0
    %5180 = vmatpush1.msra.mxu0 0.0
    %5181 = vmatprep.subr.mxu0 0.0
    %5182 = vmatpush1.msra.mxu0 0.0
    %5183 = vmatprep.subr.mxu0 0.0
    %5184 = vmatpush1.msra.mxu0 0.0
    %5185 = vmatprep.subr.mxu0 0.0
    %5186 = vmatpush1.msra.mxu0 0.0
    %5187 = vmatprep.subr.mxu0 0.0
    %5188 = vmatpush1.msra.mxu0 0.0
    %5189 = vmatprep.subr.mxu0 0.0
    %5190 = vmatpush1.msra.mxu0 0.0
    %5191 = vmatprep.subr.mxu0 0.0
    %5192 = vmatpush1.msra.mxu0 0.0
    %5193 = vmatprep.subr.mxu0 0.0
    %5194 = vmatpush1.msra.mxu0 0.0
    %5195 = vmatprep.subr.mxu0 0.0
    %5196 = vmatpush1.msra.mxu0 0.0
    %5197 = vmatprep.subr.mxu0 0.0
    %5198 = vmatpush1.msra.mxu0 0.0
    %5199 = vmatprep.subr.mxu0 0.0
    %5200 = vmatpush1.msra.mxu0 0.0
    %5201 = vmatprep.subr.mxu0 0.0
    %5202 = vmatpush1.msra.mxu0 0.0
    %5203 = vmatprep.subr.mxu0 0.0
    %5204 = vmatpush1.msra.mxu0 0.0
    %5205 = vmatprep.subr.mxu0 0.0
    %5206 = vmatpush1.msra.mxu0 0.0
    %5207 = vmatprep.subr.mxu0 0.0
    %5208 = vmatpush1.msra.mxu0 0.0
    %5209 = vmatprep.subr.mxu0 0.0
    %5210 = vmatpush1.msra.mxu0 0.0
    %5211 = vmatprep.subr.mxu0 0.0
    %5212 = vmatpush1.msra.mxu0 0.0
    %5213 = vmatprep.subr.mxu0 0.0
    %5214 = vmatpush1.msra.mxu0 0.0
    %5215 = vmatprep.subr.mxu0 0.0
    %5216 = vmatpush1.msra.mxu0 0.0
    %5217 = vmatprep.subr.mxu0 0.0
    %5218 = vmatpush1.msra.mxu0 0.0
    %5219 = vmatprep.subr.mxu0 0.0
    %5220 = vmatpush1.msra.mxu0 0.0
    %5221 = vmatprep.subr.mxu0 0.0
    %5222 = vmatpush1.msra.mxu0 0.0
    %5223 = vmatprep.subr.mxu0 0.0
    %5224 = vmatpush1.msra.mxu0 0.0
    %5225 = vmatprep.mubr.f32.mxu0 0.0
    %v5226 = vand.u32 %v4905, 4294901760
    %v5227 = vsub.f32 %v4905, %v5226
    %v5228 = vand.u32 %v5227, 4294901760
    %5229 = vmatmul.mubr.f32.gmra.mrb[0].mxu0 %v5228
    %v5230 = vpop.f32.mrb[0].mxu0
    %v5231 = vadd.f32 %v5154, %v5230
    %v5232 = vpop.f32.mrb[0].mxu0
    %5233 = vdwg.mxu0
    %5234 = vmatprep.subr.mxu0 0.0
    %v5235 = vand.u32 %v86, 4294901760
    %v5236 = vsub.f32 %v86, %v5235
    %v5237 = vand.u32 %v5236, 4294901760
    %5238 = vmatpush1.msra.mxu0 %v5237
    %5239 = vmatprep.subr.mxu0 0.0
    %v5240 = vand.u32 %v87, 4294901760
    %v5241 = vsub.f32 %v87, %v5240
    %v5242 = vand.u32 %v5241, 4294901760
    %5243 = vmatpush1.msra.mxu0 %v5242
    %5244 = vmatprep.subr.mxu0 0.0
    %v5245 = vand.u32 %v88, 4294901760
    %v5246 = vsub.f32 %v88, %v5245
    %v5247 = vand.u32 %v5246, 4294901760
    %5248 = vmatpush1.msra.mxu0 %v5247
    %5249 = vmatprep.subr.mxu0 0.0
    %v5250 = vand.u32 %v89, 4294901760
    %v5251 = vsub.f32 %v89, %v5250
    %v5252 = vand.u32 %v5251, 4294901760
    %5253 = vmatpush1.msra.mxu0 %v5252
    %5254 = vmatprep.subr.mxu0 0.0
    %5255 = vmatpush1.msra.mxu0 0.0
    %5256 = vmatprep.subr.mxu0 0.0
    %5257 = vmatpush1.msra.mxu0 0.0
    %5258 = vmatprep.subr.mxu0 0.0
    %5259 = vmatpush1.msra.mxu0 0.0
    %5260 = vmatprep.subr.mxu0 0.0
    %5261 = vmatpush1.msra.mxu0 0.0
    %5262 = vmatprep.subr.mxu0 0.0
    %5263 = vmatpush1.msra.mxu0 0.0
    %5264 = vmatprep.subr.mxu0 0.0
    %5265 = vmatpush1.msra.mxu0 0.0
    %5266 = vmatprep.subr.mxu0 0.0
    %5267 = vmatpush1.msra.mxu0 0.0
    %5268 = vmatprep.subr.mxu0 0.0
    %5269 = vmatpush1.msra.mxu0 0.0
    %5270 = vmatprep.subr.mxu0 0.0
    %5271 = vmatpush1.msra.mxu0 0.0
    %5272 = vmatprep.subr.mxu0 0.0
    %5273 = vmatpush1.msra.mxu0 0.0
    %5274 = vmatprep.subr.mxu0 0.0
    %5275 = vmatpush1.msra.mxu0 0.0
    %5276 = vmatprep.subr.mxu0 0.0
    %5277 = vmatpush1.msra.mxu0 0.0
    %5278 = vmatprep.subr.mxu0 0.0
    %5279 = vmatpush1.msra.mxu0 0.0
    %5280 = vmatprep.subr.mxu0 0.0
    %5281 = vmatpush1.msra.mxu0 0.0
    %5282 = vmatprep.subr.mxu0 0.0
    %5283 = vmatpush1.msra.mxu0 0.0
    %5284 = vmatprep.subr.mxu0 0.0
    %5285 = vmatpush1.msra.mxu0 0.0
    %5286 = vmatprep.subr.mxu0 0.0
    %5287 = vmatpush1.msra.mxu0 0.0
    %5288 = vmatprep.subr.mxu0 0.0
    %5289 = vmatpush1.msra.mxu0 0.0
    %5290 = vmatprep.subr.mxu0 0.0
    %5291 = vmatpush1.msra.mxu0 0.0
    %5292 = vmatprep.subr.mxu0 0.0
    %5293 = vmatpush1.msra.mxu0 0.0
    %5294 = vmatprep.subr.mxu0 0.0
    %5295 = vmatpush1.msra.mxu0 0.0
    %5296 = vmatprep.subr.mxu0 0.0
    %5297 = vmatpush1.msra.mxu0 0.0
    %5298 = vmatprep.subr.mxu0 0.0
    %5299 = vmatpush1.msra.mxu0 0.0
    %5300 = vmatprep.subr.mxu0 0.0
    %5301 = vmatpush1.msra.mxu0 0.0
    %5302 = vmatprep.subr.mxu0 0.0
    %5303 = vmatpush1.msra.mxu0 0.0
    %5304 = vmatprep.subr.mxu0 0.0
    %5305 = vmatpush1.msra.mxu0 0.0
    %5306 = vmatprep.subr.mxu0 0.0
    %5307 = vmatpush1.msra.mxu0 0.0
    %5308 = vmatprep.subr.mxu0 0.0
    %5309 = vmatpush1.msra.mxu0 0.0
    %5310 = vmatprep.mubr.f32.mxu0 0.0
    %v5311 = vand.u32 %v4905, 4294901760
    %5312 = vmatmul.mubr.f32.gmra.mrb[0].mxu0 %v5311
    %v5313 = vpop.f32.mrb[0].mxu0
    %v5314 = vadd.f32 %v5231, %v5313
    %v5315 = vpop.f32.mrb[0].mxu0
    %5316 = vdwg.mxu0
    %5317 = vmatprep.subr.mxu0 0.0
    %v5318 = vand.u32 %v86, 4294901760
    %5319 = vmatpush1.msra.mxu0 %v5318
    %5320 = vmatprep.subr.mxu0 0.0
    %v5321 = vand.u32 %v87, 4294901760
    %5322 = vmatpush1.msra.mxu0 %v5321
    %5323 = vmatprep.subr.mxu0 0.0
    %v5324 = vand.u32 %v88, 4294901760
    %5325 = vmatpush1.msra.mxu0 %v5324
    %5326 = vmatprep.subr.mxu0 0.0
    %v5327 = vand.u32 %v89, 4294901760
    %5328 = vmatpush1.msra.mxu0 %v5327
    %5329 = vmatprep.subr.mxu0 0.0
    %5330 = vmatpush1.msra.mxu0 0.0
    %5331 = vmatprep.subr.mxu0 0.0
    %5332 = vmatpush1.msra.mxu0 0.0
    %5333 = vmatprep.subr.mxu0 0.0
    %5334 = vmatpush1.msra.mxu0 0.0
    %5335 = vmatprep.subr.mxu0 0.0
    %5336 = vmatpush1.msra.mxu0 0.0
    %5337 = vmatprep.subr.mxu0 0.0
    %5338 = vmatpush1.msra.mxu0 0.0
    %5339 = vmatprep.subr.mxu0 0.0
    %5340 = vmatpush1.msra.mxu0 0.0
    %5341 = vmatprep.subr.mxu0 0.0
    %5342 = vmatpush1.msra.mxu0 0.0
    %5343 = vmatprep.subr.mxu0 0.0
    %5344 = vmatpush1.msra.mxu0 0.0
    %5345 = vmatprep.subr.mxu0 0.0
    %5346 = vmatpush1.msra.mxu0 0.0
    %5347 = vmatprep.subr.mxu0 0.0
    %5348 = vmatpush1.msra.mxu0 0.0
    %5349 = vmatprep.subr.mxu0 0.0
    %5350 = vmatpush1.msra.mxu0 0.0
    %5351 = vmatprep.subr.mxu0 0.0
    %5352 = vmatpush1.msra.mxu0 0.0
    %5353 = vmatprep.subr.mxu0 0.0
    %5354 = vmatpush1.msra.mxu0 0.0
    %5355 = vmatprep.subr.mxu0 0.0
    %5356 = vmatpush1.msra.mxu0 0.0
    %5357 = vmatprep.subr.mxu0 0.0
    %5358 = vmatpush1.msra.mxu0 0.0
    %5359 = vmatprep.subr.mxu0 0.0
    %5360 = vmatpush1.msra.mxu0 0.0
    %5361 = vmatprep.subr.mxu0 0.0
    %5362 = vmatpush1.msra.mxu0 0.0
    %5363 = vmatprep.subr.mxu0 0.0
    %5364 = vmatpush1.msra.mxu0 0.0
    %5365 = vmatprep.subr.mxu0 0.0
    %5366 = vmatpush1.msra.mxu0 0.0
    %5367 = vmatprep.subr.mxu0 0.0
    %5368 = vmatpush1.msra.mxu0 0.0
    %5369 = vmatprep.subr.mxu0 0.0
    %5370 = vmatpush1.msra.mxu0 0.0
    %5371 = vmatprep.subr.mxu0 0.0
    %5372 = vmatpush1.msra.mxu0 0.0
    %5373 = vmatprep.subr.mxu0 0.0
    %5374 = vmatpush1.msra.mxu0 0.0
    %5375 = vmatprep.subr.mxu0 0.0
    %5376 = vmatpush1.msra.mxu0 0.0
    %5377 = vmatprep.subr.mxu0 0.0
    %5378 = vmatpush1.msra.mxu0 0.0
    %5379 = vmatprep.subr.mxu0 0.0
    %5380 = vmatpush1.msra.mxu0 0.0
    %5381 = vmatprep.subr.mxu0 0.0
    %5382 = vmatpush1.msra.mxu0 0.0
    %5383 = vmatprep.subr.mxu0 0.0
    %5384 = vmatpush1.msra.mxu0 0.0
    %5385 = vmatprep.mubr.f32.mxu0 0.0
    %v5386 = vand.u32 %v4905, 4294901760
    %5387 = vmatmul.mubr.f32.gmra.mrb[0].mxu0 %v5386
    %v5388 = vpop.f32.mrb[0].mxu0
    %v5389 = vadd.f32 %v5314, %v5388
    %v5390 = vpop.f32.mrb[0].mxu0
    %5391 = vdwg.mxu0
    %v5393 = vsel %vm582, %v4901, 0
    %5395 = vmatprep.subr.mxu0 0.0
    %v5396 = vand.u32 %v85, 4294901760
    %5397 = vmatpush1.msra.mxu0 %v5396
    %5398 = vmatprep.subr.mxu0 0.0
    %5399 = vmatpush1.msra.mxu0 0.0
    %5400 = vmatprep.subr.mxu0 0.0
    %5401 = vmatpush1.msra.mxu0 0.0
    %5402 = vmatprep.subr.mxu0 0.0
    %5403 = vmatpush1.msra.mxu0 0.0
    %5404 = vmatprep.subr.mxu0 0.0
    %5405 = vmatpush1.msra.mxu0 0.0
    %5406 = vmatprep.subr.mxu0 0.0
    %5407 = vmatpush1.msra.mxu0 0.0
    %5408 = vmatprep.subr.mxu0 0.0
    %5409 = vmatpush1.msra.mxu0 0.0
    %5410 = vmatprep.subr.mxu0 0.0
    %5411 = vmatpush1.msra.mxu0 0.0
    %5412 = vmatprep.subr.mxu0 0.0
    %5413 = vmatpush1.msra.mxu0 0.0
    %5414 = vmatprep.subr.mxu0 0.0
    %5415 = vmatpush1.msra.mxu0 0.0
    %5416 = vmatprep.subr.mxu0 0.0
    %5417 = vmatpush1.msra.mxu0 0.0
    %5418 = vmatprep.subr.mxu0 0.0
    %5419 = vmatpush1.msra.mxu0 0.0
    %5420 = vmatprep.subr.mxu0 0.0
    %5421 = vmatpush1.msra.mxu0 0.0
    %5422 = vmatprep.subr.mxu0 0.0
    %5423 = vmatpush1.msra.mxu0 0.0
    %5424 = vmatprep.subr.mxu0 0.0
    %5425 = vmatpush1.msra.mxu0 0.0
    %5426 = vmatprep.subr.mxu0 0.0
    %5427 = vmatpush1.msra.mxu0 0.0
    %5428 = vmatprep.subr.mxu0 0.0
    %5429 = vmatpush1.msra.mxu0 0.0
    %5430 = vmatprep.subr.mxu0 0.0
    %5431 = vmatpush1.msra.mxu0 0.0
    %5432 = vmatprep.subr.mxu0 0.0
    %5433 = vmatpush1.msra.mxu0 0.0
    %5434 = vmatprep.subr.mxu0 0.0
    %5435 = vmatpush1.msra.mxu0 0.0
    %5436 = vmatprep.subr.mxu0 0.0
    %5437 = vmatpush1.msra.mxu0 0.0
    %5438 = vmatprep.subr.mxu0 0.0
    %5439 = vmatpush1.msra.mxu0 0.0
    %5440 = vmatprep.subr.mxu0 0.0
    %5441 = vmatpush1.msra.mxu0 0.0
    %5442 = vmatprep.subr.mxu0 0.0
    %5443 = vmatpush1.msra.mxu0 0.0
    %5444 = vmatprep.subr.mxu0 0.0
    %5445 = vmatpush1.msra.mxu0 0.0
    %5446 = vmatprep.subr.mxu0 0.0
    %5447 = vmatpush1.msra.mxu0 0.0
    %5448 = vmatprep.subr.mxu0 0.0
    %5449 = vmatpush1.msra.mxu0 0.0
    %5450 = vmatprep.subr.mxu0 0.0
    %5451 = vmatpush1.msra.mxu0 0.0
    %5452 = vmatprep.subr.mxu0 0.0
    %5453 = vmatpush1.msra.mxu0 0.0
    %5454 = vmatprep.subr.mxu0 0.0
    %5455 = vmatpush1.msra.mxu0 0.0
    %5456 = vmatprep.subr.mxu0 0.0
    %5457 = vmatpush1.msra.mxu0 0.0
    %5458 = vmatprep.subr.mxu0 0.0
    %5459 = vmatpush1.msra.mxu0 0.0
    %5460 = vmatprep.mubr.f32.mxu0 0.0
    %v5461 = vand.u32 %v5393, 4294901760
    %v5462 = vsub.f32 %v5393, %v5461
    %v5463 = vand.u32 %v5462, 4294901760
    %v5464 = vsub.f32 %v5462, %v5463
    %v5465 = vand.u32 %v5464, 4294901760
    %5466 = vmatmul.mubr.f32.gmra.mrb[0].mxu0 %v5465
    %v5467 = vpop.f32.mrb[0].mxu0
    %v5468 = vadd.f32 %v5389, %v5467
    %v5469 = vpop.f32.mrb[0].mxu0
    %5470 = vdwg.mxu0
    %5471 = vmatprep.subr.mxu0 0.0
    %v5472 = vand.u32 %v85, 4294901760
    %v5473 = vsub.f32 %v85, %v5472
    %v5474 = vand.u32 %v5473, 4294901760
    %v5475 = vsub.f32 %v5473, %v5474
    %v5476 = vand.u32 %v5475, 4294901760
    %5477 = vmatpush1.msra.mxu0 %v5476
    %5478 = vmatprep.subr.mxu0 0.0
    %5479 = vmatpush1.msra.mxu0 0.0
    %5480 = vmatprep.subr.mxu0 0.0
    %5481 = vmatpush1.msra.mxu0 0.0
    %5482 = vmatprep.subr.mxu0 0.0
    %5483 = vmatpush1.msra.mxu0 0.0
    %5484 = vmatprep.subr.mxu0 0.0
    %5485 = vmatpush1.msra.mxu0 0.0
    %5486 = vmatprep.subr.mxu0 0.0
    %5487 = vmatpush1.msra.mxu0 0.0
    %5488 = vmatprep.subr.mxu0 0.0
    %5489 = vmatpush1.msra.mxu0 0.0
    %5490 = vmatprep.subr.mxu0 0.0
    %5491 = vmatpush1.msra.mxu0 0.0
    %5492 = vmatprep.subr.mxu0 0.0
    %5493 = vmatpush1.msra.mxu0 0.0
    %5494 = vmatprep.subr.mxu0 0.0
    %5495 = vmatpush1.msra.mxu0 0.0
    %5496 = vmatprep.subr.mxu0 0.0
    %5497 = vmatpush1.msra.mxu0 0.0
    %5498 = vmatprep.subr.mxu0 0.0
    %5499 = vmatpush1.msra.mxu0 0.0
    %5500 = vmatprep.subr.mxu0 0.0
    %5501 = vmatpush1.msra.mxu0 0.0
    %5502 = vmatprep.subr.mxu0 0.0
    %5503 = vmatpush1.msra.mxu0 0.0
    %5504 = vmatprep.subr.mxu0 0.0
    %5505 = vmatpush1.msra.mxu0 0.0
    %5506 = vmatprep.subr.mxu0 0.0
    %5507 = vmatpush1.msra.mxu0 0.0
    %5508 = vmatprep.subr.mxu0 0.0
    %5509 = vmatpush1.msra.mxu0 0.0
    %5510 = vmatprep.subr.mxu0 0.0
    %5511 = vmatpush1.msra.mxu0 0.0
    %5512 = vmatprep.subr.mxu0 0.0
    %5513 = vmatpush1.msra.mxu0 0.0
    %5514 = vmatprep.subr.mxu0 0.0
    %5515 = vmatpush1.msra.mxu0 0.0
    %5516 = vmatprep.subr.mxu0 0.0
    %5517 = vmatpush1.msra.mxu0 0.0
    %5518 = vmatprep.subr.mxu0 0.0
    %5519 = vmatpush1.msra.mxu0 0.0
    %5520 = vmatprep.subr.mxu0 0.0
    %5521 = vmatpush1.msra.mxu0 0.0
    %5522 = vmatprep.subr.mxu0 0.0
    %5523 = vmatpush1.msra.mxu0 0.0
    %5524 = vmatprep.subr.mxu0 0.0
    %5525 = vmatpush1.msra.mxu0 0.0
    %5526 = vmatprep.subr.mxu0 0.0
    %5527 = vmatpush1.msra.mxu0 0.0
    %5528 = vmatprep.subr.mxu0 0.0
    %5529 = vmatpush1.msra.mxu0 0.0
    %5530 = vmatprep.subr.mxu0 0.0
    %5531 = vmatpush1.msra.mxu0 0.0
    %5532 = vmatprep.subr.mxu0 0.0
    %5533 = vmatpush1.msra.mxu0 0.0
    %5534 = vmatprep.subr.mxu0 0.0
    %5535 = vmatpush1.msra.mxu0 0.0
    %5536 = vmatprep.subr.mxu0 0.0
    %5537 = vmatpush1.msra.mxu0 0.0
    %5538 = vmatprep.subr.mxu0 0.0
    %5539 = vmatpush1.msra.mxu0 0.0
    %5540 = vmatprep.mubr.f32.mxu0 0.0
    %v5541 = vand.u32 %v5393, 4294901760
    %5542 = vmatmul.mubr.f32.gmra.mrb[0].mxu0 %v5541
    %v5543 = vpop.f32.mrb[0].mxu0
    %v5544 = vadd.f32 %v5468, %v5543
    %v5545 = vpop.f32.mrb[0].mxu0
    %5546 = vdwg.mxu0
    %5547 = vmatprep.subr.mxu0 0.0
    %v5548 = vand.u32 %v85, 4294901760
    %v5549 = vsub.f32 %v85, %v5548
    %5550 = vmatpush1.msra.mxu0 %v5549
    %5551 = vmatprep.subr.mxu0 0.0
    %5552 = vmatpush1.msra.mxu0 0.0
    %5553 = vmatprep.subr.mxu0 0.0
    %5554 = vmatpush1.msra.mxu0 0.0
    %5555 = vmatprep.subr.mxu0 0.0
    %5556 = vmatpush1.msra.mxu0 0.0
    %5557 = vmatprep.subr.mxu0 0.0
    %5558 = vmatpush1.msra.mxu0 0.0
    %5559 = vmatprep.subr.mxu0 0.0
    %5560 = vmatpush1.msra.mxu0 0.0
    %5561 = vmatprep.subr.mxu0 0.0
    %5562 = vmatpush1.msra.mxu0 0.0
    %5563 = vmatprep.subr.mxu0 0.0
    %5564 = vmatpush1.msra.mxu0 0.0
    %5565 = vmatprep.subr.mxu0 0.0
    %5566 = vmatpush1.msra.mxu0 0.0
    %5567 = vmatprep.subr.mxu0 0.0
    %5568 = vmatpush1.msra.mxu0 0.0
    %5569 = vmatprep.subr.mxu0 0.0
    %5570 = vmatpush1.msra.mxu0 0.0
    %5571 = vmatprep.subr.mxu0 0.0
    %5572 = vmatpush1.msra.mxu0 0.0
    %5573 = vmatprep.subr.mxu0 0.0
    %5574 = vmatpush1.msra.mxu0 0.0
    %5575 = vmatprep.subr.mxu0 0.0
    %5576 = vmatpush1.msra.mxu0 0.0
    %5577 = vmatprep.subr.mxu0 0.0
    %5578 = vmatpush1.msra.mxu0 0.0
    %5579 = vmatprep.subr.mxu0 0.0
    %5580 = vmatpush1.msra.mxu0 0.0
    %5581 = vmatprep.subr.mxu0 0.0
    %5582 = vmatpush1.msra.mxu0 0.0
    %5583 = vmatprep.subr.mxu0 0.0
    %5584 = vmatpush1.msra.mxu0 0.0
    %5585 = vmatprep.subr.mxu0 0.0
    %5586 = vmatpush1.msra.mxu0 0.0
    %5587 = vmatprep.subr.mxu0 0.0
    %5588 = vmatpush1.msra.mxu0 0.0
    %5589 = vmatprep.subr.mxu0 0.0
    %5590 = vmatpush1.msra.mxu0 0.0
    %5591 = vmatprep.subr.mxu0 0.0
    %5592 = vmatpush1.msra.mxu0 0.0
    %5593 = vmatprep.subr.mxu0 0.0
    %5594 = vmatpush1.msra.mxu0 0.0
    %5595 = vmatprep.subr.mxu0 0.0
    %5596 = vmatpush1.msra.mxu0 0.0
    %5597 = vmatprep.subr.mxu0 0.0
    %5598 = vmatpush1.msra.mxu0 0.0
    %5599 = vmatprep.subr.mxu0 0.0
    %5600 = vmatpush1.msra.mxu0 0.0
    %5601 = vmatprep.subr.mxu0 0.0
    %5602 = vmatpush1.msra.mxu0 0.0
    %5603 = vmatprep.subr.mxu0 0.0
    %5604 = vmatpush1.msra.mxu0 0.0
    %5605 = vmatprep.subr.mxu0 0.0
    %5606 = vmatpush1.msra.mxu0 0.0
    %5607 = vmatprep.subr.mxu0 0.0
    %5608 = vmatpush1.msra.mxu0 0.0
    %5609 = vmatprep.subr.mxu0 0.0
    %5610 = vmatpush1.msra.mxu0 0.0
    %5611 = vmatprep.subr.mxu0 0.0
    %5612 = vmatpush1.msra.mxu0 0.0
    %5613 = vmatprep.mubr.f32.mxu0 0.0
    %v5614 = vand.u32 %v5393, 4294901760
    %v5615 = vsub.f32 %v5393, %v5614
    %5616 = vmatmul.mubr.f32.gmra.mrb[0].mxu0 %v5615
    %v5617 = vpop.f32.mrb[0].mxu0
    %v5618 = vadd.f32 %v5544, %v5617
    %v5619 = vpop.f32.mrb[0].mxu0
    %5620 = vdwg.mxu0
    %5621 = vmatprep.subr.mxu0 0.0
    %v5622 = vand.u32 %v85, 4294901760
    %5623 = vmatpush1.msra.mxu0 %v5622
    %5624 = vmatprep.subr.mxu0 0.0
    %5625 = vmatpush1.msra.mxu0 0.0
    %5626 = vmatprep.subr.mxu0 0.0
    %5627 = vmatpush1.msra.mxu0 0.0
    %5628 = vmatprep.subr.mxu0 0.0
    %5629 = vmatpush1.msra.mxu0 0.0
    %5630 = vmatprep.subr.mxu0 0.0
    %5631 = vmatpush1.msra.mxu0 0.0
    %5632 = vmatprep.subr.mxu0 0.0
    %5633 = vmatpush1.msra.mxu0 0.0
    %5634 = vmatprep.subr.mxu0 0.0
    %5635 = vmatpush1.msra.mxu0 0.0
    %5636 = vmatprep.subr.mxu0 0.0
    %5637 = vmatpush1.msra.mxu0 0.0
    %5638 = vmatprep.subr.mxu0 0.0
    %5639 = vmatpush1.msra.mxu0 0.0
    %5640 = vmatprep.subr.mxu0 0.0
    %5641 = vmatpush1.msra.mxu0 0.0
    %5642 = vmatprep.subr.mxu0 0.0
    %5643 = vmatpush1.msra.mxu0 0.0
    %5644 = vmatprep.subr.mxu0 0.0
    %5645 = vmatpush1.msra.mxu0 0.0
    %5646 = vmatprep.subr.mxu0 0.0
    %5647 = vmatpush1.msra.mxu0 0.0
    %5648 = vmatprep.subr.mxu0 0.0
    %5649 = vmatpush1.msra.mxu0 0.0
    %5650 = vmatprep.subr.mxu0 0.0
    %5651 = vmatpush1.msra.mxu0 0.0
    %5652 = vmatprep.subr.mxu0 0.0
    %5653 = vmatpush1.msra.mxu0 0.0
    %5654 = vmatprep.subr.mxu0 0.0
    %5655 = vmatpush1.msra.mxu0 0.0
    %5656 = vmatprep.subr.mxu0 0.0
    %5657 = vmatpush1.msra.mxu0 0.0
    %5658 = vmatprep.subr.mxu0 0.0
    %5659 = vmatpush1.msra.mxu0 0.0
    %5660 = vmatprep.subr.mxu0 0.0
    %5661 = vmatpush1.msra.mxu0 0.0
    %5662 = vmatprep.subr.mxu0 0.0
    %5663 = vmatpush1.msra.mxu0 0.0
    %5664 = vmatprep.subr.mxu0 0.0
    %5665 = vmatpush1.msra.mxu0 0.0
    %5666 = vmatprep.subr.mxu0 0.0
    %5667 = vmatpush1.msra.mxu0 0.0
    %5668 = vmatprep.subr.mxu0 0.0
    %5669 = vmatpush1.msra.mxu0 0.0
    %5670 = vmatprep.subr.mxu0 0.0
    %5671 = vmatpush1.msra.mxu0 0.0
    %5672 = vmatprep.subr.mxu0 0.0
    %5673 = vmatpush1.msra.mxu0 0.0
    %5674 = vmatprep.subr.mxu0 0.0
    %5675 = vmatpush1.msra.mxu0 0.0
    %5676 = vmatprep.subr.mxu0 0.0
    %5677 = vmatpush1.msra.mxu0 0.0
    %5678 = vmatprep.subr.mxu0 0.0
    %5679 = vmatpush1.msra.mxu0 0.0
    %5680 = vmatprep.subr.mxu0 0.0
    %5681 = vmatpush1.msra.mxu0 0.0
    %5682 = vmatprep.subr.mxu0 0.0
    %5683 = vmatpush1.msra.mxu0 0.0
    %5684 = vmatprep.subr.mxu0 0.0
    %5685 = vmatpush1.msra.mxu0 0.0
    %5686 = vmatprep.mubr.f32.mxu0 0.0
    %v5687 = vand.u32 %v5393, 4294901760
    %v5688 = vsub.f32 %v5393, %v5687
    %v5689 = vand.u32 %v5688, 4294901760
    %5690 = vmatmul.mubr.f32.gmra.mrb[0].mxu0 %v5689
    %v5691 = vpop.f32.mrb[0].mxu0
    %v5692 = vadd.f32 %v5618, %v5691
    %v5693 = vpop.f32.mrb[0].mxu0
    %5694 = vdwg.mxu0
    %5695 = vmatprep.subr.mxu0 0.0
    %v5696 = vand.u32 %v85, 4294901760
    %v5697 = vsub.f32 %v85, %v5696
    %v5698 = vand.u32 %v5697, 4294901760
    %5699 = vmatpush1.msra.mxu0 %v5698
    %5700 = vmatprep.subr.mxu0 0.0
    %5701 = vmatpush1.msra.mxu0 0.0
    %5702 = vmatprep.subr.mxu0 0.0
    %5703 = vmatpush1.msra.mxu0 0.0
    %5704 = vmatprep.subr.mxu0 0.0
    %5705 = vmatpush1.msra.mxu0 0.0
    %5706 = vmatprep.subr.mxu0 0.0
    %5707 = vmatpush1.msra.mxu0 0.0
    %5708 = vmatprep.subr.mxu0 0.0
    %5709 = vmatpush1.msra.mxu0 0.0
    %5710 = vmatprep.subr.mxu0 0.0
    %5711 = vmatpush1.msra.mxu0 0.0
    %5712 = vmatprep.subr.mxu0 0.0
    %5713 = vmatpush1.msra.mxu0 0.0
    %5714 = vmatprep.subr.mxu0 0.0
    %5715 = vmatpush1.msra.mxu0 0.0
    %5716 = vmatprep.subr.mxu0 0.0
    %5717 = vmatpush1.msra.mxu0 0.0
    %5718 = vmatprep.subr.mxu0 0.0
    %5719 = vmatpush1.msra.mxu0 0.0
    %5720 = vmatprep.subr.mxu0 0.0
    %5721 = vmatpush1.msra.mxu0 0.0
    %5722 = vmatprep.subr.mxu0 0.0
    %5723 = vmatpush1.msra.mxu0 0.0
    %5724 = vmatprep.subr.mxu0 0.0
    %5725 = vmatpush1.msra.mxu0 0.0
    %5726 = vmatprep.subr.mxu0 0.0
    %5727 = vmatpush1.msra.mxu0 0.0
    %5728 = vmatprep.subr.mxu0 0.0
    %5729 = vmatpush1.msra.mxu0 0.0
    %5730 = vmatprep.subr.mxu0 0.0
    %5731 = vmatpush1.msra.mxu0 0.0
    %5732 = vmatprep.subr.mxu0 0.0
    %5733 = vmatpush1.msra.mxu0 0.0
    %5734 = vmatprep.subr.mxu0 0.0
    %5735 = vmatpush1.msra.mxu0 0.0
    %5736 = vmatprep.subr.mxu0 0.0
    %5737 = vmatpush1.msra.mxu0 0.0
    %5738 = vmatprep.subr.mxu0 0.0
    %5739 = vmatpush1.msra.mxu0 0.0
    %5740 = vmatprep.subr.mxu0 0.0
    %5741 = vmatpush1.msra.mxu0 0.0
    %5742 = vmatprep.subr.mxu0 0.0
    %5743 = vmatpush1.msra.mxu0 0.0
    %5744 = vmatprep.subr.mxu0 0.0
    %5745 = vmatpush1.msra.mxu0 0.0
    %5746 = vmatprep.subr.mxu0 0.0
    %5747 = vmatpush1.msra.mxu0 0.0
    %5748 = vmatprep.subr.mxu0 0.0
    %5749 = vmatpush1.msra.mxu0 0.0
    %5750 = vmatprep.subr.mxu0 0.0
    %5751 = vmatpush1.msra.mxu0 0.0
    %5752 = vmatprep.subr.mxu0 0.0
    %5753 = vmatpush1.msra.mxu0 0.0
    %5754 = vmatprep.subr.mxu0 0.0
    %5755 = vmatpush1.msra.mxu0 0.0
    %5756 = vmatprep.subr.mxu0 0.0
    %5757 = vmatpush1.msra.mxu0 0.0
    %5758 = vmatprep.subr.mxu0 0.0
    %5759 = vmatpush1.msra.mxu0 0.0
    %5760 = vmatprep.subr.mxu0 0.0
    %5761 = vmatpush1.msra.mxu0 0.0
    %5762 = vmatprep.mubr.f32.mxu0 0.0
    %v5763 = vand.u32 %v5393, 4294901760
    %5764 = vmatmul.mubr.f32.gmra.mrb[0].mxu0 %v5763
    %v5765 = vpop.f32.mrb[0].mxu0
    %v5766 = vadd.f32 %v5692, %v5765
    %v5767 = vpop.f32.mrb[0].mxu0
    %5768 = vdwg.mxu0
    %5769 = vmatprep.subr.mxu0 0.0
    %v5770 = vand.u32 %v85, 4294901760
    %5771 = vmatpush1.msra.mxu0 %v5770
    %5772 = vmatprep.subr.mxu0 0.0
    %5773 = vmatpush1.msra.mxu0 0.0
    %5774 = vmatprep.subr.mxu0 0.0
    %5775 = vmatpush1.msra.mxu0 0.0
    %5776 = vmatprep.subr.mxu0 0.0
    %5777 = vmatpush1.msra.mxu0 0.0
    %5778 = vmatprep.subr.mxu0 0.0
    %5779 = vmatpush1.msra.mxu0 0.0
    %5780 = vmatprep.subr.mxu0 0.0
    %5781 = vmatpush1.msra.mxu0 0.0
    %5782 = vmatprep.subr.mxu0 0.0
    %5783 = vmatpush1.msra.mxu0 0.0
    %5784 = vmatprep.subr.mxu0 0.0
    %5785 = vmatpush1.msra.mxu0 0.0
    %5786 = vmatprep.subr.mxu0 0.0
    %5787 = vmatpush1.msra.mxu0 0.0
    %5788 = vmatprep.subr.mxu0 0.0
    %5789 = vmatpush1.msra.mxu0 0.0
    %5790 = vmatprep.subr.mxu0 0.0
    %5791 = vmatpush1.msra.mxu0 0.0
    %5792 = vmatprep.subr.mxu0 0.0
    %5793 = vmatpush1.msra.mxu0 0.0
    %5794 = vmatprep.subr.mxu0 0.0
    %5795 = vmatpush1.msra.mxu0 0.0
    %5796 = vmatprep.subr.mxu0 0.0
    %5797 = vmatpush1.msra.mxu0 0.0
    %5798 = vmatprep.subr.mxu0 0.0
    %5799 = vmatpush1.msra.mxu0 0.0
    %5800 = vmatprep.subr.mxu0 0.0
    %5801 = vmatpush1.msra.mxu0 0.0
    %5802 = vmatprep.subr.mxu0 0.0
    %5803 = vmatpush1.msra.mxu0 0.0
    %5804 = vmatprep.subr.mxu0 0.0
    %5805 = vmatpush1.msra.mxu0 0.0
    %5806 = vmatprep.subr.mxu0 0.0
    %5807 = vmatpush1.msra.mxu0 0.0
    %5808 = vmatprep.subr.mxu0 0.0
    %5809 = vmatpush1.msra.mxu0 0.0
    %5810 = vmatprep.subr.mxu0 0.0
    %5811 = vmatpush1.msra.mxu0 0.0
    %5812 = vmatprep.subr.mxu0 0.0
    %5813 = vmatpush1.msra.mxu0 0.0
    %5814 = vmatprep.subr.mxu0 0.0
    %5815 = vmatpush1.msra.mxu0 0.0
    %5816 = vmatprep.subr.mxu0 0.0
    %5817 = vmatpush1.msra.mxu0 0.0
    %5818 = vmatprep.subr.mxu0 0.0
    %5819 = vmatpush1.msra.mxu0 0.0
    %5820 = vmatprep.subr.mxu0 0.0
    %5821 = vmatpush1.msra.mxu0 0.0
    %5822 = vmatprep.subr.mxu0 0.0
    %5823 = vmatpush1.msra.mxu0 0.0
    %5824 = vmatprep.subr.mxu0 0.0
    %5825 = vmatpush1.msra.mxu0 0.0
    %5826 = vmatprep.subr.mxu0 0.0
    %5827 = vmatpush1.msra.mxu0 0.0
    %5828 = vmatprep.subr.mxu0 0.0
    %5829 = vmatpush1.msra.mxu0 0.0
    %5830 = vmatprep.subr.mxu0 0.0
    %5831 = vmatpush1.msra.mxu0 0.0
    %5832 = vmatprep.subr.mxu0 0.0
    %5833 = vmatpush1.msra.mxu0 0.0
    %5834 = vmatprep.mubr.f32.mxu0 0.0
    %v5835 = vand.u32 %v5393, 4294901760
    %5836 = vmatmul.mubr.f32.gmra.mrb[0].mxu0 %v5835
    %v5837 = vpop.f32.mrb[0].mxu0
    %v5838 = vadd.f32 %v5766, %v5837
    %v5839 = vpop.f32.mrb[0].mxu0
    %5840 = vdwg.mxu0
    %v5841 = vtanh.pop %v5838
    %v5842 = vmul.f32 %v5841, 0.5
    %v5843 = vadd.f32 %v5842, 0.5
    %v5844 = vmul.f32 %v5843, %v4893
    %5846 = vrot.lane.b32.xlu0 %v5841, 32
    %v5847 = vpop.permute.xlu0 %5846
    %v5849 = vmul.f32 %v5843, %v5847
    %5851 = vrot.lane.b32.xlu0 %v5849, 32
    %v5852 = vpop.permute.xlu0 %5851
    %v5854 = vadd.f32 %v5844, %v5852
    %v5855 = vtanh.pop %v5854
    %5857 = vrot.lane.b32.xlu0 %v5855, 32
    %v5858 = vpop.permute.xlu0 %5857
    %v5860 = vmul.f32 %v5843, %v5858
    %s5861 = scalar_lea.vmem [#allocation6], 24
    %v5862 = vld [vmem:[%s5861] sm:$0xf]
    %5864 = vrot.lane.b32.xlu0 %v5860, 64
    %v5865 = vpop.permute.xlu0 %5864
    %v5866 = vsel %vm93, %v5865, 0
    %5868 = vmatprep.subr.mxu0 0.0
    %v5869 = vand.u32 %v86, 4294901760
    %5870 = vmatpush1.msra.mxu0 %v5869
    %5871 = vmatprep.subr.mxu0 0.0
    %v5872 = vand.u32 %v87, 4294901760
    %5873 = vmatpush1.msra.mxu0 %v5872
    %5874 = vmatprep.subr.mxu0 0.0
    %v5875 = vand.u32 %v88, 4294901760
    %5876 = vmatpush1.msra.mxu0 %v5875
    %5877 = vmatprep.subr.mxu0 0.0
    %v5878 = vand.u32 %v89, 4294901760
    %5879 = vmatpush1.msra.mxu0 %v5878
    %5880 = vmatprep.subr.mxu0 0.0
    %5881 = vmatpush1.msra.mxu0 0.0
    %5882 = vmatprep.subr.mxu0 0.0
    %5883 = vmatpush1.msra.mxu0 0.0
    %5884 = vmatprep.subr.mxu0 0.0
    %5885 = vmatpush1.msra.mxu0 0.0
    %5886 = vmatprep.subr.mxu0 0.0
    %5887 = vmatpush1.msra.mxu0 0.0
    %5888 = vmatprep.subr.mxu0 0.0
    %5889 = vmatpush1.msra.mxu0 0.0
    %5890 = vmatprep.subr.mxu0 0.0
    %5891 = vmatpush1.msra.mxu0 0.0
    %5892 = vmatprep.subr.mxu0 0.0
    %5893 = vmatpush1.msra.mxu0 0.0
    %5894 = vmatprep.subr.mxu0 0.0
    %5895 = vmatpush1.msra.mxu0 0.0
    %5896 = vmatprep.subr.mxu0 0.0
    %5897 = vmatpush1.msra.mxu0 0.0
    %5898 = vmatprep.subr.mxu0 0.0
    %5899 = vmatpush1.msra.mxu0 0.0
    %5900 = vmatprep.subr.mxu0 0.0
    %5901 = vmatpush1.msra.mxu0 0.0
    %5902 = vmatprep.subr.mxu0 0.0
    %5903 = vmatpush1.msra.mxu0 0.0
    %5904 = vmatprep.subr.mxu0 0.0
    %5905 = vmatpush1.msra.mxu0 0.0
    %5906 = vmatprep.subr.mxu0 0.0
    %5907 = vmatpush1.msra.mxu0 0.0
    %5908 = vmatprep.subr.mxu0 0.0
    %5909 = vmatpush1.msra.mxu0 0.0
    %5910 = vmatprep.subr.mxu0 0.0
    %5911 = vmatpush1.msra.mxu0 0.0
    %5912 = vmatprep.subr.mxu0 0.0
    %5913 = vmatpush1.msra.mxu0 0.0
    %5914 = vmatprep.subr.mxu0 0.0
    %5915 = vmatpush1.msra.mxu0 0.0
    %5916 = vmatprep.subr.mxu0 0.0
    %5917 = vmatpush1.msra.mxu0 0.0
    %5918 = vmatprep.subr.mxu0 0.0
    %5919 = vmatpush1.msra.mxu0 0.0
    %5920 = vmatprep.subr.mxu0 0.0
    %5921 = vmatpush1.msra.mxu0 0.0
    %5922 = vmatprep.subr.mxu0 0.0
    %5923 = vmatpush1.msra.mxu0 0.0
    %5924 = vmatprep.subr.mxu0 0.0
    %5925 = vmatpush1.msra.mxu0 0.0
    %5926 = vmatprep.subr.mxu0 0.0
    %5927 = vmatpush1.msra.mxu0 0.0
    %5928 = vmatprep.subr.mxu0 0.0
    %5929 = vmatpush1.msra.mxu0 0.0
    %5930 = vmatprep.subr.mxu0 0.0
    %5931 = vmatpush1.msra.mxu0 0.0
    %5932 = vmatprep.subr.mxu0 0.0
    %5933 = vmatpush1.msra.mxu0 0.0
    %5934 = vmatprep.subr.mxu0 0.0
    %5935 = vmatpush1.msra.mxu0 0.0
    %5936 = vmatprep.mubr.f32.mxu0 0.0
    %v5937 = vand.u32 %v5866, 4294901760
    %v5938 = vsub.f32 %v5866, %v5937
    %v5939 = vand.u32 %v5938, 4294901760
    %v5940 = vsub.f32 %v5938, %v5939
    %v5941 = vand.u32 %v5940, 4294901760
    %5942 = vmatmul.mubr.f32.gmra.mrb[0].mxu0 %v5941
    %v5943 = vpop.f32.mrb[0].mxu0
    %v5944 = vadd.f32 0.0, %v5943
    %v5945 = vpop.f32.mrb[0].mxu0
    %5946 = vdwg.mxu0
    %5947 = vmatprep.subr.mxu0 0.0
    %v5948 = vand.u32 %v86, 4294901760
    %v5949 = vsub.f32 %v86, %v5948
    %v5950 = vand.u32 %v5949, 4294901760
    %v5951 = vsub.f32 %v5949, %v5950
    %v5952 = vand.u32 %v5951, 4294901760
    %5953 = vmatpush1.msra.mxu0 %v5952
    %5954 = vmatprep.subr.mxu0 0.0
    %v5955 = vand.u32 %v87, 4294901760
    %v5956 = vsub.f32 %v87, %v5955
    %v5957 = vand.u32 %v5956, 4294901760
    %v5958 = vsub.f32 %v5956, %v5957
    %v5959 = vand.u32 %v5958, 4294901760
    %5960 = vmatpush1.msra.mxu0 %v5959
    %5961 = vmatprep.subr.mxu0 0.0
    %v5962 = vand.u32 %v88, 4294901760
    %v5963 = vsub.f32 %v88, %v5962
    %v5964 = vand.u32 %v5963, 4294901760
    %v5965 = vsub.f32 %v5963, %v5964
    %v5966 = vand.u32 %v5965, 4294901760
    %5967 = vmatpush1.msra.mxu0 %v5966
    %5968 = vmatprep.subr.mxu0 0.0
    %v5969 = vand.u32 %v89, 4294901760
    %v5970 = vsub.f32 %v89, %v5969
    %v5971 = vand.u32 %v5970, 4294901760
    %v5972 = vsub.f32 %v5970, %v5971
    %v5973 = vand.u32 %v5972, 4294901760
    %5974 = vmatpush1.msra.mxu0 %v5973
    %5975 = vmatprep.subr.mxu0 0.0
    %5976 = vmatpush1.msra.mxu0 0.0
    %5977 = vmatprep.subr.mxu0 0.0
    %5978 = vmatpush1.msra.mxu0 0.0
    %5979 = vmatprep.subr.mxu0 0.0
    %5980 = vmatpush1.msra.mxu0 0.0
    %5981 = vmatprep.subr.mxu0 0.0
    %5982 = vmatpush1.msra.mxu0 0.0
    %5983 = vmatprep.subr.mxu0 0.0
    %5984 = vmatpush1.msra.mxu0 0.0
    %5985 = vmatprep.subr.mxu0 0.0
    %5986 = vmatpush1.msra.mxu0 0.0
    %5987 = vmatprep.subr.mxu0 0.0
    %5988 = vmatpush1.msra.mxu0 0.0
    %5989 = vmatprep.subr.mxu0 0.0
    %5990 = vmatpush1.msra.mxu0 0.0
    %5991 = vmatprep.subr.mxu0 0.0
    %5992 = vmatpush1.msra.mxu0 0.0
    %5993 = vmatprep.subr.mxu0 0.0
    %5994 = vmatpush1.msra.mxu0 0.0
    %5995 = vmatprep.subr.mxu0 0.0
    %5996 = vmatpush1.msra.mxu0 0.0
    %5997 = vmatprep.subr.mxu0 0.0
    %5998 = vmatpush1.msra.mxu0 0.0
    %5999 = vmatprep.subr.mxu0 0.0
    %6000 = vmatpush1.msra.mxu0 0.0
    %6001 = vmatprep.subr.mxu0 0.0
    %6002 = vmatpush1.msra.mxu0 0.0
    %6003 = vmatprep.subr.mxu0 0.0
    %6004 = vmatpush1.msra.mxu0 0.0
    %6005 = vmatprep.subr.mxu0 0.0
    %6006 = vmatpush1.msra.mxu0 0.0
    %6007 = vmatprep.subr.mxu0 0.0
    %6008 = vmatpush1.msra.mxu0 0.0
    %6009 = vmatprep.subr.mxu0 0.0
    %6010 = vmatpush1.msra.mxu0 0.0
    %6011 = vmatprep.subr.mxu0 0.0
    %6012 = vmatpush1.msra.mxu0 0.0
    %6013 = vmatprep.subr.mxu0 0.0
    %6014 = vmatpush1.msra.mxu0 0.0
    %6015 = vmatprep.subr.mxu0 0.0
    %6016 = vmatpush1.msra.mxu0 0.0
    %6017 = vmatprep.subr.mxu0 0.0
    %6018 = vmatpush1.msra.mxu0 0.0
    %6019 = vmatprep.subr.mxu0 0.0
    %6020 = vmatpush1.msra.mxu0 0.0
    %6021 = vmatprep.subr.mxu0 0.0
    %6022 = vmatpush1.msra.mxu0 0.0
    %6023 = vmatprep.subr.mxu0 0.0
    %6024 = vmatpush1.msra.mxu0 0.0
    %6025 = vmatprep.subr.mxu0 0.0
    %6026 = vmatpush1.msra.mxu0 0.0
    %6027 = vmatprep.subr.mxu0 0.0
    %6028 = vmatpush1.msra.mxu0 0.0
    %6029 = vmatprep.subr.mxu0 0.0
    %6030 = vmatpush1.msra.mxu0 0.0
    %6031 = vmatprep.mubr.f32.mxu0 0.0
    %v6032 = vand.u32 %v5866, 4294901760
    %6033 = vmatmul.mubr.f32.gmra.mrb[0].mxu0 %v6032
    %v6034 = vpop.f32.mrb[0].mxu0
    %v6035 = vadd.f32 %v5944, %v6034
    %v6036 = vpop.f32.mrb[0].mxu0
    %6037 = vdwg.mxu0
    %6038 = vmatprep.subr.mxu0 0.0
    %v6039 = vand.u32 %v86, 4294901760
    %v6040 = vsub.f32 %v86, %v6039
    %6041 = vmatpush1.msra.mxu0 %v6040
    %6042 = vmatprep.subr.mxu0 0.0
    %v6043 = vand.u32 %v87, 4294901760
    %v6044 = vsub.f32 %v87, %v6043
    %6045 = vmatpush1.msra.mxu0 %v6044
    %6046 = vmatprep.subr.mxu0 0.0
    %v6047 = vand.u32 %v88, 4294901760
    %v6048 = vsub.f32 %v88, %v6047
    %6049 = vmatpush1.msra.mxu0 %v6048
    %6050 = vmatprep.subr.mxu0 0.0
    %v6051 = vand.u32 %v89, 4294901760
    %v6052 = vsub.f32 %v89, %v6051
    %6053 = vmatpush1.msra.mxu0 %v6052
    %6054 = vmatprep.subr.mxu0 0.0
    %6055 = vmatpush1.msra.mxu0 0.0
    %6056 = vmatprep.subr.mxu0 0.0
    %6057 = vmatpush1.msra.mxu0 0.0
    %6058 = vmatprep.subr.mxu0 0.0
    %6059 = vmatpush1.msra.mxu0 0.0
    %6060 = vmatprep.subr.mxu0 0.0
    %6061 = vmatpush1.msra.mxu0 0.0
    %6062 = vmatprep.subr.mxu0 0.0
    %6063 = vmatpush1.msra.mxu0 0.0
    %6064 = vmatprep.subr.mxu0 0.0
    %6065 = vmatpush1.msra.mxu0 0.0
    %6066 = vmatprep.subr.mxu0 0.0
    %6067 = vmatpush1.msra.mxu0 0.0
    %6068 = vmatprep.subr.mxu0 0.0
    %6069 = vmatpush1.msra.mxu0 0.0
    %6070 = vmatprep.subr.mxu0 0.0
    %6071 = vmatpush1.msra.mxu0 0.0
    %6072 = vmatprep.subr.mxu0 0.0
    %6073 = vmatpush1.msra.mxu0 0.0
    %6074 = vmatprep.subr.mxu0 0.0
    %6075 = vmatpush1.msra.mxu0 0.0
    %6076 = vmatprep.subr.mxu0 0.0
    %6077 = vmatpush1.msra.mxu0 0.0
    %6078 = vmatprep.subr.mxu0 0.0
    %6079 = vmatpush1.msra.mxu0 0.0
    %6080 = vmatprep.subr.mxu0 0.0
    %6081 = vmatpush1.msra.mxu0 0.0
    %6082 = vmatprep.subr.mxu0 0.0
    %6083 = vmatpush1.msra.mxu0 0.0
    %6084 = vmatprep.subr.mxu0 0.0
    %6085 = vmatpush1.msra.mxu0 0.0
    %6086 = vmatprep.subr.mxu0 0.0
    %6087 = vmatpush1.msra.mxu0 0.0
    %6088 = vmatprep.subr.mxu0 0.0
    %6089 = vmatpush1.msra.mxu0 0.0
    %6090 = vmatprep.subr.mxu0 0.0
    %6091 = vmatpush1.msra.mxu0 0.0
    %6092 = vmatprep.subr.mxu0 0.0
    %6093 = vmatpush1.msra.mxu0 0.0
    %6094 = vmatprep.subr.mxu0 0.0
    %6095 = vmatpush1.msra.mxu0 0.0
    %6096 = vmatprep.subr.mxu0 0.0
    %6097 = vmatpush1.msra.mxu0 0.0
    %6098 = vmatprep.subr.mxu0 0.0
    %6099 = vmatpush1.msra.mxu0 0.0
    %6100 = vmatprep.subr.mxu0 0.0
    %6101 = vmatpush1.msra.mxu0 0.0
    %6102 = vmatprep.subr.mxu0 0.0
    %6103 = vmatpush1.msra.mxu0 0.0
    %6104 = vmatprep.subr.mxu0 0.0
    %6105 = vmatpush1.msra.mxu0 0.0
    %6106 = vmatprep.subr.mxu0 0.0
    %6107 = vmatpush1.msra.mxu0 0.0
    %6108 = vmatprep.subr.mxu0 0.0
    %6109 = vmatpush1.msra.mxu0 0.0
    %6110 = vmatprep.mubr.f32.mxu0 0.0
    %v6111 = vand.u32 %v5866, 4294901760
    %v6112 = vsub.f32 %v5866, %v6111
    %6113 = vmatmul.mubr.f32.gmra.mrb[0].mxu0 %v6112
    %v6114 = vpop.f32.mrb[0].mxu0
    %v6115 = vadd.f32 %v6035, %v6114
    %v6116 = vpop.f32.mrb[0].mxu0
    %6117 = vdwg.mxu0
    %6118 = vmatprep.subr.mxu0 0.0
    %v6119 = vand.u32 %v86, 4294901760
    %6120 = vmatpush1.msra.mxu0 %v6119
    %6121 = vmatprep.subr.mxu0 0.0
    %v6122 = vand.u32 %v87, 4294901760
    %6123 = vmatpush1.msra.mxu0 %v6122
    %6124 = vmatprep.subr.mxu0 0.0
    %v6125 = vand.u32 %v88, 4294901760
    %6126 = vmatpush1.msra.mxu0 %v6125
    %6127 = vmatprep.subr.mxu0 0.0
    %v6128 = vand.u32 %v89, 4294901760
    %6129 = vmatpush1.msra.mxu0 %v6128
    %6130 = vmatprep.subr.mxu0 0.0
    %6131 = vmatpush1.msra.mxu0 0.0
    %6132 = vmatprep.subr.mxu0 0.0
    %6133 = vmatpush1.msra.mxu0 0.0
    %6134 = vmatprep.subr.mxu0 0.0
    %6135 = vmatpush1.msra.mxu0 0.0
    %6136 = vmatprep.subr.mxu0 0.0
    %6137 = vmatpush1.msra.mxu0 0.0
    %6138 = vmatprep.subr.mxu0 0.0
    %6139 = vmatpush1.msra.mxu0 0.0
    %6140 = vmatprep.subr.mxu0 0.0
    %6141 = vmatpush1.msra.mxu0 0.0
    %6142 = vmatprep.subr.mxu0 0.0
    %6143 = vmatpush1.msra.mxu0 0.0
    %6144 = vmatprep.subr.mxu0 0.0
    %6145 = vmatpush1.msra.mxu0 0.0
    %6146 = vmatprep.subr.mxu0 0.0
    %6147 = vmatpush1.msra.mxu0 0.0
    %6148 = vmatprep.subr.mxu0 0.0
    %6149 = vmatpush1.msra.mxu0 0.0
    %6150 = vmatprep.subr.mxu0 0.0
    %6151 = vmatpush1.msra.mxu0 0.0
    %6152 = vmatprep.subr.mxu0 0.0
    %6153 = vmatpush1.msra.mxu0 0.0
    %6154 = vmatprep.subr.mxu0 0.0
    %6155 = vmatpush1.msra.mxu0 0.0
    %6156 = vmatprep.subr.mxu0 0.0
    %6157 = vmatpush1.msra.mxu0 0.0
    %6158 = vmatprep.subr.mxu0 0.0
    %6159 = vmatpush1.msra.mxu0 0.0
    %6160 = vmatprep.subr.mxu0 0.0
    %6161 = vmatpush1.msra.mxu0 0.0
    %6162 = vmatprep.subr.mxu0 0.0
    %6163 = vmatpush1.msra.mxu0 0.0
    %6164 = vmatprep.subr.mxu0 0.0
    %6165 = vmatpush1.msra.mxu0 0.0
    %6166 = vmatprep.subr.mxu0 0.0
    %6167 = vmatpush1.msra.mxu0 0.0
    %6168 = vmatprep.subr.mxu0 0.0
    %6169 = vmatpush1.msra.mxu0 0.0
    %6170 = vmatprep.subr.mxu0 0.0
    %6171 = vmatpush1.msra.mxu0 0.0
    %6172 = vmatprep.subr.mxu0 0.0
    %6173 = vmatpush1.msra.mxu0 0.0
    %6174 = vmatprep.subr.mxu0 0.0
    %6175 = vmatpush1.msra.mxu0 0.0
    %6176 = vmatprep.subr.mxu0 0.0
    %6177 = vmatpush1.msra.mxu0 0.0
    %6178 = vmatprep.subr.mxu0 0.0
    %6179 = vmatpush1.msra.mxu0 0.0
    %6180 = vmatprep.subr.mxu0 0.0
    %6181 = vmatpush1.msra.mxu0 0.0
    %6182 = vmatprep.subr.mxu0 0.0
    %6183 = vmatpush1.msra.mxu0 0.0
    %6184 = vmatprep.subr.mxu0 0.0
    %6185 = vmatpush1.msra.mxu0 0.0
    %6186 = vmatprep.mubr.f32.mxu0 0.0
    %v6187 = vand.u32 %v5866, 4294901760
    %v6188 = vsub.f32 %v5866, %v6187
    %v6189 = vand.u32 %v6188, 4294901760
    %6190 = vmatmul.mubr.f32.gmra.mrb[0].mxu0 %v6189
    %v6191 = vpop.f32.mrb[0].mxu0
    %v6192 = vadd.f32 %v6115, %v6191
    %v6193 = vpop.f32.mrb[0].mxu0
    %6194 = vdwg.mxu0
    %6195 = vmatprep.subr.mxu0 0.0
    %v6196 = vand.u32 %v86, 4294901760
    %v6197 = vsub.f32 %v86, %v6196
    %v6198 = vand.u32 %v6197, 4294901760
    %6199 = vmatpush1.msra.mxu0 %v6198
    %6200 = vmatprep.subr.mxu0 0.0
    %v6201 = vand.u32 %v87, 4294901760
    %v6202 = vsub.f32 %v87, %v6201
    %v6203 = vand.u32 %v6202, 4294901760
    %6204 = vmatpush1.msra.mxu0 %v6203
    %6205 = vmatprep.subr.mxu0 0.0
    %v6206 = vand.u32 %v88, 4294901760
    %v6207 = vsub.f32 %v88, %v6206
    %v6208 = vand.u32 %v6207, 4294901760
    %6209 = vmatpush1.msra.mxu0 %v6208
    %6210 = vmatprep.subr.mxu0 0.0
    %v6211 = vand.u32 %v89, 4294901760
    %v6212 = vsub.f32 %v89, %v6211
    %v6213 = vand.u32 %v6212, 4294901760
    %6214 = vmatpush1.msra.mxu0 %v6213
    %6215 = vmatprep.subr.mxu0 0.0
    %6216 = vmatpush1.msra.mxu0 0.0
    %6217 = vmatprep.subr.mxu0 0.0
    %6218 = vmatpush1.msra.mxu0 0.0
    %6219 = vmatprep.subr.mxu0 0.0
    %6220 = vmatpush1.msra.mxu0 0.0
    %6221 = vmatprep.subr.mxu0 0.0
    %6222 = vmatpush1.msra.mxu0 0.0
    %6223 = vmatprep.subr.mxu0 0.0
    %6224 = vmatpush1.msra.mxu0 0.0
    %6225 = vmatprep.subr.mxu0 0.0
    %6226 = vmatpush1.msra.mxu0 0.0
    %6227 = vmatprep.subr.mxu0 0.0
    %6228 = vmatpush1.msra.mxu0 0.0
    %6229 = vmatprep.subr.mxu0 0.0
    %6230 = vmatpush1.msra.mxu0 0.0
    %6231 = vmatprep.subr.mxu0 0.0
    %6232 = vmatpush1.msra.mxu0 0.0
    %6233 = vmatprep.subr.mxu0 0.0
    %6234 = vmatpush1.msra.mxu0 0.0
    %6235 = vmatprep.subr.mxu0 0.0
    %6236 = vmatpush1.msra.mxu0 0.0
    %6237 = vmatprep.subr.mxu0 0.0
    %6238 = vmatpush1.msra.mxu0 0.0
    %6239 = vmatprep.subr.mxu0 0.0
    %6240 = vmatpush1.msra.mxu0 0.0
    %6241 = vmatprep.subr.mxu0 0.0
    %6242 = vmatpush1.msra.mxu0 0.0
    %6243 = vmatprep.subr.mxu0 0.0
    %6244 = vmatpush1.msra.mxu0 0.0
    %6245 = vmatprep.subr.mxu0 0.0
    %6246 = vmatpush1.msra.mxu0 0.0
    %6247 = vmatprep.subr.mxu0 0.0
    %6248 = vmatpush1.msra.mxu0 0.0
    %6249 = vmatprep.subr.mxu0 0.0
    %6250 = vmatpush1.msra.mxu0 0.0
    %6251 = vmatprep.subr.mxu0 0.0
    %6252 = vmatpush1.msra.mxu0 0.0
    %6253 = vmatprep.subr.mxu0 0.0
    %6254 = vmatpush1.msra.mxu0 0.0
    %6255 = vmatprep.subr.mxu0 0.0
    %6256 = vmatpush1.msra.mxu0 0.0
    %6257 = vmatprep.subr.mxu0 0.0
    %6258 = vmatpush1.msra.mxu0 0.0
    %6259 = vmatprep.subr.mxu0 0.0
    %6260 = vmatpush1.msra.mxu0 0.0
    %6261 = vmatprep.subr.mxu0 0.0
    %6262 = vmatpush1.msra.mxu0 0.0
    %6263 = vmatprep.subr.mxu0 0.0
    %6264 = vmatpush1.msra.mxu0 0.0
    %6265 = vmatprep.subr.mxu0 0.0
    %6266 = vmatpush1.msra.mxu0 0.0
    %6267 = vmatprep.subr.mxu0 0.0
    %6268 = vmatpush1.msra.mxu0 0.0
    %6269 = vmatprep.subr.mxu0 0.0
    %6270 = vmatpush1.msra.mxu0 0.0
    %6271 = vmatprep.mubr.f32.mxu0 0.0
    %v6272 = vand.u32 %v5866, 4294901760
    %6273 = vmatmul.mubr.f32.gmra.mrb[0].mxu0 %v6272
    %v6274 = vpop.f32.mrb[0].mxu0
    %v6275 = vadd.f32 %v6192, %v6274
    %v6276 = vpop.f32.mrb[0].mxu0
    %6277 = vdwg.mxu0
    %6278 = vmatprep.subr.mxu0 0.0
    %v6279 = vand.u32 %v86, 4294901760
    %6280 = vmatpush1.msra.mxu0 %v6279
    %6281 = vmatprep.subr.mxu0 0.0
    %v6282 = vand.u32 %v87, 4294901760
    %6283 = vmatpush1.msra.mxu0 %v6282
    %6284 = vmatprep.subr.mxu0 0.0
    %v6285 = vand.u32 %v88, 4294901760
    %6286 = vmatpush1.msra.mxu0 %v6285
    %6287 = vmatprep.subr.mxu0 0.0
    %v6288 = vand.u32 %v89, 4294901760
    %6289 = vmatpush1.msra.mxu0 %v6288
    %6290 = vmatprep.subr.mxu0 0.0
    %6291 = vmatpush1.msra.mxu0 0.0
    %6292 = vmatprep.subr.mxu0 0.0
    %6293 = vmatpush1.msra.mxu0 0.0
    %6294 = vmatprep.subr.mxu0 0.0
    %6295 = vmatpush1.msra.mxu0 0.0
    %6296 = vmatprep.subr.mxu0 0.0
    %6297 = vmatpush1.msra.mxu0 0.0
    %6298 = vmatprep.subr.mxu0 0.0
    %6299 = vmatpush1.msra.mxu0 0.0
    %6300 = vmatprep.subr.mxu0 0.0
    %6301 = vmatpush1.msra.mxu0 0.0
    %6302 = vmatprep.subr.mxu0 0.0
    %6303 = vmatpush1.msra.mxu0 0.0
    %6304 = vmatprep.subr.mxu0 0.0
    %6305 = vmatpush1.msra.mxu0 0.0
    %6306 = vmatprep.subr.mxu0 0.0
    %6307 = vmatpush1.msra.mxu0 0.0
    %6308 = vmatprep.subr.mxu0 0.0
    %6309 = vmatpush1.msra.mxu0 0.0
    %6310 = vmatprep.subr.mxu0 0.0
    %6311 = vmatpush1.msra.mxu0 0.0
    %6312 = vmatprep.subr.mxu0 0.0
    %6313 = vmatpush1.msra.mxu0 0.0
    %6314 = vmatprep.subr.mxu0 0.0
    %6315 = vmatpush1.msra.mxu0 0.0
    %6316 = vmatprep.subr.mxu0 0.0
    %6317 = vmatpush1.msra.mxu0 0.0
    %6318 = vmatprep.subr.mxu0 0.0
    %6319 = vmatpush1.msra.mxu0 0.0
    %6320 = vmatprep.subr.mxu0 0.0
    %6321 = vmatpush1.msra.mxu0 0.0
    %6322 = vmatprep.subr.mxu0 0.0
    %6323 = vmatpush1.msra.mxu0 0.0
    %6324 = vmatprep.subr.mxu0 0.0
    %6325 = vmatpush1.msra.mxu0 0.0
    %6326 = vmatprep.subr.mxu0 0.0
    %6327 = vmatpush1.msra.mxu0 0.0
    %6328 = vmatprep.subr.mxu0 0.0
    %6329 = vmatpush1.msra.mxu0 0.0
    %6330 = vmatprep.subr.mxu0 0.0
    %6331 = vmatpush1.msra.mxu0 0.0
    %6332 = vmatprep.subr.mxu0 0.0
    %6333 = vmatpush1.msra.mxu0 0.0
    %6334 = vmatprep.subr.mxu0 0.0
    %6335 = vmatpush1.msra.mxu0 0.0
    %6336 = vmatprep.subr.mxu0 0.0
    %6337 = vmatpush1.msra.mxu0 0.0
    %6338 = vmatprep.subr.mxu0 0.0
    %6339 = vmatpush1.msra.mxu0 0.0
    %6340 = vmatprep.subr.mxu0 0.0
    %6341 = vmatpush1.msra.mxu0 0.0
    %6342 = vmatprep.subr.mxu0 0.0
    %6343 = vmatpush1.msra.mxu0 0.0
    %6344 = vmatprep.subr.mxu0 0.0
    %6345 = vmatpush1.msra.mxu0 0.0
    %6346 = vmatprep.mubr.f32.mxu0 0.0
    %v6347 = vand.u32 %v5866, 4294901760
    %6348 = vmatmul.mubr.f32.gmra.mrb[0].mxu0 %v6347
    %v6349 = vpop.f32.mrb[0].mxu0
    %v6350 = vadd.f32 %v6275, %v6349
    %v6351 = vpop.f32.mrb[0].mxu0
    %6352 = vdwg.mxu0
    %v6354 = vsel %vm582, %v5862, 0
    %6356 = vmatprep.subr.mxu0 0.0
    %v6357 = vand.u32 %v85, 4294901760
    %6358 = vmatpush1.msra.mxu0 %v6357
    %6359 = vmatprep.subr.mxu0 0.0
    %6360 = vmatpush1.msra.mxu0 0.0
    %6361 = vmatprep.subr.mxu0 0.0
    %6362 = vmatpush1.msra.mxu0 0.0
    %6363 = vmatprep.subr.mxu0 0.0
    %6364 = vmatpush1.msra.mxu0 0.0
    %6365 = vmatprep.subr.mxu0 0.0
    %6366 = vmatpush1.msra.mxu0 0.0
    %6367 = vmatprep.subr.mxu0 0.0
    %6368 = vmatpush1.msra.mxu0 0.0
    %6369 = vmatprep.subr.mxu0 0.0
    %6370 = vmatpush1.msra.mxu0 0.0
    %6371 = vmatprep.subr.mxu0 0.0
    %6372 = vmatpush1.msra.mxu0 0.0
    %6373 = vmatprep.subr.mxu0 0.0
    %6374 = vmatpush1.msra.mxu0 0.0
    %6375 = vmatprep.subr.mxu0 0.0
    %6376 = vmatpush1.msra.mxu0 0.0
    %6377 = vmatprep.subr.mxu0 0.0
    %6378 = vmatpush1.msra.mxu0 0.0
    %6379 = vmatprep.subr.mxu0 0.0
    %6380 = vmatpush1.msra.mxu0 0.0
    %6381 = vmatprep.subr.mxu0 0.0
    %6382 = vmatpush1.msra.mxu0 0.0
    %6383 = vmatprep.subr.mxu0 0.0
    %6384 = vmatpush1.msra.mxu0 0.0
    %6385 = vmatprep.subr.mxu0 0.0
    %6386 = vmatpush1.msra.mxu0 0.0
    %6387 = vmatprep.subr.mxu0 0.0
    %6388 = vmatpush1.msra.mxu0 0.0
    %6389 = vmatprep.subr.mxu0 0.0
    %6390 = vmatpush1.msra.mxu0 0.0
    %6391 = vmatprep.subr.mxu0 0.0
    %6392 = vmatpush1.msra.mxu0 0.0
    %6393 = vmatprep.subr.mxu0 0.0
    %6394 = vmatpush1.msra.mxu0 0.0
    %6395 = vmatprep.subr.mxu0 0.0
    %6396 = vmatpush1.msra.mxu0 0.0
    %6397 = vmatprep.subr.mxu0 0.0
    %6398 = vmatpush1.msra.mxu0 0.0
    %6399 = vmatprep.subr.mxu0 0.0
    %6400 = vmatpush1.msra.mxu0 0.0
    %6401 = vmatprep.subr.mxu0 0.0
    %6402 = vmatpush1.msra.mxu0 0.0
    %6403 = vmatprep.subr.mxu0 0.0
    %6404 = vmatpush1.msra.mxu0 0.0
    %6405 = vmatprep.subr.mxu0 0.0
    %6406 = vmatpush1.msra.mxu0 0.0
    %6407 = vmatprep.subr.mxu0 0.0
    %6408 = vmatpush1.msra.mxu0 0.0
    %6409 = vmatprep.subr.mxu0 0.0
    %6410 = vmatpush1.msra.mxu0 0.0
    %6411 = vmatprep.subr.mxu0 0.0
    %6412 = vmatpush1.msra.mxu0 0.0
    %6413 = vmatprep.subr.mxu0 0.0
    %6414 = vmatpush1.msra.mxu0 0.0
    %6415 = vmatprep.subr.mxu0 0.0
    %6416 = vmatpush1.msra.mxu0 0.0
    %6417 = vmatprep.subr.mxu0 0.0
    %6418 = vmatpush1.msra.mxu0 0.0
    %6419 = vmatprep.subr.mxu0 0.0
    %6420 = vmatpush1.msra.mxu0 0.0
    %6421 = vmatprep.mubr.f32.mxu0 0.0
    %v6422 = vand.u32 %v6354, 4294901760
    %v6423 = vsub.f32 %v6354, %v6422
    %v6424 = vand.u32 %v6423, 4294901760
    %v6425 = vsub.f32 %v6423, %v6424
    %v6426 = vand.u32 %v6425, 4294901760
    %6427 = vmatmul.mubr.f32.gmra.mrb[0].mxu0 %v6426
    %v6428 = vpop.f32.mrb[0].mxu0
    %v6429 = vadd.f32 %v6350, %v6428
    %v6430 = vpop.f32.mrb[0].mxu0
    %6431 = vdwg.mxu0
    %6432 = vmatprep.subr.mxu0 0.0
    %v6433 = vand.u32 %v85, 4294901760
    %v6434 = vsub.f32 %v85, %v6433
    %v6435 = vand.u32 %v6434, 4294901760
    %v6436 = vsub.f32 %v6434, %v6435
    %v6437 = vand.u32 %v6436, 4294901760
    %6438 = vmatpush1.msra.mxu0 %v6437
    %6439 = vmatprep.subr.mxu0 0.0
    %6440 = vmatpush1.msra.mxu0 0.0
    %6441 = vmatprep.subr.mxu0 0.0
    %6442 = vmatpush1.msra.mxu0 0.0
    %6443 = vmatprep.subr.mxu0 0.0
    %6444 = vmatpush1.msra.mxu0 0.0
    %6445 = vmatprep.subr.mxu0 0.0
    %6446 = vmatpush1.msra.mxu0 0.0
    %6447 = vmatprep.subr.mxu0 0.0
    %6448 = vmatpush1.msra.mxu0 0.0
    %6449 = vmatprep.subr.mxu0 0.0
    %6450 = vmatpush1.msra.mxu0 0.0
    %6451 = vmatprep.subr.mxu0 0.0
    %6452 = vmatpush1.msra.mxu0 0.0
    %6453 = vmatprep.subr.mxu0 0.0
    %6454 = vmatpush1.msra.mxu0 0.0
    %6455 = vmatprep.subr.mxu0 0.0
    %6456 = vmatpush1.msra.mxu0 0.0
    %6457 = vmatprep.subr.mxu0 0.0
    %6458 = vmatpush1.msra.mxu0 0.0
    %6459 = vmatprep.subr.mxu0 0.0
    %6460 = vmatpush1.msra.mxu0 0.0
    %6461 = vmatprep.subr.mxu0 0.0
    %6462 = vmatpush1.msra.mxu0 0.0
    %6463 = vmatprep.subr.mxu0 0.0
    %6464 = vmatpush1.msra.mxu0 0.0
    %6465 = vmatprep.subr.mxu0 0.0
    %6466 = vmatpush1.msra.mxu0 0.0
    %6467 = vmatprep.subr.mxu0 0.0
    %6468 = vmatpush1.msra.mxu0 0.0
    %6469 = vmatprep.subr.mxu0 0.0
    %6470 = vmatpush1.msra.mxu0 0.0
    %6471 = vmatprep.subr.mxu0 0.0
    %6472 = vmatpush1.msra.mxu0 0.0
    %6473 = vmatprep.subr.mxu0 0.0
    %6474 = vmatpush1.msra.mxu0 0.0
    %6475 = vmatprep.subr.mxu0 0.0
    %6476 = vmatpush1.msra.mxu0 0.0
    %6477 = vmatprep.subr.mxu0 0.0
    %6478 = vmatpush1.msra.mxu0 0.0
    %6479 = vmatprep.subr.mxu0 0.0
    %6480 = vmatpush1.msra.mxu0 0.0
    %6481 = vmatprep.subr.mxu0 0.0
    %6482 = vmatpush1.msra.mxu0 0.0
    %6483 = vmatprep.subr.mxu0 0.0
    %6484 = vmatpush1.msra.mxu0 0.0
    %6485 = vmatprep.subr.mxu0 0.0
    %6486 = vmatpush1.msra.mxu0 0.0
    %6487 = vmatprep.subr.mxu0 0.0
    %6488 = vmatpush1.msra.mxu0 0.0
    %6489 = vmatprep.subr.mxu0 0.0
    %6490 = vmatpush1.msra.mxu0 0.0
    %6491 = vmatprep.subr.mxu0 0.0
    %6492 = vmatpush1.msra.mxu0 0.0
    %6493 = vmatprep.subr.mxu0 0.0
    %6494 = vmatpush1.msra.mxu0 0.0
    %6495 = vmatprep.subr.mxu0 0.0
    %6496 = vmatpush1.msra.mxu0 0.0
    %6497 = vmatprep.subr.mxu0 0.0
    %6498 = vmatpush1.msra.mxu0 0.0
    %6499 = vmatprep.subr.mxu0 0.0
    %6500 = vmatpush1.msra.mxu0 0.0
    %6501 = vmatprep.mubr.f32.mxu0 0.0
    %v6502 = vand.u32 %v6354, 4294901760
    %6503 = vmatmul.mubr.f32.gmra.mrb[0].mxu0 %v6502
    %v6504 = vpop.f32.mrb[0].mxu0
    %v6505 = vadd.f32 %v6429, %v6504
    %v6506 = vpop.f32.mrb[0].mxu0
    %6507 = vdwg.mxu0
    %6508 = vmatprep.subr.mxu0 0.0
    %v6509 = vand.u32 %v85, 4294901760
    %v6510 = vsub.f32 %v85, %v6509
    %6511 = vmatpush1.msra.mxu0 %v6510
    %6512 = vmatprep.subr.mxu0 0.0
    %6513 = vmatpush1.msra.mxu0 0.0
    %6514 = vmatprep.subr.mxu0 0.0
    %6515 = vmatpush1.msra.mxu0 0.0
    %6516 = vmatprep.subr.mxu0 0.0
    %6517 = vmatpush1.msra.mxu0 0.0
    %6518 = vmatprep.subr.mxu0 0.0
    %6519 = vmatpush1.msra.mxu0 0.0
    %6520 = vmatprep.subr.mxu0 0.0
    %6521 = vmatpush1.msra.mxu0 0.0
    %6522 = vmatprep.subr.mxu0 0.0
    %6523 = vmatpush1.msra.mxu0 0.0
    %6524 = vmatprep.subr.mxu0 0.0
    %6525 = vmatpush1.msra.mxu0 0.0
    %6526 = vmatprep.subr.mxu0 0.0
    %6527 = vmatpush1.msra.mxu0 0.0
    %6528 = vmatprep.subr.mxu0 0.0
    %6529 = vmatpush1.msra.mxu0 0.0
    %6530 = vmatprep.subr.mxu0 0.0
    %6531 = vmatpush1.msra.mxu0 0.0
    %6532 = vmatprep.subr.mxu0 0.0
    %6533 = vmatpush1.msra.mxu0 0.0
    %6534 = vmatprep.subr.mxu0 0.0
    %6535 = vmatpush1.msra.mxu0 0.0
    %6536 = vmatprep.subr.mxu0 0.0
    %6537 = vmatpush1.msra.mxu0 0.0
    %6538 = vmatprep.subr.mxu0 0.0
    %6539 = vmatpush1.msra.mxu0 0.0
    %6540 = vmatprep.subr.mxu0 0.0
    %6541 = vmatpush1.msra.mxu0 0.0
    %6542 = vmatprep.subr.mxu0 0.0
    %6543 = vmatpush1.msra.mxu0 0.0
    %6544 = vmatprep.subr.mxu0 0.0
    %6545 = vmatpush1.msra.mxu0 0.0
    %6546 = vmatprep.subr.mxu0 0.0
    %6547 = vmatpush1.msra.mxu0 0.0
    %6548 = vmatprep.subr.mxu0 0.0
    %6549 = vmatpush1.msra.mxu0 0.0
    %6550 = vmatprep.subr.mxu0 0.0
    %6551 = vmatpush1.msra.mxu0 0.0
    %6552 = vmatprep.subr.mxu0 0.0
    %6553 = vmatpush1.msra.mxu0 0.0
    %6554 = vmatprep.subr.mxu0 0.0
    %6555 = vmatpush1.msra.mxu0 0.0
    %6556 = vmatprep.subr.mxu0 0.0
    %6557 = vmatpush1.msra.mxu0 0.0
    %6558 = vmatprep.subr.mxu0 0.0
    %6559 = vmatpush1.msra.mxu0 0.0
    %6560 = vmatprep.subr.mxu0 0.0
    %6561 = vmatpush1.msra.mxu0 0.0
    %6562 = vmatprep.subr.mxu0 0.0
    %6563 = vmatpush1.msra.mxu0 0.0
    %6564 = vmatprep.subr.mxu0 0.0
    %6565 = vmatpush1.msra.mxu0 0.0
    %6566 = vmatprep.subr.mxu0 0.0
    %6567 = vmatpush1.msra.mxu0 0.0
    %6568 = vmatprep.subr.mxu0 0.0
    %6569 = vmatpush1.msra.mxu0 0.0
    %6570 = vmatprep.subr.mxu0 0.0
    %6571 = vmatpush1.msra.mxu0 0.0
    %6572 = vmatprep.subr.mxu0 0.0
    %6573 = vmatpush1.msra.mxu0 0.0
    %6574 = vmatprep.mubr.f32.mxu0 0.0
    %v6575 = vand.u32 %v6354, 4294901760
    %v6576 = vsub.f32 %v6354, %v6575
    %6577 = vmatmul.mubr.f32.gmra.mrb[0].mxu0 %v6576
    %v6578 = vpop.f32.mrb[0].mxu0
    %v6579 = vadd.f32 %v6505, %v6578
    %v6580 = vpop.f32.mrb[0].mxu0
    %6581 = vdwg.mxu0
    %6582 = vmatprep.subr.mxu0 0.0
    %v6583 = vand.u32 %v85, 4294901760
    %6584 = vmatpush1.msra.mxu0 %v6583
    %6585 = vmatprep.subr.mxu0 0.0
    %6586 = vmatpush1.msra.mxu0 0.0
    %6587 = vmatprep.subr.mxu0 0.0
    %6588 = vmatpush1.msra.mxu0 0.0
    %6589 = vmatprep.subr.mxu0 0.0
    %6590 = vmatpush1.msra.mxu0 0.0
    %6591 = vmatprep.subr.mxu0 0.0
    %6592 = vmatpush1.msra.mxu0 0.0
    %6593 = vmatprep.subr.mxu0 0.0
    %6594 = vmatpush1.msra.mxu0 0.0
    %6595 = vmatprep.subr.mxu0 0.0
    %6596 = vmatpush1.msra.mxu0 0.0
    %6597 = vmatprep.subr.mxu0 0.0
    %6598 = vmatpush1.msra.mxu0 0.0
    %6599 = vmatprep.subr.mxu0 0.0
    %6600 = vmatpush1.msra.mxu0 0.0
    %6601 = vmatprep.subr.mxu0 0.0
    %6602 = vmatpush1.msra.mxu0 0.0
    %6603 = vmatprep.subr.mxu0 0.0
    %6604 = vmatpush1.msra.mxu0 0.0
    %6605 = vmatprep.subr.mxu0 0.0
    %6606 = vmatpush1.msra.mxu0 0.0
    %6607 = vmatprep.subr.mxu0 0.0
    %6608 = vmatpush1.msra.mxu0 0.0
    %6609 = vmatprep.subr.mxu0 0.0
    %6610 = vmatpush1.msra.mxu0 0.0
    %6611 = vmatprep.subr.mxu0 0.0
    %6612 = vmatpush1.msra.mxu0 0.0
    %6613 = vmatprep.subr.mxu0 0.0
    %6614 = vmatpush1.msra.mxu0 0.0
    %6615 = vmatprep.subr.mxu0 0.0
    %6616 = vmatpush1.msra.mxu0 0.0
    %6617 = vmatprep.subr.mxu0 0.0
    %6618 = vmatpush1.msra.mxu0 0.0
    %6619 = vmatprep.subr.mxu0 0.0
    %6620 = vmatpush1.msra.mxu0 0.0
    %6621 = vmatprep.subr.mxu0 0.0
    %6622 = vmatpush1.msra.mxu0 0.0
    %6623 = vmatprep.subr.mxu0 0.0
    %6624 = vmatpush1.msra.mxu0 0.0
    %6625 = vmatprep.subr.mxu0 0.0
    %6626 = vmatpush1.msra.mxu0 0.0
    %6627 = vmatprep.subr.mxu0 0.0
    %6628 = vmatpush1.msra.mxu0 0.0
    %6629 = vmatprep.subr.mxu0 0.0
    %6630 = vmatpush1.msra.mxu0 0.0
    %6631 = vmatprep.subr.mxu0 0.0
    %6632 = vmatpush1.msra.mxu0 0.0
    %6633 = vmatprep.subr.mxu0 0.0
    %6634 = vmatpush1.msra.mxu0 0.0
    %6635 = vmatprep.subr.mxu0 0.0
    %6636 = vmatpush1.msra.mxu0 0.0
    %6637 = vmatprep.subr.mxu0 0.0
    %6638 = vmatpush1.msra.mxu0 0.0
    %6639 = vmatprep.subr.mxu0 0.0
    %6640 = vmatpush1.msra.mxu0 0.0
    %6641 = vmatprep.subr.mxu0 0.0
    %6642 = vmatpush1.msra.mxu0 0.0
    %6643 = vmatprep.subr.mxu0 0.0
    %6644 = vmatpush1.msra.mxu0 0.0
    %6645 = vmatprep.subr.mxu0 0.0
    %6646 = vmatpush1.msra.mxu0 0.0
    %6647 = vmatprep.mubr.f32.mxu0 0.0
    %v6648 = vand.u32 %v6354, 4294901760
    %v6649 = vsub.f32 %v6354, %v6648
    %v6650 = vand.u32 %v6649, 4294901760
    %6651 = vmatmul.mubr.f32.gmra.mrb[0].mxu0 %v6650
    %v6652 = vpop.f32.mrb[0].mxu0
    %v6653 = vadd.f32 %v6579, %v6652
    %v6654 = vpop.f32.mrb[0].mxu0
    %6655 = vdwg.mxu0
    %6656 = vmatprep.subr.mxu0 0.0
    %v6657 = vand.u32 %v85, 4294901760
    %v6658 = vsub.f32 %v85, %v6657
    %v6659 = vand.u32 %v6658, 4294901760
    %6660 = vmatpush1.msra.mxu0 %v6659
    %6661 = vmatprep.subr.mxu0 0.0
    %6662 = vmatpush1.msra.mxu0 0.0
    %6663 = vmatprep.subr.mxu0 0.0
    %6664 = vmatpush1.msra.mxu0 0.0
    %6665 = vmatprep.subr.mxu0 0.0
    %6666 = vmatpush1.msra.mxu0 0.0
    %6667 = vmatprep.subr.mxu0 0.0
    %6668 = vmatpush1.msra.mxu0 0.0
    %6669 = vmatprep.subr.mxu0 0.0
    %6670 = vmatpush1.msra.mxu0 0.0
    %6671 = vmatprep.subr.mxu0 0.0
    %6672 = vmatpush1.msra.mxu0 0.0
    %6673 = vmatprep.subr.mxu0 0.0
    %6674 = vmatpush1.msra.mxu0 0.0
    %6675 = vmatprep.subr.mxu0 0.0
    %6676 = vmatpush1.msra.mxu0 0.0
    %6677 = vmatprep.subr.mxu0 0.0
    %6678 = vmatpush1.msra.mxu0 0.0
    %6679 = vmatprep.subr.mxu0 0.0
    %6680 = vmatpush1.msra.mxu0 0.0
    %6681 = vmatprep.subr.mxu0 0.0
    %6682 = vmatpush1.msra.mxu0 0.0
    %6683 = vmatprep.subr.mxu0 0.0
    %6684 = vmatpush1.msra.mxu0 0.0
    %6685 = vmatprep.subr.mxu0 0.0
    %6686 = vmatpush1.msra.mxu0 0.0
    %6687 = vmatprep.subr.mxu0 0.0
    %6688 = vmatpush1.msra.mxu0 0.0
    %6689 = vmatprep.subr.mxu0 0.0
    %6690 = vmatpush1.msra.mxu0 0.0
    %6691 = vmatprep.subr.mxu0 0.0
    %6692 = vmatpush1.msra.mxu0 0.0
    %6693 = vmatprep.subr.mxu0 0.0
    %6694 = vmatpush1.msra.mxu0 0.0
    %6695 = vmatprep.subr.mxu0 0.0
    %6696 = vmatpush1.msra.mxu0 0.0
    %6697 = vmatprep.subr.mxu0 0.0
    %6698 = vmatpush1.msra.mxu0 0.0
    %6699 = vmatprep.subr.mxu0 0.0
    %6700 = vmatpush1.msra.mxu0 0.0
    %6701 = vmatprep.subr.mxu0 0.0
    %6702 = vmatpush1.msra.mxu0 0.0
    %6703 = vmatprep.subr.mxu0 0.0
    %6704 = vmatpush1.msra.mxu0 0.0
    %6705 = vmatprep.subr.mxu0 0.0
    %6706 = vmatpush1.msra.mxu0 0.0
    %6707 = vmatprep.subr.mxu0 0.0
    %6708 = vmatpush1.msra.mxu0 0.0
    %6709 = vmatprep.subr.mxu0 0.0
    %6710 = vmatpush1.msra.mxu0 0.0
    %6711 = vmatprep.subr.mxu0 0.0
    %6712 = vmatpush1.msra.mxu0 0.0
    %6713 = vmatprep.subr.mxu0 0.0
    %6714 = vmatpush1.msra.mxu0 0.0
    %6715 = vmatprep.subr.mxu0 0.0
    %6716 = vmatpush1.msra.mxu0 0.0
    %6717 = vmatprep.subr.mxu0 0.0
    %6718 = vmatpush1.msra.mxu0 0.0
    %6719 = vmatprep.subr.mxu0 0.0
    %6720 = vmatpush1.msra.mxu0 0.0
    %6721 = vmatprep.subr.mxu0 0.0
    %6722 = vmatpush1.msra.mxu0 0.0
    %6723 = vmatprep.mubr.f32.mxu0 0.0
    %v6724 = vand.u32 %v6354, 4294901760
    %6725 = vmatmul.mubr.f32.gmra.mrb[0].mxu0 %v6724
    %v6726 = vpop.f32.mrb[0].mxu0
    %v6727 = vadd.f32 %v6653, %v6726
    %v6728 = vpop.f32.mrb[0].mxu0
    %6729 = vdwg.mxu0
    %6730 = vmatprep.subr.mxu0 0.0
    %v6731 = vand.u32 %v85, 4294901760
    %6732 = vmatpush1.msra.mxu0 %v6731
    %6733 = vmatprep.subr.mxu0 0.0
    %6734 = vmatpush1.msra.mxu0 0.0
    %6735 = vmatprep.subr.mxu0 0.0
    %6736 = vmatpush1.msra.mxu0 0.0
    %6737 = vmatprep.subr.mxu0 0.0
    %6738 = vmatpush1.msra.mxu0 0.0
    %6739 = vmatprep.subr.mxu0 0.0
    %6740 = vmatpush1.msra.mxu0 0.0
    %6741 = vmatprep.subr.mxu0 0.0
    %6742 = vmatpush1.msra.mxu0 0.0
    %6743 = vmatprep.subr.mxu0 0.0
    %6744 = vmatpush1.msra.mxu0 0.0
    %6745 = vmatprep.subr.mxu0 0.0
    %6746 = vmatpush1.msra.mxu0 0.0
    %6747 = vmatprep.subr.mxu0 0.0
    %6748 = vmatpush1.msra.mxu0 0.0
    %6749 = vmatprep.subr.mxu0 0.0
    %6750 = vmatpush1.msra.mxu0 0.0
    %6751 = vmatprep.subr.mxu0 0.0
    %6752 = vmatpush1.msra.mxu0 0.0
    %6753 = vmatprep.subr.mxu0 0.0
    %6754 = vmatpush1.msra.mxu0 0.0
    %6755 = vmatprep.subr.mxu0 0.0
    %6756 = vmatpush1.msra.mxu0 0.0
    %6757 = vmatprep.subr.mxu0 0.0
    %6758 = vmatpush1.msra.mxu0 0.0
    %6759 = vmatprep.subr.mxu0 0.0
    %6760 = vmatpush1.msra.mxu0 0.0
    %6761 = vmatprep.subr.mxu0 0.0
    %6762 = vmatpush1.msra.mxu0 0.0
    %6763 = vmatprep.subr.mxu0 0.0
    %6764 = vmatpush1.msra.mxu0 0.0
    %6765 = vmatprep.subr.mxu0 0.0
    %6766 = vmatpush1.msra.mxu0 0.0
    %6767 = vmatprep.subr.mxu0 0.0
    %6768 = vmatpush1.msra.mxu0 0.0
    %6769 = vmatprep.subr.mxu0 0.0
    %6770 = vmatpush1.msra.mxu0 0.0
    %6771 = vmatprep.subr.mxu0 0.0
    %6772 = vmatpush1.msra.mxu0 0.0
    %6773 = vmatprep.subr.mxu0 0.0
    %6774 = vmatpush1.msra.mxu0 0.0
    %6775 = vmatprep.subr.mxu0 0.0
    %6776 = vmatpush1.msra.mxu0 0.0
    %6777 = vmatprep.subr.mxu0 0.0
    %6778 = vmatpush1.msra.mxu0 0.0
    %6779 = vmatprep.subr.mxu0 0.0
    %6780 = vmatpush1.msra.mxu0 0.0
    %6781 = vmatprep.subr.mxu0 0.0
    %6782 = vmatpush1.msra.mxu0 0.0
    %6783 = vmatprep.subr.mxu0 0.0
    %6784 = vmatpush1.msra.mxu0 0.0
    %6785 = vmatprep.subr.mxu0 0.0
    %6786 = vmatpush1.msra.mxu0 0.0
    %6787 = vmatprep.subr.mxu0 0.0
    %6788 = vmatpush1.msra.mxu0 0.0
    %6789 = vmatprep.subr.mxu0 0.0
    %6790 = vmatpush1.msra.mxu0 0.0
    %6791 = vmatprep.subr.mxu0 0.0
    %6792 = vmatpush1.msra.mxu0 0.0
    %6793 = vmatprep.subr.mxu0 0.0
    %6794 = vmatpush1.msra.mxu0 0.0
    %6795 = vmatprep.mubr.f32.mxu0 0.0
    %v6796 = vand.u32 %v6354, 4294901760
    %6797 = vmatmul.mubr.f32.gmra.mrb[0].mxu0 %v6796
    %v6798 = vpop.f32.mrb[0].mxu0
    %v6799 = vadd.f32 %v6727, %v6798
    %v6800 = vpop.f32.mrb[0].mxu0
    %6801 = vdwg.mxu0
    %v6802 = vtanh.pop %v6799
    %v6803 = vmul.f32 %v6802, 0.5
    %v6804 = vadd.f32 %v6803, 0.5
    %v6805 = vmul.f32 %v6804, %v5854
    %6807 = vrot.lane.b32.xlu0 %v6802, 32
    %v6808 = vpop.permute.xlu0 %6807
    %v6810 = vmul.f32 %v6804, %v6808
    %6812 = vrot.lane.b32.xlu0 %v6810, 32
    %v6813 = vpop.permute.xlu0 %6812
    %v6815 = vadd.f32 %v6805, %v6813
    %v6816 = vtanh.pop %v6815
    %6818 = vrot.lane.b32.xlu0 %v6816, 32
    %v6819 = vpop.permute.xlu0 %6818
    %v6821 = vmul.f32 %v6804, %v6819
    %s6822 = scalar_lea.vmem [#allocation6], 28
    %v6823 = vld [vmem:[%s6822] sm:$0xf]
    %6825 = vrot.lane.b32.xlu0 %v6821, 64
    %v6826 = vpop.permute.xlu0 %6825
    %v6827 = vsel %vm93, %v6826, 0
    %6829 = vmatprep.subr.mxu0 0.0
    %v6830 = vand.u32 %v86, 4294901760
    %6831 = vmatpush1.msra.mxu0 %v6830
    %6832 = vmatprep.subr.mxu0 0.0
    %v6833 = vand.u32 %v87, 4294901760
    %6834 = vmatpush1.msra.mxu0 %v6833
    %6835 = vmatprep.subr.mxu0 0.0
    %v6836 = vand.u32 %v88, 4294901760
    %6837 = vmatpush1.msra.mxu0 %v6836
    %6838 = vmatprep.subr.mxu0 0.0
    %v6839 = vand.u32 %v89, 4294901760
    %6840 = vmatpush1.msra.mxu0 %v6839
    %6841 = vmatprep.subr.mxu0 0.0
    %6842 = vmatpush1.msra.mxu0 0.0
    %6843 = vmatprep.subr.mxu0 0.0
    %6844 = vmatpush1.msra.mxu0 0.0
    %6845 = vmatprep.subr.mxu0 0.0
    %6846 = vmatpush1.msra.mxu0 0.0
    %6847 = vmatprep.subr.mxu0 0.0
    %6848 = vmatpush1.msra.mxu0 0.0
    %6849 = vmatprep.subr.mxu0 0.0
    %6850 = vmatpush1.msra.mxu0 0.0
    %6851 = vmatprep.subr.mxu0 0.0
    %6852 = vmatpush1.msra.mxu0 0.0
    %6853 = vmatprep.subr.mxu0 0.0
    %6854 = vmatpush1.msra.mxu0 0.0
    %6855 = vmatprep.subr.mxu0 0.0
    %6856 = vmatpush1.msra.mxu0 0.0
    %6857 = vmatprep.subr.mxu0 0.0
    %6858 = vmatpush1.msra.mxu0 0.0
    %6859 = vmatprep.subr.mxu0 0.0
    %6860 = vmatpush1.msra.mxu0 0.0
    %6861 = vmatprep.subr.mxu0 0.0
    %6862 = vmatpush1.msra.mxu0 0.0
    %6863 = vmatprep.subr.mxu0 0.0
    %6864 = vmatpush1.msra.mxu0 0.0
    %6865 = vmatprep.subr.mxu0 0.0
    %6866 = vmatpush1.msra.mxu0 0.0
    %6867 = vmatprep.subr.mxu0 0.0
    %6868 = vmatpush1.msra.mxu0 0.0
    %6869 = vmatprep.subr.mxu0 0.0
    %6870 = vmatpush1.msra.mxu0 0.0
    %6871 = vmatprep.subr.mxu0 0.0
    %6872 = vmatpush1.msra.mxu0 0.0
    %6873 = vmatprep.subr.mxu0 0.0
    %6874 = vmatpush1.msra.mxu0 0.0
    %6875 = vmatprep.subr.mxu0 0.0
    %6876 = vmatpush1.msra.mxu0 0.0
    %6877 = vmatprep.subr.mxu0 0.0
    %6878 = vmatpush1.msra.mxu0 0.0
    %6879 = vmatprep.subr.mxu0 0.0
    %6880 = vmatpush1.msra.mxu0 0.0
    %6881 = vmatprep.subr.mxu0 0.0
    %6882 = vmatpush1.msra.mxu0 0.0
    %6883 = vmatprep.subr.mxu0 0.0
    %6884 = vmatpush1.msra.mxu0 0.0
    %6885 = vmatprep.subr.mxu0 0.0
    %6886 = vmatpush1.msra.mxu0 0.0
    %6887 = vmatprep.subr.mxu0 0.0
    %6888 = vmatpush1.msra.mxu0 0.0
    %6889 = vmatprep.subr.mxu0 0.0
    %6890 = vmatpush1.msra.mxu0 0.0
    %6891 = vmatprep.subr.mxu0 0.0
    %6892 = vmatpush1.msra.mxu0 0.0
    %6893 = vmatprep.subr.mxu0 0.0
    %6894 = vmatpush1.msra.mxu0 0.0
    %6895 = vmatprep.subr.mxu0 0.0
    %6896 = vmatpush1.msra.mxu0 0.0
    %6897 = vmatprep.mubr.f32.mxu0 0.0
    %v6898 = vand.u32 %v6827, 4294901760
    %v6899 = vsub.f32 %v6827, %v6898
    %v6900 = vand.u32 %v6899, 4294901760
    %v6901 = vsub.f32 %v6899, %v6900
    %v6902 = vand.u32 %v6901, 4294901760
    %6903 = vmatmul.mubr.f32.gmra.mrb[0].mxu0 %v6902
    %v6904 = vpop.f32.mrb[0].mxu0
    %v6905 = vadd.f32 0.0, %v6904
    %v6906 = vpop.f32.mrb[0].mxu0
    %6907 = vdwg.mxu0
    %6908 = vmatprep.subr.mxu0 0.0
    %v6909 = vand.u32 %v86, 4294901760
    %v6910 = vsub.f32 %v86, %v6909
    %v6911 = vand.u32 %v6910, 4294901760
    %v6912 = vsub.f32 %v6910, %v6911
    %v6913 = vand.u32 %v6912, 4294901760
    %6914 = vmatpush1.msra.mxu0 %v6913
    %6915 = vmatprep.subr.mxu0 0.0
    %v6916 = vand.u32 %v87, 4294901760
    %v6917 = vsub.f32 %v87, %v6916
    %v6918 = vand.u32 %v6917, 4294901760
    %v6919 = vsub.f32 %v6917, %v6918
    %v6920 = vand.u32 %v6919, 4294901760
    %6921 = vmatpush1.msra.mxu0 %v6920
    %6922 = vmatprep.subr.mxu0 0.0
    %v6923 = vand.u32 %v88, 4294901760
    %v6924 = vsub.f32 %v88, %v6923
    %v6925 = vand.u32 %v6924, 4294901760
    %v6926 = vsub.f32 %v6924, %v6925
    %v6927 = vand.u32 %v6926, 4294901760
    %6928 = vmatpush1.msra.mxu0 %v6927
    %6929 = vmatprep.subr.mxu0 0.0
    %v6930 = vand.u32 %v89, 4294901760
    %v6931 = vsub.f32 %v89, %v6930
    %v6932 = vand.u32 %v6931, 4294901760
    %v6933 = vsub.f32 %v6931, %v6932
    %v6934 = vand.u32 %v6933, 4294901760
    %6935 = vmatpush1.msra.mxu0 %v6934
    %6936 = vmatprep.subr.mxu0 0.0
    %6937 = vmatpush1.msra.mxu0 0.0
    %6938 = vmatprep.subr.mxu0 0.0
    %6939 = vmatpush1.msra.mxu0 0.0
    %6940 = vmatprep.subr.mxu0 0.0
    %6941 = vmatpush1.msra.mxu0 0.0
    %6942 = vmatprep.subr.mxu0 0.0
    %6943 = vmatpush1.msra.mxu0 0.0
    %6944 = vmatprep.subr.mxu0 0.0
    %6945 = vmatpush1.msra.mxu0 0.0
    %6946 = vmatprep.subr.mxu0 0.0
    %6947 = vmatpush1.msra.mxu0 0.0
    %6948 = vmatprep.subr.mxu0 0.0
    %6949 = vmatpush1.msra.mxu0 0.0
    %6950 = vmatprep.subr.mxu0 0.0
    %6951 = vmatpush1.msra.mxu0 0.0
    %6952 = vmatprep.subr.mxu0 0.0
    %6953 = vmatpush1.msra.mxu0 0.0
    %6954 = vmatprep.subr.mxu0 0.0
    %6955 = vmatpush1.msra.mxu0 0.0
    %6956 = vmatprep.subr.mxu0 0.0
    %6957 = vmatpush1.msra.mxu0 0.0
    %6958 = vmatprep.subr.mxu0 0.0
    %6959 = vmatpush1.msra.mxu0 0.0
    %6960 = vmatprep.subr.mxu0 0.0
    %6961 = vmatpush1.msra.mxu0 0.0
    %6962 = vmatprep.subr.mxu0 0.0
    %6963 = vmatpush1.msra.mxu0 0.0
    %6964 = vmatprep.subr.mxu0 0.0
    %6965 = vmatpush1.msra.mxu0 0.0
    %6966 = vmatprep.subr.mxu0 0.0
    %6967 = vmatpush1.msra.mxu0 0.0
    %6968 = vmatprep.subr.mxu0 0.0
    %6969 = vmatpush1.msra.mxu0 0.0
    %6970 = vmatprep.subr.mxu0 0.0
    %6971 = vmatpush1.msra.mxu0 0.0
    %6972 = vmatprep.subr.mxu0 0.0
    %6973 = vmatpush1.msra.mxu0 0.0
    %6974 = vmatprep.subr.mxu0 0.0
    %6975 = vmatpush1.msra.mxu0 0.0
    %6976 = vmatprep.subr.mxu0 0.0
    %6977 = vmatpush1.msra.mxu0 0.0
    %6978 = vmatprep.subr.mxu0 0.0
    %6979 = vmatpush1.msra.mxu0 0.0
    %6980 = vmatprep.subr.mxu0 0.0
    %6981 = vmatpush1.msra.mxu0 0.0
    %6982 = vmatprep.subr.mxu0 0.0
    %6983 = vmatpush1.msra.mxu0 0.0
    %6984 = vmatprep.subr.mxu0 0.0
    %6985 = vmatpush1.msra.mxu0 0.0
    %6986 = vmatprep.subr.mxu0 0.0
    %6987 = vmatpush1.msra.mxu0 0.0
    %6988 = vmatprep.subr.mxu0 0.0
    %6989 = vmatpush1.msra.mxu0 0.0
    %6990 = vmatprep.subr.mxu0 0.0
    %6991 = vmatpush1.msra.mxu0 0.0
    %6992 = vmatprep.mubr.f32.mxu0 0.0
    %v6993 = vand.u32 %v6827, 4294901760
    %6994 = vmatmul.mubr.f32.gmra.mrb[0].mxu0 %v6993
    %v6995 = vpop.f32.mrb[0].mxu0
    %v6996 = vadd.f32 %v6905, %v6995
    %v6997 = vpop.f32.mrb[0].mxu0
    %6998 = vdwg.mxu0
    %6999 = vmatprep.subr.mxu0 0.0
    %v7000 = vand.u32 %v86, 4294901760
    %v7001 = vsub.f32 %v86, %v7000
    %7002 = vmatpush1.msra.mxu0 %v7001
    %7003 = vmatprep.subr.mxu0 0.0
    %v7004 = vand.u32 %v87, 4294901760
    %v7005 = vsub.f32 %v87, %v7004
    %7006 = vmatpush1.msra.mxu0 %v7005
    %7007 = vmatprep.subr.mxu0 0.0
    %v7008 = vand.u32 %v88, 4294901760
    %v7009 = vsub.f32 %v88, %v7008
    %7010 = vmatpush1.msra.mxu0 %v7009
    %7011 = vmatprep.subr.mxu0 0.0
    %v7012 = vand.u32 %v89, 4294901760
    %v7013 = vsub.f32 %v89, %v7012
    %7014 = vmatpush1.msra.mxu0 %v7013
    %7015 = vmatprep.subr.mxu0 0.0
    %7016 = vmatpush1.msra.mxu0 0.0
    %7017 = vmatprep.subr.mxu0 0.0
    %7018 = vmatpush1.msra.mxu0 0.0
    %7019 = vmatprep.subr.mxu0 0.0
    %7020 = vmatpush1.msra.mxu0 0.0
    %7021 = vmatprep.subr.mxu0 0.0
    %7022 = vmatpush1.msra.mxu0 0.0
    %7023 = vmatprep.subr.mxu0 0.0
    %7024 = vmatpush1.msra.mxu0 0.0
    %7025 = vmatprep.subr.mxu0 0.0
    %7026 = vmatpush1.msra.mxu0 0.0
    %7027 = vmatprep.subr.mxu0 0.0
    %7028 = vmatpush1.msra.mxu0 0.0
    %7029 = vmatprep.subr.mxu0 0.0
    %7030 = vmatpush1.msra.mxu0 0.0
    %7031 = vmatprep.subr.mxu0 0.0
    %7032 = vmatpush1.msra.mxu0 0.0
    %7033 = vmatprep.subr.mxu0 0.0
    %7034 = vmatpush1.msra.mxu0 0.0
    %7035 = vmatprep.subr.mxu0 0.0
    %7036 = vmatpush1.msra.mxu0 0.0
    %7037 = vmatprep.subr.mxu0 0.0
    %7038 = vmatpush1.msra.mxu0 0.0
    %7039 = vmatprep.subr.mxu0 0.0
    %7040 = vmatpush1.msra.mxu0 0.0
    %7041 = vmatprep.subr.mxu0 0.0
    %7042 = vmatpush1.msra.mxu0 0.0
    %7043 = vmatprep.subr.mxu0 0.0
    %7044 = vmatpush1.msra.mxu0 0.0
    %7045 = vmatprep.subr.mxu0 0.0
    %7046 = vmatpush1.msra.mxu0 0.0
    %7047 = vmatprep.subr.mxu0 0.0
    %7048 = vmatpush1.msra.mxu0 0.0
    %7049 = vmatprep.subr.mxu0 0.0
    %7050 = vmatpush1.msra.mxu0 0.0
    %7051 = vmatprep.subr.mxu0 0.0
    %7052 = vmatpush1.msra.mxu0 0.0
    %7053 = vmatprep.subr.mxu0 0.0
    %7054 = vmatpush1.msra.mxu0 0.0
    %7055 = vmatprep.subr.mxu0 0.0
    %7056 = vmatpush1.msra.mxu0 0.0
    %7057 = vmatprep.subr.mxu0 0.0
    %7058 = vmatpush1.msra.mxu0 0.0
    %7059 = vmatprep.subr.mxu0 0.0
    %7060 = vmatpush1.msra.mxu0 0.0
    %7061 = vmatprep.subr.mxu0 0.0
    %7062 = vmatpush1.msra.mxu0 0.0
    %7063 = vmatprep.subr.mxu0 0.0
    %7064 = vmatpush1.msra.mxu0 0.0
    %7065 = vmatprep.subr.mxu0 0.0
    %7066 = vmatpush1.msra.mxu0 0.0
    %7067 = vmatprep.subr.mxu0 0.0
    %7068 = vmatpush1.msra.mxu0 0.0
    %7069 = vmatprep.subr.mxu0 0.0
    %7070 = vmatpush1.msra.mxu0 0.0
    %7071 = vmatprep.mubr.f32.mxu0 0.0
    %v7072 = vand.u32 %v6827, 4294901760
    %v7073 = vsub.f32 %v6827, %v7072
    %7074 = vmatmul.mubr.f32.gmra.mrb[0].mxu0 %v7073
    %v7075 = vpop.f32.mrb[0].mxu0
    %v7076 = vadd.f32 %v6996, %v7075
    %v7077 = vpop.f32.mrb[0].mxu0
    %7078 = vdwg.mxu0
    %7079 = vmatprep.subr.mxu0 0.0
    %v7080 = vand.u32 %v86, 4294901760
    %7081 = vmatpush1.msra.mxu0 %v7080
    %7082 = vmatprep.subr.mxu0 0.0
    %v7083 = vand.u32 %v87, 4294901760
    %7084 = vmatpush1.msra.mxu0 %v7083
    %7085 = vmatprep.subr.mxu0 0.0
    %v7086 = vand.u32 %v88, 4294901760
    %7087 = vmatpush1.msra.mxu0 %v7086
    %7088 = vmatprep.subr.mxu0 0.0
    %v7089 = vand.u32 %v89, 4294901760
    %7090 = vmatpush1.msra.mxu0 %v7089
    %7091 = vmatprep.subr.mxu0 0.0
    %7092 = vmatpush1.msra.mxu0 0.0
    %7093 = vmatprep.subr.mxu0 0.0
    %7094 = vmatpush1.msra.mxu0 0.0
    %7095 = vmatprep.subr.mxu0 0.0
    %7096 = vmatpush1.msra.mxu0 0.0
    %7097 = vmatprep.subr.mxu0 0.0
    %7098 = vmatpush1.msra.mxu0 0.0
    %7099 = vmatprep.subr.mxu0 0.0
    %7100 = vmatpush1.msra.mxu0 0.0
    %7101 = vmatprep.subr.mxu0 0.0
    %7102 = vmatpush1.msra.mxu0 0.0
    %7103 = vmatprep.subr.mxu0 0.0
    %7104 = vmatpush1.msra.mxu0 0.0
    %7105 = vmatprep.subr.mxu0 0.0
    %7106 = vmatpush1.msra.mxu0 0.0
    %7107 = vmatprep.subr.mxu0 0.0
    %7108 = vmatpush1.msra.mxu0 0.0
    %7109 = vmatprep.subr.mxu0 0.0
    %7110 = vmatpush1.msra.mxu0 0.0
    %7111 = vmatprep.subr.mxu0 0.0
    %7112 = vmatpush1.msra.mxu0 0.0
    %7113 = vmatprep.subr.mxu0 0.0
    %7114 = vmatpush1.msra.mxu0 0.0
    %7115 = vmatprep.subr.mxu0 0.0
    %7116 = vmatpush1.msra.mxu0 0.0
    %7117 = vmatprep.subr.mxu0 0.0
    %7118 = vmatpush1.msra.mxu0 0.0
    %7119 = vmatprep.subr.mxu0 0.0
    %7120 = vmatpush1.msra.mxu0 0.0
    %7121 = vmatprep.subr.mxu0 0.0
    %7122 = vmatpush1.msra.mxu0 0.0
    %7123 = vmatprep.subr.mxu0 0.0
    %7124 = vmatpush1.msra.mxu0 0.0
    %7125 = vmatprep.subr.mxu0 0.0
    %7126 = vmatpush1.msra.mxu0 0.0
    %7127 = vmatprep.subr.mxu0 0.0
    %7128 = vmatpush1.msra.mxu0 0.0
    %7129 = vmatprep.subr.mxu0 0.0
    %7130 = vmatpush1.msra.mxu0 0.0
    %7131 = vmatprep.subr.mxu0 0.0
    %7132 = vmatpush1.msra.mxu0 0.0
    %7133 = vmatprep.subr.mxu0 0.0
    %7134 = vmatpush1.msra.mxu0 0.0
    %7135 = vmatprep.subr.mxu0 0.0
    %7136 = vmatpush1.msra.mxu0 0.0
    %7137 = vmatprep.subr.mxu0 0.0
    %7138 = vmatpush1.msra.mxu0 0.0
    %7139 = vmatprep.subr.mxu0 0.0
    %7140 = vmatpush1.msra.mxu0 0.0
    %7141 = vmatprep.subr.mxu0 0.0
    %7142 = vmatpush1.msra.mxu0 0.0
    %7143 = vmatprep.subr.mxu0 0.0
    %7144 = vmatpush1.msra.mxu0 0.0
    %7145 = vmatprep.subr.mxu0 0.0
    %7146 = vmatpush1.msra.mxu0 0.0
    %7147 = vmatprep.mubr.f32.mxu0 0.0
    %v7148 = vand.u32 %v6827, 4294901760
    %v7149 = vsub.f32 %v6827, %v7148
    %v7150 = vand.u32 %v7149, 4294901760
    %7151 = vmatmul.mubr.f32.gmra.mrb[0].mxu0 %v7150
    %v7152 = vpop.f32.mrb[0].mxu0
    %v7153 = vadd.f32 %v7076, %v7152
    %v7154 = vpop.f32.mrb[0].mxu0
    %7155 = vdwg.mxu0
    %7156 = vmatprep.subr.mxu0 0.0
    %v7157 = vand.u32 %v86, 4294901760
    %v7158 = vsub.f32 %v86, %v7157
    %v7159 = vand.u32 %v7158, 4294901760
    %7160 = vmatpush1.msra.mxu0 %v7159
    %7161 = vmatprep.subr.mxu0 0.0
    %v7162 = vand.u32 %v87, 4294901760
    %v7163 = vsub.f32 %v87, %v7162
    %v7164 = vand.u32 %v7163, 4294901760
    %7165 = vmatpush1.msra.mxu0 %v7164
    %7166 = vmatprep.subr.mxu0 0.0
    %v7167 = vand.u32 %v88, 4294901760
    %v7168 = vsub.f32 %v88, %v7167
    %v7169 = vand.u32 %v7168, 4294901760
    %7170 = vmatpush1.msra.mxu0 %v7169
    %7171 = vmatprep.subr.mxu0 0.0
    %v7172 = vand.u32 %v89, 4294901760
    %v7173 = vsub.f32 %v89, %v7172
    %v7174 = vand.u32 %v7173, 4294901760
    %7175 = vmatpush1.msra.mxu0 %v7174
    %7176 = vmatprep.subr.mxu0 0.0
    %7177 = vmatpush1.msra.mxu0 0.0
    %7178 = vmatprep.subr.mxu0 0.0
    %7179 = vmatpush1.msra.mxu0 0.0
    %7180 = vmatprep.subr.mxu0 0.0
    %7181 = vmatpush1.msra.mxu0 0.0
    %7182 = vmatprep.subr.mxu0 0.0
    %7183 = vmatpush1.msra.mxu0 0.0
    %7184 = vmatprep.subr.mxu0 0.0
    %7185 = vmatpush1.msra.mxu0 0.0
    %7186 = vmatprep.subr.mxu0 0.0
    %7187 = vmatpush1.msra.mxu0 0.0
    %7188 = vmatprep.subr.mxu0 0.0
    %7189 = vmatpush1.msra.mxu0 0.0
    %7190 = vmatprep.subr.mxu0 0.0
    %7191 = vmatpush1.msra.mxu0 0.0
    %7192 = vmatprep.subr.mxu0 0.0
    %7193 = vmatpush1.msra.mxu0 0.0
    %7194 = vmatprep.subr.mxu0 0.0
    %7195 = vmatpush1.msra.mxu0 0.0
    %7196 = vmatprep.subr.mxu0 0.0
    %7197 = vmatpush1.msra.mxu0 0.0
    %7198 = vmatprep.subr.mxu0 0.0
    %7199 = vmatpush1.msra.mxu0 0.0
    %7200 = vmatprep.subr.mxu0 0.0
    %7201 = vmatpush1.msra.mxu0 0.0
    %7202 = vmatprep.subr.mxu0 0.0
    %7203 = vmatpush1.msra.mxu0 0.0
    %7204 = vmatprep.subr.mxu0 0.0
    %7205 = vmatpush1.msra.mxu0 0.0
    %7206 = vmatprep.subr.mxu0 0.0
    %7207 = vmatpush1.msra.mxu0 0.0
    %7208 = vmatprep.subr.mxu0 0.0
    %7209 = vmatpush1.msra.mxu0 0.0
    %7210 = vmatprep.subr.mxu0 0.0
    %7211 = vmatpush1.msra.mxu0 0.0
    %7212 = vmatprep.subr.mxu0 0.0
    %7213 = vmatpush1.msra.mxu0 0.0
    %7214 = vmatprep.subr.mxu0 0.0
    %7215 = vmatpush1.msra.mxu0 0.0
    %7216 = vmatprep.subr.mxu0 0.0
    %7217 = vmatpush1.msra.mxu0 0.0
    %7218 = vmatprep.subr.mxu0 0.0
    %7219 = vmatpush1.msra.mxu0 0.0
    %7220 = vmatprep.subr.mxu0 0.0
    %7221 = vmatpush1.msra.mxu0 0.0
    %7222 = vmatprep.subr.mxu0 0.0
    %7223 = vmatpush1.msra.mxu0 0.0
    %7224 = vmatprep.subr.mxu0 0.0
    %7225 = vmatpush1.msra.mxu0 0.0
    %7226 = vmatprep.subr.mxu0 0.0
    %7227 = vmatpush1.msra.mxu0 0.0
    %7228 = vmatprep.subr.mxu0 0.0
    %7229 = vmatpush1.msra.mxu0 0.0
    %7230 = vmatprep.subr.mxu0 0.0
    %7231 = vmatpush1.msra.mxu0 0.0
    %7232 = vmatprep.mubr.f32.mxu0 0.0
    %v7233 = vand.u32 %v6827, 4294901760
    %7234 = vmatmul.mubr.f32.gmra.mrb[0].mxu0 %v7233
    %v7235 = vpop.f32.mrb[0].mxu0
    %v7236 = vadd.f32 %v7153, %v7235
    %v7237 = vpop.f32.mrb[0].mxu0
    %7238 = vdwg.mxu0
    %7239 = vmatprep.subr.mxu0 0.0
    %v7240 = vand.u32 %v86, 4294901760
    %7241 = vmatpush1.msra.mxu0 %v7240
    %7242 = vmatprep.subr.mxu0 0.0
    %v7243 = vand.u32 %v87, 4294901760
    %7244 = vmatpush1.msra.mxu0 %v7243
    %7245 = vmatprep.subr.mxu0 0.0
    %v7246 = vand.u32 %v88, 4294901760
    %7247 = vmatpush1.msra.mxu0 %v7246
    %7248 = vmatprep.subr.mxu0 0.0
    %v7249 = vand.u32 %v89, 4294901760
    %7250 = vmatpush1.msra.mxu0 %v7249
    %7251 = vmatprep.subr.mxu0 0.0
    %7252 = vmatpush1.msra.mxu0 0.0
    %7253 = vmatprep.subr.mxu0 0.0
    %7254 = vmatpush1.msra.mxu0 0.0
    %7255 = vmatprep.subr.mxu0 0.0
    %7256 = vmatpush1.msra.mxu0 0.0
    %7257 = vmatprep.subr.mxu0 0.0
    %7258 = vmatpush1.msra.mxu0 0.0
    %7259 = vmatprep.subr.mxu0 0.0
    %7260 = vmatpush1.msra.mxu0 0.0
    %7261 = vmatprep.subr.mxu0 0.0
    %7262 = vmatpush1.msra.mxu0 0.0
    %7263 = vmatprep.subr.mxu0 0.0
    %7264 = vmatpush1.msra.mxu0 0.0
    %7265 = vmatprep.subr.mxu0 0.0
    %7266 = vmatpush1.msra.mxu0 0.0
    %7267 = vmatprep.subr.mxu0 0.0
    %7268 = vmatpush1.msra.mxu0 0.0
    %7269 = vmatprep.subr.mxu0 0.0
    %7270 = vmatpush1.msra.mxu0 0.0
    %7271 = vmatprep.subr.mxu0 0.0
    %7272 = vmatpush1.msra.mxu0 0.0
    %7273 = vmatprep.subr.mxu0 0.0
    %7274 = vmatpush1.msra.mxu0 0.0
    %7275 = vmatprep.subr.mxu0 0.0
    %7276 = vmatpush1.msra.mxu0 0.0
    %7277 = vmatprep.subr.mxu0 0.0
    %7278 = vmatpush1.msra.mxu0 0.0
    %7279 = vmatprep.subr.mxu0 0.0
    %7280 = vmatpush1.msra.mxu0 0.0
    %7281 = vmatprep.subr.mxu0 0.0
    %7282 = vmatpush1.msra.mxu0 0.0
    %7283 = vmatprep.subr.mxu0 0.0
    %7284 = vmatpush1.msra.mxu0 0.0
    %7285 = vmatprep.subr.mxu0 0.0
    %7286 = vmatpush1.msra.mxu0 0.0
    %7287 = vmatprep.subr.mxu0 0.0
    %7288 = vmatpush1.msra.mxu0 0.0
    %7289 = vmatprep.subr.mxu0 0.0
    %7290 = vmatpush1.msra.mxu0 0.0
    %7291 = vmatprep.subr.mxu0 0.0
    %7292 = vmatpush1.msra.mxu0 0.0
    %7293 = vmatprep.subr.mxu0 0.0
    %7294 = vmatpush1.msra.mxu0 0.0
    %7295 = vmatprep.subr.mxu0 0.0
    %7296 = vmatpush1.msra.mxu0 0.0
    %7297 = vmatprep.subr.mxu0 0.0
    %7298 = vmatpush1.msra.mxu0 0.0
    %7299 = vmatprep.subr.mxu0 0.0
    %7300 = vmatpush1.msra.mxu0 0.0
    %7301 = vmatprep.subr.mxu0 0.0
    %7302 = vmatpush1.msra.mxu0 0.0
    %7303 = vmatprep.subr.mxu0 0.0
    %7304 = vmatpush1.msra.mxu0 0.0
    %7305 = vmatprep.subr.mxu0 0.0
    %7306 = vmatpush1.msra.mxu0 0.0
    %7307 = vmatprep.mubr.f32.mxu0 0.0
    %v7308 = vand.u32 %v6827, 4294901760
    %7309 = vmatmul.mubr.f32.gmra.mrb[0].mxu0 %v7308
    %v7310 = vpop.f32.mrb[0].mxu0
    %v7311 = vadd.f32 %v7236, %v7310
    %v7312 = vpop.f32.mrb[0].mxu0
    %7313 = vdwg.mxu0
    %v7315 = vsel %vm582, %v6823, 0
    %7317 = vmatprep.subr.mxu0 0.0
    %v7318 = vand.u32 %v85, 4294901760
    %7319 = vmatpush1.msra.mxu0 %v7318
    %7320 = vmatprep.subr.mxu0 0.0
    %7321 = vmatpush1.msra.mxu0 0.0
    %7322 = vmatprep.subr.mxu0 0.0
    %7323 = vmatpush1.msra.mxu0 0.0
    %7324 = vmatprep.subr.mxu0 0.0
    %7325 = vmatpush1.msra.mxu0 0.0
    %7326 = vmatprep.subr.mxu0 0.0
    %7327 = vmatpush1.msra.mxu0 0.0
    %7328 = vmatprep.subr.mxu0 0.0
    %7329 = vmatpush1.msra.mxu0 0.0
    %7330 = vmatprep.subr.mxu0 0.0
    %7331 = vmatpush1.msra.mxu0 0.0
    %7332 = vmatprep.subr.mxu0 0.0
    %7333 = vmatpush1.msra.mxu0 0.0
    %7334 = vmatprep.subr.mxu0 0.0
    %7335 = vmatpush1.msra.mxu0 0.0
    %7336 = vmatprep.subr.mxu0 0.0
    %7337 = vmatpush1.msra.mxu0 0.0
    %7338 = vmatprep.subr.mxu0 0.0
    %7339 = vmatpush1.msra.mxu0 0.0
    %7340 = vmatprep.subr.mxu0 0.0
    %7341 = vmatpush1.msra.mxu0 0.0
    %7342 = vmatprep.subr.mxu0 0.0
    %7343 = vmatpush1.msra.mxu0 0.0
    %7344 = vmatprep.subr.mxu0 0.0
    %7345 = vmatpush1.msra.mxu0 0.0
    %7346 = vmatprep.subr.mxu0 0.0
    %7347 = vmatpush1.msra.mxu0 0.0
    %7348 = vmatprep.subr.mxu0 0.0
    %7349 = vmatpush1.msra.mxu0 0.0
    %7350 = vmatprep.subr.mxu0 0.0
    %7351 = vmatpush1.msra.mxu0 0.0
    %7352 = vmatprep.subr.mxu0 0.0
    %7353 = vmatpush1.msra.mxu0 0.0
    %7354 = vmatprep.subr.mxu0 0.0
    %7355 = vmatpush1.msra.mxu0 0.0
    %7356 = vmatprep.subr.mxu0 0.0
    %7357 = vmatpush1.msra.mxu0 0.0
    %7358 = vmatprep.subr.mxu0 0.0
    %7359 = vmatpush1.msra.mxu0 0.0
    %7360 = vmatprep.subr.mxu0 0.0
    %7361 = vmatpush1.msra.mxu0 0.0
    %7362 = vmatprep.subr.mxu0 0.0
    %7363 = vmatpush1.msra.mxu0 0.0
    %7364 = vmatprep.subr.mxu0 0.0
    %7365 = vmatpush1.msra.mxu0 0.0
    %7366 = vmatprep.subr.mxu0 0.0
    %7367 = vmatpush1.msra.mxu0 0.0
    %7368 = vmatprep.subr.mxu0 0.0
    %7369 = vmatpush1.msra.mxu0 0.0
    %7370 = vmatprep.subr.mxu0 0.0
    %7371 = vmatpush1.msra.mxu0 0.0
    %7372 = vmatprep.subr.mxu0 0.0
    %7373 = vmatpush1.msra.mxu0 0.0
    %7374 = vmatprep.subr.mxu0 0.0
    %7375 = vmatpush1.msra.mxu0 0.0
    %7376 = vmatprep.subr.mxu0 0.0
    %7377 = vmatpush1.msra.mxu0 0.0
    %7378 = vmatprep.subr.mxu0 0.0
    %7379 = vmatpush1.msra.mxu0 0.0
    %7380 = vmatprep.subr.mxu0 0.0
    %7381 = vmatpush1.msra.mxu0 0.0
    %7382 = vmatprep.mubr.f32.mxu0 0.0
    %v7383 = vand.u32 %v7315, 4294901760
    %v7384 = vsub.f32 %v7315, %v7383
    %v7385 = vand.u32 %v7384, 4294901760
    %v7386 = vsub.f32 %v7384, %v7385
    %v7387 = vand.u32 %v7386, 4294901760
    %7388 = vmatmul.mubr.f32.gmra.mrb[0].mxu0 %v7387
    %v7389 = vpop.f32.mrb[0].mxu0
    %v7390 = vadd.f32 %v7311, %v7389
    %v7391 = vpop.f32.mrb[0].mxu0
    %7392 = vdwg.mxu0
    %7393 = vmatprep.subr.mxu0 0.0
    %v7394 = vand.u32 %v85, 4294901760
    %v7395 = vsub.f32 %v85, %v7394
    %v7396 = vand.u32 %v7395, 4294901760
    %v7397 = vsub.f32 %v7395, %v7396
    %v7398 = vand.u32 %v7397, 4294901760
    %7399 = vmatpush1.msra.mxu0 %v7398
    %7400 = vmatprep.subr.mxu0 0.0
    %7401 = vmatpush1.msra.mxu0 0.0
    %7402 = vmatprep.subr.mxu0 0.0
    %7403 = vmatpush1.msra.mxu0 0.0
    %7404 = vmatprep.subr.mxu0 0.0
    %7405 = vmatpush1.msra.mxu0 0.0
    %7406 = vmatprep.subr.mxu0 0.0
    %7407 = vmatpush1.msra.mxu0 0.0
    %7408 = vmatprep.subr.mxu0 0.0
    %7409 = vmatpush1.msra.mxu0 0.0
    %7410 = vmatprep.subr.mxu0 0.0
    %7411 = vmatpush1.msra.mxu0 0.0
    %7412 = vmatprep.subr.mxu0 0.0
    %7413 = vmatpush1.msra.mxu0 0.0
    %7414 = vmatprep.subr.mxu0 0.0
    %7415 = vmatpush1.msra.mxu0 0.0
    %7416 = vmatprep.subr.mxu0 0.0
    %7417 = vmatpush1.msra.mxu0 0.0
    %7418 = vmatprep.subr.mxu0 0.0
    %7419 = vmatpush1.msra.mxu0 0.0
    %7420 = vmatprep.subr.mxu0 0.0
    %7421 = vmatpush1.msra.mxu0 0.0
    %7422 = vmatprep.subr.mxu0 0.0
    %7423 = vmatpush1.msra.mxu0 0.0
    %7424 = vmatprep.subr.mxu0 0.0
    %7425 = vmatpush1.msra.mxu0 0.0
    %7426 = vmatprep.subr.mxu0 0.0
    %7427 = vmatpush1.msra.mxu0 0.0
    %7428 = vmatprep.subr.mxu0 0.0
    %7429 = vmatpush1.msra.mxu0 0.0
    %7430 = vmatprep.subr.mxu0 0.0
    %7431 = vmatpush1.msra.mxu0 0.0
    %7432 = vmatprep.subr.mxu0 0.0
    %7433 = vmatpush1.msra.mxu0 0.0
    %7434 = vmatprep.subr.mxu0 0.0
    %7435 = vmatpush1.msra.mxu0 0.0
    %7436 = vmatprep.subr.mxu0 0.0
    %7437 = vmatpush1.msra.mxu0 0.0
    %7438 = vmatprep.subr.mxu0 0.0
    %7439 = vmatpush1.msra.mxu0 0.0
    %7440 = vmatprep.subr.mxu0 0.0
    %7441 = vmatpush1.msra.mxu0 0.0
    %7442 = vmatprep.subr.mxu0 0.0
    %7443 = vmatpush1.msra.mxu0 0.0
    %7444 = vmatprep.subr.mxu0 0.0
    %7445 = vmatpush1.msra.mxu0 0.0
    %7446 = vmatprep.subr.mxu0 0.0
    %7447 = vmatpush1.msra.mxu0 0.0
    %7448 = vmatprep.subr.mxu0 0.0
    %7449 = vmatpush1.msra.mxu0 0.0
    %7450 = vmatprep.subr.mxu0 0.0
    %7451 = vmatpush1.msra.mxu0 0.0
    %7452 = vmatprep.subr.mxu0 0.0
    %7453 = vmatpush1.msra.mxu0 0.0
    %7454 = vmatprep.subr.mxu0 0.0
    %7455 = vmatpush1.msra.mxu0 0.0
    %7456 = vmatprep.subr.mxu0 0.0
    %7457 = vmatpush1.msra.mxu0 0.0
    %7458 = vmatprep.subr.mxu0 0.0
    %7459 = vmatpush1.msra.mxu0 0.0
    %7460 = vmatprep.subr.mxu0 0.0
    %7461 = vmatpush1.msra.mxu0 0.0
    %7462 = vmatprep.mubr.f32.mxu0 0.0
    %v7463 = vand.u32 %v7315, 4294901760
    %7464 = vmatmul.mubr.f32.gmra.mrb[0].mxu0 %v7463
    %v7465 = vpop.f32.mrb[0].mxu0
    %v7466 = vadd.f32 %v7390, %v7465
    %v7467 = vpop.f32.mrb[0].mxu0
    %7468 = vdwg.mxu0
    %7469 = vmatprep.subr.mxu0 0.0
    %v7470 = vand.u32 %v85, 4294901760
    %v7471 = vsub.f32 %v85, %v7470
    %7472 = vmatpush1.msra.mxu0 %v7471
    %7473 = vmatprep.subr.mxu0 0.0
    %7474 = vmatpush1.msra.mxu0 0.0
    %7475 = vmatprep.subr.mxu0 0.0
    %7476 = vmatpush1.msra.mxu0 0.0
    %7477 = vmatprep.subr.mxu0 0.0
    %7478 = vmatpush1.msra.mxu0 0.0
    %7479 = vmatprep.subr.mxu0 0.0
    %7480 = vmatpush1.msra.mxu0 0.0
    %7481 = vmatprep.subr.mxu0 0.0
    %7482 = vmatpush1.msra.mxu0 0.0
    %7483 = vmatprep.subr.mxu0 0.0
    %7484 = vmatpush1.msra.mxu0 0.0
    %7485 = vmatprep.subr.mxu0 0.0
    %7486 = vmatpush1.msra.mxu0 0.0
    %7487 = vmatprep.subr.mxu0 0.0
    %7488 = vmatpush1.msra.mxu0 0.0
    %7489 = vmatprep.subr.mxu0 0.0
    %7490 = vmatpush1.msra.mxu0 0.0
    %7491 = vmatprep.subr.mxu0 0.0
    %7492 = vmatpush1.msra.mxu0 0.0
    %7493 = vmatprep.subr.mxu0 0.0
    %7494 = vmatpush1.msra.mxu0 0.0
    %7495 = vmatprep.subr.mxu0 0.0
    %7496 = vmatpush1.msra.mxu0 0.0
    %7497 = vmatprep.subr.mxu0 0.0
    %7498 = vmatpush1.msra.mxu0 0.0
    %7499 = vmatprep.subr.mxu0 0.0
    %7500 = vmatpush1.msra.mxu0 0.0
    %7501 = vmatprep.subr.mxu0 0.0
    %7502 = vmatpush1.msra.mxu0 0.0
    %7503 = vmatprep.subr.mxu0 0.0
    %7504 = vmatpush1.msra.mxu0 0.0
    %7505 = vmatprep.subr.mxu0 0.0
    %7506 = vmatpush1.msra.mxu0 0.0
    %7507 = vmatprep.subr.mxu0 0.0
    %7508 = vmatpush1.msra.mxu0 0.0
    %7509 = vmatprep.subr.mxu0 0.0
    %7510 = vmatpush1.msra.mxu0 0.0
    %7511 = vmatprep.subr.mxu0 0.0
    %7512 = vmatpush1.msra.mxu0 0.0
    %7513 = vmatprep.subr.mxu0 0.0
    %7514 = vmatpush1.msra.mxu0 0.0
    %7515 = vmatprep.subr.mxu0 0.0
    %7516 = vmatpush1.msra.mxu0 0.0
    %7517 = vmatprep.subr.mxu0 0.0
    %7518 = vmatpush1.msra.mxu0 0.0
    %7519 = vmatprep.subr.mxu0 0.0
    %7520 = vmatpush1.msra.mxu0 0.0
    %7521 = vmatprep.subr.mxu0 0.0
    %7522 = vmatpush1.msra.mxu0 0.0
    %7523 = vmatprep.subr.mxu0 0.0
    %7524 = vmatpush1.msra.mxu0 0.0
    %7525 = vmatprep.subr.mxu0 0.0
    %7526 = vmatpush1.msra.mxu0 0.0
    %7527 = vmatprep.subr.mxu0 0.0
    %7528 = vmatpush1.msra.mxu0 0.0
    %7529 = vmatprep.subr.mxu0 0.0
    %7530 = vmatpush1.msra.mxu0 0.0
    %7531 = vmatprep.subr.mxu0 0.0
    %7532 = vmatpush1.msra.mxu0 0.0
    %7533 = vmatprep.subr.mxu0 0.0
    %7534 = vmatpush1.msra.mxu0 0.0
    %7535 = vmatprep.mubr.f32.mxu0 0.0
    %v7536 = vand.u32 %v7315, 4294901760
    %v7537 = vsub.f32 %v7315, %v7536
    %7538 = vmatmul.mubr.f32.gmra.mrb[0].mxu0 %v7537
    %v7539 = vpop.f32.mrb[0].mxu0
    %v7540 = vadd.f32 %v7466, %v7539
    %v7541 = vpop.f32.mrb[0].mxu0
    %7542 = vdwg.mxu0
    %7543 = vmatprep.subr.mxu0 0.0
    %v7544 = vand.u32 %v85, 4294901760
    %7545 = vmatpush1.msra.mxu0 %v7544
    %7546 = vmatprep.subr.mxu0 0.0
    %7547 = vmatpush1.msra.mxu0 0.0
    %7548 = vmatprep.subr.mxu0 0.0
    %7549 = vmatpush1.msra.mxu0 0.0
    %7550 = vmatprep.subr.mxu0 0.0
    %7551 = vmatpush1.msra.mxu0 0.0
    %7552 = vmatprep.subr.mxu0 0.0
    %7553 = vmatpush1.msra.mxu0 0.0
    %7554 = vmatprep.subr.mxu0 0.0
    %7555 = vmatpush1.msra.mxu0 0.0
    %7556 = vmatprep.subr.mxu0 0.0
    %7557 = vmatpush1.msra.mxu0 0.0
    %7558 = vmatprep.subr.mxu0 0.0
    %7559 = vmatpush1.msra.mxu0 0.0
    %7560 = vmatprep.subr.mxu0 0.0
    %7561 = vmatpush1.msra.mxu0 0.0
    %7562 = vmatprep.subr.mxu0 0.0
    %7563 = vmatpush1.msra.mxu0 0.0
    %7564 = vmatprep.subr.mxu0 0.0
    %7565 = vmatpush1.msra.mxu0 0.0
    %7566 = vmatprep.subr.mxu0 0.0
    %7567 = vmatpush1.msra.mxu0 0.0
    %7568 = vmatprep.subr.mxu0 0.0
    %7569 = vmatpush1.msra.mxu0 0.0
    %7570 = vmatprep.subr.mxu0 0.0
    %7571 = vmatpush1.msra.mxu0 0.0
    %7572 = vmatprep.subr.mxu0 0.0
    %7573 = vmatpush1.msra.mxu0 0.0
    %7574 = vmatprep.subr.mxu0 0.0
    %7575 = vmatpush1.msra.mxu0 0.0
    %7576 = vmatprep.subr.mxu0 0.0
    %7577 = vmatpush1.msra.mxu0 0.0
    %7578 = vmatprep.subr.mxu0 0.0
    %7579 = vmatpush1.msra.mxu0 0.0
    %7580 = vmatprep.subr.mxu0 0.0
    %7581 = vmatpush1.msra.mxu0 0.0
    %7582 = vmatprep.subr.mxu0 0.0
    %7583 = vmatpush1.msra.mxu0 0.0
    %7584 = vmatprep.subr.mxu0 0.0
    %7585 = vmatpush1.msra.mxu0 0.0
    %7586 = vmatprep.subr.mxu0 0.0
    %7587 = vmatpush1.msra.mxu0 0.0
    %7588 = vmatprep.subr.mxu0 0.0
    %7589 = vmatpush1.msra.mxu0 0.0
    %7590 = vmatprep.subr.mxu0 0.0
    %7591 = vmatpush1.msra.mxu0 0.0
    %7592 = vmatprep.subr.mxu0 0.0
    %7593 = vmatpush1.msra.mxu0 0.0
    %7594 = vmatprep.subr.mxu0 0.0
    %7595 = vmatpush1.msra.mxu0 0.0
    %7596 = vmatprep.subr.mxu0 0.0
    %7597 = vmatpush1.msra.mxu0 0.0
    %7598 = vmatprep.subr.mxu0 0.0
    %7599 = vmatpush1.msra.mxu0 0.0
    %7600 = vmatprep.subr.mxu0 0.0
    %7601 = vmatpush1.msra.mxu0 0.0
    %7602 = vmatprep.subr.mxu0 0.0
    %7603 = vmatpush1.msra.mxu0 0.0
    %7604 = vmatprep.subr.mxu0 0.0
    %7605 = vmatpush1.msra.mxu0 0.0
    %7606 = vmatprep.subr.mxu0 0.0
    %7607 = vmatpush1.msra.mxu0 0.0
    %7608 = vmatprep.mubr.f32.mxu0 0.0
    %v7609 = vand.u32 %v7315, 4294901760
    %v7610 = vsub.f32 %v7315, %v7609
    %v7611 = vand.u32 %v7610, 4294901760
    %7612 = vmatmul.mubr.f32.gmra.mrb[0].mxu0 %v7611
    %v7613 = vpop.f32.mrb[0].mxu0
    %v7614 = vadd.f32 %v7540, %v7613
    %v7615 = vpop.f32.mrb[0].mxu0
    %7616 = vdwg.mxu0
    %7617 = vmatprep.subr.mxu0 0.0
    %v7618 = vand.u32 %v85, 4294901760
    %v7619 = vsub.f32 %v85, %v7618
    %v7620 = vand.u32 %v7619, 4294901760
    %7621 = vmatpush1.msra.mxu0 %v7620
    %7622 = vmatprep.subr.mxu0 0.0
    %7623 = vmatpush1.msra.mxu0 0.0
    %7624 = vmatprep.subr.mxu0 0.0
    %7625 = vmatpush1.msra.mxu0 0.0
    %7626 = vmatprep.subr.mxu0 0.0
    %7627 = vmatpush1.msra.mxu0 0.0
    %7628 = vmatprep.subr.mxu0 0.0
    %7629 = vmatpush1.msra.mxu0 0.0
    %7630 = vmatprep.subr.mxu0 0.0
    %7631 = vmatpush1.msra.mxu0 0.0
    %7632 = vmatprep.subr.mxu0 0.0
    %7633 = vmatpush1.msra.mxu0 0.0
    %7634 = vmatprep.subr.mxu0 0.0
    %7635 = vmatpush1.msra.mxu0 0.0
    %7636 = vmatprep.subr.mxu0 0.0
    %7637 = vmatpush1.msra.mxu0 0.0
    %7638 = vmatprep.subr.mxu0 0.0
    %7639 = vmatpush1.msra.mxu0 0.0
    %7640 = vmatprep.subr.mxu0 0.0
    %7641 = vmatpush1.msra.mxu0 0.0
    %7642 = vmatprep.subr.mxu0 0.0
    %7643 = vmatpush1.msra.mxu0 0.0
    %7644 = vmatprep.subr.mxu0 0.0
    %7645 = vmatpush1.msra.mxu0 0.0
    %7646 = vmatprep.subr.mxu0 0.0
    %7647 = vmatpush1.msra.mxu0 0.0
    %7648 = vmatprep.subr.mxu0 0.0
    %7649 = vmatpush1.msra.mxu0 0.0
    %7650 = vmatprep.subr.mxu0 0.0
    %7651 = vmatpush1.msra.mxu0 0.0
    %7652 = vmatprep.subr.mxu0 0.0
    %7653 = vmatpush1.msra.mxu0 0.0
    %7654 = vmatprep.subr.mxu0 0.0
    %7655 = vmatpush1.msra.mxu0 0.0
    %7656 = vmatprep.subr.mxu0 0.0
    %7657 = vmatpush1.msra.mxu0 0.0
    %7658 = vmatprep.subr.mxu0 0.0
    %7659 = vmatpush1.msra.mxu0 0.0
    %7660 = vmatprep.subr.mxu0 0.0
    %7661 = vmatpush1.msra.mxu0 0.0
    %7662 = vmatprep.subr.mxu0 0.0
    %7663 = vmatpush1.msra.mxu0 0.0
    %7664 = vmatprep.subr.mxu0 0.0
    %7665 = vmatpush1.msra.mxu0 0.0
    %7666 = vmatprep.subr.mxu0 0.0
    %7667 = vmatpush1.msra.mxu0 0.0
    %7668 = vmatprep.subr.mxu0 0.0
    %7669 = vmatpush1.msra.mxu0 0.0
    %7670 = vmatprep.subr.mxu0 0.0
    %7671 = vmatpush1.msra.mxu0 0.0
    %7672 = vmatprep.subr.mxu0 0.0
    %7673 = vmatpush1.msra.mxu0 0.0
    %7674 = vmatprep.subr.mxu0 0.0
    %7675 = vmatpush1.msra.mxu0 0.0
    %7676 = vmatprep.subr.mxu0 0.0
    %7677 = vmatpush1.msra.mxu0 0.0
    %7678 = vmatprep.subr.mxu0 0.0
    %7679 = vmatpush1.msra.mxu0 0.0
    %7680 = vmatprep.subr.mxu0 0.0
    %7681 = vmatpush1.msra.mxu0 0.0
    %7682 = vmatprep.subr.mxu0 0.0
    %7683 = vmatpush1.msra.mxu0 0.0
    %7684 = vmatprep.mubr.f32.mxu0 0.0
    %v7685 = vand.u32 %v7315, 4294901760
    %7686 = vmatmul.mubr.f32.gmra.mrb[0].mxu0 %v7685
    %v7687 = vpop.f32.mrb[0].mxu0
    %v7688 = vadd.f32 %v7614, %v7687
    %v7689 = vpop.f32.mrb[0].mxu0
    %7690 = vdwg.mxu0
    %7691 = vmatprep.subr.mxu0 0.0
    %v7692 = vand.u32 %v85, 4294901760
    %7693 = vmatpush1.msra.mxu0 %v7692
    %7694 = vmatprep.subr.mxu0 0.0
    %7695 = vmatpush1.msra.mxu0 0.0
    %7696 = vmatprep.subr.mxu0 0.0
    %7697 = vmatpush1.msra.mxu0 0.0
    %7698 = vmatprep.subr.mxu0 0.0
    %7699 = vmatpush1.msra.mxu0 0.0
    %7700 = vmatprep.subr.mxu0 0.0
    %7701 = vmatpush1.msra.mxu0 0.0
    %7702 = vmatprep.subr.mxu0 0.0
    %7703 = vmatpush1.msra.mxu0 0.0
    %7704 = vmatprep.subr.mxu0 0.0
    %7705 = vmatpush1.msra.mxu0 0.0
    %7706 = vmatprep.subr.mxu0 0.0
    %7707 = vmatpush1.msra.mxu0 0.0
    %7708 = vmatprep.subr.mxu0 0.0
    %7709 = vmatpush1.msra.mxu0 0.0
    %7710 = vmatprep.subr.mxu0 0.0
    %7711 = vmatpush1.msra.mxu0 0.0
    %7712 = vmatprep.subr.mxu0 0.0
    %7713 = vmatpush1.msra.mxu0 0.0
    %7714 = vmatprep.subr.mxu0 0.0
    %7715 = vmatpush1.msra.mxu0 0.0
    %7716 = vmatprep.subr.mxu0 0.0
    %7717 = vmatpush1.msra.mxu0 0.0
    %7718 = vmatprep.subr.mxu0 0.0
    %7719 = vmatpush1.msra.mxu0 0.0
    %7720 = vmatprep.subr.mxu0 0.0
    %7721 = vmatpush1.msra.mxu0 0.0
    %7722 = vmatprep.subr.mxu0 0.0
    %7723 = vmatpush1.msra.mxu0 0.0
    %7724 = vmatprep.subr.mxu0 0.0
    %7725 = vmatpush1.msra.mxu0 0.0
    %7726 = vmatprep.subr.mxu0 0.0
    %7727 = vmatpush1.msra.mxu0 0.0
    %7728 = vmatprep.subr.mxu0 0.0
    %7729 = vmatpush1.msra.mxu0 0.0
    %7730 = vmatprep.subr.mxu0 0.0
    %7731 = vmatpush1.msra.mxu0 0.0
    %7732 = vmatprep.subr.mxu0 0.0
    %7733 = vmatpush1.msra.mxu0 0.0
    %7734 = vmatprep.subr.mxu0 0.0
    %7735 = vmatpush1.msra.mxu0 0.0
    %7736 = vmatprep.subr.mxu0 0.0
    %7737 = vmatpush1.msra.mxu0 0.0
    %7738 = vmatprep.subr.mxu0 0.0
    %7739 = vmatpush1.msra.mxu0 0.0
    %7740 = vmatprep.subr.mxu0 0.0
    %7741 = vmatpush1.msra.mxu0 0.0
    %7742 = vmatprep.subr.mxu0 0.0
    %7743 = vmatpush1.msra.mxu0 0.0
    %7744 = vmatprep.subr.mxu0 0.0
    %7745 = vmatpush1.msra.mxu0 0.0
    %7746 = vmatprep.subr.mxu0 0.0
    %7747 = vmatpush1.msra.mxu0 0.0
    %7748 = vmatprep.subr.mxu0 0.0
    %7749 = vmatpush1.msra.mxu0 0.0
    %7750 = vmatprep.subr.mxu0 0.0
    %7751 = vmatpush1.msra.mxu0 0.0
    %7752 = vmatprep.subr.mxu0 0.0
    %7753 = vmatpush1.msra.mxu0 0.0
    %7754 = vmatprep.subr.mxu0 0.0
    %7755 = vmatpush1.msra.mxu0 0.0
    %7756 = vmatprep.mubr.f32.mxu0 0.0
    %v7757 = vand.u32 %v7315, 4294901760
    %7758 = vmatmul.mubr.f32.gmra.mrb[0].mxu0 %v7757
    %v7759 = vpop.f32.mrb[0].mxu0
    %v7760 = vadd.f32 %v7688, %v7759
    %v7761 = vpop.f32.mrb[0].mxu0
    %7762 = vdwg.mxu0
    %v7763 = vtanh.pop %v7760
    %v7764 = vmul.f32 %v7763, 0.5
    %v7765 = vadd.f32 %v7764, 0.5
    %v7766 = vmul.f32 %v7765, %v6815
    %7768 = vrot.lane.b32.xlu0 %v7763, 32
    %v7769 = vpop.permute.xlu0 %7768
    %v7771 = vmul.f32 %v7765, %v7769
    %7773 = vrot.lane.b32.xlu0 %v7771, 32
    %v7774 = vpop.permute.xlu0 %7773
    %v7776 = vadd.f32 %v7766, %v7774
    %v7777 = vtanh.pop %v7776
    %7779 = vrot.lane.b32.xlu0 %v7777, 32
    %v7780 = vpop.permute.xlu0 %7779
    %v7782 = vmul.f32 %v7765, %v7780
    %7784 = vrot.lane.b32.xlu0 %v7782, 64
    %v7785 = vpop.permute.xlu0 %7784
    %vm7787 = vcmask 257024
    %7788 = vst.msk [vmem:[#allocation2] sm:$0xf] %vm7787, %v7785
    %7790 = vrot.lane.b32.xlu0 %v7776, 96
    %v7791 = vpop.permute.xlu0 %7790
    %7793 = vst.msk [vmem:[#allocation3] sm:$0xf] %vm7787, %v7791
    // Predicated region
    $region54: #{tpu_custom_call.1} parent=1 // pred_check
      %p7794 = pneg %p78
    $region55: #{tpu_custom_call.1} parent=1 // pred_check_branch
      %7796 = sbr.rel (%p7794) target = $region57
    $region56: #{tpu_custom_call.1} parent=1 // pred_region
      %v7797 = vmax.f32 %v7782, 0.0
      %v7798 = vld [vmem:[#allocation11] sm:$0xff]
      %v7799 = vld [vmem:[#allocation11 + $0x8] sm:$0xff]
      %v7800 = vld [vmem:[#allocation11 + $0x10] sm:$0xff]
      %v7801 = vld [vmem:[#allocation11 + $0x18] sm:$0xff]
      %v7802 = vld [vmem:[%s5] sm:$0x1]
      %v7804 = vlaneseq
      %v7805 = vshrl.u32 %v7804, 7
      %v7806 = vsub.s32 0, %v7805
      %v7807 = vrot.slane %v7802, %v7806
      %7810 = vrot.lane.b32.xlu0 %v7797, 64
      %v7811 = vpop.permute.xlu0 %7810
      %v7812 = vsel %vm93, %v7811, 0
      %7814 = vmatprep.subr.mxu0 0.0
      %v7815 = vand.u32 %v7798, 4294901760
      %7816 = vmatpush1.msra.mxu0 %v7815
      %7817 = vmatprep.subr.mxu0 0.0
      %v7818 = vand.u32 %v7799, 4294901760
      %7819 = vmatpush1.msra.mxu0 %v7818
      %7820 = vmatprep.subr.mxu0 0.0
      %v7821 = vand.u32 %v7800, 4294901760
      %7822 = vmatpush1.msra.mxu0 %v7821
      %7823 = vmatprep.subr.mxu0 0.0
      %v7824 = vand.u32 %v7801, 4294901760
      %7825 = vmatpush1.msra.mxu0 %v7824
      %7826 = vmatprep.subr.mxu0 0.0
      %7827 = vmatpush1.msra.mxu0 0.0
      %7828 = vmatprep.subr.mxu0 0.0
      %7829 = vmatpush1.msra.mxu0 0.0
      %7830 = vmatprep.subr.mxu0 0.0
      %7831 = vmatpush1.msra.mxu0 0.0
      %7832 = vmatprep.subr.mxu0 0.0
      %7833 = vmatpush1.msra.mxu0 0.0
      %7834 = vmatprep.subr.mxu0 0.0
      %7835 = vmatpush1.msra.mxu0 0.0
      %7836 = vmatprep.subr.mxu0 0.0
      %7837 = vmatpush1.msra.mxu0 0.0
      %7838 = vmatprep.subr.mxu0 0.0
      %7839 = vmatpush1.msra.mxu0 0.0
      %7840 = vmatprep.subr.mxu0 0.0
      %7841 = vmatpush1.msra.mxu0 0.0
      %7842 = vmatprep.subr.mxu0 0.0
      %7843 = vmatpush1.msra.mxu0 0.0
      %7844 = vmatprep.subr.mxu0 0.0
      %7845 = vmatpush1.msra.mxu0 0.0
      %7846 = vmatprep.subr.mxu0 0.0
      %7847 = vmatpush1.msra.mxu0 0.0
      %7848 = vmatprep.subr.mxu0 0.0
      %7849 = vmatpush1.msra.mxu0 0.0
      %7850 = vmatprep.subr.mxu0 0.0
      %7851 = vmatpush1.msra.mxu0 0.0
      %7852 = vmatprep.subr.mxu0 0.0
      %7853 = vmatpush1.msra.mxu0 0.0
      %7854 = vmatprep.subr.mxu0 0.0
      %7855 = vmatpush1.msra.mxu0 0.0
      %7856 = vmatprep.subr.mxu0 0.0
      %7857 = vmatpush1.msra.mxu0 0.0
      %7858 = vmatprep.subr.mxu0 0.0
      %7859 = vmatpush1.msra.mxu0 0.0
      %7860 = vmatprep.subr.mxu0 0.0
      %7861 = vmatpush1.msra.mxu0 0.0
      %7862 = vmatprep.subr.mxu0 0.0
      %7863 = vmatpush1.msra.mxu0 0.0
      %7864 = vmatprep.subr.mxu0 0.0
      %7865 = vmatpush1.msra.mxu0 0.0
      %7866 = vmatprep.subr.mxu0 0.0
      %7867 = vmatpush1.msra.mxu0 0.0
      %7868 = vmatprep.subr.mxu0 0.0
      %7869 = vmatpush1.msra.mxu0 0.0
      %7870 = vmatprep.subr.mxu0 0.0
      %7871 = vmatpush1.msra.mxu0 0.0
      %7872 = vmatprep.subr.mxu0 0.0
      %7873 = vmatpush1.msra.mxu0 0.0
      %7874 = vmatprep.subr.mxu0 0.0
      %7875 = vmatpush1.msra.mxu0 0.0
      %7876 = vmatprep.subr.mxu0 0.0
      %7877 = vmatpush1.msra.mxu0 0.0
      %7878 = vmatprep.subr.mxu0 0.0
      %7879 = vmatpush1.msra.mxu0 0.0
      %7880 = vmatprep.subr.mxu0 0.0
      %7881 = vmatpush1.msra.mxu0 0.0
      %7882 = vmatprep.mubr.f32.mxu0 0.0
      %v7883 = vand.u32 %v7812, 4294901760
      %v7884 = vsub.f32 %v7812, %v7883
      %v7885 = vand.u32 %v7884, 4294901760
      %v7886 = vsub.f32 %v7884, %v7885
      %v7887 = vand.u32 %v7886, 4294901760
      %7888 = vmatmul.mubr.f32.gmra.mrb[0].mxu0 %v7887
      %v7889 = vpop.f32.mrb[0].mxu0
      %v7890 = vadd.f32 %v7807, %v7889
      %v7891 = vpop.f32.mrb[0].mxu0
      %7892 = vdwg.mxu0
      %7893 = vmatprep.subr.mxu0 0.0
      %v7894 = vand.u32 %v7798, 4294901760
      %v7895 = vsub.f32 %v7798, %v7894
      %v7896 = vand.u32 %v7895, 4294901760
      %v7897 = vsub.f32 %v7895, %v7896
      %v7898 = vand.u32 %v7897, 4294901760
      %7899 = vmatpush1.msra.mxu0 %v7898
      %7900 = vmatprep.subr.mxu0 0.0
      %v7901 = vand.u32 %v7799, 4294901760
      %v7902 = vsub.f32 %v7799, %v7901
      %v7903 = vand.u32 %v7902, 4294901760
      %v7904 = vsub.f32 %v7902, %v7903
      %v7905 = vand.u32 %v7904, 4294901760
      %7906 = vmatpush1.msra.mxu0 %v7905
      %7907 = vmatprep.subr.mxu0 0.0
      %v7908 = vand.u32 %v7800, 4294901760
      %v7909 = vsub.f32 %v7800, %v7908
      %v7910 = vand.u32 %v7909, 4294901760
      %v7911 = vsub.f32 %v7909, %v7910
      %v7912 = vand.u32 %v7911, 4294901760
      %7913 = vmatpush1.msra.mxu0 %v7912
      %7914 = vmatprep.subr.mxu0 0.0
      %v7915 = vand.u32 %v7801, 4294901760
      %v7916 = vsub.f32 %v7801, %v7915
      %v7917 = vand.u32 %v7916, 4294901760
      %v7918 = vsub.f32 %v7916, %v7917
      %v7919 = vand.u32 %v7918, 4294901760
      %7920 = vmatpush1.msra.mxu0 %v7919
      %7921 = vmatprep.subr.mxu0 0.0
      %7922 = vmatpush1.msra.mxu0 0.0
      %7923 = vmatprep.subr.mxu0 0.0
      %7924 = vmatpush1.msra.mxu0 0.0
      %7925 = vmatprep.subr.mxu0 0.0
      %7926 = vmatpush1.msra.mxu0 0.0
      %7927 = vmatprep.subr.mxu0 0.0
      %7928 = vmatpush1.msra.mxu0 0.0
      %7929 = vmatprep.subr.mxu0 0.0
      %7930 = vmatpush1.msra.mxu0 0.0
      %7931 = vmatprep.subr.mxu0 0.0
      %7932 = vmatpush1.msra.mxu0 0.0
      %7933 = vmatprep.subr.mxu0 0.0
      %7934 = vmatpush1.msra.mxu0 0.0
      %7935 = vmatprep.subr.mxu0 0.0
      %7936 = vmatpush1.msra.mxu0 0.0
      %7937 = vmatprep.subr.mxu0 0.0
      %7938 = vmatpush1.msra.mxu0 0.0
      %7939 = vmatprep.subr.mxu0 0.0
      %7940 = vmatpush1.msra.mxu0 0.0
      %7941 = vmatprep.subr.mxu0 0.0
      %7942 = vmatpush1.msra.mxu0 0.0
      %7943 = vmatprep.subr.mxu0 0.0
      %7944 = vmatpush1.msra.mxu0 0.0
      %7945 = vmatprep.subr.mxu0 0.0
      %7946 = vmatpush1.msra.mxu0 0.0
      %7947 = vmatprep.subr.mxu0 0.0
      %7948 = vmatpush1.msra.mxu0 0.0
      %7949 = vmatprep.subr.mxu0 0.0
      %7950 = vmatpush1.msra.mxu0 0.0
      %7951 = vmatprep.subr.mxu0 0.0
      %7952 = vmatpush1.msra.mxu0 0.0
      %7953 = vmatprep.subr.mxu0 0.0
      %7954 = vmatpush1.msra.mxu0 0.0
      %7955 = vmatprep.subr.mxu0 0.0
      %7956 = vmatpush1.msra.mxu0 0.0
      %7957 = vmatprep.subr.mxu0 0.0
      %7958 = vmatpush1.msra.mxu0 0.0
      %7959 = vmatprep.subr.mxu0 0.0
      %7960 = vmatpush1.msra.mxu0 0.0
      %7961 = vmatprep.subr.mxu0 0.0
      %7962 = vmatpush1.msra.mxu0 0.0
      %7963 = vmatprep.subr.mxu0 0.0
      %7964 = vmatpush1.msra.mxu0 0.0
      %7965 = vmatprep.subr.mxu0 0.0
      %7966 = vmatpush1.msra.mxu0 0.0
      %7967 = vmatprep.subr.mxu0 0.0
      %7968 = vmatpush1.msra.mxu0 0.0
      %7969 = vmatprep.subr.mxu0 0.0
      %7970 = vmatpush1.msra.mxu0 0.0
      %7971 = vmatprep.subr.mxu0 0.0
      %7972 = vmatpush1.msra.mxu0 0.0
      %7973 = vmatprep.subr.mxu0 0.0
      %7974 = vmatpush1.msra.mxu0 0.0
      %7975 = vmatprep.subr.mxu0 0.0
      %7976 = vmatpush1.msra.mxu0 0.0
      %7977 = vmatprep.mubr.f32.mxu0 0.0
      %v7978 = vand.u32 %v7812, 4294901760
      %7979 = vmatmul.mubr.f32.gmra.mrb[0].mxu0 %v7978
      %v7980 = vpop.f32.mrb[0].mxu0
      %v7981 = vadd.f32 %v7890, %v7980
      %v7982 = vpop.f32.mrb[0].mxu0
      %7983 = vdwg.mxu0
      %7984 = vmatprep.subr.mxu0 0.0
      %v7985 = vand.u32 %v7798, 4294901760
      %v7986 = vsub.f32 %v7798, %v7985
      %7987 = vmatpush1.msra.mxu0 %v7986
      %7988 = vmatprep.subr.mxu0 0.0
      %v7989 = vand.u32 %v7799, 4294901760
      %v7990 = vsub.f32 %v7799, %v7989
      %7991 = vmatpush1.msra.mxu0 %v7990
      %7992 = vmatprep.subr.mxu0 0.0
      %v7993 = vand.u32 %v7800, 4294901760
      %v7994 = vsub.f32 %v7800, %v7993
      %7995 = vmatpush1.msra.mxu0 %v7994
      %7996 = vmatprep.subr.mxu0 0.0
      %v7997 = vand.u32 %v7801, 4294901760
      %v7998 = vsub.f32 %v7801, %v7997
      %7999 = vmatpush1.msra.mxu0 %v7998
      %8000 = vmatprep.subr.mxu0 0.0
      %8001 = vmatpush1.msra.mxu0 0.0
      %8002 = vmatprep.subr.mxu0 0.0
      %8003 = vmatpush1.msra.mxu0 0.0
      %8004 = vmatprep.subr.mxu0 0.0
      %8005 = vmatpush1.msra.mxu0 0.0
      %8006 = vmatprep.subr.mxu0 0.0
      %8007 = vmatpush1.msra.mxu0 0.0
      %8008 = vmatprep.subr.mxu0 0.0
      %8009 = vmatpush1.msra.mxu0 0.0
      %8010 = vmatprep.subr.mxu0 0.0
      %8011 = vmatpush1.msra.mxu0 0.0
      %8012 = vmatprep.subr.mxu0 0.0
      %8013 = vmatpush1.msra.mxu0 0.0
      %8014 = vmatprep.subr.mxu0 0.0
      %8015 = vmatpush1.msra.mxu0 0.0
      %8016 = vmatprep.subr.mxu0 0.0
      %8017 = vmatpush1.msra.mxu0 0.0
      %8018 = vmatprep.subr.mxu0 0.0
      %8019 = vmatpush1.msra.mxu0 0.0
      %8020 = vmatprep.subr.mxu0 0.0
      %8021 = vmatpush1.msra.mxu0 0.0
      %8022 = vmatprep.subr.mxu0 0.0
      %8023 = vmatpush1.msra.mxu0 0.0
      %8024 = vmatprep.subr.mxu0 0.0
      %8025 = vmatpush1.msra.mxu0 0.0
      %8026 = vmatprep.subr.mxu0 0.0
      %8027 = vmatpush1.msra.mxu0 0.0
      %8028 = vmatprep.subr.mxu0 0.0
      %8029 = vmatpush1.msra.mxu0 0.0
      %8030 = vmatprep.subr.mxu0 0.0
      %8031 = vmatpush1.msra.mxu0 0.0
      %8032 = vmatprep.subr.mxu0 0.0
      %8033 = vmatpush1.msra.mxu0 0.0
      %8034 = vmatprep.subr.mxu0 0.0
      %8035 = vmatpush1.msra.mxu0 0.0
      %8036 = vmatprep.subr.mxu0 0.0
      %8037 = vmatpush1.msra.mxu0 0.0
      %8038 = vmatprep.subr.mxu0 0.0
      %8039 = vmatpush1.msra.mxu0 0.0
      %8040 = vmatprep.subr.mxu0 0.0
      %8041 = vmatpush1.msra.mxu0 0.0
      %8042 = vmatprep.subr.mxu0 0.0
      %8043 = vmatpush1.msra.mxu0 0.0
      %8044 = vmatprep.subr.mxu0 0.0
      %8045 = vmatpush1.msra.mxu0 0.0
      %8046 = vmatprep.subr.mxu0 0.0
      %8047 = vmatpush1.msra.mxu0 0.0
      %8048 = vmatprep.subr.mxu0 0.0
      %8049 = vmatpush1.msra.mxu0 0.0
      %8050 = vmatprep.subr.mxu0 0.0
      %8051 = vmatpush1.msra.mxu0 0.0
      %8052 = vmatprep.subr.mxu0 0.0
      %8053 = vmatpush1.msra.mxu0 0.0
      %8054 = vmatprep.subr.mxu0 0.0
      %8055 = vmatpush1.msra.mxu0 0.0
      %8056 = vmatprep.mubr.f32.mxu0 0.0
      %v8057 = vand.u32 %v7812, 4294901760
      %v8058 = vsub.f32 %v7812, %v8057
      %8059 = vmatmul.mubr.f32.gmra.mrb[0].mxu0 %v8058
      %v8060 = vpop.f32.mrb[0].mxu0
      %v8061 = vadd.f32 %v7981, %v8060
      %v8062 = vpop.f32.mrb[0].mxu0
      %8063 = vdwg.mxu0
      %8064 = vmatprep.subr.mxu0 0.0
      %v8065 = vand.u32 %v7798, 4294901760
      %8066 = vmatpush1.msra.mxu0 %v8065
      %8067 = vmatprep.subr.mxu0 0.0
      %v8068 = vand.u32 %v7799, 4294901760
      %8069 = vmatpush1.msra.mxu0 %v8068
      %8070 = vmatprep.subr.mxu0 0.0
      %v8071 = vand.u32 %v7800, 4294901760
      %8072 = vmatpush1.msra.mxu0 %v8071
      %8073 = vmatprep.subr.mxu0 0.0
      %v8074 = vand.u32 %v7801, 4294901760
      %8075 = vmatpush1.msra.mxu0 %v8074
      %8076 = vmatprep.subr.mxu0 0.0
      %8077 = vmatpush1.msra.mxu0 0.0
      %8078 = vmatprep.subr.mxu0 0.0
      %8079 = vmatpush1.msra.mxu0 0.0
      %8080 = vmatprep.subr.mxu0 0.0
      %8081 = vmatpush1.msra.mxu0 0.0
      %8082 = vmatprep.subr.mxu0 0.0
      %8083 = vmatpush1.msra.mxu0 0.0
      %8084 = vmatprep.subr.mxu0 0.0
      %8085 = vmatpush1.msra.mxu0 0.0
      %8086 = vmatprep.subr.mxu0 0.0
      %8087 = vmatpush1.msra.mxu0 0.0
      %8088 = vmatprep.subr.mxu0 0.0
      %8089 = vmatpush1.msra.mxu0 0.0
      %8090 = vmatprep.subr.mxu0 0.0
      %8091 = vmatpush1.msra.mxu0 0.0
      %8092 = vmatprep.subr.mxu0 0.0
      %8093 = vmatpush1.msra.mxu0 0.0
      %8094 = vmatprep.subr.mxu0 0.0
      %8095 = vmatpush1.msra.mxu0 0.0
      %8096 = vmatprep.subr.mxu0 0.0
      %8097 = vmatpush1.msra.mxu0 0.0
      %8098 = vmatprep.subr.mxu0 0.0
      %8099 = vmatpush1.msra.mxu0 0.0
      %8100 = vmatprep.subr.mxu0 0.0
      %8101 = vmatpush1.msra.mxu0 0.0
      %8102 = vmatprep.subr.mxu0 0.0
      %8103 = vmatpush1.msra.mxu0 0.0
      %8104 = vmatprep.subr.mxu0 0.0
      %8105 = vmatpush1.msra.mxu0 0.0
      %8106 = vmatprep.subr.mxu0 0.0
      %8107 = vmatpush1.msra.mxu0 0.0
      %8108 = vmatprep.subr.mxu0 0.0
      %8109 = vmatpush1.msra.mxu0 0.0
      %8110 = vmatprep.subr.mxu0 0.0
      %8111 = vmatpush1.msra.mxu0 0.0
      %8112 = vmatprep.subr.mxu0 0.0
      %8113 = vmatpush1.msra.mxu0 0.0
      %8114 = vmatprep.subr.mxu0 0.0
      %8115 = vmatpush1.msra.mxu0 0.0
      %8116 = vmatprep.subr.mxu0 0.0
      %8117 = vmatpush1.msra.mxu0 0.0
      %8118 = vmatprep.subr.mxu0 0.0
      %8119 = vmatpush1.msra.mxu0 0.0
      %8120 = vmatprep.subr.mxu0 0.0
      %8121 = vmatpush1.msra.mxu0 0.0
      %8122 = vmatprep.subr.mxu0 0.0
      %8123 = vmatpush1.msra.mxu0 0.0
      %8124 = vmatprep.subr.mxu0 0.0
      %8125 = vmatpush1.msra.mxu0 0.0
      %8126 = vmatprep.subr.mxu0 0.0
      %8127 = vmatpush1.msra.mxu0 0.0
      %8128 = vmatprep.subr.mxu0 0.0
      %8129 = vmatpush1.msra.mxu0 0.0
      %8130 = vmatprep.subr.mxu0 0.0
      %8131 = vmatpush1.msra.mxu0 0.0
      %8132 = vmatprep.mubr.f32.mxu0 0.0
      %v8133 = vand.u32 %v7812, 4294901760
      %v8134 = vsub.f32 %v7812, %v8133
      %v8135 = vand.u32 %v8134, 4294901760
      %8136 = vmatmul.mubr.f32.gmra.mrb[0].mxu0 %v8135
      %v8137 = vpop.f32.mrb[0].mxu0
      %v8138 = vadd.f32 %v8061, %v8137
      %v8139 = vpop.f32.mrb[0].mxu0
      %8140 = vdwg.mxu0
      %8141 = vmatprep.subr.mxu0 0.0
      %v8142 = vand.u32 %v7798, 4294901760
      %v8143 = vsub.f32 %v7798, %v8142
      %v8144 = vand.u32 %v8143, 4294901760
      %8145 = vmatpush1.msra.mxu0 %v8144
      %8146 = vmatprep.subr.mxu0 0.0
      %v8147 = vand.u32 %v7799, 4294901760
      %v8148 = vsub.f32 %v7799, %v8147
      %v8149 = vand.u32 %v8148, 4294901760
      %8150 = vmatpush1.msra.mxu0 %v8149
      %8151 = vmatprep.subr.mxu0 0.0
      %v8152 = vand.u32 %v7800, 4294901760
      %v8153 = vsub.f32 %v7800, %v8152
      %v8154 = vand.u32 %v8153, 4294901760
      %8155 = vmatpush1.msra.mxu0 %v8154
      %8156 = vmatprep.subr.mxu0 0.0
      %v8157 = vand.u32 %v7801, 4294901760
      %v8158 = vsub.f32 %v7801, %v8157
      %v8159 = vand.u32 %v8158, 4294901760
      %8160 = vmatpush1.msra.mxu0 %v8159
      %8161 = vmatprep.subr.mxu0 0.0
      %8162 = vmatpush1.msra.mxu0 0.0
      %8163 = vmatprep.subr.mxu0 0.0
      %8164 = vmatpush1.msra.mxu0 0.0
      %8165 = vmatprep.subr.mxu0 0.0
      %8166 = vmatpush1.msra.mxu0 0.0
      %8167 = vmatprep.subr.mxu0 0.0
      %8168 = vmatpush1.msra.mxu0 0.0
      %8169 = vmatprep.subr.mxu0 0.0
      %8170 = vmatpush1.msra.mxu0 0.0
      %8171 = vmatprep.subr.mxu0 0.0
      %8172 = vmatpush1.msra.mxu0 0.0
      %8173 = vmatprep.subr.mxu0 0.0
      %8174 = vmatpush1.msra.mxu0 0.0
      %8175 = vmatprep.subr.mxu0 0.0
      %8176 = vmatpush1.msra.mxu0 0.0
      %8177 = vmatprep.subr.mxu0 0.0
      %8178 = vmatpush1.msra.mxu0 0.0
      %8179 = vmatprep.subr.mxu0 0.0
      %8180 = vmatpush1.msra.mxu0 0.0
      %8181 = vmatprep.subr.mxu0 0.0
      %8182 = vmatpush1.msra.mxu0 0.0
      %8183 = vmatprep.subr.mxu0 0.0
      %8184 = vmatpush1.msra.mxu0 0.0
      %8185 = vmatprep.subr.mxu0 0.0
      %8186 = vmatpush1.msra.mxu0 0.0
      %8187 = vmatprep.subr.mxu0 0.0
      %8188 = vmatpush1.msra.mxu0 0.0
      %8189 = vmatprep.subr.mxu0 0.0
      %8190 = vmatpush1.msra.mxu0 0.0
      %8191 = vmatprep.subr.mxu0 0.0
      %8192 = vmatpush1.msra.mxu0 0.0
      %8193 = vmatprep.subr.mxu0 0.0
      %8194 = vmatpush1.msra.mxu0 0.0
      %8195 = vmatprep.subr.mxu0 0.0
      %8196 = vmatpush1.msra.mxu0 0.0
      %8197 = vmatprep.subr.mxu0 0.0
      %8198 = vmatpush1.msra.mxu0 0.0
      %8199 = vmatprep.subr.mxu0 0.0
      %8200 = vmatpush1.msra.mxu0 0.0
      %8201 = vmatprep.subr.mxu0 0.0
      %8202 = vmatpush1.msra.mxu0 0.0
      %8203 = vmatprep.subr.mxu0 0.0
      %8204 = vmatpush1.msra.mxu0 0.0
      %8205 = vmatprep.subr.mxu0 0.0
      %8206 = vmatpush1.msra.mxu0 0.0
      %8207 = vmatprep.subr.mxu0 0.0
      %8208 = vmatpush1.msra.mxu0 0.0
      %8209 = vmatprep.subr.mxu0 0.0
      %8210 = vmatpush1.msra.mxu0 0.0
      %8211 = vmatprep.subr.mxu0 0.0
      %8212 = vmatpush1.msra.mxu0 0.0
      %8213 = vmatprep.subr.mxu0 0.0
      %8214 = vmatpush1.msra.mxu0 0.0
      %8215 = vmatprep.subr.mxu0 0.0
      %8216 = vmatpush1.msra.mxu0 0.0
      %8217 = vmatprep.mubr.f32.mxu0 0.0
      %v8218 = vand.u32 %v7812, 4294901760
      %8219 = vmatmul.mubr.f32.gmra.mrb[0].mxu0 %v8218
      %v8220 = vpop.f32.mrb[0].mxu0
      %v8221 = vadd.f32 %v8138, %v8220
      %v8222 = vpop.f32.mrb[0].mxu0
      %8223 = vdwg.mxu0
      %8224 = vmatprep.subr.mxu0 0.0
      %v8225 = vand.u32 %v7798, 4294901760
      %8226 = vmatpush1.msra.mxu0 %v8225
      %8227 = vmatprep.subr.mxu0 0.0
      %v8228 = vand.u32 %v7799, 4294901760
      %8229 = vmatpush1.msra.mxu0 %v8228
      %8230 = vmatprep.subr.mxu0 0.0
      %v8231 = vand.u32 %v7800, 4294901760
      %8232 = vmatpush1.msra.mxu0 %v8231
      %8233 = vmatprep.subr.mxu0 0.0
      %v8234 = vand.u32 %v7801, 4294901760
      %8235 = vmatpush1.msra.mxu0 %v8234
      %8236 = vmatprep.subr.mxu0 0.0
      %8237 = vmatpush1.msra.mxu0 0.0
      %8238 = vmatprep.subr.mxu0 0.0
      %8239 = vmatpush1.msra.mxu0 0.0
      %8240 = vmatprep.subr.mxu0 0.0
      %8241 = vmatpush1.msra.mxu0 0.0
      %8242 = vmatprep.subr.mxu0 0.0
      %8243 = vmatpush1.msra.mxu0 0.0
      %8244 = vmatprep.subr.mxu0 0.0
      %8245 = vmatpush1.msra.mxu0 0.0
      %8246 = vmatprep.subr.mxu0 0.0
      %8247 = vmatpush1.msra.mxu0 0.0
      %8248 = vmatprep.subr.mxu0 0.0
      %8249 = vmatpush1.msra.mxu0 0.0
      %8250 = vmatprep.subr.mxu0 0.0
      %8251 = vmatpush1.msra.mxu0 0.0
      %8252 = vmatprep.subr.mxu0 0.0
      %8253 = vmatpush1.msra.mxu0 0.0
      %8254 = vmatprep.subr.mxu0 0.0
      %8255 = vmatpush1.msra.mxu0 0.0
      %8256 = vmatprep.subr.mxu0 0.0
      %8257 = vmatpush1.msra.mxu0 0.0
      %8258 = vmatprep.subr.mxu0 0.0
      %8259 = vmatpush1.msra.mxu0 0.0
      %8260 = vmatprep.subr.mxu0 0.0
      %8261 = vmatpush1.msra.mxu0 0.0
      %8262 = vmatprep.subr.mxu0 0.0
      %8263 = vmatpush1.msra.mxu0 0.0
      %8264 = vmatprep.subr.mxu0 0.0
      %8265 = vmatpush1.msra.mxu0 0.0
      %8266 = vmatprep.subr.mxu0 0.0
      %8267 = vmatpush1.msra.mxu0 0.0
      %8268 = vmatprep.subr.mxu0 0.0
      %8269 = vmatpush1.msra.mxu0 0.0
      %8270 = vmatprep.subr.mxu0 0.0
      %8271 = vmatpush1.msra.mxu0 0.0
      %8272 = vmatprep.subr.mxu0 0.0
      %8273 = vmatpush1.msra.mxu0 0.0
      %8274 = vmatprep.subr.mxu0 0.0
      %8275 = vmatpush1.msra.mxu0 0.0
      %8276 = vmatprep.subr.mxu0 0.0
      %8277 = vmatpush1.msra.mxu0 0.0
      %8278 = vmatprep.subr.mxu0 0.0
      %8279 = vmatpush1.msra.mxu0 0.0
      %8280 = vmatprep.subr.mxu0 0.0
      %8281 = vmatpush1.msra.mxu0 0.0
      %8282 = vmatprep.subr.mxu0 0.0
      %8283 = vmatpush1.msra.mxu0 0.0
      %8284 = vmatprep.subr.mxu0 0.0
      %8285 = vmatpush1.msra.mxu0 0.0
      %8286 = vmatprep.subr.mxu0 0.0
      %8287 = vmatpush1.msra.mxu0 0.0
      %8288 = vmatprep.subr.mxu0 0.0
      %8289 = vmatpush1.msra.mxu0 0.0
      %8290 = vmatprep.subr.mxu0 0.0
      %8291 = vmatpush1.msra.mxu0 0.0
      %8292 = vmatprep.mubr.f32.mxu0 0.0
      %v8293 = vand.u32 %v7812, 4294901760
      %8294 = vmatmul.mubr.f32.gmra.mrb[0].mxu0 %v8293
      %v8295 = vpop.f32.mrb[0].mxu0
      %v8296 = vadd.f32 %v8221, %v8295
      %v8297 = vpop.f32.mrb[0].mxu0
      %8298 = vdwg.mxu0
      %v8299 = vld [vmem:[%s7] sm:$0x1]
      %v8301 = vsel %vm93, %v8299, 0
      %v8304 = vsel %vm93, %v8296, 0
      %8306 = vmatprep.subr.mxu0 0.0
      %v8307 = vand.u32 %v8304, 4294901760
      %8308 = vmatpush1.xpose.msra.mxu0 %v8307
      %8309 = vmatprep.subr.mxu0 0.0
      %8310 = vmatpush1.xpose.msra.mxu0 0.0
      %8311 = vmatprep.subr.mxu0 0.0
      %8312 = vmatpush1.xpose.msra.mxu0 0.0
      %8313 = vmatprep.subr.mxu0 0.0
      %8314 = vmatpush1.xpose.msra.mxu0 0.0
      %8315 = vmatprep.subr.mxu0 0.0
      %8316 = vmatpush1.xpose.msra.mxu0 0.0
      %8317 = vmatprep.subr.mxu0 0.0
      %8318 = vmatpush1.xpose.msra.mxu0 0.0
      %8319 = vmatprep.subr.mxu0 0.0
      %8320 = vmatpush1.xpose.msra.mxu0 0.0
      %8321 = vmatprep.subr.mxu0 0.0
      %8322 = vmatpush1.xpose.msra.mxu0 0.0
      %8323 = vmatprep.subr.mxu0 0.0
      %8324 = vmatpush1.xpose.msra.mxu0 0.0
      %8325 = vmatprep.subr.mxu0 0.0
      %8326 = vmatpush1.xpose.msra.mxu0 0.0
      %8327 = vmatprep.subr.mxu0 0.0
      %8328 = vmatpush1.xpose.msra.mxu0 0.0
      %8329 = vmatprep.subr.mxu0 0.0
      %8330 = vmatpush1.xpose.msra.mxu0 0.0
      %8331 = vmatprep.subr.mxu0 0.0
      %8332 = vmatpush1.xpose.msra.mxu0 0.0
      %8333 = vmatprep.subr.mxu0 0.0
      %8334 = vmatpush1.xpose.msra.mxu0 0.0
      %8335 = vmatprep.subr.mxu0 0.0
      %8336 = vmatpush1.xpose.msra.mxu0 0.0
      %8337 = vmatprep.subr.mxu0 0.0
      %8338 = vmatpush1.xpose.msra.mxu0 0.0
      %8339 = vmatprep.subr.mxu0 0.0
      %8340 = vmatpush1.xpose.msra.mxu0 0.0
      %8341 = vmatprep.subr.mxu0 0.0
      %8342 = vmatpush1.xpose.msra.mxu0 0.0
      %8343 = vmatprep.subr.mxu0 0.0
      %8344 = vmatpush1.xpose.msra.mxu0 0.0
      %8345 = vmatprep.subr.mxu0 0.0
      %8346 = vmatpush1.xpose.msra.mxu0 0.0
      %8347 = vmatprep.subr.mxu0 0.0
      %8348 = vmatpush1.xpose.msra.mxu0 0.0
      %8349 = vmatprep.subr.mxu0 0.0
      %8350 = vmatpush1.xpose.msra.mxu0 0.0
      %8351 = vmatprep.subr.mxu0 0.0
      %8352 = vmatpush1.xpose.msra.mxu0 0.0
      %8353 = vmatprep.subr.mxu0 0.0
      %8354 = vmatpush1.xpose.msra.mxu0 0.0
      %8355 = vmatprep.subr.mxu0 0.0
      %8356 = vmatpush1.xpose.msra.mxu0 0.0
      %8357 = vmatprep.subr.mxu0 0.0
      %8358 = vmatpush1.xpose.msra.mxu0 0.0
      %8359 = vmatprep.subr.mxu0 0.0
      %8360 = vmatpush1.xpose.msra.mxu0 0.0
      %8361 = vmatprep.subr.mxu0 0.0
      %8362 = vmatpush1.xpose.msra.mxu0 0.0
      %8363 = vmatprep.subr.mxu0 0.0
      %8364 = vmatpush1.xpose.msra.mxu0 0.0
      %8365 = vmatprep.subr.mxu0 0.0
      %8366 = vmatpush1.xpose.msra.mxu0 0.0
      %8367 = vmatprep.subr.mxu0 0.0
      %8368 = vmatpush1.xpose.msra.mxu0 0.0
      %8369 = vmatprep.subr.mxu0 0.0
      %8370 = vmatpush1.xpose.msra.mxu0 0.0
      %8371 = vmatprep.mubr.f32.mxu0 0.0
      %v8372 = vand.u32 %v8301, 4294901760
      %v8373 = vsub.f32 %v8301, %v8372
      %v8374 = vand.u32 %v8373, 4294901760
      %v8375 = vsub.f32 %v8373, %v8374
      %v8376 = vand.u32 %v8375, 4294901760
      %8377 = vmatmul.mubr.f32.gmra.mrb[0].mxu0 %v8376
      %v8378 = vpop.f32.mrb[0].mxu0
      %v8379 = vadd.f32 0.0, %v8378
      %v8380 = vpop.f32.mrb[0].mxu0
      %8381 = vdwg.mxu0
      %8382 = vmatprep.subr.mxu0 0.0
      %v8383 = vand.u32 %v8304, 4294901760
      %v8384 = vsub.f32 %v8304, %v8383
      %v8385 = vand.u32 %v8384, 4294901760
      %v8386 = vsub.f32 %v8384, %v8385
      %v8387 = vand.u32 %v8386, 4294901760
      %8388 = vmatpush1.xpose.msra.mxu0 %v8387
      %8389 = vmatprep.subr.mxu0 0.0
      %8390 = vmatpush1.xpose.msra.mxu0 0.0
      %8391 = vmatprep.subr.mxu0 0.0
      %8392 = vmatpush1.xpose.msra.mxu0 0.0
      %8393 = vmatprep.subr.mxu0 0.0
      %8394 = vmatpush1.xpose.msra.mxu0 0.0
      %8395 = vmatprep.subr.mxu0 0.0
      %8396 = vmatpush1.xpose.msra.mxu0 0.0
      %8397 = vmatprep.subr.mxu0 0.0
      %8398 = vmatpush1.xpose.msra.mxu0 0.0
      %8399 = vmatprep.subr.mxu0 0.0
      %8400 = vmatpush1.xpose.msra.mxu0 0.0
      %8401 = vmatprep.subr.mxu0 0.0
      %8402 = vmatpush1.xpose.msra.mxu0 0.0
      %8403 = vmatprep.subr.mxu0 0.0
      %8404 = vmatpush1.xpose.msra.mxu0 0.0
      %8405 = vmatprep.subr.mxu0 0.0
      %8406 = vmatpush1.xpose.msra.mxu0 0.0
      %8407 = vmatprep.subr.mxu0 0.0
      %8408 = vmatpush1.xpose.msra.mxu0 0.0
      %8409 = vmatprep.subr.mxu0 0.0
      %8410 = vmatpush1.xpose.msra.mxu0 0.0
      %8411 = vmatprep.subr.mxu0 0.0
      %8412 = vmatpush1.xpose.msra.mxu0 0.0
      %8413 = vmatprep.subr.mxu0 0.0
      %8414 = vmatpush1.xpose.msra.mxu0 0.0
      %8415 = vmatprep.subr.mxu0 0.0
      %8416 = vmatpush1.xpose.msra.mxu0 0.0
      %8417 = vmatprep.subr.mxu0 0.0
      %8418 = vmatpush1.xpose.msra.mxu0 0.0
      %8419 = vmatprep.subr.mxu0 0.0
      %8420 = vmatpush1.xpose.msra.mxu0 0.0
      %8421 = vmatprep.subr.mxu0 0.0
      %8422 = vmatpush1.xpose.msra.mxu0 0.0
      %8423 = vmatprep.subr.mxu0 0.0
      %8424 = vmatpush1.xpose.msra.mxu0 0.0
      %8425 = vmatprep.subr.mxu0 0.0
      %8426 = vmatpush1.xpose.msra.mxu0 0.0
      %8427 = vmatprep.subr.mxu0 0.0
      %8428 = vmatpush1.xpose.msra.mxu0 0.0
      %8429 = vmatprep.subr.mxu0 0.0
      %8430 = vmatpush1.xpose.msra.mxu0 0.0
      %8431 = vmatprep.subr.mxu0 0.0
      %8432 = vmatpush1.xpose.msra.mxu0 0.0
      %8433 = vmatprep.subr.mxu0 0.0
      %8434 = vmatpush1.xpose.msra.mxu0 0.0
      %8435 = vmatprep.subr.mxu0 0.0
      %8436 = vmatpush1.xpose.msra.mxu0 0.0
      %8437 = vmatprep.subr.mxu0 0.0
      %8438 = vmatpush1.xpose.msra.mxu0 0.0
      %8439 = vmatprep.subr.mxu0 0.0
      %8440 = vmatpush1.xpose.msra.mxu0 0.0
      %8441 = vmatprep.subr.mxu0 0.0
      %8442 = vmatpush1.xpose.msra.mxu0 0.0
      %8443 = vmatprep.subr.mxu0 0.0
      %8444 = vmatpush1.xpose.msra.mxu0 0.0
      %8445 = vmatprep.subr.mxu0 0.0
      %8446 = vmatpush1.xpose.msra.mxu0 0.0
      %8447 = vmatprep.subr.mxu0 0.0
      %8448 = vmatpush1.xpose.msra.mxu0 0.0
      %8449 = vmatprep.subr.mxu0 0.0
      %8450 = vmatpush1.xpose.msra.mxu0 0.0
      %8451 = vmatprep.mubr.f32.mxu0 0.0
      %v8452 = vand.u32 %v8301, 4294901760
      %8453 = vmatmul.mubr.f32.gmra.mrb[0].mxu0 %v8452
      %v8454 = vpop.f32.mrb[0].mxu0
      %v8455 = vadd.f32 %v8379, %v8454
      %v8456 = vpop.f32.mrb[0].mxu0
      %8457 = vdwg.mxu0
      %8458 = vmatprep.subr.mxu0 0.0
      %v8459 = vand.u32 %v8304, 4294901760
      %v8460 = vsub.f32 %v8304, %v8459
      %8461 = vmatpush1.xpose.msra.mxu0 %v8460
      %8462 = vmatprep.subr.mxu0 0.0
      %8463 = vmatpush1.xpose.msra.mxu0 0.0
      %8464 = vmatprep.subr.mxu0 0.0
      %8465 = vmatpush1.xpose.msra.mxu0 0.0
      %8466 = vmatprep.subr.mxu0 0.0
      %8467 = vmatpush1.xpose.msra.mxu0 0.0
      %8468 = vmatprep.subr.mxu0 0.0
      %8469 = vmatpush1.xpose.msra.mxu0 0.0
      %8470 = vmatprep.subr.mxu0 0.0
      %8471 = vmatpush1.xpose.msra.mxu0 0.0
      %8472 = vmatprep.subr.mxu0 0.0
      %8473 = vmatpush1.xpose.msra.mxu0 0.0
      %8474 = vmatprep.subr.mxu0 0.0
      %8475 = vmatpush1.xpose.msra.mxu0 0.0
      %8476 = vmatprep.subr.mxu0 0.0
      %8477 = vmatpush1.xpose.msra.mxu0 0.0
      %8478 = vmatprep.subr.mxu0 0.0
      %8479 = vmatpush1.xpose.msra.mxu0 0.0
      %8480 = vmatprep.subr.mxu0 0.0
      %8481 = vmatpush1.xpose.msra.mxu0 0.0
      %8482 = vmatprep.subr.mxu0 0.0
      %8483 = vmatpush1.xpose.msra.mxu0 0.0
      %8484 = vmatprep.subr.mxu0 0.0
      %8485 = vmatpush1.xpose.msra.mxu0 0.0
      %8486 = vmatprep.subr.mxu0 0.0
      %8487 = vmatpush1.xpose.msra.mxu0 0.0
      %8488 = vmatprep.subr.mxu0 0.0
      %8489 = vmatpush1.xpose.msra.mxu0 0.0
      %8490 = vmatprep.subr.mxu0 0.0
      %8491 = vmatpush1.xpose.msra.mxu0 0.0
      %8492 = vmatprep.subr.mxu0 0.0
      %8493 = vmatpush1.xpose.msra.mxu0 0.0
      %8494 = vmatprep.subr.mxu0 0.0
      %8495 = vmatpush1.xpose.msra.mxu0 0.0
      %8496 = vmatprep.subr.mxu0 0.0
      %8497 = vmatpush1.xpose.msra.mxu0 0.0
      %8498 = vmatprep.subr.mxu0 0.0
      %8499 = vmatpush1.xpose.msra.mxu0 0.0
      %8500 = vmatprep.subr.mxu0 0.0
      %8501 = vmatpush1.xpose.msra.mxu0 0.0
      %8502 = vmatprep.subr.mxu0 0.0
      %8503 = vmatpush1.xpose.msra.mxu0 0.0
      %8504 = vmatprep.subr.mxu0 0.0
      %8505 = vmatpush1.xpose.msra.mxu0 0.0
      %8506 = vmatprep.subr.mxu0 0.0
      %8507 = vmatpush1.xpose.msra.mxu0 0.0
      %8508 = vmatprep.subr.mxu0 0.0
      %8509 = vmatpush1.xpose.msra.mxu0 0.0
      %8510 = vmatprep.subr.mxu0 0.0
      %8511 = vmatpush1.xpose.msra.mxu0 0.0
      %8512 = vmatprep.subr.mxu0 0.0
      %8513 = vmatpush1.xpose.msra.mxu0 0.0
      %8514 = vmatprep.subr.mxu0 0.0
      %8515 = vmatpush1.xpose.msra.mxu0 0.0
      %8516 = vmatprep.subr.mxu0 0.0
      %8517 = vmatpush1.xpose.msra.mxu0 0.0
      %8518 = vmatprep.subr.mxu0 0.0
      %8519 = vmatpush1.xpose.msra.mxu0 0.0
      %8520 = vmatprep.subr.mxu0 0.0
      %8521 = vmatpush1.xpose.msra.mxu0 0.0
      %8522 = vmatprep.subr.mxu0 0.0
      %8523 = vmatpush1.xpose.msra.mxu0 0.0
      %8524 = vmatprep.mubr.f32.mxu0 0.0
      %v8525 = vand.u32 %v8301, 4294901760
      %v8526 = vsub.f32 %v8301, %v8525
      %8527 = vmatmul.mubr.f32.gmra.mrb[0].mxu0 %v8526
      %v8528 = vpop.f32.mrb[0].mxu0
      %v8529 = vadd.f32 %v8455, %v8528
      %v8530 = vpop.f32.mrb[0].mxu0
      %8531 = vdwg.mxu0
      %8532 = vmatprep.subr.mxu0 0.0
      %v8533 = vand.u32 %v8304, 4294901760
      %8534 = vmatpush1.xpose.msra.mxu0 %v8533
      %8535 = vmatprep.subr.mxu0 0.0
      %8536 = vmatpush1.xpose.msra.mxu0 0.0
      %8537 = vmatprep.subr.mxu0 0.0
      %8538 = vmatpush1.xpose.msra.mxu0 0.0
      %8539 = vmatprep.subr.mxu0 0.0
      %8540 = vmatpush1.xpose.msra.mxu0 0.0
      %8541 = vmatprep.subr.mxu0 0.0
      %8542 = vmatpush1.xpose.msra.mxu0 0.0
      %8543 = vmatprep.subr.mxu0 0.0
      %8544 = vmatpush1.xpose.msra.mxu0 0.0
      %8545 = vmatprep.subr.mxu0 0.0
      %8546 = vmatpush1.xpose.msra.mxu0 0.0
      %8547 = vmatprep.subr.mxu0 0.0
      %8548 = vmatpush1.xpose.msra.mxu0 0.0
      %8549 = vmatprep.subr.mxu0 0.0
      %8550 = vmatpush1.xpose.msra.mxu0 0.0
      %8551 = vmatprep.subr.mxu0 0.0
      %8552 = vmatpush1.xpose.msra.mxu0 0.0
      %8553 = vmatprep.subr.mxu0 0.0
      %8554 = vmatpush1.xpose.msra.mxu0 0.0
      %8555 = vmatprep.subr.mxu0 0.0
      %8556 = vmatpush1.xpose.msra.mxu0 0.0
      %8557 = vmatprep.subr.mxu0 0.0
      %8558 = vmatpush1.xpose.msra.mxu0 0.0
      %8559 = vmatprep.subr.mxu0 0.0
      %8560 = vmatpush1.xpose.msra.mxu0 0.0
      %8561 = vmatprep.subr.mxu0 0.0
      %8562 = vmatpush1.xpose.msra.mxu0 0.0
      %8563 = vmatprep.subr.mxu0 0.0
      %8564 = vmatpush1.xpose.msra.mxu0 0.0
      %8565 = vmatprep.subr.mxu0 0.0
      %8566 = vmatpush1.xpose.msra.mxu0 0.0
      %8567 = vmatprep.subr.mxu0 0.0
      %8568 = vmatpush1.xpose.msra.mxu0 0.0
      %8569 = vmatprep.subr.mxu0 0.0
      %8570 = vmatpush1.xpose.msra.mxu0 0.0
      %8571 = vmatprep.subr.mxu0 0.0
      %8572 = vmatpush1.xpose.msra.mxu0 0.0
      %8573 = vmatprep.subr.mxu0 0.0
      %8574 = vmatpush1.xpose.msra.mxu0 0.0
      %8575 = vmatprep.subr.mxu0 0.0
      %8576 = vmatpush1.xpose.msra.mxu0 0.0
      %8577 = vmatprep.subr.mxu0 0.0
      %8578 = vmatpush1.xpose.msra.mxu0 0.0
      %8579 = vmatprep.subr.mxu0 0.0
      %8580 = vmatpush1.xpose.msra.mxu0 0.0
      %8581 = vmatprep.subr.mxu0 0.0
      %8582 = vmatpush1.xpose.msra.mxu0 0.0
      %8583 = vmatprep.subr.mxu0 0.0
      %8584 = vmatpush1.xpose.msra.mxu0 0.0
      %8585 = vmatprep.subr.mxu0 0.0
      %8586 = vmatpush1.xpose.msra.mxu0 0.0
      %8587 = vmatprep.subr.mxu0 0.0
      %8588 = vmatpush1.xpose.msra.mxu0 0.0
      %8589 = vmatprep.subr.mxu0 0.0
      %8590 = vmatpush1.xpose.msra.mxu0 0.0
      %8591 = vmatprep.subr.mxu0 0.0
      %8592 = vmatpush1.xpose.msra.mxu0 0.0
      %8593 = vmatprep.subr.mxu0 0.0
      %8594 = vmatpush1.xpose.msra.mxu0 0.0
      %8595 = vmatprep.subr.mxu0 0.0
      %8596 = vmatpush1.xpose.msra.mxu0 0.0
      %8597 = vmatprep.mubr.f32.mxu0 0.0
      %v8598 = vand.u32 %v8301, 4294901760
      %v8599 = vsub.f32 %v8301, %v8598
      %v8600 = vand.u32 %v8599, 4294901760
      %8601 = vmatmul.mubr.f32.gmra.mrb[0].mxu0 %v8600
      %v8602 = vpop.f32.mrb[0].mxu0
      %v8603 = vadd.f32 %v8529, %v8602
      %v8604 = vpop.f32.mrb[0].mxu0
      %8605 = vdwg.mxu0
      %8606 = vmatprep.subr.mxu0 0.0
      %v8607 = vand.u32 %v8304, 4294901760
      %v8608 = vsub.f32 %v8304, %v8607
      %v8609 = vand.u32 %v8608, 4294901760
      %8610 = vmatpush1.xpose.msra.mxu0 %v8609
      %8611 = vmatprep.subr.mxu0 0.0
      %8612 = vmatpush1.xpose.msra.mxu0 0.0
      %8613 = vmatprep.subr.mxu0 0.0
      %8614 = vmatpush1.xpose.msra.mxu0 0.0
      %8615 = vmatprep.subr.mxu0 0.0
      %8616 = vmatpush1.xpose.msra.mxu0 0.0
      %8617 = vmatprep.subr.mxu0 0.0
      %8618 = vmatpush1.xpose.msra.mxu0 0.0
      %8619 = vmatprep.subr.mxu0 0.0
      %8620 = vmatpush1.xpose.msra.mxu0 0.0
      %8621 = vmatprep.subr.mxu0 0.0
      %8622 = vmatpush1.xpose.msra.mxu0 0.0
      %8623 = vmatprep.subr.mxu0 0.0
      %8624 = vmatpush1.xpose.msra.mxu0 0.0
      %8625 = vmatprep.subr.mxu0 0.0
      %8626 = vmatpush1.xpose.msra.mxu0 0.0
      %8627 = vmatprep.subr.mxu0 0.0
      %8628 = vmatpush1.xpose.msra.mxu0 0.0
      %8629 = vmatprep.subr.mxu0 0.0
      %8630 = vmatpush1.xpose.msra.mxu0 0.0
      %8631 = vmatprep.subr.mxu0 0.0
      %8632 = vmatpush1.xpose.msra.mxu0 0.0
      %8633 = vmatprep.subr.mxu0 0.0
      %8634 = vmatpush1.xpose.msra.mxu0 0.0
      %8635 = vmatprep.subr.mxu0 0.0
      %8636 = vmatpush1.xpose.msra.mxu0 0.0
      %8637 = vmatprep.subr.mxu0 0.0
      %8638 = vmatpush1.xpose.msra.mxu0 0.0
      %8639 = vmatprep.subr.mxu0 0.0
      %8640 = vmatpush1.xpose.msra.mxu0 0.0
      %8641 = vmatprep.subr.mxu0 0.0
      %8642 = vmatpush1.xpose.msra.mxu0 0.0
      %8643 = vmatprep.subr.mxu0 0.0
      %8644 = vmatpush1.xpose.msra.mxu0 0.0
      %8645 = vmatprep.subr.mxu0 0.0
      %8646 = vmatpush1.xpose.msra.mxu0 0.0
      %8647 = vmatprep.subr.mxu0 0.0
      %8648 = vmatpush1.xpose.msra.mxu0 0.0
      %8649 = vmatprep.subr.mxu0 0.0
      %8650 = vmatpush1.xpose.msra.mxu0 0.0
      %8651 = vmatprep.subr.mxu0 0.0
      %8652 = vmatpush1.xpose.msra.mxu0 0.0
      %8653 = vmatprep.subr.mxu0 0.0
      %8654 = vmatpush1.xpose.msra.mxu0 0.0
      %8655 = vmatprep.subr.mxu0 0.0
      %8656 = vmatpush1.xpose.msra.mxu0 0.0
      %8657 = vmatprep.subr.mxu0 0.0
      %8658 = vmatpush1.xpose.msra.mxu0 0.0
      %8659 = vmatprep.subr.mxu0 0.0
      %8660 = vmatpush1.xpose.msra.mxu0 0.0
      %8661 = vmatprep.subr.mxu0 0.0
      %8662 = vmatpush1.xpose.msra.mxu0 0.0
      %8663 = vmatprep.subr.mxu0 0.0
      %8664 = vmatpush1.xpose.msra.mxu0 0.0
      %8665 = vmatprep.subr.mxu0 0.0
      %8666 = vmatpush1.xpose.msra.mxu0 0.0
      %8667 = vmatprep.subr.mxu0 0.0
      %8668 = vmatpush1.xpose.msra.mxu0 0.0
      %8669 = vmatprep.subr.mxu0 0.0
      %8670 = vmatpush1.xpose.msra.mxu0 0.0
      %8671 = vmatprep.subr.mxu0 0.0
      %8672 = vmatpush1.xpose.msra.mxu0 0.0
      %8673 = vmatprep.mubr.f32.mxu0 0.0
      %v8674 = vand.u32 %v8301, 4294901760
      %8675 = vmatmul.mubr.f32.gmra.mrb[0].mxu0 %v8674
      %v8676 = vpop.f32.mrb[0].mxu0
      %v8677 = vadd.f32 %v8603, %v8676
      %v8678 = vpop.f32.mrb[0].mxu0
      %8679 = vdwg.mxu0
      %8680 = vmatprep.subr.mxu0 0.0
      %v8681 = vand.u32 %v8304, 4294901760
      %8682 = vmatpush1.xpose.msra.mxu0 %v8681
      %8683 = vmatprep.subr.mxu0 0.0
      %8684 = vmatpush1.xpose.msra.mxu0 0.0
      %8685 = vmatprep.subr.mxu0 0.0
      %8686 = vmatpush1.xpose.msra.mxu0 0.0
      %8687 = vmatprep.subr.mxu0 0.0
      %8688 = vmatpush1.xpose.msra.mxu0 0.0
      %8689 = vmatprep.subr.mxu0 0.0
      %8690 = vmatpush1.xpose.msra.mxu0 0.0
      %8691 = vmatprep.subr.mxu0 0.0
      %8692 = vmatpush1.xpose.msra.mxu0 0.0
      %8693 = vmatprep.subr.mxu0 0.0
      %8694 = vmatpush1.xpose.msra.mxu0 0.0
      %8695 = vmatprep.subr.mxu0 0.0
      %8696 = vmatpush1.xpose.msra.mxu0 0.0
      %8697 = vmatprep.subr.mxu0 0.0
      %8698 = vmatpush1.xpose.msra.mxu0 0.0
      %8699 = vmatprep.subr.mxu0 0.0
      %8700 = vmatpush1.xpose.msra.mxu0 0.0
      %8701 = vmatprep.subr.mxu0 0.0
      %8702 = vmatpush1.xpose.msra.mxu0 0.0
      %8703 = vmatprep.subr.mxu0 0.0
      %8704 = vmatpush1.xpose.msra.mxu0 0.0
      %8705 = vmatprep.subr.mxu0 0.0
      %8706 = vmatpush1.xpose.msra.mxu0 0.0
      %8707 = vmatprep.subr.mxu0 0.0
      %8708 = vmatpush1.xpose.msra.mxu0 0.0
      %8709 = vmatprep.subr.mxu0 0.0
      %8710 = vmatpush1.xpose.msra.mxu0 0.0
      %8711 = vmatprep.subr.mxu0 0.0
      %8712 = vmatpush1.xpose.msra.mxu0 0.0
      %8713 = vmatprep.subr.mxu0 0.0
      %8714 = vmatpush1.xpose.msra.mxu0 0.0
      %8715 = vmatprep.subr.mxu0 0.0
      %8716 = vmatpush1.xpose.msra.mxu0 0.0
      %8717 = vmatprep.subr.mxu0 0.0
      %8718 = vmatpush1.xpose.msra.mxu0 0.0
      %8719 = vmatprep.subr.mxu0 0.0
      %8720 = vmatpush1.xpose.msra.mxu0 0.0
      %8721 = vmatprep.subr.mxu0 0.0
      %8722 = vmatpush1.xpose.msra.mxu0 0.0
      %8723 = vmatprep.subr.mxu0 0.0
      %8724 = vmatpush1.xpose.msra.mxu0 0.0
      %8725 = vmatprep.subr.mxu0 0.0
      %8726 = vmatpush1.xpose.msra.mxu0 0.0
      %8727 = vmatprep.subr.mxu0 0.0
      %8728 = vmatpush1.xpose.msra.mxu0 0.0
      %8729 = vmatprep.subr.mxu0 0.0
      %8730 = vmatpush1.xpose.msra.mxu0 0.0
      %8731 = vmatprep.subr.mxu0 0.0
      %8732 = vmatpush1.xpose.msra.mxu0 0.0
      %8733 = vmatprep.subr.mxu0 0.0
      %8734 = vmatpush1.xpose.msra.mxu0 0.0
      %8735 = vmatprep.subr.mxu0 0.0
      %8736 = vmatpush1.xpose.msra.mxu0 0.0
      %8737 = vmatprep.subr.mxu0 0.0
      %8738 = vmatpush1.xpose.msra.mxu0 0.0
      %8739 = vmatprep.subr.mxu0 0.0
      %8740 = vmatpush1.xpose.msra.mxu0 0.0
      %8741 = vmatprep.subr.mxu0 0.0
      %8742 = vmatpush1.xpose.msra.mxu0 0.0
      %8743 = vmatprep.subr.mxu0 0.0
      %8744 = vmatpush1.xpose.msra.mxu0 0.0
      %8745 = vmatprep.mubr.f32.mxu0 0.0
      %v8746 = vand.u32 %v8301, 4294901760
      %8747 = vmatmul.mubr.f32.gmra.mrb[0].mxu0 %v8746
      %v8748 = vpop.f32.mrb[0].mxu0
      %v8749 = vadd.f32 %v8677, %v8748
      %v8750 = vpop.f32.mrb[0].mxu0
      %8751 = vdwg.mxu0
      %v8752 = vld [vmem:[#allocation4] sm:$0x1]
      %v8753 = vld [vmem:[%s1] sm:$0x1]
      %8755 = vset.pattern.permute.xlu0 0
      %8756 = vperm.xlu0 %8755, %v8752
      %v8757 = vpop.permute.xlu0 %8756
      %v8759 = vlaneseq
      %v8760 = vshrl.u32 %v8759, 7
      %v8761 = vsub.s32 0, %v8760
      %v8762 = vrot.slane %v8757, %v8761
      %v8763 = vmul.f32 %v8762, %v8753
      %v8764 = vadd.f32 %v8763, %v8749
      %v8765 = vld [vmem:[#allocation5] sm:$0x1]
      %8767 = vset.pattern.permute.xlu0 0
      %8768 = vperm.xlu0 %8767, %v8765
      %v8769 = vpop.permute.xlu0 %8768
      %v8771 = vlaneseq
      %v8772 = vshrl.u32 %v8771, 7
      %v8773 = vsub.s32 0, %v8772
      %v8774 = vrot.slane %v8769, %v8773
      %v8775 = vadd.f32 %v8764, %v8774
      %vm8776 = vcmask 24576
      %v8777 = vsel %vm8776, %v8775, -inf
      %8778 = vmax.xlane.f32.xlu0 %v8777
      %v8779 = vpop.xlane.xlu0 %8778
      %v8780 = vmax.f32 %v8779, 1.0
      %v8781 = vsub.f32 1.0, %v8780
      %v8782 = vmul.f32 %v8781, 1.442695
      %v8783 = vpow.pop %v8782
      %v8784 = vsub.f32 %v8775, %v8780
      %v8785 = vmul.f32 %v8784, 1.442695
      %v8786 = vpow.pop %v8785
      %v8787 = vsel %vm8776, %v8786, 0.0
      %8788 = vadd.xlane.f32.xlu0 %v8787
      %v8789 = vpop.xlane.xlu0 %8788
      %v8790 = vadd.f32 %v8783, %v8789
      %v8791 = vrcp.pop %v8790
      %v8792 = vmul.f32 1.0, %v8791
      %v8793 = vmul.f32 %v8783, %v8792
      %vm8794 = vcmask 0
      %8795 = vst.msk [vmem:[#allocation12] sm:$0x1] %vm8794, %v8793
      %v8796 = vmul.f32 %v8786, %v8792
      %v8798 = vlaneseq
      %v8799 = vshrl.u32 %v8798, 7
      %v8800 = vsub.s32 0, %v8799
      %v8801 = vrot.slane %v8796, %v8800
      %8802 = vrot.lane.b32.xlu0 %v8801, 1
      %v8803 = vpop.permute.xlu0 %8802
      %vm8805 = vcmask 32776
      %8806 = vst.msk [vmem:[#allocation12] sm:$0x1] %vm8805, %v8803
    $region57: #{tpu_custom_call.1} parent=1 // pred_fallthru
      _
    // Predicated region
    $region58: #{tpu_custom_call.1} parent=1 // pred_check
      _
    $region59: #{tpu_custom_call.1} parent=1 // pred_check_branch
      %8808 = sbr.rel (0) target = $region61
    $region60: #{tpu_custom_call.1} parent=1 // pred_region
      %s8810 = ssub.s32 16, 16
      %8811 = vsyncadd [#allocation8], %s8810
      %s8813 = sshll.u32 [#allocation12], 4
      %s8814 = int_to_ptr.vmem [resolvable:$true] %s8813
      %8816 = dma.vmem_to_hbm [thread:$0]  %s8814, 16, %s9, [#allocation8]
    $region61: #{tpu_custom_call.1} parent=1 // pred_fallthru
      _
    // Predicated region
    $region62: #{tpu_custom_call.1} parent=1 // pred_check
      _
    $region63: #{tpu_custom_call.1} parent=1 // pred_check_branch
      %8818 = sbr.rel (0) target = $region65
    $region64: #{tpu_custom_call.1} parent=1 // pred_region
      %8819 = dma.done [#allocation8], 16
    $region65: #{tpu_custom_call.1} parent=1 // pred_fallthru
      _
    %8820 = vsyncpa [#allocation7], 1
    %8821 = vsyncpa [#allocation10], 1
    %8822 = vsyncpa [#allocation8], 1

</llo_original>
